<compile_context>
chip_gen: v5e
topology: v5e:2x2
jax: 0.10.0
libtpu: 0.0.40
codegen_flags: <defaults>
</compile_context>

<pallas_src>
import functools

import jax
import jax.numpy as jnp
from jax import lax
from jax.experimental import pallas as pl
from jax.experimental.pallas import tpu as pltpu

_EPS = 1e-5
_PREC = lax.Precision.HIGHEST  # used only by the pure-JAX reference


# ---------------------------------------------------------------------------
# Kernels
# ---------------------------------------------------------------------------
def _conv_stage_kernel(apply_affine, *refs):
    """(optional BN-affine + ReLU) -> 3x3 conv (9 accumulating MXU matmuls)
    -> per-block BN statistics.

    refs (apply_affine=True ): x, scale, shift, w, y, stat, pad_scr
    refs (apply_affine=False): x,               w, y, stat, pad_scr

    x_ref    : (1, H, W, Cin)   bf16 activation block (one batch element)
    scale_ref: (1, Cin)         f32 per-channel BN scale of the previous stage
    shift_ref: (1, Cin)         f32 per-channel BN shift
    w_ref    : (9, Cin, Cout)   bf16 conv taps, tap-major index = dy*3 + dx
    y_ref    : (1, H, W, Cout)  bf16 pre-BN conv output
    stat_ref : (1, 2, Cout)     f32 [sum(y), sum((y - block_mean)^2)]
    pad_scr  : (H+2, W+2, Cin)  bf16 zero-halo scratch
    """
    if apply_affine:
        x_ref, scale_ref, shift_ref, w_ref, y_ref, stat_ref, pad_scr = refs
    else:
        x_ref, w_ref, y_ref, stat_ref, pad_scr = refs

    _, H, W, Cin = x_ref.shape
    Cout = w_ref.shape[2]

    if apply_affine:
        h = x_ref[0].astype(jnp.float32) * scale_ref[...] + shift_ref[...]
        h = jnp.maximum(h, 0.0).astype(pad_scr.dtype)
    else:
        h = x_ref[0].astype(pad_scr.dtype)

    # Zero only the 1-element halo; the interior is fully overwritten below.
    # Done every grid step (NOT only at program_id==0) so it is safe under
    # "parallel" megacore sharding.
    zrow = jnp.zeros((1, W + 2, Cin), pad_scr.dtype)
    zcol = jnp.zeros((H, 1, Cin), pad_scr.dtype)
    pad_scr[0:1, :, :] = zrow
    pad_scr[H + 1:H + 2, :, :] = zrow
    pad_scr[1:H + 1, 0:1, :] = zcol
    pad_scr[1:H + 1, W + 1:W + 2, :] = zcol
    pad_scr[1:H + 1, 1:W + 1, :] = h

    # 3x3 conv as 9 accumulating matmuls (K = Cin each) with f32 accumulation;
    # no im2col concatenate, no (H*W, 9*Cin) temp.
    acc = jnp.zeros((H * W, Cout), jnp.float32)
    for dy in range(3):
        for dx in range(3):
            view = pad_scr[dy:dy + H, dx:dx + W, :].reshape(H * W, Cin)
            acc = acc + jnp.dot(view, w_ref[dy * 3 + dx],
                                preferred_element_type=jnp.float32)

    y_ref[0] = acc.reshape(H, W, Cout).astype(y_ref.dtype)

    # Per-block BN statistics: channel sum, and sum of squares centered on the
    # per-block mean (combined across blocks with Chan's formula outside) ->
    # no catastrophic cancellation of E[y^2] - E[y]^2.
    blk_sum = jnp.sum(acc, axis=0, keepdims=True)                # (1, Cout)
    d = acc - blk_sum * (1.0 / float(H * W))
    stat_ref[0] = jnp.concatenate(
        [blk_sum, jnp.sum(d * d, axis=0, keepdims=True)], axis=0)  # (2, Cout)


def _bn_relu_pool_kernel(y_ref, scale_ref, shift_ref, skip_ref, pool_ref):
    """Final BN-affine + ReLU -> skip, plus 2x2 stride-2 maxpool."""
    _, H, W, C = skip_ref.shape

    s = jnp.maximum(
        y_ref[0].astype(jnp.float32) * scale_ref[...] + shift_ref[...], 0.0)
    skip_ref[0] = s.astype(skip_ref.dtype)

    # MaxPool 2x2 stride 2 via reshape + max (no strided ref loads, no scratch).
    a = s.reshape(H // 2, 2, W, C)
    rowmax = jnp.maximum(a[:, 0, :, :], a[:, 1, :, :])           # (H/2, W, C)
    b = rowmax.reshape(H // 2, W // 2, 2, C)
    pool_ref[0] = jnp.maximum(b[:, :, 0, :], b[:, :, 1, :]).astype(pool_ref.dtype)


# ---------------------------------------------------------------------------
# pallas_call wrappers
# ---------------------------------------------------------------------------
def _vmem_limit_bytes(*nbytes):
    need = int(sum(int(b) for b in nbytes))
    # 2x headroom for in-kernel temps / relayouts; clamp to the smallest
    # physical VMEM across current chips (v7x: 64 MiB).
    return int(min(max(2 * need + (8 << 20), 24 << 20), 64 << 20))


def _conv_stage(x, w_taps, scale=None, shift=None):
    """One (affine+relu)+conv3x3 stage, grid over the batch axis."""
    apply_affine = scale is not None
    N, H, W, Cin = x.shape
    Cout = w_taps.shape[2]

    in_specs = [pl.BlockSpec((1, H, W, Cin), lambda n: (n, 0, 0, 0))]
    args = [x]
    if apply_affine:
        in_specs += [pl.BlockSpec((1, Cin), lambda n: (0, 0)),
                     pl.BlockSpec((1, Cin), lambda n: (0, 0))]
        args += [scale, shift]
    in_specs.append(pl.BlockSpec((9, Cin, Cout), lambda n: (0, 0, 0)))
    args.append(w_taps)

    vmem = _vmem_limit_bytes(
        2 * H * W * Cin * 2,             # x block   (bf16, double-buffered)
        2 * 9 * Cin * Cout * 2,          # weights   (bf16, double-buffered)
        2 * H * W * Cout * 2,            # y block   (bf16, double-buffered)
        (H + 2) * (W + 2) * Cin * 2,     # pad scratch (bf16)
        H * W * Cout * 4,                # f32 accumulator temp
        H * W * Cin * 4)                 # f32 affine temp

    return pl.pallas_call(
        functools.partial(_conv_stage_kernel, apply_affine),
        grid=(N,),
        in_specs=in_specs,
        out_specs=(
            pl.BlockSpec((1, H, W, Cout), lambda n: (n, 0, 0, 0)),
            pl.BlockSpec((1, 2, Cout), lambda n: (n, 0, 0)),
        ),
        out_shape=(
            jax.ShapeDtypeStruct((N, H, W, Cout), jnp.bfloat16),
            jax.ShapeDtypeStruct((N, 2, Cout), jnp.float32),
        ),
        scratch_shapes=[pltpu.VMEM((H + 2, W + 2, Cin), jnp.bfloat16)],
        compiler_params=pltpu.CompilerParams(
            dimension_semantics=("parallel",),
            vmem_limit_bytes=vmem),
    )(*args)


def _bn_relu_pool(y, scale, shift):
    N, H, W, C = y.shape
    vmem = _vmem_limit_bytes(
        2 * H * W * C * 2,                    # y block (bf16, double-buffered)
        2 * H * W * C * 4,                    # skip block (f32, double-buffered)
        2 * (H // 2) * (W // 2) * C * 4,      # pool block (f32, double-buffered)
        H * W * C * 4)                        # f32 temps
    skip, pool = pl.pallas_call(
        _bn_relu_pool_kernel,
        grid=(N,),
        in_specs=[
            pl.BlockSpec((1, H, W, C), lambda n: (n, 0, 0, 0)),
            pl.BlockSpec((1, C), lambda n: (0, 0)),
            pl.BlockSpec((1, C), lambda n: (0, 0)),
        ],
        out_specs=(
            pl.BlockSpec((1, H, W, C), lambda n: (n, 0, 0, 0)),
            pl.BlockSpec((1, H // 2, W // 2, C), lambda n: (n, 0, 0, 0)),
        ),
        out_shape=(
            jax.ShapeDtypeStruct((N, H, W, C), jnp.float32),
            jax.ShapeDtypeStruct((N, H // 2, W // 2, C), jnp.float32),
        ),
        compiler_params=pltpu.CompilerParams(
            dimension_semantics=("parallel",),
            vmem_limit_bytes=vmem),
    )(y, scale, shift)
    return pool, skip


# ---------------------------------------------------------------------------
# Wrapper glue (O(N*C) work + layout plumbing only)
# ---------------------------------------------------------------------------
def _torch_conv_w_to_taps(w):
    # torch (Cout, Cin, 3, 3) -> (9, Cin, Cout), taps ordered (dy, dx)
    cout, cin = w.shape[0], w.shape[1]
    return jnp.transpose(w, (2, 3, 1, 0)).reshape(9, cin, cout)


def _bn_affine_from_stats(stats, gamma, beta, n_block, count):
    """Chan-combine per-block (sum, centered M2) into per-channel scale/shift."""
    sums = stats[:, 0, :]                       # (N, C)
    m2 = stats[:, 1, :]                         # (N, C)
    mean_b = sums / n_block
    mu = jnp.sum(sums, axis=0) / count
    var = (jnp.sum(m2, axis=0)
           + n_block * jnp.sum((mean_b - mu) ** 2, axis=0)) / count  # biased
    scale = gamma * lax.rsqrt(var + _EPS)
    shift = beta - mu * scale
    return scale.reshape(1, -1), shift.reshape(1, -1)


@jax.jit
def contracting_block_forward(x_nchw, params):
    """Returns (pooled, skip), both in NCHW like the PyTorch module."""
    # NHWC + bf16: stage 1 only consumes x as matmul input, so bf16 halves the
    # input DMA and its double-buffered VMEM block.
    x = jnp.transpose(x_nchw, (0, 2, 3, 1)).astype(jnp.bfloat16)
    N, H, W, Cin = x.shape
    n_block = float(H * W)
    count = float(N * H * W)

    w1 = _torch_conv_w_to_taps(params["w1"]).astype(jnp.bfloat16)
    w2 = _torch_conv_w_to_taps(params["w2"]).astype(jnp.bfloat16)
    # Conv biases b1/b2 intentionally unused: a per-channel constant added
    # before TRAINING-mode BatchNorm cancels exactly in (y - mean).

    # Stage 1: conv1 + per-block BN1 stats (no incoming affine / ReLU).
    y1, st1 = _conv_stage(x, w1)

    # Stage 2: BN1 + ReLU folded into conv2's kernel, + per-block BN2 stats.
    s1, b1 = _bn_affine_from_stats(st1, params["g1"], params["be1"],
                                   n_block, count)
    y2, st2 = _conv_stage(y1, w2, s1, b1)

    # Stage 3: BN2 + ReLU -> skip, 2x2/2 maxpool -> pooled.
    s2, b2 = _bn_affine_from_stats(st2, params["g2"], params["be2"],
                                   n_block, count)
    pooled, skip = _bn_relu_pool(y2, s2, b2)

    # NOTE: the NHWC->NCHW transposes are an extra HBM round trip; return NHWC
    # instead if the downstream consumer allows it.
    return (jnp.transpose(pooled, (0, 3, 1, 2)),
            jnp.transpose(skip, (0, 3, 1, 2)))


# ---------------------------------------------------------------------------
# Pure-JAX reference (mirrors the PyTorch module) + test harness
# ---------------------------------------------------------------------------
def _reference_forward(x_nchw, p):
    def conv(x, w, b):
        y = lax.conv_general_dilated(
            x, w, window_strides=(1, 1), padding=((1, 1), (1, 1)),
            dimension_numbers=("NCHW", "OIHW", "NCHW"), precision=_PREC)
        return y + b[None, :, None, None]

    def bn_relu(x, g, be):
        mean = jnp.mean(x, axis=(0, 2, 3), keepdims=True)
        var = jnp.var(x, axis=(0, 2, 3), keepdims=True)
        y = (x - mean) * lax.rsqrt(var + _EPS)
        y = y * g[None, :, None, None] + be[None, :, None, None]
        return jnp.maximum(y, 0.0)

    h = bn_relu(conv(x_nchw, p["w1"], p["b1"]), p["g1"], p["be1"])
    skip = bn_relu(conv(h, p["w2"], p["b2"]), p["g2"], p["be2"])
    pooled = lax.reduce_window(skip, -jnp.inf, lax.max,
                               (1, 1, 2, 2), (1, 1, 2, 2), "VALID")
    return pooled, skip


def _init_params(key, in_channels, out_channels):
    ks = jax.random.split(key, 4)
    return {
        "w1": 0.2 * jax.random.normal(ks[0], (out_channels, in_channels, 3, 3),
                                      jnp.float32),
        "b1": 0.05 * jax.random.normal(ks[1], (out_channels,), jnp.float32),
        "w2": 0.2 * jax.random.normal(ks[2], (out_channels, out_channels, 3, 3),
                                      jnp.float32),
        "b2": 0.05 * jax.random.normal(ks[3], (out_channels,), jnp.float32),
        "g1": 1.0 + 0.1 * jnp.arange(out_channels, dtype=jnp.float32) / out_channels,
        "be1": 0.02 * jnp.arange(out_channels, dtype=jnp.float32),
        "g2": 1.0 - 0.1 * jnp.arange(out_channels, dtype=jnp.float32) / out_channels,
        "be2": -0.02 * jnp.arange(out_channels, dtype=jnp.float32),
    }


if __name__ == "__main__":
    N, Cin, Cout, H, W = 2, 4, 8, 16, 16
    key = jax.random.PRNGKey(0)
    kx, kp = jax.random.split(key)
    x = jax.random.normal(kx, (N, Cin, H, W), jnp.float32)   # NCHW, like PyTorch
    params = _init_params(kp, Cin, Cout)

    pooled, skip = contracting_block_forward(x, params)
    jax.block_until_ready((pooled, skip))

    assert pooled.shape == (N, Cout, H // 2, W // 2), pooled.shape
    assert skip.shape == (N, Cout, H, W), skip.shape

    ref_pooled, ref_skip = _reference_forward(x, params)
    # bf16 matmul inputs + bf16 inter-stage activations vs. an f32
    # HIGHEST-precision reference on BN-normalized O(1) activations -> a few
    # e-3 .. ~2e-2 max error is expected.
    tol = 5e-2
    assert jnp.allclose(pooled, ref_pooled, atol=tol, rtol=tol), (
        float(jnp.max(jnp.abs(pooled - ref_pooled))))
    assert jnp.allclose(skip, ref_skip, atol=tol, rtol=tol), (
        float(jnp.max(jnp.abs(skip - ref_skip))))

    print("KERNEL_OK")
</pallas_src>

<mosaic_0001>
module attributes {stable_mosaic.version = 11 : i64} {
  func.func @_conv_stage_kernel(%arg0: i32, %arg1: memref<1x16x16x4xbf16, #tpu.memory_space<vmem>>, %arg2: memref<9x4x8xbf16, #tpu.memory_space<vmem>>, %arg3: memref<1x16x16x8xbf16, #tpu.memory_space<vmem>>, %arg4: memref<1x2x8xf32, #tpu.memory_space<vmem>>, %arg5: memref<18x18x4xbf16, #tpu.memory_space<vmem>>) attributes {dimension_semantics = [#tpu.dimension_semantics<parallel>], iteration_bounds = array<i64: 2>, scalar_prefetch = 0 : i64, scratch_operands = 1 : i64, tpu.core_type = #tpu.core_type<tc>, window_params = [{transform_indices = @transform_0, window_bounds = array<i64: 1, 16, 16, 4>}, {pipeline_mode = #tpu.pipeline_mode<synchronous>, transform_indices = @transform_1, window_bounds = array<i64: 9, 4, 8>}, {transform_indices = @transform_2, window_bounds = array<i64: 1, 16, 16, 8>}, {transform_indices = @transform_3, window_bounds = array<i64: 1, 2, 8>}]} {
    %c0 = arith.constant 0 : index
    %c0_0 = arith.constant 0 : index
    %c0_1 = arith.constant 0 : index
    %c0_2 = arith.constant 0 : index
    %0 = vector.load %arg1[%c0, %c0_0, %c0_1, %c0_2] : memref<1x16x16x4xbf16, #tpu.memory_space<vmem>>, vector<1x16x16x4xbf16>
    %1 = vector.shape_cast %0 : vector<1x16x16x4xbf16> to vector<16x16x4xbf16>
    %cst = arith.constant 0.000000e+00 : bf16
    %2 = vector.broadcast %cst : bf16 to vector<1x18x4xbf16>
    %cst_3 = arith.constant 0.000000e+00 : bf16
    %3 = vector.broadcast %cst_3 : bf16 to vector<16x1x4xbf16>
    %c0_4 = arith.constant 0 : index
    %c0_5 = arith.constant 0 : index
    %c0_6 = arith.constant 0 : index
    %4 = vector.load %arg5[%c0_4, %c0_5, %c0_6] : memref<18x18x4xbf16, #tpu.memory_space<vmem>>, vector<1x18x4xbf16>
    tpu.vector_store %arg5[%c0_4, %c0_5, %c0_6], %2 {strides = array<i32>} : memref<18x18x4xbf16, #tpu.memory_space<vmem>>, vector<1x18x4xbf16>,
    %c17 = arith.constant 17 : index
    %c0_7 = arith.constant 0 : index
    %c0_8 = arith.constant 0 : index
    %5 = vector.load %arg5[%c17, %c0_7, %c0_8] : memref<18x18x4xbf16, #tpu.memory_space<vmem>>, vector<1x18x4xbf16>
    tpu.vector_store %arg5[%c17, %c0_7, %c0_8], %2 {strides = array<i32>} : memref<18x18x4xbf16, #tpu.memory_space<vmem>>, vector<1x18x4xbf16>,
    %c1 = arith.constant 1 : index
    %c0_9 = arith.constant 0 : index
    %c0_10 = arith.constant 0 : index
    %6 = vector.load %arg5[%c1, %c0_9, %c0_10] : memref<18x18x4xbf16, #tpu.memory_space<vmem>>, vector<16x1x4xbf16>
    tpu.vector_store %arg5[%c1, %c0_9, %c0_10], %3 {strides = array<i32>} : memref<18x18x4xbf16, #tpu.memory_space<vmem>>, vector<16x1x4xbf16>,
    %c1_11 = arith.constant 1 : index
    %c17_12 = arith.constant 17 : index
    %c0_13 = arith.constant 0 : index
    %7 = vector.load %arg5[%c1_11, %c17_12, %c0_13] : memref<18x18x4xbf16, #tpu.memory_space<vmem>>, vector<16x1x4xbf16>
    tpu.vector_store %arg5[%c1_11, %c17_12, %c0_13], %3 {strides = array<i32>} : memref<18x18x4xbf16, #tpu.memory_space<vmem>>, vector<16x1x4xbf16>,
    %c1_14 = arith.constant 1 : index
    %c1_15 = arith.constant 1 : index
    %c0_16 = arith.constant 0 : index
    %8 = vector.load %arg5[%c1_14, %c1_15, %c0_16] : memref<18x18x4xbf16, #tpu.memory_space<vmem>>, vector<16x16x4xbf16>
    tpu.vector_store %arg5[%c1_14, %c1_15, %c0_16], %1 {strides = array<i32>} : memref<18x18x4xbf16, #tpu.memory_space<vmem>>, vector<16x16x4xbf16>,
    %cst_17 = arith.constant 0.000000e+00 : f32
    %9 = vector.broadcast %cst_17 : f32 to vector<256x8xf32>
    %c0_18 = arith.constant 0 : index
    %c0_19 = arith.constant 0 : index
    %c0_20 = arith.constant 0 : index
    %10 = vector.load %arg5[%c0_18, %c0_19, %c0_20] : memref<18x18x4xbf16, #tpu.memory_space<vmem>>, vector<16x16x4xbf16>
    %11 = vector.shape_cast %10 : vector<16x16x4xbf16> to vector<256x4xbf16>
    %c0_21 = arith.constant 0 : index
    %c0_22 = arith.constant 0 : index
    %c0_23 = arith.constant 0 : index
    %12 = vector.load %arg2[%c0_21, %c0_22, %c0_23] : memref<9x4x8xbf16, #tpu.memory_space<vmem>>, vector<1x4x8xbf16>
    %13 = vector.shape_cast %12 : vector<1x4x8xbf16> to vector<4x8xbf16>
    %cst_24 = arith.constant dense<0.000000e+00> : vector<256x8xf32>
    %14 = tpu.matmul %11, %13, %cst_24 {dimension_numbers = #tpu.dot_dimension_numbers<[1], [0], [0], [1], [0, 0, 1, 1], [], []>} : vector<256x4xbf16>, vector<4x8xbf16>, vector<256x8xf32> -> vector<256x8xf32>
    %15 = arith.addf %9, %14 : vector<256x8xf32>
    %c0_25 = arith.constant 0 : index
    %c1_26 = arith.constant 1 : index
    %c0_27 = arith.constant 0 : index
    %16 = vector.load %arg5[%c0_25, %c1_26, %c0_27] : memref<18x18x4xbf16, #tpu.memory_space<vmem>>, vector<16x16x4xbf16>
    %17 = vector.shape_cast %16 : vector<16x16x4xbf16> to vector<256x4xbf16>
    %c1_28 = arith.constant 1 : index
    %c0_29 = arith.constant 0 : index
    %c0_30 = arith.constant 0 : index
    %18 = vector.load %arg2[%c1_28, %c0_29, %c0_30] : memref<9x4x8xbf16, #tpu.memory_space<vmem>>, vector<1x4x8xbf16>
    %19 = vector.shape_cast %18 : vector<1x4x8xbf16> to vector<4x8xbf16>
    %cst_31 = arith.constant dense<0.000000e+00> : vector<256x8xf32>
    %20 = tpu.matmul %17, %19, %cst_31 {dimension_numbers = #tpu.dot_dimension_numbers<[1], [0], [0], [1], [0, 0, 1, 1], [], []>} : vector<256x4xbf16>, vector<4x8xbf16>, vector<256x8xf32> -> vector<256x8xf32>
    %21 = arith.addf %15, %20 : vector<256x8xf32>
    %c0_32 = arith.constant 0 : index
    %c2 = arith.constant 2 : index
    %c0_33 = arith.constant 0 : index
    %22 = vector.load %arg5[%c0_32, %c2, %c0_33] : memref<18x18x4xbf16, #tpu.memory_space<vmem>>, vector<16x16x4xbf16>
    %23 = vector.shape_cast %22 : vector<16x16x4xbf16> to vector<256x4xbf16>
    %c2_34 = arith.constant 2 : index
    %c0_35 = arith.constant 0 : index
    %c0_36 = arith.constant 0 : index
    %24 = vector.load %arg2[%c2_34, %c0_35, %c0_36] : memref<9x4x8xbf16, #tpu.memory_space<vmem>>, vector<1x4x8xbf16>
    %25 = vector.shape_cast %24 : vector<1x4x8xbf16> to vector<4x8xbf16>
    %cst_37 = arith.constant dense<0.000000e+00> : vector<256x8xf32>
    %26 = tpu.matmul %23, %25, %cst_37 {dimension_numbers = #tpu.dot_dimension_numbers<[1], [0], [0], [1], [0, 0, 1, 1], [], []>} : vector<256x4xbf16>, vector<4x8xbf16>, vector<256x8xf32> -> vector<256x8xf32>
    %27 = arith.addf %21, %26 : vector<256x8xf32>
    %c1_38 = arith.constant 1 : index
    %c0_39 = arith.constant 0 : index
    %c0_40 = arith.constant 0 : index
    %28 = vector.load %arg5[%c1_38, %c0_39, %c0_40] : memref<18x18x4xbf16, #tpu.memory_space<vmem>>, vector<16x16x4xbf16>
    %29 = vector.shape_cast %28 : vector<16x16x4xbf16> to vector<256x4xbf16>
    %c3 = arith.constant 3 : index
    %c0_41 = arith.constant 0 : index
    %c0_42 = arith.constant 0 : index
    %30 = vector.load %arg2[%c3, %c0_41, %c0_42] : memref<9x4x8xbf16, #tpu.memory_space<vmem>>, vector<1x4x8xbf16>
    %31 = vector.shape_cast %30 : vector<1x4x8xbf16> to vector<4x8xbf16>
    %cst_43 = arith.constant dense<0.000000e+00> : vector<256x8xf32>
    %32 = tpu.matmul %29, %31, %cst_43 {dimension_numbers = #tpu.dot_dimension_numbers<[1], [0], [0], [1], [0, 0, 1, 1], [], []>} : vector<256x4xbf16>, vector<4x8xbf16>, vector<256x8xf32> -> vector<256x8xf32>
    %33 = arith.addf %27, %32 : vector<256x8xf32>
    %c1_44 = arith.constant 1 : index
    %c1_45 = arith.constant 1 : index
    %c0_46 = arith.constant 0 : index
    %34 = vector.load %arg5[%c1_44, %c1_45, %c0_46] : memref<18x18x4xbf16, #tpu.memory_space<vmem>>, vector<16x16x4xbf16>
    %35 = vector.shape_cast %34 : vector<16x16x4xbf16> to vector<256x4xbf16>
    %c4 = arith.constant 4 : index
    %c0_47 = arith.constant 0 : index
    %c0_48 = arith.constant 0 : index
    %36 = vector.load %arg2[%c4, %c0_47, %c0_48] : memref<9x4x8xbf16, #tpu.memory_space<vmem>>, vector<1x4x8xbf16>
    %37 = vector.shape_cast %36 : vector<1x4x8xbf16> to vector<4x8xbf16>
    %cst_49 = arith.constant dense<0.000000e+00> : vector<256x8xf32>
    %38 = tpu.matmul %35, %37, %cst_49 {dimension_numbers = #tpu.dot_dimension_numbers<[1], [0], [0], [1], [0, 0, 1, 1], [], []>} : vector<256x4xbf16>, vector<4x8xbf16>, vector<256x8xf32> -> vector<256x8xf32>
    %39 = arith.addf %33, %38 : vector<256x8xf32>
    %c1_50 = arith.constant 1 : index
    %c2_51 = arith.constant 2 : index
    %c0_52 = arith.constant 0 : index
    %40 = vector.load %arg5[%c1_50, %c2_51, %c0_52] : memref<18x18x4xbf16, #tpu.memory_space<vmem>>, vector<16x16x4xbf16>
    %41 = vector.shape_cast %40 : vector<16x16x4xbf16> to vector<256x4xbf16>
    %c5 = arith.constant 5 : index
    %c0_53 = arith.constant 0 : index
    %c0_54 = arith.constant 0 : index
    %42 = vector.load %arg2[%c5, %c0_53, %c0_54] : memref<9x4x8xbf16, #tpu.memory_space<vmem>>, vector<1x4x8xbf16>
    %43 = vector.shape_cast %42 : vector<1x4x8xbf16> to vector<4x8xbf16>
    %cst_55 = arith.constant dense<0.000000e+00> : vector<256x8xf32>
    %44 = tpu.matmul %41, %43, %cst_55 {dimension_numbers = #tpu.dot_dimension_numbers<[1], [0], [0], [1], [0, 0, 1, 1], [], []>} : vector<256x4xbf16>, vector<4x8xbf16>, vector<256x8xf32> -> vector<256x8xf32>
    %45 = arith.addf %39, %44 : vector<256x8xf32>
    %c2_56 = arith.constant 2 : index
    %c0_57 = arith.constant 0 : index
    %c0_58 = arith.constant 0 : index
    %46 = vector.load %arg5[%c2_56, %c0_57, %c0_58] : memref<18x18x4xbf16, #tpu.memory_space<vmem>>, vector<16x16x4xbf16>
    %47 = vector.shape_cast %46 : vector<16x16x4xbf16> to vector<256x4xbf16>
    %c6 = arith.constant 6 : index
    %c0_59 = arith.constant 0 : index
    %c0_60 = arith.constant 0 : index
    %48 = vector.load %arg2[%c6, %c0_59, %c0_60] : memref<9x4x8xbf16, #tpu.memory_space<vmem>>, vector<1x4x8xbf16>
    %49 = vector.shape_cast %48 : vector<1x4x8xbf16> to vector<4x8xbf16>
    %cst_61 = arith.constant dense<0.000000e+00> : vector<256x8xf32>
    %50 = tpu.matmul %47, %49, %cst_61 {dimension_numbers = #tpu.dot_dimension_numbers<[1], [0], [0], [1], [0, 0, 1, 1], [], []>} : vector<256x4xbf16>, vector<4x8xbf16>, vector<256x8xf32> -> vector<256x8xf32>
    %51 = arith.addf %45, %50 : vector<256x8xf32>
    %c2_62 = arith.constant 2 : index
    %c1_63 = arith.constant 1 : index
    %c0_64 = arith.constant 0 : index
    %52 = vector.load %arg5[%c2_62, %c1_63, %c0_64] : memref<18x18x4xbf16, #tpu.memory_space<vmem>>, vector<16x16x4xbf16>
    %53 = vector.shape_cast %52 : vector<16x16x4xbf16> to vector<256x4xbf16>
    %c7 = arith.constant 7 : index
    %c0_65 = arith.constant 0 : index
    %c0_66 = arith.constant 0 : index
    %54 = vector.load %arg2[%c7, %c0_65, %c0_66] : memref<9x4x8xbf16, #tpu.memory_space<vmem>>, vector<1x4x8xbf16>
    %55 = vector.shape_cast %54 : vector<1x4x8xbf16> to vector<4x8xbf16>
    %cst_67 = arith.constant dense<0.000000e+00> : vector<256x8xf32>
    %56 = tpu.matmul %53, %55, %cst_67 {dimension_numbers = #tpu.dot_dimension_numbers<[1], [0], [0], [1], [0, 0, 1, 1], [], []>} : vector<256x4xbf16>, vector<4x8xbf16>, vector<256x8xf32> -> vector<256x8xf32>
    %57 = arith.addf %51, %56 : vector<256x8xf32>
    %c2_68 = arith.constant 2 : index
    %c2_69 = arith.constant 2 : index
    %c0_70 = arith.constant 0 : index
    %58 = vector.load %arg5[%c2_68, %c2_69, %c0_70] : memref<18x18x4xbf16, #tpu.memory_space<vmem>>, vector<16x16x4xbf16>
    %59 = vector.shape_cast %58 : vector<16x16x4xbf16> to vector<256x4xbf16>
    %c8 = arith.constant 8 : index
    %c0_71 = arith.constant 0 : index
    %c0_72 = arith.constant 0 : index
    %60 = vector.load %arg2[%c8, %c0_71, %c0_72] : memref<9x4x8xbf16, #tpu.memory_space<vmem>>, vector<1x4x8xbf16>
    %61 = vector.shape_cast %60 : vector<1x4x8xbf16> to vector<4x8xbf16>
    %cst_73 = arith.constant dense<0.000000e+00> : vector<256x8xf32>
    %62 = tpu.matmul %59, %61, %cst_73 {dimension_numbers = #tpu.dot_dimension_numbers<[1], [0], [0], [1], [0, 0, 1, 1], [], []>} : vector<256x4xbf16>, vector<4x8xbf16>, vector<256x8xf32> -> vector<256x8xf32>
    %63 = arith.addf %57, %62 : vector<256x8xf32>
    %64 = vector.shape_cast %63 : vector<256x8xf32> to vector<16x16x8xf32>
    %65 = arith.truncf %64 : vector<16x16x8xf32> to vector<16x16x8xbf16>
    %c0_74 = arith.constant 0 : index
    %c0_75 = arith.constant 0 : index
    %c0_76 = arith.constant 0 : index
    %c0_77 = arith.constant 0 : index
    %66 = vector.load %arg3[%c0_74, %c0_75, %c0_76, %c0_77] : memref<1x16x16x8xbf16, #tpu.memory_space<vmem>>, vector<1x16x16x8xbf16>
    %67 = vector.shape_cast %66 : vector<1x16x16x8xbf16> to vector<16x16x8xbf16>
    %68 = vector.shape_cast %65 : vector<16x16x8xbf16> to vector<1x16x16x8xbf16>
    tpu.vector_store %arg3[%c0_74, %c0_75, %c0_76, %c0_77], %68 {strides = array<i32>} : memref<1x16x16x8xbf16, #tpu.memory_space<vmem>>, vector<1x16x16x8xbf16>,
    %cst_78 = arith.constant dense<0.000000e+00> : vector<8xf32>
    %69 = vector.multi_reduction <add>, %63, %cst_78 [0] : vector<256x8xf32> to vector<8xf32>
    %70 = vector.shape_cast %69 : vector<8xf32> to vector<1x8xf32>
    %cst_79 = arith.constant 3.906250e-03 : f32
    %71 = vector.broadcast %cst_79 : f32 to vector<1x8xf32>
    %72 = arith.mulf %70, %71 : vector<1x8xf32>
    %73 = vector.broadcast %72 : vector<1x8xf32> to vector<256x8xf32>
    %74 = arith.subf %63, %73 : vector<256x8xf32>
    %75 = arith.mulf %74, %74 : vector<256x8xf32>
    %cst_80 = arith.constant dense<0.000000e+00> : vector<8xf32>
    %76 = vector.multi_reduction <add>, %75, %cst_80 [0] : vector<256x8xf32> to vector<8xf32>
    %77 = vector.shape_cast %76 : vector<8xf32> to vector<1x8xf32>
    %78 = tpu.concatenate %70, %77 in 0 : vector<1x8xf32>, vector<1x8xf32> -> vector<2x8xf32>
    %c0_81 = arith.constant 0 : index
    %c0_82 = arith.constant 0 : index
    %c0_83 = arith.constant 0 : index
    %79 = vector.load %arg4[%c0_81, %c0_82, %c0_83] : memref<1x2x8xf32, #tpu.memory_space<vmem>>, vector<1x2x8xf32>
    %80 = vector.shape_cast %79 : vector<1x2x8xf32> to vector<2x8xf32>
    %81 = vector.shape_cast %78 : vector<2x8xf32> to vector<1x2x8xf32>
    tpu.vector_store %arg4[%c0_81, %c0_82, %c0_83], %81 {strides = array<i32>} : memref<1x2x8xf32, #tpu.memory_space<vmem>>, vector<1x2x8xf32>,
    return
  }
  func.func @transform_0(%arg0: i32) -> (i32, i32, i32, i32) {
    %c0_i32 = arith.constant 0 : i32
    %c0_i32_0 = arith.constant 0 : i32
    %c0_i32_1 = arith.constant 0 : i32
    %c0_i32_2 = arith.constant 0 : i32
    return %arg0, %c0_i32, %c0_i32_0, %c0_i32_1 : i32, i32, i32, i32
  }
  func.func @transform_1(%arg0: i32) -> (i32, i32, i32) {
    %c0_i32 = arith.constant 0 : i32
    %c0_i32_0 = arith.constant 0 : i32
    %c0_i32_1 = arith.constant 0 : i32
    %c0_i32_2 = arith.constant 0 : i32
    return %c0_i32, %c0_i32_0, %c0_i32_1 : i32, i32, i32
  }
  func.func @transform_2(%arg0: i32) -> (i32, i32, i32, i32) {
    %c0_i32 = arith.constant 0 : i32
    %c0_i32_0 = arith.constant 0 : i32
    %c0_i32_1 = arith.constant 0 : i32
    %c0_i32_2 = arith.constant 0 : i32
    return %arg0, %c0_i32, %c0_i32_0, %c0_i32_1 : i32, i32, i32, i32
  }
  func.func @transform_3(%arg0: i32) -> (i32, i32, i32) {
    %c0_i32 = arith.constant 0 : i32
    %c0_i32_0 = arith.constant 0 : i32
    %c0_i32_1 = arith.constant 0 : i32
    return %arg0, %c0_i32, %c0_i32_0 : i32, i32, i32
  }
}

module attributes {stable_mosaic.version = 11 : i64} {
  func.func @_bn_relu_pool_kernel(%arg0: i32, %arg1: memref<1x16x16x8xbf16, #tpu.memory_space<vmem>>, %arg2: memref<1x8xf32, #tpu.memory_space<vmem>>, %arg3: memref<1x8xf32, #tpu.memory_space<vmem>>, %arg4: memref<1x16x16x8xf32, #tpu.memory_space<vmem>>, %arg5: memref<1x8x8x8xf32, #tpu.memory_space<vmem>>) attributes {dimension_semantics = [#tpu.dimension_semantics<parallel>], iteration_bounds = array<i64: 2>, scalar_prefetch = 0 : i64, scratch_operands = 0 : i64, tpu.core_type = #tpu.core_type<tc>, window_params = [{transform_indices = @transform_0, window_bounds = array<i64: 1, 16, 16, 8>}, {pipeline_mode = #tpu.pipeline_mode<synchronous>, transform_indices = @transform_1, window_bounds = array<i64: 1, 8>}, {pipeline_mode = #tpu.pipeline_mode<synchronous>, transform_indices = @transform_2, window_bounds = array<i64: 1, 8>}, {transform_indices = @transform_3, window_bounds = array<i64: 1, 16, 16, 8>}, {transform_indices = @transform_4, window_bounds = array<i64: 1, 8, 8, 8>}]} {
    %c0 = arith.constant 0 : index
    %c0_0 = arith.constant 0 : index
    %c0_1 = arith.constant 0 : index
    %c0_2 = arith.constant 0 : index
    %0 = vector.load %arg1[%c0, %c0_0, %c0_1, %c0_2] : memref<1x16x16x8xbf16, #tpu.memory_space<vmem>>, vector<1x16x16x8xbf16>
    %1 = vector.shape_cast %0 : vector<1x16x16x8xbf16> to vector<16x16x8xbf16>
    %2 = arith.extf %1 : vector<16x16x8xbf16> to vector<16x16x8xf32>
    %c0_3 = arith.constant 0 : index
    %c0_4 = arith.constant 0 : index
    %3 = vector.load %arg2[%c0_3, %c0_4] : memref<1x8xf32, #tpu.memory_space<vmem>>, vector<1x8xf32>
    %4 = vector.shape_cast %3 : vector<1x8xf32> to vector<1x1x8xf32>
    %5 = vector.broadcast %4 : vector<1x1x8xf32> to vector<16x16x8xf32>
    %6 = arith.mulf %2, %5 : vector<16x16x8xf32>
    %c0_5 = arith.constant 0 : index
    %c0_6 = arith.constant 0 : index
    %7 = vector.load %arg3[%c0_5, %c0_6] : memref<1x8xf32, #tpu.memory_space<vmem>>, vector<1x8xf32>
    %8 = vector.shape_cast %7 : vector<1x8xf32> to vector<1x1x8xf32>
    %9 = vector.broadcast %8 : vector<1x1x8xf32> to vector<16x16x8xf32>
    %10 = arith.addf %6, %9 : vector<16x16x8xf32>
    %cst = arith.constant 0.000000e+00 : f32
    %11 = vector.broadcast %cst : f32 to vector<16x16x8xf32>
    %12 = arith.maximumf %10, %11 : vector<16x16x8xf32>
    %c0_7 = arith.constant 0 : index
    %c0_8 = arith.constant 0 : index
    %c0_9 = arith.constant 0 : index
    %c0_10 = arith.constant 0 : index
    %13 = vector.load %arg4[%c0_7, %c0_8, %c0_9, %c0_10] : memref<1x16x16x8xf32, #tpu.memory_space<vmem>>, vector<1x16x16x8xf32>
    %14 = vector.shape_cast %13 : vector<1x16x16x8xf32> to vector<16x16x8xf32>
    %15 = vector.shape_cast %12 : vector<16x16x8xf32> to vector<1x16x16x8xf32>
    tpu.vector_store %arg4[%c0_7, %c0_8, %c0_9, %c0_10], %15 {strides = array<i32>} : memref<1x16x16x8xf32, #tpu.memory_space<vmem>>, vector<1x16x16x8xf32>,
    %16 = vector.shape_cast %12 : vector<16x16x8xf32> to vector<8x2x16x8xf32>
    %17 = vector.extract_strided_slice %16 {offsets = [0, 0, 0, 0], sizes = [8, 1, 16, 8], strides = [1, 1, 1, 1]} : vector<8x2x16x8xf32> to vector<8x1x16x8xf32>
    %18 = vector.shape_cast %17 : vector<8x1x16x8xf32> to vector<8x16x8xf32>
    %19 = vector.extract_strided_slice %16 {offsets = [0, 1, 0, 0], sizes = [8, 1, 16, 8], strides = [1, 1, 1, 1]} : vector<8x2x16x8xf32> to vector<8x1x16x8xf32>
    %20 = vector.shape_cast %19 : vector<8x1x16x8xf32> to vector<8x16x8xf32>
    %21 = arith.maximumf %18, %20 : vector<8x16x8xf32>
    %22 = vector.shape_cast %21 : vector<8x16x8xf32> to vector<8x8x2x8xf32>
    %23 = vector.extract_strided_slice %22 {offsets = [0, 0, 0, 0], sizes = [8, 8, 1, 8], strides = [1, 1, 1, 1]} : vector<8x8x2x8xf32> to vector<8x8x1x8xf32>
    %24 = vector.shape_cast %23 : vector<8x8x1x8xf32> to vector<8x8x8xf32>
    %25 = vector.extract_strided_slice %22 {offsets = [0, 0, 1, 0], sizes = [8, 8, 1, 8], strides = [1, 1, 1, 1]} : vector<8x8x2x8xf32> to vector<8x8x1x8xf32>
    %26 = vector.shape_cast %25 : vector<8x8x1x8xf32> to vector<8x8x8xf32>
    %27 = arith.maximumf %24, %26 : vector<8x8x8xf32>
    %c0_11 = arith.constant 0 : index
    %c0_12 = arith.constant 0 : index
    %c0_13 = arith.constant 0 : index
    %c0_14 = arith.constant 0 : index
    %28 = vector.load %arg5[%c0_11, %c0_12, %c0_13, %c0_14] : memref<1x8x8x8xf32, #tpu.memory_space<vmem>>, vector<1x8x8x8xf32>
    %29 = vector.shape_cast %28 : vector<1x8x8x8xf32> to vector<8x8x8xf32>
    %30 = vector.shape_cast %27 : vector<8x8x8xf32> to vector<1x8x8x8xf32>
    tpu.vector_store %arg5[%c0_11, %c0_12, %c0_13, %c0_14], %30 {strides = array<i32>} : memref<1x8x8x8xf32, #tpu.memory_space<vmem>>, vector<1x8x8x8xf32>,
    return
  }
  func.func @transform_0(%arg0: i32) -> (i32, i32, i32, i32) {
    %c0_i32 = arith.constant 0 : i32
    %c0_i32_0 = arith.constant 0 : i32
    %c0_i32_1 = arith.constant 0 : i32
    %c0_i32_2 = arith.constant 0 : i32
    return %arg0, %c0_i32, %c0_i32_0, %c0_i32_1 : i32, i32, i32, i32
  }
  func.func @transform_1(%arg0: i32) -> (i32, i32) {
    %c0_i32 = arith.constant 0 : i32
    %c0_i32_0 = arith.constant 0 : i32
    %c0_i32_1 = arith.constant 0 : i32
    return %c0_i32, %c0_i32_0 : i32, i32
  }
  func.func @transform_2(%arg0: i32) -> (i32, i32) {
    %c0_i32 = arith.constant 0 : i32
    %c0_i32_0 = arith.constant 0 : i32
    %c0_i32_1 = arith.constant 0 : i32
    return %c0_i32, %c0_i32_0 : i32, i32
  }
  func.func @transform_3(%arg0: i32) -> (i32, i32, i32, i32) {
    %c0_i32 = arith.constant 0 : i32
    %c0_i32_0 = arith.constant 0 : i32
    %c0_i32_1 = arith.constant 0 : i32
    %c0_i32_2 = arith.constant 0 : i32
    return %arg0, %c0_i32, %c0_i32_0, %c0_i32_1 : i32, i32, i32, i32
  }
  func.func @transform_4(%arg0: i32) -> (i32, i32, i32, i32) {
    %c0_i32 = arith.constant 0 : i32
    %c0_i32_0 = arith.constant 0 : i32
    %c0_i32_1 = arith.constant 0 : i32
    %c0_i32_2 = arith.constant 0 : i32
    return %arg0, %c0_i32, %c0_i32_0, %c0_i32_1 : i32, i32, i32, i32
  }
}

module attributes {stable_mosaic.version = 11 : i64} {
  func.func @_conv_stage_kernel(%arg0: i32, %arg1: memref<1x16x16x8xbf16, #tpu.memory_space<vmem>>, %arg2: memref<1x8xf32, #tpu.memory_space<vmem>>, %arg3: memref<1x8xf32, #tpu.memory_space<vmem>>, %arg4: memref<9x8x8xbf16, #tpu.memory_space<vmem>>, %arg5: memref<1x16x16x8xbf16, #tpu.memory_space<vmem>>, %arg6: memref<1x2x8xf32, #tpu.memory_space<vmem>>, %arg7: memref<18x18x8xbf16, #tpu.memory_space<vmem>>) attributes {dimension_semantics = [#tpu.dimension_semantics<parallel>], iteration_bounds = array<i64: 2>, scalar_prefetch = 0 : i64, scratch_operands = 1 : i64, tpu.core_type = #tpu.core_type<tc>, window_params = [{transform_indices = @transform_0, window_bounds = array<i64: 1, 16, 16, 8>}, {pipeline_mode = #tpu.pipeline_mode<synchronous>, transform_indices = @transform_1, window_bounds = array<i64: 1, 8>}, {pipeline_mode = #tpu.pipeline_mode<synchronous>, transform_indices = @transform_2, window_bounds = array<i64: 1, 8>}, {pipeline_mode = #tpu.pipeline_mode<synchronous>, transform_indices = @transform_3, window_bounds = array<i64: 9, 8, 8>}, {transform_indices = @transform_4, window_bounds = array<i64: 1, 16, 16, 8>}, {transform_indices = @transform_5, window_bounds = array<i64: 1, 2, 8>}]} {
    %c0 = arith.constant 0 : index
    %c0_0 = arith.constant 0 : index
    %c0_1 = arith.constant 0 : index
    %c0_2 = arith.constant 0 : index
    %0 = vector.load %arg1[%c0, %c0_0, %c0_1, %c0_2] : memref<1x16x16x8xbf16, #tpu.memory_space<vmem>>, vector<1x16x16x8xbf16>
    %1 = vector.shape_cast %0 : vector<1x16x16x8xbf16> to vector<16x16x8xbf16>
    %2 = arith.extf %1 : vector<16x16x8xbf16> to vector<16x16x8xf32>
    %c0_3 = arith.constant 0 : index
    %c0_4 = arith.constant 0 : index
    %3 = vector.load %arg2[%c0_3, %c0_4] : memref<1x8xf32, #tpu.memory_space<vmem>>, vector<1x8xf32>
    %4 = vector.shape_cast %3 : vector<1x8xf32> to vector<1x1x8xf32>
    %5 = vector.broadcast %4 : vector<1x1x8xf32> to vector<16x16x8xf32>
    %6 = arith.mulf %2, %5 : vector<16x16x8xf32>
    %c0_5 = arith.constant 0 : index
    %c0_6 = arith.constant 0 : index
    %7 = vector.load %arg3[%c0_5, %c0_6] : memref<1x8xf32, #tpu.memory_space<vmem>>, vector<1x8xf32>
    %8 = vector.shape_cast %7 : vector<1x8xf32> to vector<1x1x8xf32>
    %9 = vector.broadcast %8 : vector<1x1x8xf32> to vector<16x16x8xf32>
    %10 = arith.addf %6, %9 : vector<16x16x8xf32>
    %cst = arith.constant 0.000000e+00 : f32
    %11 = vector.broadcast %cst : f32 to vector<16x16x8xf32>
    %12 = arith.maximumf %10, %11 : vector<16x16x8xf32>
    %13 = arith.truncf %12 : vector<16x16x8xf32> to vector<16x16x8xbf16>
    %cst_7 = arith.constant 0.000000e+00 : bf16
    %14 = vector.broadcast %cst_7 : bf16 to vector<1x18x8xbf16>
    %cst_8 = arith.constant 0.000000e+00 : bf16
    %15 = vector.broadcast %cst_8 : bf16 to vector<16x1x8xbf16>
    %c0_9 = arith.constant 0 : index
    %c0_10 = arith.constant 0 : index
    %c0_11 = arith.constant 0 : index
    %16 = vector.load %arg7[%c0_9, %c0_10, %c0_11] : memref<18x18x8xbf16, #tpu.memory_space<vmem>>, vector<1x18x8xbf16>
    tpu.vector_store %arg7[%c0_9, %c0_10, %c0_11], %14 {strides = array<i32>} : memref<18x18x8xbf16, #tpu.memory_space<vmem>>, vector<1x18x8xbf16>,
    %c17 = arith.constant 17 : index
    %c0_12 = arith.constant 0 : index
    %c0_13 = arith.constant 0 : index
    %17 = vector.load %arg7[%c17, %c0_12, %c0_13] : memref<18x18x8xbf16, #tpu.memory_space<vmem>>, vector<1x18x8xbf16>
    tpu.vector_store %arg7[%c17, %c0_12, %c0_13], %14 {strides = array<i32>} : memref<18x18x8xbf16, #tpu.memory_space<vmem>>, vector<1x18x8xbf16>,
    %c1 = arith.constant 1 : index
    %c0_14 = arith.constant 0 : index
    %c0_15 = arith.constant 0 : index
    %18 = vector.load %arg7[%c1, %c0_14, %c0_15] : memref<18x18x8xbf16, #tpu.memory_space<vmem>>, vector<16x1x8xbf16>
    tpu.vector_store %arg7[%c1, %c0_14, %c0_15], %15 {strides = array<i32>} : memref<18x18x8xbf16, #tpu.memory_space<vmem>>, vector<16x1x8xbf16>,
    %c1_16 = arith.constant 1 : index
    %c17_17 = arith.constant 17 : index
    %c0_18 = arith.constant 0 : index
    %19 = vector.load %arg7[%c1_16, %c17_17, %c0_18] : memref<18x18x8xbf16, #tpu.memory_space<vmem>>, vector<16x1x8xbf16>
    tpu.vector_store %arg7[%c1_16, %c17_17, %c0_18], %15 {strides = array<i32>} : memref<18x18x8xbf16, #tpu.memory_space<vmem>>, vector<16x1x8xbf16>,
    %c1_19 = arith.constant 1 : index
    %c1_20 = arith.constant 1 : index
    %c0_21 = arith.constant 0 : index
    %20 = vector.load %arg7[%c1_19, %c1_20, %c0_21] : memref<18x18x8xbf16, #tpu.memory_space<vmem>>, vector<16x16x8xbf16>
    tpu.vector_store %arg7[%c1_19, %c1_20, %c0_21], %13 {strides = array<i32>} : memref<18x18x8xbf16, #tpu.memory_space<vmem>>, vector<16x16x8xbf16>,
    %cst_22 = arith.constant 0.000000e+00 : f32
    %21 = vector.broadcast %cst_22 : f32 to vector<256x8xf32>
    %c0_23 = arith.constant 0 : index
    %c0_24 = arith.constant 0 : index
    %c0_25 = arith.constant 0 : index
    %22 = vector.load %arg7[%c0_23, %c0_24, %c0_25] : memref<18x18x8xbf16, #tpu.memory_space<vmem>>, vector<16x16x8xbf16>
    %23 = vector.shape_cast %22 : vector<16x16x8xbf16> to vector<256x8xbf16>
    %c0_26 = arith.constant 0 : index
    %c0_27 = arith.constant 0 : index
    %c0_28 = arith.constant 0 : index
    %24 = vector.load %arg4[%c0_26, %c0_27, %c0_28] : memref<9x8x8xbf16, #tpu.memory_space<vmem>>, vector<1x8x8xbf16>
    %25 = vector.shape_cast %24 : vector<1x8x8xbf16> to vector<8x8xbf16>
    %cst_29 = arith.constant dense<0.000000e+00> : vector<256x8xf32>
    %26 = tpu.matmul %23, %25, %cst_29 {dimension_numbers = #tpu.dot_dimension_numbers<[1], [0], [0], [1], [0, 0, 1, 1], [], []>} : vector<256x8xbf16>, vector<8x8xbf16>, vector<256x8xf32> -> vector<256x8xf32>
    %27 = arith.addf %21, %26 : vector<256x8xf32>
    %c0_30 = arith.constant 0 : index
    %c1_31 = arith.constant 1 : index
    %c0_32 = arith.constant 0 : index
    %28 = vector.load %arg7[%c0_30, %c1_31, %c0_32] : memref<18x18x8xbf16, #tpu.memory_space<vmem>>, vector<16x16x8xbf16>
    %29 = vector.shape_cast %28 : vector<16x16x8xbf16> to vector<256x8xbf16>
    %c1_33 = arith.constant 1 : index
    %c0_34 = arith.constant 0 : index
    %c0_35 = arith.constant 0 : index
    %30 = vector.load %arg4[%c1_33, %c0_34, %c0_35] : memref<9x8x8xbf16, #tpu.memory_space<vmem>>, vector<1x8x8xbf16>
    %31 = vector.shape_cast %30 : vector<1x8x8xbf16> to vector<8x8xbf16>
    %cst_36 = arith.constant dense<0.000000e+00> : vector<256x8xf32>
    %32 = tpu.matmul %29, %31, %cst_36 {dimension_numbers = #tpu.dot_dimension_numbers<[1], [0], [0], [1], [0, 0, 1, 1], [], []>} : vector<256x8xbf16>, vector<8x8xbf16>, vector<256x8xf32> -> vector<256x8xf32>
    %33 = arith.addf %27, %32 : vector<256x8xf32>
    %c0_37 = arith.constant 0 : index
    %c2 = arith.constant 2 : index
    %c0_38 = arith.constant 0 : index
    %34 = vector.load %arg7[%c0_37, %c2, %c0_38] : memref<18x18x8xbf16, #tpu.memory_space<vmem>>, vector<16x16x8xbf16>
    %35 = vector.shape_cast %34 : vector<16x16x8xbf16> to vector<256x8xbf16>
    %c2_39 = arith.constant 2 : index
    %c0_40 = arith.constant 0 : index
    %c0_41 = arith.constant 0 : index
    %36 = vector.load %arg4[%c2_39, %c0_40, %c0_41] : memref<9x8x8xbf16, #tpu.memory_space<vmem>>, vector<1x8x8xbf16>
    %37 = vector.shape_cast %36 : vector<1x8x8xbf16> to vector<8x8xbf16>
    %cst_42 = arith.constant dense<0.000000e+00> : vector<256x8xf32>
    %38 = tpu.matmul %35, %37, %cst_42 {dimension_numbers = #tpu.dot_dimension_numbers<[1], [0], [0], [1], [0, 0, 1, 1], [], []>} : vector<256x8xbf16>, vector<8x8xbf16>, vector<256x8xf32> -> vector<256x8xf32>
    %39 = arith.addf %33, %38 : vector<256x8xf32>
    %c1_43 = arith.constant 1 : index
    %c0_44 = arith.constant 0 : index
    %c0_45 = arith.constant 0 : index
    %40 = vector.load %arg7[%c1_43, %c0_44, %c0_45] : memref<18x18x8xbf16, #tpu.memory_space<vmem>>, vector<16x16x8xbf16>
    %41 = vector.shape_cast %40 : vector<16x16x8xbf16> to vector<256x8xbf16>
    %c3 = arith.constant 3 : index
    %c0_46 = arith.constant 0 : index
    %c0_47 = arith.constant 0 : index
    %42 = vector.load %arg4[%c3, %c0_46, %c0_47] : memref<9x8x8xbf16, #tpu.memory_space<vmem>>, vector<1x8x8xbf16>
    %43 = vector.shape_cast %42 : vector<1x8x8xbf16> to vector<8x8xbf16>
    %cst_48 = arith.constant dense<0.000000e+00> : vector<256x8xf32>
    %44 = tpu.matmul %41, %43, %cst_48 {dimension_numbers = #tpu.dot_dimension_numbers<[1], [0], [0], [1], [0, 0, 1, 1], [], []>} : vector<256x8xbf16>, vector<8x8xbf16>, vector<256x8xf32> -> vector<256x8xf32>
    %45 = arith.addf %39, %44 : vector<256x8xf32>
    %c1_49 = arith.constant 1 : index
    %c1_50 = arith.constant 1 : index
    %c0_51 = arith.constant 0 : index
    %46 = vector.load %arg7[%c1_49, %c1_50, %c0_51] : memref<18x18x8xbf16, #tpu.memory_space<vmem>>, vector<16x16x8xbf16>
    %47 = vector.shape_cast %46 : vector<16x16x8xbf16> to vector<256x8xbf16>
    %c4 = arith.constant 4 : index
    %c0_52 = arith.constant 0 : index
    %c0_53 = arith.constant 0 : index
    %48 = vector.load %arg4[%c4, %c0_52, %c0_53] : memref<9x8x8xbf16, #tpu.memory_space<vmem>>, vector<1x8x8xbf16>
    %49 = vector.shape_cast %48 : vector<1x8x8xbf16> to vector<8x8xbf16>
    %cst_54 = arith.constant dense<0.000000e+00> : vector<256x8xf32>
    %50 = tpu.matmul %47, %49, %cst_54 {dimension_numbers = #tpu.dot_dimension_numbers<[1], [0], [0], [1], [0, 0, 1, 1], [], []>} : vector<256x8xbf16>, vector<8x8xbf16>, vector<256x8xf32> -> vector<256x8xf32>
    %51 = arith.addf %45, %50 : vector<256x8xf32>
    %c1_55 = arith.constant 1 : index
    %c2_56 = arith.constant 2 : index
    %c0_57 = arith.constant 0 : index
    %52 = vector.load %arg7[%c1_55, %c2_56, %c0_57] : memref<18x18x8xbf16, #tpu.memory_space<vmem>>, vector<16x16x8xbf16>
    %53 = vector.shape_cast %52 : vector<16x16x8xbf16> to vector<256x8xbf16>
    %c5 = arith.constant 5 : index
    %c0_58 = arith.constant 0 : index
    %c0_59 = arith.constant 0 : index
    %54 = vector.load %arg4[%c5, %c0_58, %c0_59] : memref<9x8x8xbf16, #tpu.memory_space<vmem>>, vector<1x8x8xbf16>
    %55 = vector.shape_cast %54 : vector<1x8x8xbf16> to vector<8x8xbf16>
    %cst_60 = arith.constant dense<0.000000e+00> : vector<256x8xf32>
    %56 = tpu.matmul %53, %55, %cst_60 {dimension_numbers = #tpu.dot_dimension_numbers<[1], [0], [0], [1], [0, 0, 1, 1], [], []>} : vector<256x8xbf16>, vector<8x8xbf16>, vector<256x8xf32> -> vector<256x8xf32>
    %57 = arith.addf %51, %56 : vector<256x8xf32>
    %c2_61 = arith.constant 2 : index
    %c0_62 = arith.constant 0 : index
    %c0_63 = arith.constant 0 : index
    %58 = vector.load %arg7[%c2_61, %c0_62, %c0_63] : memref<18x18x8xbf16, #tpu.memory_space<vmem>>, vector<16x16x8xbf16>
    %59 = vector.shape_cast %58 : vector<16x16x8xbf16> to vector<256x8xbf16>
    %c6 = arith.constant 6 : index
    %c0_64 = arith.constant 0 : index
    %c0_65 = arith.constant 0 : index
    %60 = vector.load %arg4[%c6, %c0_64, %c0_65] : memref<9x8x8xbf16, #tpu.memory_space<vmem>>, vector<1x8x8xbf16>
    %61 = vector.shape_cast %60 : vector<1x8x8xbf16> to vector<8x8xbf16>
    %cst_66 = arith.constant dense<0.000000e+00> : vector<256x8xf32>
    %62 = tpu.matmul %59, %61, %cst_66 {dimension_numbers = #tpu.dot_dimension_numbers<[1], [0], [0], [1], [0, 0, 1, 1], [], []>} : vector<256x8xbf16>, vector<8x8xbf16>, vector<256x8xf32> -> vector<256x8xf32>
    %63 = arith.addf %57, %62 : vector<256x8xf32>
    %c2_67 = arith.constant 2 : index
    %c1_68 = arith.constant 1 : index
    %c0_69 = arith.constant 0 : index
    %64 = vector.load %arg7[%c2_67, %c1_68, %c0_69] : memref<18x18x8xbf16, #tpu.memory_space<vmem>>, vector<16x16x8xbf16>
    %65 = vector.shape_cast %64 : vector<16x16x8xbf16> to vector<256x8xbf16>
    %c7 = arith.constant 7 : index
    %c0_70 = arith.constant 0 : index
    %c0_71 = arith.constant 0 : index
    %66 = vector.load %arg4[%c7, %c0_70, %c0_71] : memref<9x8x8xbf16, #tpu.memory_space<vmem>>, vector<1x8x8xbf16>
    %67 = vector.shape_cast %66 : vector<1x8x8xbf16> to vector<8x8xbf16>
    %cst_72 = arith.constant dense<0.000000e+00> : vector<256x8xf32>
    %68 = tpu.matmul %65, %67, %cst_72 {dimension_numbers = #tpu.dot_dimension_numbers<[1], [0], [0], [1], [0, 0, 1, 1], [], []>} : vector<256x8xbf16>, vector<8x8xbf16>, vector<256x8xf32> -> vector<256x8xf32>
    %69 = arith.addf %63, %68 : vector<256x8xf32>
    %c2_73 = arith.constant 2 : index
    %c2_74 = arith.constant 2 : index
    %c0_75 = arith.constant 0 : index
    %70 = vector.load %arg7[%c2_73, %c2_74, %c0_75] : memref<18x18x8xbf16, #tpu.memory_space<vmem>>, vector<16x16x8xbf16>
    %71 = vector.shape_cast %70 : vector<16x16x8xbf16> to vector<256x8xbf16>
    %c8 = arith.constant 8 : index
    %c0_76 = arith.constant 0 : index
    %c0_77 = arith.constant 0 : index
    %72 = vector.load %arg4[%c8, %c0_76, %c0_77] : memref<9x8x8xbf16, #tpu.memory_space<vmem>>, vector<1x8x8xbf16>
    %73 = vector.shape_cast %72 : vector<1x8x8xbf16> to vector<8x8xbf16>
    %cst_78 = arith.constant dense<0.000000e+00> : vector<256x8xf32>
    %74 = tpu.matmul %71, %73, %cst_78 {dimension_numbers = #tpu.dot_dimension_numbers<[1], [0], [0], [1], [0, 0, 1, 1], [], []>} : vector<256x8xbf16>, vector<8x8xbf16>, vector<256x8xf32> -> vector<256x8xf32>
    %75 = arith.addf %69, %74 : vector<256x8xf32>
    %76 = vector.shape_cast %75 : vector<256x8xf32> to vector<16x16x8xf32>
    %77 = arith.truncf %76 : vector<16x16x8xf32> to vector<16x16x8xbf16>
    %c0_79 = arith.constant 0 : index
    %c0_80 = arith.constant 0 : index
    %c0_81 = arith.constant 0 : index
    %c0_82 = arith.constant 0 : index
    %78 = vector.load %arg5[%c0_79, %c0_80, %c0_81, %c0_82] : memref<1x16x16x8xbf16, #tpu.memory_space<vmem>>, vector<1x16x16x8xbf16>
    %79 = vector.shape_cast %78 : vector<1x16x16x8xbf16> to vector<16x16x8xbf16>
    %80 = vector.shape_cast %77 : vector<16x16x8xbf16> to vector<1x16x16x8xbf16>
    tpu.vector_store %arg5[%c0_79, %c0_80, %c0_81, %c0_82], %80 {strides = array<i32>} : memref<1x16x16x8xbf16, #tpu.memory_space<vmem>>, vector<1x16x16x8xbf16>,
    %cst_83 = arith.constant dense<0.000000e+00> : vector<8xf32>
    %81 = vector.multi_reduction <add>, %75, %cst_83 [0] : vector<256x8xf32> to vector<8xf32>
    %82 = vector.shape_cast %81 : vector<8xf32> to vector<1x8xf32>
    %cst_84 = arith.constant 3.906250e-03 : f32
    %83 = vector.broadcast %cst_84 : f32 to vector<1x8xf32>
    %84 = arith.mulf %82, %83 : vector<1x8xf32>
    %85 = vector.broadcast %84 : vector<1x8xf32> to vector<256x8xf32>
    %86 = arith.subf %75, %85 : vector<256x8xf32>
    %87 = arith.mulf %86, %86 : vector<256x8xf32>
    %cst_85 = arith.constant dense<0.000000e+00> : vector<8xf32>
    %88 = vector.multi_reduction <add>, %87, %cst_85 [0] : vector<256x8xf32> to vector<8xf32>
    %89 = vector.shape_cast %88 : vector<8xf32> to vector<1x8xf32>
    %90 = tpu.concatenate %82, %89 in 0 : vector<1x8xf32>, vector<1x8xf32> -> vector<2x8xf32>
    %c0_86 = arith.constant 0 : index
    %c0_87 = arith.constant 0 : index
    %c0_88 = arith.constant 0 : index
    %91 = vector.load %arg6[%c0_86, %c0_87, %c0_88] : memref<1x2x8xf32, #tpu.memory_space<vmem>>, vector<1x2x8xf32>
    %92 = vector.shape_cast %91 : vector<1x2x8xf32> to vector<2x8xf32>
    %93 = vector.shape_cast %90 : vector<2x8xf32> to vector<1x2x8xf32>
    tpu.vector_store %arg6[%c0_86, %c0_87, %c0_88], %93 {strides = array<i32>} : memref<1x2x8xf32, #tpu.memory_space<vmem>>, vector<1x2x8xf32>,
    return
  }
  func.func @transform_0(%arg0: i32) -> (i32, i32, i32, i32) {
    %c0_i32 = arith.constant 0 : i32
    %c0_i32_0 = arith.constant 0 : i32
    %c0_i32_1 = arith.constant 0 : i32
    %c0_i32_2 = arith.constant 0 : i32
    return %arg0, %c0_i32, %c0_i32_0, %c0_i32_1 : i32, i32, i32, i32
  }
  func.func @transform_1(%arg0: i32) -> (i32, i32) {
    %c0_i32 = arith.constant 0 : i32
    %c0_i32_0 = arith.constant 0 : i32
    %c0_i32_1 = arith.constant 0 : i32
    return %c0_i32, %c0_i32_0 : i32, i32
  }
  func.func @transform_2(%arg0: i32) -> (i32, i32) {
    %c0_i32 = arith.constant 0 : i32
    %c0_i32_0 = arith.constant 0 : i32
    %c0_i32_1 = arith.constant 0 : i32
    return %c0_i32, %c0_i32_0 : i32, i32
  }
  func.func @transform_3(%arg0: i32) -> (i32, i32, i32) {
    %c0_i32 = arith.constant 0 : i32
    %c0_i32_0 = arith.constant 0 : i32
    %c0_i32_1 = arith.constant 0 : i32
    %c0_i32_2 = arith.constant 0 : i32
    return %c0_i32, %c0_i32_0, %c0_i32_1 : i32, i32, i32
  }
  func.func @transform_4(%arg0: i32) -> (i32, i32, i32, i32) {
    %c0_i32 = arith.constant 0 : i32
    %c0_i32_0 = arith.constant 0 : i32
    %c0_i32_1 = arith.constant 0 : i32
    %c0_i32_2 = arith.constant 0 : i32
    return %arg0, %c0_i32, %c0_i32_0, %c0_i32_1 : i32, i32, i32, i32
  }
  func.func @transform_5(%arg0: i32) -> (i32, i32, i32) {
    %c0_i32 = arith.constant 0 : i32
    %c0_i32_0 = arith.constant 0 : i32
    %c0_i32_1 = arith.constant 0 : i32
    return %arg0, %c0_i32, %c0_i32_0 : i32, i32, i32
  }
}

</mosaic_0001>

<llo_original>
// kernel: contracting_block_forward.5
$region0: #{contracting_block_forward.5}
  #allocation0 [shape = 'u32[]', space=smem, size = 0x4, offset = 0x4, fixed_abs, tag = 'smem constant byte address 0x4 - core index']
  #allocation1 [shape = 'u32[72,128]{1,0:T(1,128)}', space=vmem, size = 0x9000, scoped, tag = 'internal scratch']
  %s0 = inlined_call_operand.vmem [shape: bf16[2,16,16,8], index: 0, kind: input, shape index: {}]
  %s1 = inlined_call_operand.vmem [shape: f32[1,8], index: 1, kind: input, shape index: {}]
  %s2 = inlined_call_operand.vmem [shape: f32[1,8], index: 2, kind: input, shape index: {}]
  %s3 = inlined_call_operand.vmem [shape: f32[2,16,16,8], index: 3, kind: output, shape index: {0}]
  %s4 = inlined_call_operand.vmem [shape: f32[2,8,8,8], index: 4, kind: output, shape index: {1}]
  %5 = xla_tuple %s3, %s4
  %s6 = sld [smem:[#allocation0]]
  $region53: #{contracting_block_forward.5} parent=0
    _
  %s8 = ssub.s32 1, %s6
  %s9 = scalar_select 0, %s8, %s6
  loop: start=0, step=1, limit=4
  $region2: #{contracting_block_forward.5} parent=0 // loop_pre_header
    _
  $region3: #{contracting_block_forward.5} parent=0 // loop_header
    %s11 = sphi 0, %s15
    %p12 = scmp.ge.s32.totalorder %s11, 4
    %s21 = sphi 0, %s23
    %s24 = sphi 0, %s21
    %s25 = sphi 0, %s24
    %s41 = sphi 0, %s25
    %s45 = sphi 0, %s45
    %s47 = sphi 0, %s45
    %s48 = sphi 0, %s47
    %s62 = sphi 0, %s48
    %s66 = sphi 0, %s66
    %s68 = sphi 0, %s66
    %s69 = sphi 0, %s68
    %s83 = sphi 0, %s69
    %s89 = sphi 0, %s91
    %s92 = sphi 0, %s89
    %s93 = sphi 0, %s92
    %s109 = sphi 0, %s93
    %s115 = sphi 0, %s117
    %s118 = sphi 0, %s115
    %s119 = sphi 0, %s118
    %s135 = sphi 0, %s119
  $region4: #{contracting_block_forward.5} parent=0 // loop_header_branch
    %14 = sbr.rel (%p12) target = $region8
  $region5: #{contracting_block_forward.5} parent=0 // loop_body
    %s16 = ssub.s32 %s11, 1
    %s17 = ssub.s32 %s11, 2
    %s18 = sadd.s32 %s11, 1
    %s19 = ssub.s32 %s11, %s18
    %p20 = scmp.eq.s32.totalorder %s19, 0
    %s22 = sadd.s32 %s21, 1
    %s23 = scalar_select %p20, %s21, %s22
    %p26 = pneg %p20
    %p27 = scmp.eq.s32.totalorder %s11, 1
    %p28 = por %p26, %p27
    %p29 = scmp.ne.s32.totalorder %s21, %s24
    %p30 = scmp.eq.s32.totalorder %s11, 0
    %p31 = por %p29, %p30
    %p32 = scmp.ne.s32.totalorder %s21, %s24
    %p33 = scmp.eq.s32.totalorder %s16, 1
    %p34 = por %p32, %p33
    %p35 = scmp.ne.s32.totalorder %s24, %s25
    %p36 = scmp.eq.s32.totalorder %s16, 0
    %p37 = por %p35, %p36
    %p38 = scmp.ne.s32.totalorder %s24, %s25
    %p39 = scmp.eq.s32.totalorder %s17, 1
    %p40 = por %p38, %p39
    %p42 = scmp.ne.s32.totalorder %s25, %s41
    %p43 = scmp.eq.s32.totalorder %s17, 0
    %p44 = por %p42, %p43
    %s46 = sadd.s32 %s45, 1
    %p49 = scmp.eq.s32.totalorder %s11, 1
    %p50 = scmp.ne.s32.totalorder %s45, %s47
    %p51 = scmp.eq.s32.totalorder %s11, 0
    %p52 = por %p50, %p51
    %p53 = scmp.ne.s32.totalorder %s45, %s47
    %p54 = scmp.eq.s32.totalorder %s16, 1
    %p55 = por %p53, %p54
    %p56 = scmp.ne.s32.totalorder %s47, %s48
    %p57 = scmp.eq.s32.totalorder %s16, 0
    %p58 = por %p56, %p57
    %p59 = scmp.ne.s32.totalorder %s47, %s48
    %p60 = scmp.eq.s32.totalorder %s17, 1
    %p61 = por %p59, %p60
    %p63 = scmp.ne.s32.totalorder %s48, %s62
    %p64 = scmp.eq.s32.totalorder %s17, 0
    %p65 = por %p63, %p64
    %s67 = sadd.s32 %s66, 1
    %p70 = scmp.eq.s32.totalorder %s11, 1
    %p71 = scmp.ne.s32.totalorder %s66, %s68
    %p72 = scmp.eq.s32.totalorder %s11, 0
    %p73 = por %p71, %p72
    %p74 = scmp.ne.s32.totalorder %s66, %s68
    %p75 = scmp.eq.s32.totalorder %s16, 1
    %p76 = por %p74, %p75
    %p77 = scmp.ne.s32.totalorder %s68, %s69
    %p78 = scmp.eq.s32.totalorder %s16, 0
    %p79 = por %p77, %p78
    %p80 = scmp.ne.s32.totalorder %s68, %s69
    %p81 = scmp.eq.s32.totalorder %s17, 1
    %p82 = por %p80, %p81
    %p84 = scmp.ne.s32.totalorder %s69, %s83
    %p85 = scmp.eq.s32.totalorder %s17, 0
    %p86 = por %p84, %p85
    %s87 = ssub.s32 %s11, %s18
    %p88 = scmp.eq.s32.totalorder %s87, 0
    %s90 = sadd.s32 %s89, 1
    %s91 = scalar_select %p88, %s89, %s90
    %p94 = pneg %p88
    %p95 = scmp.eq.s32.totalorder %s11, 1
    %p96 = por %p94, %p95
    %p97 = scmp.ne.s32.totalorder %s89, %s92
    %p98 = scmp.eq.s32.totalorder %s11, 0
    %p99 = por %p97, %p98
    %p100 = scmp.ne.s32.totalorder %s89, %s92
    %p101 = scmp.eq.s32.totalorder %s16, 1
    %p102 = por %p100, %p101
    %p103 = scmp.ne.s32.totalorder %s92, %s93
    %p104 = scmp.eq.s32.totalorder %s16, 0
    %p105 = por %p103, %p104
    %p106 = scmp.ne.s32.totalorder %s92, %s93
    %p107 = scmp.eq.s32.totalorder %s17, 1
    %p108 = por %p106, %p107
    %p110 = scmp.ne.s32.totalorder %s93, %s109
    %p111 = scmp.eq.s32.totalorder %s17, 0
    %p112 = por %p110, %p111
    %s113 = ssub.s32 %s11, %s18
    %p114 = scmp.eq.s32.totalorder %s113, 0
    %s116 = sadd.s32 %s115, 1
    %s117 = scalar_select %p114, %s115, %s116
    %p120 = pneg %p114
    %p121 = scmp.eq.s32.totalorder %s11, 1
    %p122 = por %p120, %p121
    %p123 = scmp.ne.s32.totalorder %s115, %s118
    %p124 = scmp.eq.s32.totalorder %s11, 0
    %p125 = por %p123, %p124
    %p126 = scmp.ne.s32.totalorder %s115, %s118
    %p127 = scmp.eq.s32.totalorder %s16, 1
    %p128 = por %p126, %p127
    %p129 = scmp.ne.s32.totalorder %s118, %s119
    %p130 = scmp.eq.s32.totalorder %s16, 0
    %p131 = por %p129, %p130
    %p132 = scmp.ne.s32.totalorder %s118, %s119
    %p133 = scmp.eq.s32.totalorder %s17, 1
    %p134 = por %p132, %p133
    %p136 = scmp.ne.s32.totalorder %s119, %s135
    %p137 = scmp.eq.s32.totalorder %s17, 0
    %p138 = por %p136, %p137
    %p139 = scmp.le.s32.totalorder 1, %s11
    %p140 = scmp.lt.s32.totalorder %s11, 3
    %p141 = pnand %p139, %p140
    %p142 = pneg %p141
    // Predicated region
    $region9: #{contracting_block_forward.5} parent=5 // pred_check
      _
    $region10: #{contracting_block_forward.5} parent=5 // pred_check_branch
      %144 = sbr.rel (%p141) target = $region12
    $region11: #{contracting_block_forward.5} parent=5 // pred_region
      %s145 = ssub.s32 %s11, 1
      // Predicated region
      $region13: #{contracting_block_forward.5} parent=11 // pred_check
        %p146 = pneg %p58
      $region14: #{contracting_block_forward.5} parent=11 // pred_check_branch
        %148 = sbr.rel (%p146) target = $region16
      $region15: #{contracting_block_forward.5} parent=11 // pred_region
        _
      $region16: #{contracting_block_forward.5} parent=11 // pred_fallthru
        _
      // Predicated region
      $region17: #{contracting_block_forward.5} parent=11 // pred_check
        %p149 = pneg %p79
      $region18: #{contracting_block_forward.5} parent=11 // pred_check_branch
        %151 = sbr.rel (%p149) target = $region20
      $region19: #{contracting_block_forward.5} parent=11 // pred_region
        _
      $region20: #{contracting_block_forward.5} parent=11 // pred_fallthru
        _
    $region12: #{contracting_block_forward.5} parent=5 // pred_fallthru
      _
    %p152 = scmp.lt.s32.totalorder %s11, 2
    // Predicated region
    $region21: #{contracting_block_forward.5} parent=5 // pred_check
      %p153 = pneg %p152
    $region22: #{contracting_block_forward.5} parent=5 // pred_check_branch
      %155 = sbr.rel (%p153) target = $region24
    $region23: #{contracting_block_forward.5} parent=5 // pred_region
      // Predicated region
      $region25: #{contracting_block_forward.5} parent=23 // pred_check
        %p156 = pneg %p31
      $region26: #{contracting_block_forward.5} parent=23 // pred_check_branch
        %158 = sbr.rel (%p156) target = $region28
      $region27: #{contracting_block_forward.5} parent=23 // pred_region
        %p159 = scmp.lt.s32.totalorder %s11, 1
        %s160 = scalar_select %p159, %s11, 1
        %s161 = smul.addr %s160, 32
        %s162 = smul.addr %s161, 4
        %s163 = scalar_lea.vmem %s0, %s162
      $region28: #{contracting_block_forward.5} parent=23 // pred_fallthru
        _
    $region24: #{contracting_block_forward.5} parent=5 // pred_fallthru
      _
    %p164 = scmp.le.s32.totalorder 1, %s11
    %p165 = scmp.lt.s32.totalorder %s11, 3
    %p166 = pnand %p164, %p165
    %p167 = pneg %p166
    // Predicated region
    $region29: #{contracting_block_forward.5} parent=5 // pred_check
      _
    $region30: #{contracting_block_forward.5} parent=5 // pred_check_branch
      %169 = sbr.rel (%p166) target = $region32
    $region31: #{contracting_block_forward.5} parent=5 // pred_region
      %s170 = ssub.s32 %s11, 1
      %p171 = scmp.lt.s32.totalorder %s16, 1
      %s172 = scalar_select %p171, %s16, 1
      %s173 = smul.addr %s172, 32
      %s174 = smul.addr %s173, 4
      %s175 = scalar_lea.vmem %s0, %s174
      %p176 = pneg %p37
      %p177 = pneg %p34
      %p178 = pneg %p58
      %p179 = pneg %p55
      %p180 = pneg %p79
      %p181 = pneg %p76
      %p182 = pneg %p105
      %p183 = pneg %p102
      %p184 = scmp.lt.s32.totalorder %s16, 1
      %s185 = scalar_select %p184, %s16, 1
      %s186 = smul.addr %s185, 32
      %s187 = smul.addr %s186, 8
      %s188 = scalar_lea.vmem %s3, %s187
      %p189 = pneg %p131
      %p190 = pneg %p128
      %p191 = scmp.lt.s32.totalorder %s16, 1
      %s192 = scalar_select %p191, %s16, 1
      %s193 = smul.addr %s192, 8
      %s194 = smul.addr %s193, 8
      %s195 = scalar_lea.vmem %s4, %s194
      %p196 = scmp.lt.s32.totalorder %s16, 1
      %s197 = scalar_select %p196, %s16, 1
      %s198 = smul.addr %s197, 32
      %s199 = smul.addr %s198, 4
      %s200 = scalar_lea.vmem %s0, %s199
      %p201 = scmp.lt.s32.totalorder %s16, 1
      %s202 = scalar_select %p201, %s16, 1
      %s203 = smul.addr %s202, 32
      %s204 = smul.addr %s203, 8
      %s205 = scalar_lea.vmem %s3, %s204
      %p206 = scmp.lt.s32.totalorder %s16, 1
      %s207 = scalar_select %p206, %s16, 1
      %s208 = smul.addr %s207, 8
      %s209 = smul.addr %s208, 8
      %s210 = scalar_lea.vmem %s4, %s209
      %v211 = vld [vmem:[%s200] sm:$0xf]
      %v212 = vld [vmem:[%s200 + $0x4] sm:$0xf]
      %v213 = vld [vmem:[%s200 + $0x8] sm:$0xf]
      %v214 = vld [vmem:[%s200 + $0xc] sm:$0xf]
      %v215 = vld [vmem:[%s200 + $0x10] sm:$0xf]
      %v216 = vld [vmem:[%s200 + $0x14] sm:$0xf]
      %v217 = vld [vmem:[%s200 + $0x18] sm:$0xf]
      %v218 = vld [vmem:[%s200 + $0x1c] sm:$0xf]
      %v219 = vld [vmem:[%s200 + $0x20] sm:$0xf]
      %v220 = vld [vmem:[%s200 + $0x24] sm:$0xf]
      %v221 = vld [vmem:[%s200 + $0x28] sm:$0xf]
      %v222 = vld [vmem:[%s200 + $0x2c] sm:$0xf]
      %v223 = vld [vmem:[%s200 + $0x30] sm:$0xf]
      %v224 = vld [vmem:[%s200 + $0x34] sm:$0xf]
      %v225 = vld [vmem:[%s200 + $0x38] sm:$0xf]
      %v226 = vld [vmem:[%s200 + $0x3c] sm:$0xf]
      %v227 = vld [vmem:[%s200 + $0x40] sm:$0xf]
      %v228 = vld [vmem:[%s200 + $0x44] sm:$0xf]
      %v229 = vld [vmem:[%s200 + $0x48] sm:$0xf]
      %v230 = vld [vmem:[%s200 + $0x4c] sm:$0xf]
      %v231 = vld [vmem:[%s200 + $0x50] sm:$0xf]
      %v232 = vld [vmem:[%s200 + $0x54] sm:$0xf]
      %v233 = vld [vmem:[%s200 + $0x58] sm:$0xf]
      %v234 = vld [vmem:[%s200 + $0x5c] sm:$0xf]
      %v235 = vld [vmem:[%s200 + $0x60] sm:$0xf]
      %v236 = vld [vmem:[%s200 + $0x64] sm:$0xf]
      %v237 = vld [vmem:[%s200 + $0x68] sm:$0xf]
      %v238 = vld [vmem:[%s200 + $0x6c] sm:$0xf]
      %v239 = vld [vmem:[%s200 + $0x70] sm:$0xf]
      %v240 = vld [vmem:[%s200 + $0x74] sm:$0xf]
      %v241 = vld [vmem:[%s200 + $0x78] sm:$0xf]
      %v242 = vld [vmem:[%s200 + $0x7c] sm:$0xf]
      %v243 = vunpack.c.l.bf16 %v211
      %v244 = vunpack.c.l.bf16 %v212
      %v245 = vunpack.c.l.bf16 %v213
      %v246 = vunpack.c.l.bf16 %v214
      %v247 = vunpack.c.l.bf16 %v215
      %v248 = vunpack.c.l.bf16 %v216
      %v249 = vunpack.c.l.bf16 %v217
      %v250 = vunpack.c.l.bf16 %v218
      %v251 = vunpack.c.l.bf16 %v219
      %v252 = vunpack.c.l.bf16 %v220
      %v253 = vunpack.c.l.bf16 %v221
      %v254 = vunpack.c.l.bf16 %v222
      %v255 = vunpack.c.l.bf16 %v223
      %v256 = vunpack.c.l.bf16 %v224
      %v257 = vunpack.c.l.bf16 %v225
      %v258 = vunpack.c.l.bf16 %v226
      %v259 = vunpack.c.l.bf16 %v227
      %v260 = vunpack.c.l.bf16 %v228
      %v261 = vunpack.c.l.bf16 %v229
      %v262 = vunpack.c.l.bf16 %v230
      %v263 = vunpack.c.l.bf16 %v231
      %v264 = vunpack.c.l.bf16 %v232
      %v265 = vunpack.c.l.bf16 %v233
      %v266 = vunpack.c.l.bf16 %v234
      %v267 = vunpack.c.l.bf16 %v235
      %v268 = vunpack.c.l.bf16 %v236
      %v269 = vunpack.c.l.bf16 %v237
      %v270 = vunpack.c.l.bf16 %v238
      %v271 = vunpack.c.l.bf16 %v239
      %v272 = vunpack.c.l.bf16 %v240
      %v273 = vunpack.c.l.bf16 %v241
      %v274 = vunpack.c.l.bf16 %v242
      %v275 = vld [vmem:[%s1] sm:$0x1]
      %v277 = vperm.slane %v275, 0
      %v279 = vmul.f32 %v243, %v277
      %v280 = vmul.f32 %v244, %v277
      %v281 = vmul.f32 %v245, %v277
      %v282 = vmul.f32 %v246, %v277
      %v283 = vmul.f32 %v247, %v277
      %v284 = vmul.f32 %v248, %v277
      %v285 = vmul.f32 %v249, %v277
      %v286 = vmul.f32 %v250, %v277
      %v287 = vmul.f32 %v251, %v277
      %v288 = vmul.f32 %v252, %v277
      %v289 = vmul.f32 %v253, %v277
      %v290 = vmul.f32 %v254, %v277
      %v291 = vmul.f32 %v255, %v277
      %v292 = vmul.f32 %v256, %v277
      %v293 = vmul.f32 %v257, %v277
      %v294 = vmul.f32 %v258, %v277
      %v295 = vmul.f32 %v259, %v277
      %v296 = vmul.f32 %v260, %v277
      %v297 = vmul.f32 %v261, %v277
      %v298 = vmul.f32 %v262, %v277
      %v299 = vmul.f32 %v263, %v277
      %v300 = vmul.f32 %v264, %v277
      %v301 = vmul.f32 %v265, %v277
      %v302 = vmul.f32 %v266, %v277
      %v303 = vmul.f32 %v267, %v277
      %v304 = vmul.f32 %v268, %v277
      %v305 = vmul.f32 %v269, %v277
      %v306 = vmul.f32 %v270, %v277
      %v307 = vmul.f32 %v271, %v277
      %v308 = vmul.f32 %v272, %v277
      %v309 = vmul.f32 %v273, %v277
      %v310 = vmul.f32 %v274, %v277
      %v311 = vld [vmem:[%s2] sm:$0x1]
      %v313 = vperm.slane %v311, 0
      %v315 = vadd.f32 %v279, %v313
      %v316 = vadd.f32 %v280, %v313
      %v317 = vadd.f32 %v281, %v313
      %v318 = vadd.f32 %v282, %v313
      %v319 = vadd.f32 %v283, %v313
      %v320 = vadd.f32 %v284, %v313
      %v321 = vadd.f32 %v285, %v313
      %v322 = vadd.f32 %v286, %v313
      %v323 = vadd.f32 %v287, %v313
      %v324 = vadd.f32 %v288, %v313
      %v325 = vadd.f32 %v289, %v313
      %v326 = vadd.f32 %v290, %v313
      %v327 = vadd.f32 %v291, %v313
      %v328 = vadd.f32 %v292, %v313
      %v329 = vadd.f32 %v293, %v313
      %v330 = vadd.f32 %v294, %v313
      %v331 = vadd.f32 %v295, %v313
      %v332 = vadd.f32 %v296, %v313
      %v333 = vadd.f32 %v297, %v313
      %v334 = vadd.f32 %v298, %v313
      %v335 = vadd.f32 %v299, %v313
      %v336 = vadd.f32 %v300, %v313
      %v337 = vadd.f32 %v301, %v313
      %v338 = vadd.f32 %v302, %v313
      %v339 = vadd.f32 %v303, %v313
      %v340 = vadd.f32 %v304, %v313
      %v341 = vadd.f32 %v305, %v313
      %v342 = vadd.f32 %v306, %v313
      %v343 = vadd.f32 %v307, %v313
      %v344 = vadd.f32 %v308, %v313
      %v345 = vadd.f32 %v309, %v313
      %v346 = vadd.f32 %v310, %v313
      %v347 = vmax.f32 %v315, 0.0
      %v348 = vmax.f32 %v316, 0.0
      %v349 = vmax.f32 %v317, 0.0
      %v350 = vmax.f32 %v318, 0.0
      %v351 = vmax.f32 %v319, 0.0
      %v352 = vmax.f32 %v320, 0.0
      %v353 = vmax.f32 %v321, 0.0
      %v354 = vmax.f32 %v322, 0.0
      %v355 = vmax.f32 %v323, 0.0
      %v356 = vmax.f32 %v324, 0.0
      %v357 = vmax.f32 %v325, 0.0
      %v358 = vmax.f32 %v326, 0.0
      %v359 = vmax.f32 %v327, 0.0
      %v360 = vmax.f32 %v328, 0.0
      %v361 = vmax.f32 %v329, 0.0
      %v362 = vmax.f32 %v330, 0.0
      %v363 = vmax.f32 %v331, 0.0
      %v364 = vmax.f32 %v332, 0.0
      %v365 = vmax.f32 %v333, 0.0
      %v366 = vmax.f32 %v334, 0.0
      %v367 = vmax.f32 %v335, 0.0
      %v368 = vmax.f32 %v336, 0.0
      %v369 = vmax.f32 %v337, 0.0
      %v370 = vmax.f32 %v338, 0.0
      %v371 = vmax.f32 %v339, 0.0
      %v372 = vmax.f32 %v340, 0.0
      %v373 = vmax.f32 %v341, 0.0
      %v374 = vmax.f32 %v342, 0.0
      %v375 = vmax.f32 %v343, 0.0
      %v376 = vmax.f32 %v344, 0.0
      %v377 = vmax.f32 %v345, 0.0
      %v378 = vmax.f32 %v346, 0.0
      %vm379 = vcmask 64512
      %380 = vst.msk [vmem:[%s205] sm:$0xff] %vm379, %v347
      %381 = vst.msk [vmem:[%s205 + $0x8] sm:$0xff] %vm379, %v348
      %382 = vst.msk [vmem:[%s205 + $0x10] sm:$0xff] %vm379, %v349
      %383 = vst.msk [vmem:[%s205 + $0x18] sm:$0xff] %vm379, %v350
      %384 = vst.msk [vmem:[%s205 + $0x20] sm:$0xff] %vm379, %v351
      %385 = vst.msk [vmem:[%s205 + $0x28] sm:$0xff] %vm379, %v352
      %386 = vst.msk [vmem:[%s205 + $0x30] sm:$0xff] %vm379, %v353
      %387 = vst.msk [vmem:[%s205 + $0x38] sm:$0xff] %vm379, %v354
      %388 = vst.msk [vmem:[%s205 + $0x40] sm:$0xff] %vm379, %v355
      %389 = vst.msk [vmem:[%s205 + $0x48] sm:$0xff] %vm379, %v356
      %390 = vst.msk [vmem:[%s205 + $0x50] sm:$0xff] %vm379, %v357
      %391 = vst.msk [vmem:[%s205 + $0x58] sm:$0xff] %vm379, %v358
      %392 = vst.msk [vmem:[%s205 + $0x60] sm:$0xff] %vm379, %v359
      %393 = vst.msk [vmem:[%s205 + $0x68] sm:$0xff] %vm379, %v360
      %394 = vst.msk [vmem:[%s205 + $0x70] sm:$0xff] %vm379, %v361
      %395 = vst.msk [vmem:[%s205 + $0x78] sm:$0xff] %vm379, %v362
      %396 = vst.msk [vmem:[%s205 + $0x80] sm:$0xff] %vm379, %v363
      %397 = vst.msk [vmem:[%s205 + $0x88] sm:$0xff] %vm379, %v364
      %398 = vst.msk [vmem:[%s205 + $0x90] sm:$0xff] %vm379, %v365
      %399 = vst.msk [vmem:[%s205 + $0x98] sm:$0xff] %vm379, %v366
      %400 = vst.msk [vmem:[%s205 + $0xa0] sm:$0xff] %vm379, %v367
      %401 = vst.msk [vmem:[%s205 + $0xa8] sm:$0xff] %vm379, %v368
      %402 = vst.msk [vmem:[%s205 + $0xb0] sm:$0xff] %vm379, %v369
      %403 = vst.msk [vmem:[%s205 + $0xb8] sm:$0xff] %vm379, %v370
      %404 = vst.msk [vmem:[%s205 + $0xc0] sm:$0xff] %vm379, %v371
      %405 = vst.msk [vmem:[%s205 + $0xc8] sm:$0xff] %vm379, %v372
      %406 = vst.msk [vmem:[%s205 + $0xd0] sm:$0xff] %vm379, %v373
      %407 = vst.msk [vmem:[%s205 + $0xd8] sm:$0xff] %vm379, %v374
      %408 = vst.msk [vmem:[%s205 + $0xe0] sm:$0xff] %vm379, %v375
      %409 = vst.msk [vmem:[%s205 + $0xe8] sm:$0xff] %vm379, %v376
      %410 = vst.msk [vmem:[%s205 + $0xf0] sm:$0xff] %vm379, %v377
      %411 = vst.msk [vmem:[%s205 + $0xf8] sm:$0xff] %vm379, %v378
      %v412 = vmax.f32 %v347, %v349
      %v413 = vmax.f32 %v348, %v350
      %v414 = vmax.f32 %v351, %v353
      %v415 = vmax.f32 %v352, %v354
      %v416 = vmax.f32 %v355, %v357
      %v417 = vmax.f32 %v356, %v358
      %v418 = vmax.f32 %v359, %v361
      %v419 = vmax.f32 %v360, %v362
      %v420 = vmax.f32 %v363, %v365
      %v421 = vmax.f32 %v364, %v366
      %v422 = vmax.f32 %v367, %v369
      %v423 = vmax.f32 %v368, %v370
      %v424 = vmax.f32 %v371, %v373
      %v425 = vmax.f32 %v372, %v374
      %v426 = vmax.f32 %v375, %v377
      %v427 = vmax.f32 %v376, %v378
      %v444 = vrot.slane %v412, 2
      %v445 = vrot.slane %v412, 4
      %v446 = vrot.slane %v412, 6
      %v447 = vrot.slane %v413, 2
      %v448 = vrot.slane %v413, 4
      %v449 = vrot.slane %v413, 6
      %v450 = vrot.slane %v414, 2
      %v451 = vrot.slane %v414, 4
      %v452 = vrot.slane %v414, 6
      %v453 = vrot.slane %v415, 2
      %v454 = vrot.slane %v415, 4
      %v455 = vrot.slane %v415, 6
      %v456 = vrot.slane %v416, 2
      %v457 = vrot.slane %v416, 4
      %v458 = vrot.slane %v416, 6
      %v459 = vrot.slane %v417, 2
      %v460 = vrot.slane %v417, 4
      %v461 = vrot.slane %v417, 6
      %v462 = vrot.slane %v418, 2
      %v463 = vrot.slane %v418, 4
      %v464 = vrot.slane %v418, 6
      %v465 = vrot.slane %v419, 2
      %v466 = vrot.slane %v419, 4
      %v467 = vrot.slane %v419, 6
      %v468 = vrot.slane %v420, 2
      %v469 = vrot.slane %v420, 4
      %v470 = vrot.slane %v420, 6
      %v471 = vrot.slane %v421, 2
      %v472 = vrot.slane %v421, 4
      %v473 = vrot.slane %v421, 6
      %v474 = vrot.slane %v422, 2
      %v475 = vrot.slane %v422, 4
      %v476 = vrot.slane %v422, 6
      %v477 = vrot.slane %v423, 2
      %v478 = vrot.slane %v423, 4
      %v479 = vrot.slane %v423, 6
      %v480 = vrot.slane %v424, 2
      %v481 = vrot.slane %v424, 4
      %v482 = vrot.slane %v424, 6
      %v483 = vrot.slane %v425, 2
      %v484 = vrot.slane %v425, 4
      %v485 = vrot.slane %v425, 6
      %v486 = vrot.slane %v426, 2
      %v487 = vrot.slane %v426, 4
      %v488 = vrot.slane %v426, 6
      %v489 = vrot.slane %v427, 2
      %v490 = vrot.slane %v427, 4
      %v491 = vrot.slane %v427, 6
      %v540 = vrot.slane %v412, 7
      %v541 = vrot.slane %v540, 2
      %v542 = vrot.slane %v444, 7
      %v543 = vrot.slane %v542, 2
      %v544 = vrot.slane %v445, 7
      %v545 = vrot.slane %v544, 2
      %v546 = vrot.slane %v446, 7
      %v547 = vrot.slane %v546, 2
      %v548 = vrot.slane %v413, 7
      %v549 = vrot.slane %v548, 2
      %v550 = vrot.slane %v447, 7
      %v551 = vrot.slane %v550, 2
      %v552 = vrot.slane %v448, 7
      %v553 = vrot.slane %v552, 2
      %v554 = vrot.slane %v449, 7
      %v555 = vrot.slane %v554, 2
      %v556 = vrot.slane %v414, 7
      %v557 = vrot.slane %v556, 2
      %v558 = vrot.slane %v450, 7
      %v559 = vrot.slane %v558, 2
      %v560 = vrot.slane %v451, 7
      %v561 = vrot.slane %v560, 2
      %v562 = vrot.slane %v452, 7
      %v563 = vrot.slane %v562, 2
      %v564 = vrot.slane %v415, 7
      %v565 = vrot.slane %v564, 2
      %v566 = vrot.slane %v453, 7
      %v567 = vrot.slane %v566, 2
      %v568 = vrot.slane %v454, 7
      %v569 = vrot.slane %v568, 2
      %v570 = vrot.slane %v455, 7
      %v571 = vrot.slane %v570, 2
      %v572 = vrot.slane %v416, 7
      %v573 = vrot.slane %v572, 2
      %v574 = vrot.slane %v456, 7
      %v575 = vrot.slane %v574, 2
      %v576 = vrot.slane %v457, 7
      %v577 = vrot.slane %v576, 2
      %v578 = vrot.slane %v458, 7
      %v579 = vrot.slane %v578, 2
      %v580 = vrot.slane %v417, 7
      %v581 = vrot.slane %v580, 2
      %v582 = vrot.slane %v459, 7
      %v583 = vrot.slane %v582, 2
      %v584 = vrot.slane %v460, 7
      %v585 = vrot.slane %v584, 2
      %v586 = vrot.slane %v461, 7
      %v587 = vrot.slane %v586, 2
      %v588 = vrot.slane %v418, 7
      %v589 = vrot.slane %v588, 2
      %v590 = vrot.slane %v462, 7
      %v591 = vrot.slane %v590, 2
      %v592 = vrot.slane %v463, 7
      %v593 = vrot.slane %v592, 2
      %v594 = vrot.slane %v464, 7
      %v595 = vrot.slane %v594, 2
      %v596 = vrot.slane %v419, 7
      %v597 = vrot.slane %v596, 2
      %v598 = vrot.slane %v465, 7
      %v599 = vrot.slane %v598, 2
      %v600 = vrot.slane %v466, 7
      %v601 = vrot.slane %v600, 2
      %v602 = vrot.slane %v467, 7
      %v603 = vrot.slane %v602, 2
      %v604 = vrot.slane %v420, 7
      %v605 = vrot.slane %v604, 2
      %v606 = vrot.slane %v468, 7
      %v607 = vrot.slane %v606, 2
      %v608 = vrot.slane %v469, 7
      %v609 = vrot.slane %v608, 2
      %v610 = vrot.slane %v470, 7
      %v611 = vrot.slane %v610, 2
      %v612 = vrot.slane %v421, 7
      %v613 = vrot.slane %v612, 2
      %v614 = vrot.slane %v471, 7
      %v615 = vrot.slane %v614, 2
      %v616 = vrot.slane %v472, 7
      %v617 = vrot.slane %v616, 2
      %v618 = vrot.slane %v473, 7
      %v619 = vrot.slane %v618, 2
      %v620 = vrot.slane %v422, 7
      %v621 = vrot.slane %v620, 2
      %v622 = vrot.slane %v474, 7
      %v623 = vrot.slane %v622, 2
      %v624 = vrot.slane %v475, 7
      %v625 = vrot.slane %v624, 2
      %v626 = vrot.slane %v476, 7
      %v627 = vrot.slane %v626, 2
      %v628 = vrot.slane %v423, 7
      %v629 = vrot.slane %v628, 2
      %v630 = vrot.slane %v477, 7
      %v631 = vrot.slane %v630, 2
      %v632 = vrot.slane %v478, 7
      %v633 = vrot.slane %v632, 2
      %v634 = vrot.slane %v479, 7
      %v635 = vrot.slane %v634, 2
      %v636 = vrot.slane %v424, 7
      %v637 = vrot.slane %v636, 2
      %v638 = vrot.slane %v480, 7
      %v639 = vrot.slane %v638, 2
      %v640 = vrot.slane %v481, 7
      %v641 = vrot.slane %v640, 2
      %v642 = vrot.slane %v482, 7
      %v643 = vrot.slane %v642, 2
      %v644 = vrot.slane %v425, 7
      %v645 = vrot.slane %v644, 2
      %v646 = vrot.slane %v483, 7
      %v647 = vrot.slane %v646, 2
      %v648 = vrot.slane %v484, 7
      %v649 = vrot.slane %v648, 2
      %v650 = vrot.slane %v485, 7
      %v651 = vrot.slane %v650, 2
      %v652 = vrot.slane %v426, 7
      %v653 = vrot.slane %v652, 2
      %v654 = vrot.slane %v486, 7
      %v655 = vrot.slane %v654, 2
      %v656 = vrot.slane %v487, 7
      %v657 = vrot.slane %v656, 2
      %v658 = vrot.slane %v488, 7
      %v659 = vrot.slane %v658, 2
      %v660 = vrot.slane %v427, 7
      %v661 = vrot.slane %v660, 2
      %v662 = vrot.slane %v489, 7
      %v663 = vrot.slane %v662, 2
      %v664 = vrot.slane %v490, 7
      %v665 = vrot.slane %v664, 2
      %v666 = vrot.slane %v491, 7
      %v667 = vrot.slane %v666, 2
      %v732 = vmax.f32 %v412, %v541
      %v733 = vmax.f32 %v444, %v543
      %v734 = vmax.f32 %v445, %v545
      %v735 = vmax.f32 %v446, %v547
      %v736 = vmax.f32 %v413, %v549
      %v737 = vmax.f32 %v447, %v551
      %v738 = vmax.f32 %v448, %v553
      %v739 = vmax.f32 %v449, %v555
      %v740 = vmax.f32 %v414, %v557
      %v741 = vmax.f32 %v450, %v559
      %v742 = vmax.f32 %v451, %v561
      %v743 = vmax.f32 %v452, %v563
      %v744 = vmax.f32 %v415, %v565
      %v745 = vmax.f32 %v453, %v567
      %v746 = vmax.f32 %v454, %v569
      %v747 = vmax.f32 %v455, %v571
      %v748 = vmax.f32 %v416, %v573
      %v749 = vmax.f32 %v456, %v575
      %v750 = vmax.f32 %v457, %v577
      %v751 = vmax.f32 %v458, %v579
      %v752 = vmax.f32 %v417, %v581
      %v753 = vmax.f32 %v459, %v583
      %v754 = vmax.f32 %v460, %v585
      %v755 = vmax.f32 %v461, %v587
      %v756 = vmax.f32 %v418, %v589
      %v757 = vmax.f32 %v462, %v591
      %v758 = vmax.f32 %v463, %v593
      %v759 = vmax.f32 %v464, %v595
      %v760 = vmax.f32 %v419, %v597
      %v761 = vmax.f32 %v465, %v599
      %v762 = vmax.f32 %v466, %v601
      %v763 = vmax.f32 %v467, %v603
      %v764 = vmax.f32 %v420, %v605
      %v765 = vmax.f32 %v468, %v607
      %v766 = vmax.f32 %v469, %v609
      %v767 = vmax.f32 %v470, %v611
      %v768 = vmax.f32 %v421, %v613
      %v769 = vmax.f32 %v471, %v615
      %v770 = vmax.f32 %v472, %v617
      %v771 = vmax.f32 %v473, %v619
      %v772 = vmax.f32 %v422, %v621
      %v773 = vmax.f32 %v474, %v623
      %v774 = vmax.f32 %v475, %v625
      %v775 = vmax.f32 %v476, %v627
      %v776 = vmax.f32 %v423, %v629
      %v777 = vmax.f32 %v477, %v631
      %v778 = vmax.f32 %v478, %v633
      %v779 = vmax.f32 %v479, %v635
      %v780 = vmax.f32 %v424, %v637
      %v781 = vmax.f32 %v480, %v639
      %v782 = vmax.f32 %v481, %v641
      %v783 = vmax.f32 %v482, %v643
      %v784 = vmax.f32 %v425, %v645
      %v785 = vmax.f32 %v483, %v647
      %v786 = vmax.f32 %v484, %v649
      %v787 = vmax.f32 %v485, %v651
      %v788 = vmax.f32 %v426, %v653
      %v789 = vmax.f32 %v486, %v655
      %v790 = vmax.f32 %v487, %v657
      %v791 = vmax.f32 %v488, %v659
      %v792 = vmax.f32 %v427, %v661
      %v793 = vmax.f32 %v489, %v663
      %v794 = vmax.f32 %v490, %v665
      %v795 = vmax.f32 %v491, %v667
      %v860 = vperm.slane %v732, 0
      %v861 = vperm.slane %v733, 0
      %v862 = vperm.slane %v734, 0
      %v863 = vperm.slane %v735, 0
      %v864 = vperm.slane %v736, 0
      %v865 = vperm.slane %v737, 0
      %v866 = vperm.slane %v738, 0
      %v867 = vperm.slane %v739, 0
      %v868 = vperm.slane %v740, 0
      %v869 = vperm.slane %v741, 0
      %v870 = vperm.slane %v742, 0
      %v871 = vperm.slane %v743, 0
      %v872 = vperm.slane %v744, 0
      %v873 = vperm.slane %v745, 0
      %v874 = vperm.slane %v746, 0
      %v875 = vperm.slane %v747, 0
      %v876 = vperm.slane %v748, 0
      %v877 = vperm.slane %v749, 0
      %v878 = vperm.slane %v750, 0
      %v879 = vperm.slane %v751, 0
      %v880 = vperm.slane %v752, 0
      %v881 = vperm.slane %v753, 0
      %v882 = vperm.slane %v754, 0
      %v883 = vperm.slane %v755, 0
      %v884 = vperm.slane %v756, 0
      %v885 = vperm.slane %v757, 0
      %v886 = vperm.slane %v758, 0
      %v887 = vperm.slane %v759, 0
      %v888 = vperm.slane %v760, 0
      %v889 = vperm.slane %v761, 0
      %v890 = vperm.slane %v762, 0
      %v891 = vperm.slane %v763, 0
      %v892 = vperm.slane %v764, 0
      %v893 = vperm.slane %v765, 0
      %v894 = vperm.slane %v766, 0
      %v895 = vperm.slane %v767, 0
      %v896 = vperm.slane %v768, 0
      %v897 = vperm.slane %v769, 0
      %v898 = vperm.slane %v770, 0
      %v899 = vperm.slane %v771, 0
      %v900 = vperm.slane %v772, 0
      %v901 = vperm.slane %v773, 0
      %v902 = vperm.slane %v774, 0
      %v903 = vperm.slane %v775, 0
      %v904 = vperm.slane %v776, 0
      %v905 = vperm.slane %v777, 0
      %v906 = vperm.slane %v778, 0
      %v907 = vperm.slane %v779, 0
      %v908 = vperm.slane %v780, 0
      %v909 = vperm.slane %v781, 0
      %v910 = vperm.slane %v782, 0
      %v911 = vperm.slane %v783, 0
      %v912 = vperm.slane %v784, 0
      %v913 = vperm.slane %v785, 0
      %v914 = vperm.slane %v786, 0
      %v915 = vperm.slane %v787, 0
      %v916 = vperm.slane %v788, 0
      %v917 = vperm.slane %v789, 0
      %v918 = vperm.slane %v790, 0
      %v919 = vperm.slane %v791, 0
      %v920 = vperm.slane %v792, 0
      %v921 = vperm.slane %v793, 0
      %v922 = vperm.slane %v794, 0
      %v923 = vperm.slane %v795, 0
      %vm924 = vcmask 1041409
      %v925 = vsel %vm924, %v861, %v860
      %vm926 = vcmask 1042434
      %v927 = vsel %vm926, %v862, %v925
      %vm928 = vcmask 1043459
      %v929 = vsel %vm928, %v863, %v927
      %vm930 = vcmask 1044484
      %v931 = vsel %vm930, %v864, %v929
      %vm932 = vcmask 1045509
      %v933 = vsel %vm932, %v865, %v931
      %vm934 = vcmask 1046534
      %v935 = vsel %vm934, %v866, %v933
      %vm936 = vcmask 1047559
      %v937 = vsel %vm936, %v867, %v935
      %v938 = vsel %vm924, %v869, %v868
      %v939 = vsel %vm926, %v870, %v938
      %v940 = vsel %vm928, %v871, %v939
      %v941 = vsel %vm930, %v872, %v940
      %v942 = vsel %vm932, %v873, %v941
      %v943 = vsel %vm934, %v874, %v942
      %v944 = vsel %vm936, %v875, %v943
      %v945 = vsel %vm924, %v877, %v876
      %v946 = vsel %vm926, %v878, %v945
      %v947 = vsel %vm928, %v879, %v946
      %v948 = vsel %vm930, %v880, %v947
      %v949 = vsel %vm932, %v881, %v948
      %v950 = vsel %vm934, %v882, %v949
      %v951 = vsel %vm936, %v883, %v950
      %v952 = vsel %vm924, %v885, %v884
      %v953 = vsel %vm926, %v886, %v952
      %v954 = vsel %vm928, %v887, %v953
      %v955 = vsel %vm930, %v888, %v954
      %v956 = vsel %vm932, %v889, %v955
      %v957 = vsel %vm934, %v890, %v956
      %v958 = vsel %vm936, %v891, %v957
      %v959 = vsel %vm924, %v893, %v892
      %v960 = vsel %vm926, %v894, %v959
      %v961 = vsel %vm928, %v895, %v960
      %v962 = vsel %vm930, %v896, %v961
      %v963 = vsel %vm932, %v897, %v962
      %v964 = vsel %vm934, %v898, %v963
      %v965 = vsel %vm936, %v899, %v964
      %v966 = vsel %vm924, %v901, %v900
      %v967 = vsel %vm926, %v902, %v966
      %v968 = vsel %vm928, %v903, %v967
      %v969 = vsel %vm930, %v904, %v968
      %v970 = vsel %vm932, %v905, %v969
      %v971 = vsel %vm934, %v906, %v970
      %v972 = vsel %vm936, %v907, %v971
      %v973 = vsel %vm924, %v909, %v908
      %v974 = vsel %vm926, %v910, %v973
      %v975 = vsel %vm928, %v911, %v974
      %v976 = vsel %vm930, %v912, %v975
      %v977 = vsel %vm932, %v913, %v976
      %v978 = vsel %vm934, %v914, %v977
      %v979 = vsel %vm936, %v915, %v978
      %v980 = vsel %vm924, %v917, %v916
      %v981 = vsel %vm926, %v918, %v980
      %v982 = vsel %vm928, %v919, %v981
      %v983 = vsel %vm930, %v920, %v982
      %v984 = vsel %vm932, %v921, %v983
      %v985 = vsel %vm934, %v922, %v984
      %v986 = vsel %vm936, %v923, %v985
      %995 = vst.msk [vmem:[%s210] sm:$0xff] %vm379, %v937
      %996 = vst.msk [vmem:[%s210 + $0x8] sm:$0xff] %vm379, %v944
      %997 = vst.msk [vmem:[%s210 + $0x10] sm:$0xff] %vm379, %v951
      %998 = vst.msk [vmem:[%s210 + $0x18] sm:$0xff] %vm379, %v958
      %999 = vst.msk [vmem:[%s210 + $0x20] sm:$0xff] %vm379, %v965
      %1000 = vst.msk [vmem:[%s210 + $0x28] sm:$0xff] %vm379, %v972
      %1001 = vst.msk [vmem:[%s210 + $0x30] sm:$0xff] %vm379, %v979
      %1002 = vst.msk [vmem:[%s210 + $0x38] sm:$0xff] %vm379, %v986
      %p1003 = scmp.lt.s32.totalorder %s16, 1
      %s1004 = scalar_select %p1003, %s16, 1
      %s1005 = smul.addr %s1004, 32
      %s1006 = smul.addr %s1005, 8
      %s1007 = scalar_lea.vmem %s3, %s1006
      %p1008 = scmp.lt.s32.totalorder %s16, 1
      %s1009 = scalar_select %p1008, %s16, 1
      %s1010 = smul.addr %s1009, 8
      %s1011 = smul.addr %s1010, 8
      %s1012 = scalar_lea.vmem %s4, %s1011
      // Predicated region
      $region33: #{contracting_block_forward.5} parent=31 // pred_check
        %p1013 = pneg %p102
      $region34: #{contracting_block_forward.5} parent=31 // pred_check_branch
        %1015 = sbr.rel (%p1013) target = $region36
      $region35: #{contracting_block_forward.5} parent=31 // pred_region
        _
      $region36: #{contracting_block_forward.5} parent=31 // pred_fallthru
        _
      // Predicated region
      $region37: #{contracting_block_forward.5} parent=31 // pred_check
        %p1016 = pneg %p128
      $region38: #{contracting_block_forward.5} parent=31 // pred_check_branch
        %1018 = sbr.rel (%p1016) target = $region40
      $region39: #{contracting_block_forward.5} parent=31 // pred_region
        _
      $region40: #{contracting_block_forward.5} parent=31 // pred_fallthru
        _
    $region32: #{contracting_block_forward.5} parent=5 // pred_fallthru
      _
    %p1019 = scmp.le.s32.totalorder 2, %s11
    // Predicated region
    $region41: #{contracting_block_forward.5} parent=5 // pred_check
      %p1020 = pneg %p1019
    $region42: #{contracting_block_forward.5} parent=5 // pred_check_branch
      %1022 = sbr.rel (%p1020) target = $region44
    $region43: #{contracting_block_forward.5} parent=5 // pred_region
      %s1023 = ssub.s32 %s11, 2
      // Predicated region
      $region45: #{contracting_block_forward.5} parent=43 // pred_check
        %p1024 = pneg %p108
      $region46: #{contracting_block_forward.5} parent=43 // pred_check_branch
        %1026 = sbr.rel (%p1024) target = $region48
      $region47: #{contracting_block_forward.5} parent=43 // pred_region
        %p1027 = scmp.lt.s32.totalorder %s17, 1
        %s1028 = scalar_select %p1027, %s17, 1
        %s1029 = smul.addr %s1028, 32
        %s1030 = smul.addr %s1029, 8
        %s1031 = scalar_lea.vmem %s3, %s1030
      $region48: #{contracting_block_forward.5} parent=43 // pred_fallthru
        _
      // Predicated region
      $region49: #{contracting_block_forward.5} parent=43 // pred_check
        %p1032 = pneg %p134
      $region50: #{contracting_block_forward.5} parent=43 // pred_check_branch
        %1034 = sbr.rel (%p1032) target = $region52
      $region51: #{contracting_block_forward.5} parent=43 // pred_region
        %p1035 = scmp.lt.s32.totalorder %s17, 1
        %s1036 = scalar_select %p1035, %s17, 1
        %s1037 = smul.addr %s1036, 8
        %s1038 = smul.addr %s1037, 8
        %s1039 = scalar_lea.vmem %s4, %s1038
      $region52: #{contracting_block_forward.5} parent=43 // pred_fallthru
        _
    $region44: #{contracting_block_forward.5} parent=5 // pred_fallthru
      _
  $region6: #{contracting_block_forward.5} parent=0 // loop_footer
    %s15 = sadd.s32 1, %s11
  $region7: #{contracting_block_forward.5} parent=0 // loop_footer_branch
    %10 = sbr.rel target = $region3
  $region8: #{contracting_block_forward.5} parent=0 // loop_exit
    _

// kernel: contracting_block_forward.3
$region0: #{contracting_block_forward.3}
  #allocation0 [shape = 'u32[]', space=smem, size = 0x4, offset = 0x4, fixed_abs, tag = 'smem constant byte address 0x4 - core index']
  #allocation1 [shape = 'u32[72,128]{1,0:T(1,128)}', space=vmem, size = 0x9000, scoped, tag = 'internal scratch']
  #allocation2 [shape = 'bf16[18,18,4]{2,1,0:T(8,128)(2,1)}', space=vmem, size = 0x1b000, scoped, tag = 'scratch operand']
  %s0 = inlined_call_operand.vmem [shape: bf16[2,16,16,4], index: 0, kind: input, shape index: {}]
  %s1 = inlined_call_operand.vmem [shape: bf16[9,4,8], index: 1, kind: input, shape index: {}]
  %s2 = inlined_call_operand.vmem [shape: bf16[2,16,16,8], index: 2, kind: output, shape index: {0}]
  %s3 = inlined_call_operand.vmem [shape: f32[2,2,8], index: 3, kind: output, shape index: {1}]
  %4 = xla_tuple %s2, %s3
  %s5 = sld [smem:[#allocation0]]
  $region49: #{contracting_block_forward.3} parent=0
    _
  %s7 = ssub.s32 1, %s5
  %s8 = scalar_select 0, %s7, %s5
  loop: start=0, step=1, limit=4
  $region2: #{contracting_block_forward.3} parent=0 // loop_pre_header
    _
  $region3: #{contracting_block_forward.3} parent=0 // loop_header
    %s10 = sphi 0, %s14
    %p11 = scmp.ge.s32.totalorder %s10, 4
    %s20 = sphi 0, %s22
    %s23 = sphi 0, %s20
    %s24 = sphi 0, %s23
    %s40 = sphi 0, %s24
    %s44 = sphi 0, %s44
    %s46 = sphi 0, %s44
    %s47 = sphi 0, %s46
    %s61 = sphi 0, %s47
    %s67 = sphi 0, %s69
    %s70 = sphi 0, %s67
    %s71 = sphi 0, %s70
    %s87 = sphi 0, %s71
    %s93 = sphi 0, %s95
    %s96 = sphi 0, %s93
    %s97 = sphi 0, %s96
    %s113 = sphi 0, %s97
  $region4: #{contracting_block_forward.3} parent=0 // loop_header_branch
    %13 = sbr.rel (%p11) target = $region8
  $region5: #{contracting_block_forward.3} parent=0 // loop_body
    %s15 = ssub.s32 %s10, 1
    %s16 = ssub.s32 %s10, 2
    %s17 = sadd.s32 %s10, 1
    %s18 = ssub.s32 %s10, %s17
    %p19 = scmp.eq.s32.totalorder %s18, 0
    %s21 = sadd.s32 %s20, 1
    %s22 = scalar_select %p19, %s20, %s21
    %p25 = pneg %p19
    %p26 = scmp.eq.s32.totalorder %s10, 1
    %p27 = por %p25, %p26
    %p28 = scmp.ne.s32.totalorder %s20, %s23
    %p29 = scmp.eq.s32.totalorder %s10, 0
    %p30 = por %p28, %p29
    %p31 = scmp.ne.s32.totalorder %s20, %s23
    %p32 = scmp.eq.s32.totalorder %s15, 1
    %p33 = por %p31, %p32
    %p34 = scmp.ne.s32.totalorder %s23, %s24
    %p35 = scmp.eq.s32.totalorder %s15, 0
    %p36 = por %p34, %p35
    %p37 = scmp.ne.s32.totalorder %s23, %s24
    %p38 = scmp.eq.s32.totalorder %s16, 1
    %p39 = por %p37, %p38
    %p41 = scmp.ne.s32.totalorder %s24, %s40
    %p42 = scmp.eq.s32.totalorder %s16, 0
    %p43 = por %p41, %p42
    %s45 = sadd.s32 %s44, 1
    %p48 = scmp.eq.s32.totalorder %s10, 1
    %p49 = scmp.ne.s32.totalorder %s44, %s46
    %p50 = scmp.eq.s32.totalorder %s10, 0
    %p51 = por %p49, %p50
    %p52 = scmp.ne.s32.totalorder %s44, %s46
    %p53 = scmp.eq.s32.totalorder %s15, 1
    %p54 = por %p52, %p53
    %p55 = scmp.ne.s32.totalorder %s46, %s47
    %p56 = scmp.eq.s32.totalorder %s15, 0
    %p57 = por %p55, %p56
    %p58 = scmp.ne.s32.totalorder %s46, %s47
    %p59 = scmp.eq.s32.totalorder %s16, 1
    %p60 = por %p58, %p59
    %p62 = scmp.ne.s32.totalorder %s47, %s61
    %p63 = scmp.eq.s32.totalorder %s16, 0
    %p64 = por %p62, %p63
    %s65 = ssub.s32 %s10, %s17
    %p66 = scmp.eq.s32.totalorder %s65, 0
    %s68 = sadd.s32 %s67, 1
    %s69 = scalar_select %p66, %s67, %s68
    %p72 = pneg %p66
    %p73 = scmp.eq.s32.totalorder %s10, 1
    %p74 = por %p72, %p73
    %p75 = scmp.ne.s32.totalorder %s67, %s70
    %p76 = scmp.eq.s32.totalorder %s10, 0
    %p77 = por %p75, %p76
    %p78 = scmp.ne.s32.totalorder %s67, %s70
    %p79 = scmp.eq.s32.totalorder %s15, 1
    %p80 = por %p78, %p79
    %p81 = scmp.ne.s32.totalorder %s70, %s71
    %p82 = scmp.eq.s32.totalorder %s15, 0
    %p83 = por %p81, %p82
    %p84 = scmp.ne.s32.totalorder %s70, %s71
    %p85 = scmp.eq.s32.totalorder %s16, 1
    %p86 = por %p84, %p85
    %p88 = scmp.ne.s32.totalorder %s71, %s87
    %p89 = scmp.eq.s32.totalorder %s16, 0
    %p90 = por %p88, %p89
    %s91 = ssub.s32 %s10, %s17
    %p92 = scmp.eq.s32.totalorder %s91, 0
    %s94 = sadd.s32 %s93, 1
    %s95 = scalar_select %p92, %s93, %s94
    %p98 = pneg %p92
    %p99 = scmp.eq.s32.totalorder %s10, 1
    %p100 = por %p98, %p99
    %p101 = scmp.ne.s32.totalorder %s93, %s96
    %p102 = scmp.eq.s32.totalorder %s10, 0
    %p103 = por %p101, %p102
    %p104 = scmp.ne.s32.totalorder %s93, %s96
    %p105 = scmp.eq.s32.totalorder %s15, 1
    %p106 = por %p104, %p105
    %p107 = scmp.ne.s32.totalorder %s96, %s97
    %p108 = scmp.eq.s32.totalorder %s15, 0
    %p109 = por %p107, %p108
    %p110 = scmp.ne.s32.totalorder %s96, %s97
    %p111 = scmp.eq.s32.totalorder %s16, 1
    %p112 = por %p110, %p111
    %p114 = scmp.ne.s32.totalorder %s97, %s113
    %p115 = scmp.eq.s32.totalorder %s16, 0
    %p116 = por %p114, %p115
    %p117 = scmp.le.s32.totalorder 1, %s10
    %p118 = scmp.lt.s32.totalorder %s10, 3
    %p119 = pnand %p117, %p118
    %p120 = pneg %p119
    // Predicated region
    $region9: #{contracting_block_forward.3} parent=5 // pred_check
      _
    $region10: #{contracting_block_forward.3} parent=5 // pred_check_branch
      %122 = sbr.rel (%p119) target = $region12
    $region11: #{contracting_block_forward.3} parent=5 // pred_region
      %s123 = ssub.s32 %s10, 1
      // Predicated region
      $region13: #{contracting_block_forward.3} parent=11 // pred_check
        %p124 = pneg %p57
      $region14: #{contracting_block_forward.3} parent=11 // pred_check_branch
        %126 = sbr.rel (%p124) target = $region16
      $region15: #{contracting_block_forward.3} parent=11 // pred_region
        _
      $region16: #{contracting_block_forward.3} parent=11 // pred_fallthru
        _
    $region12: #{contracting_block_forward.3} parent=5 // pred_fallthru
      _
    %p127 = scmp.lt.s32.totalorder %s10, 2
    // Predicated region
    $region17: #{contracting_block_forward.3} parent=5 // pred_check
      %p128 = pneg %p127
    $region18: #{contracting_block_forward.3} parent=5 // pred_check_branch
      %130 = sbr.rel (%p128) target = $region20
    $region19: #{contracting_block_forward.3} parent=5 // pred_region
      // Predicated region
      $region21: #{contracting_block_forward.3} parent=19 // pred_check
        %p131 = pneg %p30
      $region22: #{contracting_block_forward.3} parent=19 // pred_check_branch
        %133 = sbr.rel (%p131) target = $region24
      $region23: #{contracting_block_forward.3} parent=19 // pred_region
        %p134 = scmp.lt.s32.totalorder %s10, 1
        %s135 = scalar_select %p134, %s10, 1
        %s136 = smul.addr %s135, 32
        %s137 = smul.addr %s136, 4
        %s138 = scalar_lea.vmem %s0, %s137
      $region24: #{contracting_block_forward.3} parent=19 // pred_fallthru
        _
    $region20: #{contracting_block_forward.3} parent=5 // pred_fallthru
      _
    %p139 = scmp.le.s32.totalorder 1, %s10
    %p140 = scmp.lt.s32.totalorder %s10, 3
    %p141 = pnand %p139, %p140
    %p142 = pneg %p141
    // Predicated region
    $region25: #{contracting_block_forward.3} parent=5 // pred_check
      _
    $region26: #{contracting_block_forward.3} parent=5 // pred_check_branch
      %144 = sbr.rel (%p141) target = $region28
    $region27: #{contracting_block_forward.3} parent=5 // pred_region
      %s145 = ssub.s32 %s10, 1
      %p146 = scmp.lt.s32.totalorder %s15, 1
      %s147 = scalar_select %p146, %s15, 1
      %s148 = smul.addr %s147, 32
      %s149 = smul.addr %s148, 4
      %s150 = scalar_lea.vmem %s0, %s149
      %p151 = pneg %p36
      %p152 = pneg %p33
      %p153 = pneg %p57
      %p154 = pneg %p54
      %p155 = pneg %p83
      %p156 = pneg %p80
      %p157 = scmp.lt.s32.totalorder %s15, 1
      %s158 = scalar_select %p157, %s15, 1
      %s159 = smul.addr %s158, 32
      %s160 = smul.addr %s159, 4
      %s161 = scalar_lea.vmem %s2, %s160
      %p162 = pneg %p109
      %p163 = pneg %p106
      %p164 = scmp.lt.s32.totalorder %s15, 1
      %s165 = scalar_select %p164, %s15, 1
      %s166 = smul.addr %s165, 2
      %s167 = scalar_lea.vmem %s3, %s166
      %p168 = scmp.lt.s32.totalorder %s15, 1
      %s169 = scalar_select %p168, %s15, 1
      %s170 = smul.addr %s169, 32
      %s171 = smul.addr %s170, 4
      %s172 = scalar_lea.vmem %s0, %s171
      %p173 = scmp.lt.s32.totalorder %s15, 1
      %s174 = scalar_select %p173, %s15, 1
      %s175 = smul.addr %s174, 32
      %s176 = smul.addr %s175, 4
      %s177 = scalar_lea.vmem %s2, %s176
      %p178 = scmp.lt.s32.totalorder %s15, 1
      %s179 = scalar_select %p178, %s15, 1
      %s180 = smul.addr %s179, 2
      %s181 = scalar_lea.vmem %s3, %s180
      %v183 = vld [vmem:[%s172] sm:$0xf]
      %v184 = vld [vmem:[%s172 + $0x4] sm:$0xf]
      %v185 = vld [vmem:[%s172 + $0x8] sm:$0xf]
      %v186 = vld [vmem:[%s172 + $0xc] sm:$0xf]
      %v187 = vld [vmem:[%s172 + $0x10] sm:$0xf]
      %v188 = vld [vmem:[%s172 + $0x14] sm:$0xf]
      %v189 = vld [vmem:[%s172 + $0x18] sm:$0xf]
      %v190 = vld [vmem:[%s172 + $0x1c] sm:$0xf]
      %v191 = vld [vmem:[%s172 + $0x20] sm:$0xf]
      %v192 = vld [vmem:[%s172 + $0x24] sm:$0xf]
      %v193 = vld [vmem:[%s172 + $0x28] sm:$0xf]
      %v194 = vld [vmem:[%s172 + $0x2c] sm:$0xf]
      %v195 = vld [vmem:[%s172 + $0x30] sm:$0xf]
      %v196 = vld [vmem:[%s172 + $0x34] sm:$0xf]
      %v197 = vld [vmem:[%s172 + $0x38] sm:$0xf]
      %v198 = vld [vmem:[%s172 + $0x3c] sm:$0xf]
      %v199 = vld [vmem:[%s172 + $0x40] sm:$0xf]
      %v200 = vld [vmem:[%s172 + $0x44] sm:$0xf]
      %v201 = vld [vmem:[%s172 + $0x48] sm:$0xf]
      %v202 = vld [vmem:[%s172 + $0x4c] sm:$0xf]
      %v203 = vld [vmem:[%s172 + $0x50] sm:$0xf]
      %v204 = vld [vmem:[%s172 + $0x54] sm:$0xf]
      %v205 = vld [vmem:[%s172 + $0x58] sm:$0xf]
      %v206 = vld [vmem:[%s172 + $0x5c] sm:$0xf]
      %v207 = vld [vmem:[%s172 + $0x60] sm:$0xf]
      %v208 = vld [vmem:[%s172 + $0x64] sm:$0xf]
      %v209 = vld [vmem:[%s172 + $0x68] sm:$0xf]
      %v210 = vld [vmem:[%s172 + $0x6c] sm:$0xf]
      %v211 = vld [vmem:[%s172 + $0x70] sm:$0xf]
      %v212 = vld [vmem:[%s172 + $0x74] sm:$0xf]
      %v213 = vld [vmem:[%s172 + $0x78] sm:$0xf]
      %v214 = vld [vmem:[%s172 + $0x7c] sm:$0xf]
      %vm215 = vcmask 27648
      %216 = vst.msk [vmem:[#allocation2] sm:$0xf] %vm215, 0
      %217 = vst.msk [vmem:[#allocation2 + $0x4] sm:$0xf] %vm215, 0
      %vm218 = vcmask 24576
      %219 = vst.msk [vmem:[#allocation2 + $0x8] sm:$0x1] %vm218, 0
      %s220 = scalar_lea.vmem [#allocation2], 204
      %221 = vst.msk [vmem:[%s220] sm:$0xf] %vm215, 0
      %222 = vst.msk [vmem:[%s220 + $0x4] sm:$0xf] %vm215, 0
      %223 = vst.msk [vmem:[%s220 + $0x8] sm:$0x1] %vm218, 0
      %s224 = scalar_lea.vmem [#allocation2], 12
      %vm225 = vcmask 24576
      %vm226 = vsmask.f32 256
      %vm227 = vmand %vm225, %vm226
      %v228 = vld [vmem:[%s224] sm:$0x1]
      %v229 = vsel %vm227, 0, %v228
      %230 = vst [vmem:[%s224] sm:$0x1] %v229
      %v231 = vld [vmem:[%s224 + $0xc] sm:$0x1]
      %v232 = vsel %vm227, 0, %v231
      %233 = vst [vmem:[%s224 + $0xc] sm:$0x1] %v232
      %v234 = vld [vmem:[%s224 + $0x18] sm:$0x1]
      %v235 = vsel %vm227, 0, %v234
      %236 = vst [vmem:[%s224 + $0x18] sm:$0x1] %v235
      %v237 = vld [vmem:[%s224 + $0x24] sm:$0x1]
      %v238 = vsel %vm227, 0, %v237
      %239 = vst [vmem:[%s224 + $0x24] sm:$0x1] %v238
      %v240 = vld [vmem:[%s224 + $0x30] sm:$0x1]
      %v241 = vsel %vm227, 0, %v240
      %242 = vst [vmem:[%s224 + $0x30] sm:$0x1] %v241
      %v243 = vld [vmem:[%s224 + $0x3c] sm:$0x1]
      %v244 = vsel %vm227, 0, %v243
      %245 = vst [vmem:[%s224 + $0x3c] sm:$0x1] %v244
      %v246 = vld [vmem:[%s224 + $0x48] sm:$0x1]
      %v247 = vsel %vm227, 0, %v246
      %248 = vst [vmem:[%s224 + $0x48] sm:$0x1] %v247
      %v249 = vld [vmem:[%s224 + $0x54] sm:$0x1]
      %v250 = vsel %vm227, 0, %v249
      %251 = vst [vmem:[%s224 + $0x54] sm:$0x1] %v250
      %v252 = vld [vmem:[%s224 + $0x60] sm:$0x1]
      %v253 = vsel %vm227, 0, %v252
      %254 = vst [vmem:[%s224 + $0x60] sm:$0x1] %v253
      %v255 = vld [vmem:[%s224 + $0x6c] sm:$0x1]
      %v256 = vsel %vm227, 0, %v255
      %257 = vst [vmem:[%s224 + $0x6c] sm:$0x1] %v256
      %v258 = vld [vmem:[%s224 + $0x78] sm:$0x1]
      %v259 = vsel %vm227, 0, %v258
      %260 = vst [vmem:[%s224 + $0x78] sm:$0x1] %v259
      %v261 = vld [vmem:[%s224 + $0x84] sm:$0x1]
      %v262 = vsel %vm227, 0, %v261
      %263 = vst [vmem:[%s224 + $0x84] sm:$0x1] %v262
      %v264 = vld [vmem:[%s224 + $0x90] sm:$0x1]
      %v265 = vsel %vm227, 0, %v264
      %266 = vst [vmem:[%s224 + $0x90] sm:$0x1] %v265
      %v267 = vld [vmem:[%s224 + $0x9c] sm:$0x1]
      %v268 = vsel %vm227, 0, %v267
      %269 = vst [vmem:[%s224 + $0x9c] sm:$0x1] %v268
      %v270 = vld [vmem:[%s224 + $0xa8] sm:$0x1]
      %v271 = vsel %vm227, 0, %v270
      %272 = vst [vmem:[%s224 + $0xa8] sm:$0x1] %v271
      %v273 = vld [vmem:[%s224 + $0xb4] sm:$0x1]
      %v274 = vsel %vm227, 0, %v273
      %275 = vst [vmem:[%s224 + $0xb4] sm:$0x1] %v274
      %vm276 = vsmask.f32 7938
      %vm277 = vmand %vm225, %vm276
      %v278 = vld [vmem:[%s224 + $0x8] sm:$0x1]
      %v279 = vsel %vm277, 0, %v278
      %280 = vst [vmem:[%s224 + $0x8] sm:$0x1] %v279
      %v281 = vld [vmem:[%s224 + $0x14] sm:$0x1]
      %v282 = vsel %vm277, 0, %v281
      %283 = vst [vmem:[%s224 + $0x14] sm:$0x1] %v282
      %v284 = vld [vmem:[%s224 + $0x20] sm:$0x1]
      %v285 = vsel %vm277, 0, %v284
      %286 = vst [vmem:[%s224 + $0x20] sm:$0x1] %v285
      %v287 = vld [vmem:[%s224 + $0x2c] sm:$0x1]
      %v288 = vsel %vm277, 0, %v287
      %289 = vst [vmem:[%s224 + $0x2c] sm:$0x1] %v288
      %v290 = vld [vmem:[%s224 + $0x38] sm:$0x1]
      %v291 = vsel %vm277, 0, %v290
      %292 = vst [vmem:[%s224 + $0x38] sm:$0x1] %v291
      %v293 = vld [vmem:[%s224 + $0x44] sm:$0x1]
      %v294 = vsel %vm277, 0, %v293
      %295 = vst [vmem:[%s224 + $0x44] sm:$0x1] %v294
      %v296 = vld [vmem:[%s224 + $0x50] sm:$0x1]
      %v297 = vsel %vm277, 0, %v296
      %298 = vst [vmem:[%s224 + $0x50] sm:$0x1] %v297
      %v299 = vld [vmem:[%s224 + $0x5c] sm:$0x1]
      %v300 = vsel %vm277, 0, %v299
      %301 = vst [vmem:[%s224 + $0x5c] sm:$0x1] %v300
      %v302 = vld [vmem:[%s224 + $0x68] sm:$0x1]
      %v303 = vsel %vm277, 0, %v302
      %304 = vst [vmem:[%s224 + $0x68] sm:$0x1] %v303
      %v305 = vld [vmem:[%s224 + $0x74] sm:$0x1]
      %v306 = vsel %vm277, 0, %v305
      %307 = vst [vmem:[%s224 + $0x74] sm:$0x1] %v306
      %v308 = vld [vmem:[%s224 + $0x80] sm:$0x1]
      %v309 = vsel %vm277, 0, %v308
      %310 = vst [vmem:[%s224 + $0x80] sm:$0x1] %v309
      %v311 = vld [vmem:[%s224 + $0x8c] sm:$0x1]
      %v312 = vsel %vm277, 0, %v311
      %313 = vst [vmem:[%s224 + $0x8c] sm:$0x1] %v312
      %v314 = vld [vmem:[%s224 + $0x98] sm:$0x1]
      %v315 = vsel %vm277, 0, %v314
      %316 = vst [vmem:[%s224 + $0x98] sm:$0x1] %v315
      %v317 = vld [vmem:[%s224 + $0xa4] sm:$0x1]
      %v318 = vsel %vm277, 0, %v317
      %319 = vst [vmem:[%s224 + $0xa4] sm:$0x1] %v318
      %v320 = vld [vmem:[%s224 + $0xb0] sm:$0x1]
      %v321 = vsel %vm277, 0, %v320
      %322 = vst [vmem:[%s224 + $0xb0] sm:$0x1] %v321
      %v323 = vld [vmem:[%s224 + $0xbc] sm:$0x1]
      %v324 = vsel %vm277, 0, %v323
      %325 = vst [vmem:[%s224 + $0xbc] sm:$0x1] %v324
      %vm326 = vsmask.f32 4368
      %vm327 = vmor %vm226, %vm326
      %v329 = vshrl.u32 %v183, 16
      %v331 = vrot.slane %v329, 7
      %v332 = vshll.u32 %v183, 16
      %v334 = vor.u32 %v331, %v332
      %v335 = vrot.slane %v331, 4
      %v337 = vshrl.u32 %v184, 16
      %v339 = vrot.slane %v337, 7
      %v340 = vshll.u32 %v184, 16
      %v342 = vor.u32 %v339, %v340
      %v343 = vsel %vm327, %v335, %v342
      %v344 = vrot.slane %v339, 4
      %v346 = vshrl.u32 %v185, 16
      %v348 = vrot.slane %v346, 7
      %v349 = vshll.u32 %v185, 16
      %v351 = vor.u32 %v348, %v349
      %v352 = vrot.slane %v348, 4
      %v354 = vshrl.u32 %v186, 16
      %v356 = vrot.slane %v354, 7
      %v357 = vshll.u32 %v186, 16
      %v359 = vor.u32 %v356, %v357
      %v360 = vsel %vm327, %v352, %v359
      %v361 = vrot.slane %v356, 4
      %v363 = vshrl.u32 %v187, 16
      %v365 = vrot.slane %v363, 7
      %v366 = vshll.u32 %v187, 16
      %v368 = vor.u32 %v365, %v366
      %v369 = vrot.slane %v365, 4
      %v371 = vshrl.u32 %v188, 16
      %v373 = vrot.slane %v371, 7
      %v374 = vshll.u32 %v188, 16
      %v376 = vor.u32 %v373, %v374
      %v377 = vsel %vm327, %v369, %v376
      %v378 = vrot.slane %v373, 4
      %v380 = vshrl.u32 %v189, 16
      %v382 = vrot.slane %v380, 7
      %v383 = vshll.u32 %v189, 16
      %v385 = vor.u32 %v382, %v383
      %v386 = vrot.slane %v382, 4
      %v388 = vshrl.u32 %v190, 16
      %v390 = vrot.slane %v388, 7
      %v391 = vshll.u32 %v190, 16
      %v393 = vor.u32 %v390, %v391
      %v394 = vsel %vm327, %v386, %v393
      %v395 = vrot.slane %v390, 4
      %v397 = vshrl.u32 %v191, 16
      %v399 = vrot.slane %v397, 7
      %v400 = vshll.u32 %v191, 16
      %v402 = vor.u32 %v399, %v400
      %v403 = vrot.slane %v399, 4
      %v405 = vshrl.u32 %v192, 16
      %v407 = vrot.slane %v405, 7
      %v408 = vshll.u32 %v192, 16
      %v410 = vor.u32 %v407, %v408
      %v411 = vsel %vm327, %v403, %v410
      %v412 = vrot.slane %v407, 4
      %v414 = vshrl.u32 %v193, 16
      %v416 = vrot.slane %v414, 7
      %v417 = vshll.u32 %v193, 16
      %v419 = vor.u32 %v416, %v417
      %v420 = vrot.slane %v416, 4
      %v422 = vshrl.u32 %v194, 16
      %v424 = vrot.slane %v422, 7
      %v425 = vshll.u32 %v194, 16
      %v427 = vor.u32 %v424, %v425
      %v428 = vsel %vm327, %v420, %v427
      %v429 = vrot.slane %v424, 4
      %v431 = vshrl.u32 %v195, 16
      %v433 = vrot.slane %v431, 7
      %v434 = vshll.u32 %v195, 16
      %v436 = vor.u32 %v433, %v434
      %v437 = vrot.slane %v433, 4
      %v439 = vshrl.u32 %v196, 16
      %v441 = vrot.slane %v439, 7
      %v442 = vshll.u32 %v196, 16
      %v444 = vor.u32 %v441, %v442
      %v445 = vsel %vm327, %v437, %v444
      %v446 = vrot.slane %v441, 4
      %v448 = vshrl.u32 %v197, 16
      %v450 = vrot.slane %v448, 7
      %v451 = vshll.u32 %v197, 16
      %v453 = vor.u32 %v450, %v451
      %v454 = vrot.slane %v450, 4
      %v456 = vshrl.u32 %v198, 16
      %v458 = vrot.slane %v456, 7
      %v459 = vshll.u32 %v198, 16
      %v461 = vor.u32 %v458, %v459
      %v462 = vsel %vm327, %v454, %v461
      %v463 = vrot.slane %v458, 4
      %v465 = vshrl.u32 %v199, 16
      %v467 = vrot.slane %v465, 7
      %v468 = vshll.u32 %v199, 16
      %v470 = vor.u32 %v467, %v468
      %v471 = vrot.slane %v467, 4
      %v473 = vshrl.u32 %v200, 16
      %v475 = vrot.slane %v473, 7
      %v476 = vshll.u32 %v200, 16
      %v478 = vor.u32 %v475, %v476
      %v479 = vsel %vm327, %v471, %v478
      %v480 = vrot.slane %v475, 4
      %v482 = vshrl.u32 %v201, 16
      %v484 = vrot.slane %v482, 7
      %v485 = vshll.u32 %v201, 16
      %v487 = vor.u32 %v484, %v485
      %v488 = vrot.slane %v484, 4
      %v490 = vshrl.u32 %v202, 16
      %v492 = vrot.slane %v490, 7
      %v493 = vshll.u32 %v202, 16
      %v495 = vor.u32 %v492, %v493
      %v496 = vsel %vm327, %v488, %v495
      %v497 = vrot.slane %v492, 4
      %v499 = vshrl.u32 %v203, 16
      %v501 = vrot.slane %v499, 7
      %v502 = vshll.u32 %v203, 16
      %v504 = vor.u32 %v501, %v502
      %v505 = vrot.slane %v501, 4
      %v507 = vshrl.u32 %v204, 16
      %v509 = vrot.slane %v507, 7
      %v510 = vshll.u32 %v204, 16
      %v512 = vor.u32 %v509, %v510
      %v513 = vsel %vm327, %v505, %v512
      %v514 = vrot.slane %v509, 4
      %v516 = vshrl.u32 %v205, 16
      %v518 = vrot.slane %v516, 7
      %v519 = vshll.u32 %v205, 16
      %v521 = vor.u32 %v518, %v519
      %v522 = vrot.slane %v518, 4
      %v524 = vshrl.u32 %v206, 16
      %v526 = vrot.slane %v524, 7
      %v527 = vshll.u32 %v206, 16
      %v529 = vor.u32 %v526, %v527
      %v530 = vsel %vm327, %v522, %v529
      %v531 = vrot.slane %v526, 4
      %v533 = vshrl.u32 %v207, 16
      %v535 = vrot.slane %v533, 7
      %v536 = vshll.u32 %v207, 16
      %v538 = vor.u32 %v535, %v536
      %v539 = vrot.slane %v535, 4
      %v541 = vshrl.u32 %v208, 16
      %v543 = vrot.slane %v541, 7
      %v544 = vshll.u32 %v208, 16
      %v546 = vor.u32 %v543, %v544
      %v547 = vsel %vm327, %v539, %v546
      %v548 = vrot.slane %v543, 4
      %v550 = vshrl.u32 %v209, 16
      %v552 = vrot.slane %v550, 7
      %v553 = vshll.u32 %v209, 16
      %v555 = vor.u32 %v552, %v553
      %v556 = vrot.slane %v552, 4
      %v558 = vshrl.u32 %v210, 16
      %v560 = vrot.slane %v558, 7
      %v561 = vshll.u32 %v210, 16
      %v563 = vor.u32 %v560, %v561
      %v564 = vsel %vm327, %v556, %v563
      %v565 = vrot.slane %v560, 4
      %v567 = vshrl.u32 %v211, 16
      %v569 = vrot.slane %v567, 7
      %v570 = vshll.u32 %v211, 16
      %v572 = vor.u32 %v569, %v570
      %v573 = vrot.slane %v569, 4
      %v575 = vshrl.u32 %v212, 16
      %v577 = vrot.slane %v575, 7
      %v578 = vshll.u32 %v212, 16
      %v580 = vor.u32 %v577, %v578
      %v581 = vsel %vm327, %v573, %v580
      %v582 = vrot.slane %v577, 4
      %v584 = vshrl.u32 %v213, 16
      %v586 = vrot.slane %v584, 7
      %v587 = vshll.u32 %v213, 16
      %v589 = vor.u32 %v586, %v587
      %v590 = vrot.slane %v586, 4
      %v592 = vshrl.u32 %v214, 16
      %v594 = vrot.slane %v592, 7
      %v595 = vshll.u32 %v214, 16
      %v597 = vor.u32 %v594, %v595
      %v598 = vsel %vm327, %v590, %v597
      %v599 = vrot.slane %v594, 4
      %vm648 = vcmask 27648
      %vm649 = vmand %vm648, %vm276
      %v650 = vld [vmem:[%s224] sm:$0xf]
      %v651 = vsel %vm649, %v334, %v650
      %652 = vst [vmem:[%s224] sm:$0xf] %v651
      %653 = vst.msk [vmem:[%s224 + $0x4] sm:$0xf] %vm215, %v343
      %v654 = vld [vmem:[%s224 + $0x8] sm:$0x1]
      %v655 = vsel %vm227, %v344, %v654
      %656 = vst [vmem:[%s224 + $0x8] sm:$0x1] %v655
      %v657 = vld [vmem:[%s224 + $0xc] sm:$0xf]
      %v658 = vsel %vm649, %v351, %v657
      %659 = vst [vmem:[%s224 + $0xc] sm:$0xf] %v658
      %660 = vst.msk [vmem:[%s224 + $0x10] sm:$0xf] %vm215, %v360
      %v661 = vld [vmem:[%s224 + $0x14] sm:$0x1]
      %v662 = vsel %vm227, %v361, %v661
      %663 = vst [vmem:[%s224 + $0x14] sm:$0x1] %v662
      %v664 = vld [vmem:[%s224 + $0x18] sm:$0xf]
      %v665 = vsel %vm649, %v368, %v664
      %666 = vst [vmem:[%s224 + $0x18] sm:$0xf] %v665
      %667 = vst.msk [vmem:[%s224 + $0x1c] sm:$0xf] %vm215, %v377
      %v668 = vld [vmem:[%s224 + $0x20] sm:$0x1]
      %v669 = vsel %vm227, %v378, %v668
      %670 = vst [vmem:[%s224 + $0x20] sm:$0x1] %v669
      %v671 = vld [vmem:[%s224 + $0x24] sm:$0xf]
      %v672 = vsel %vm649, %v385, %v671
      %673 = vst [vmem:[%s224 + $0x24] sm:$0xf] %v672
      %674 = vst.msk [vmem:[%s224 + $0x28] sm:$0xf] %vm215, %v394
      %v675 = vld [vmem:[%s224 + $0x2c] sm:$0x1]
      %v676 = vsel %vm227, %v395, %v675
      %677 = vst [vmem:[%s224 + $0x2c] sm:$0x1] %v676
      %v678 = vld [vmem:[%s224 + $0x30] sm:$0xf]
      %v679 = vsel %vm649, %v402, %v678
      %680 = vst [vmem:[%s224 + $0x30] sm:$0xf] %v679
      %681 = vst.msk [vmem:[%s224 + $0x34] sm:$0xf] %vm215, %v411
      %v682 = vld [vmem:[%s224 + $0x38] sm:$0x1]
      %v683 = vsel %vm227, %v412, %v682
      %684 = vst [vmem:[%s224 + $0x38] sm:$0x1] %v683
      %v685 = vld [vmem:[%s224 + $0x3c] sm:$0xf]
      %v686 = vsel %vm649, %v419, %v685
      %687 = vst [vmem:[%s224 + $0x3c] sm:$0xf] %v686
      %688 = vst.msk [vmem:[%s224 + $0x40] sm:$0xf] %vm215, %v428
      %v689 = vld [vmem:[%s224 + $0x44] sm:$0x1]
      %v690 = vsel %vm227, %v429, %v689
      %691 = vst [vmem:[%s224 + $0x44] sm:$0x1] %v690
      %v692 = vld [vmem:[%s224 + $0x48] sm:$0xf]
      %v693 = vsel %vm649, %v436, %v692
      %694 = vst [vmem:[%s224 + $0x48] sm:$0xf] %v693
      %695 = vst.msk [vmem:[%s224 + $0x4c] sm:$0xf] %vm215, %v445
      %v696 = vld [vmem:[%s224 + $0x50] sm:$0x1]
      %v697 = vsel %vm227, %v446, %v696
      %698 = vst [vmem:[%s224 + $0x50] sm:$0x1] %v697
      %v699 = vld [vmem:[%s224 + $0x54] sm:$0xf]
      %v700 = vsel %vm649, %v453, %v699
      %701 = vst [vmem:[%s224 + $0x54] sm:$0xf] %v700
      %702 = vst.msk [vmem:[%s224 + $0x58] sm:$0xf] %vm215, %v462
      %v703 = vld [vmem:[%s224 + $0x5c] sm:$0x1]
      %v704 = vsel %vm227, %v463, %v703
      %705 = vst [vmem:[%s224 + $0x5c] sm:$0x1] %v704
      %v706 = vld [vmem:[%s224 + $0x60] sm:$0xf]
      %v707 = vsel %vm649, %v470, %v706
      %708 = vst [vmem:[%s224 + $0x60] sm:$0xf] %v707
      %709 = vst.msk [vmem:[%s224 + $0x64] sm:$0xf] %vm215, %v479
      %v710 = vld [vmem:[%s224 + $0x68] sm:$0x1]
      %v711 = vsel %vm227, %v480, %v710
      %712 = vst [vmem:[%s224 + $0x68] sm:$0x1] %v711
      %v713 = vld [vmem:[%s224 + $0x6c] sm:$0xf]
      %v714 = vsel %vm649, %v487, %v713
      %715 = vst [vmem:[%s224 + $0x6c] sm:$0xf] %v714
      %716 = vst.msk [vmem:[%s224 + $0x70] sm:$0xf] %vm215, %v496
      %v717 = vld [vmem:[%s224 + $0x74] sm:$0x1]
      %v718 = vsel %vm227, %v497, %v717
      %719 = vst [vmem:[%s224 + $0x74] sm:$0x1] %v718
      %v720 = vld [vmem:[%s224 + $0x78] sm:$0xf]
      %v721 = vsel %vm649, %v504, %v720
      %722 = vst [vmem:[%s224 + $0x78] sm:$0xf] %v721
      %723 = vst.msk [vmem:[%s224 + $0x7c] sm:$0xf] %vm215, %v513
      %v724 = vld [vmem:[%s224 + $0x80] sm:$0x1]
      %v725 = vsel %vm227, %v514, %v724
      %726 = vst [vmem:[%s224 + $0x80] sm:$0x1] %v725
      %v727 = vld [vmem:[%s224 + $0x84] sm:$0xf]
      %v728 = vsel %vm649, %v521, %v727
      %729 = vst [vmem:[%s224 + $0x84] sm:$0xf] %v728
      %730 = vst.msk [vmem:[%s224 + $0x88] sm:$0xf] %vm215, %v530
      %v731 = vld [vmem:[%s224 + $0x8c] sm:$0x1]
      %v732 = vsel %vm227, %v531, %v731
      %733 = vst [vmem:[%s224 + $0x8c] sm:$0x1] %v732
      %v734 = vld [vmem:[%s224 + $0x90] sm:$0xf]
      %v735 = vsel %vm649, %v538, %v734
      %736 = vst [vmem:[%s224 + $0x90] sm:$0xf] %v735
      %737 = vst.msk [vmem:[%s224 + $0x94] sm:$0xf] %vm215, %v547
      %v738 = vld [vmem:[%s224 + $0x98] sm:$0x1]
      %v739 = vsel %vm227, %v548, %v738
      %740 = vst [vmem:[%s224 + $0x98] sm:$0x1] %v739
      %v741 = vld [vmem:[%s224 + $0x9c] sm:$0xf]
      %v742 = vsel %vm649, %v555, %v741
      %743 = vst [vmem:[%s224 + $0x9c] sm:$0xf] %v742
      %744 = vst.msk [vmem:[%s224 + $0xa0] sm:$0xf] %vm215, %v564
      %v745 = vld [vmem:[%s224 + $0xa4] sm:$0x1]
      %v746 = vsel %vm227, %v565, %v745
      %747 = vst [vmem:[%s224 + $0xa4] sm:$0x1] %v746
      %v748 = vld [vmem:[%s224 + $0xa8] sm:$0xf]
      %v749 = vsel %vm649, %v572, %v748
      %750 = vst [vmem:[%s224 + $0xa8] sm:$0xf] %v749
      %751 = vst.msk [vmem:[%s224 + $0xac] sm:$0xf] %vm215, %v581
      %v752 = vld [vmem:[%s224 + $0xb0] sm:$0x1]
      %v753 = vsel %vm227, %v582, %v752
      %754 = vst [vmem:[%s224 + $0xb0] sm:$0x1] %v753
      %v755 = vld [vmem:[%s224 + $0xb4] sm:$0xf]
      %v756 = vsel %vm649, %v589, %v755
      %757 = vst [vmem:[%s224 + $0xb4] sm:$0xf] %v756
      %758 = vst.msk [vmem:[%s224 + $0xb8] sm:$0xf] %vm215, %v598
      %v759 = vld [vmem:[%s224 + $0xbc] sm:$0x1]
      %v760 = vsel %vm227, %v599, %v759
      %761 = vst [vmem:[%s224 + $0xbc] sm:$0x1] %v760
      %v762 = vld [vmem:[#allocation2] sm:$0xf]
      %v763 = vld [vmem:[#allocation2 + $0x4] sm:$0xf]
      %v764 = vld [vmem:[#allocation2 + $0xc] sm:$0xf]
      %v765 = vld [vmem:[#allocation2 + $0x10] sm:$0xf]
      %v766 = vld [vmem:[#allocation2 + $0x18] sm:$0xf]
      %v767 = vld [vmem:[#allocation2 + $0x1c] sm:$0xf]
      %v768 = vld [vmem:[#allocation2 + $0x24] sm:$0xf]
      %v769 = vld [vmem:[#allocation2 + $0x28] sm:$0xf]
      %v770 = vld [vmem:[#allocation2 + $0x30] sm:$0xf]
      %v771 = vld [vmem:[#allocation2 + $0x34] sm:$0xf]
      %v772 = vld [vmem:[#allocation2 + $0x3c] sm:$0xf]
      %v773 = vld [vmem:[#allocation2 + $0x40] sm:$0xf]
      %v774 = vld [vmem:[#allocation2 + $0x48] sm:$0xf]
      %v775 = vld [vmem:[#allocation2 + $0x4c] sm:$0xf]
      %v776 = vld [vmem:[#allocation2 + $0x54] sm:$0xf]
      %v777 = vld [vmem:[#allocation2 + $0x58] sm:$0xf]
      %v778 = vld [vmem:[#allocation2 + $0x60] sm:$0xf]
      %v779 = vld [vmem:[#allocation2 + $0x64] sm:$0xf]
      %v780 = vld [vmem:[#allocation2 + $0x6c] sm:$0xf]
      %v781 = vld [vmem:[#allocation2 + $0x70] sm:$0xf]
      %v782 = vld [vmem:[#allocation2 + $0x78] sm:$0xf]
      %v783 = vld [vmem:[#allocation2 + $0x7c] sm:$0xf]
      %v784 = vld [vmem:[#allocation2 + $0x84] sm:$0xf]
      %v785 = vld [vmem:[#allocation2 + $0x88] sm:$0xf]
      %v786 = vld [vmem:[#allocation2 + $0x90] sm:$0xf]
      %v787 = vld [vmem:[#allocation2 + $0x94] sm:$0xf]
      %v788 = vld [vmem:[#allocation2 + $0x9c] sm:$0xf]
      %v789 = vld [vmem:[#allocation2 + $0xa0] sm:$0xf]
      %v790 = vld [vmem:[#allocation2 + $0xa8] sm:$0xf]
      %v791 = vld [vmem:[#allocation2 + $0xac] sm:$0xf]
      %v792 = vld [vmem:[#allocation2 + $0xb4] sm:$0xf]
      %v793 = vld [vmem:[#allocation2 + $0xb8] sm:$0xf]
      %v794 = vld [vmem:[%s1] sm:$0x3]
      %v795 = vld [vmem:[#allocation2 + $0x8] sm:$0x1]
      %v796 = vld [vmem:[#allocation2 + $0x14] sm:$0x1]
      %v797 = vld [vmem:[#allocation2 + $0x20] sm:$0x1]
      %v798 = vld [vmem:[#allocation2 + $0x2c] sm:$0x1]
      %v799 = vld [vmem:[#allocation2 + $0x38] sm:$0x1]
      %v800 = vld [vmem:[#allocation2 + $0x44] sm:$0x1]
      %v801 = vld [vmem:[#allocation2 + $0x50] sm:$0x1]
      %v802 = vld [vmem:[#allocation2 + $0x5c] sm:$0x1]
      %v803 = vld [vmem:[#allocation2 + $0x68] sm:$0x1]
      %v804 = vld [vmem:[#allocation2 + $0x74] sm:$0x1]
      %v805 = vld [vmem:[#allocation2 + $0x80] sm:$0x1]
      %v806 = vld [vmem:[#allocation2 + $0x8c] sm:$0x1]
      %v807 = vld [vmem:[#allocation2 + $0x98] sm:$0x1]
      %v808 = vld [vmem:[#allocation2 + $0xa4] sm:$0x1]
      %v809 = vld [vmem:[#allocation2 + $0xb0] sm:$0x1]
      %v810 = vld [vmem:[#allocation2 + $0xbc] sm:$0x1]
      %vm811 = vsmask.f32 3328
      %vm812 = vsmask.f32 7440
      %vm813 = vmor %vm811, %vm812
      %v815 = vshrl.u32 %v762, 16
      %v817 = vrot.slane %v815, 4
      %v818 = vshll.u32 %v762, 16
      %v820 = vrot.slane %v818, 5
      %v821 = vor.u32 %v817, %v820
      %v822 = vrot.slane %v821, 4
      %v824 = vshll.u32 %v763, 16
      %v826 = vrot.slane %v824, 5
      %v827 = vsel %vm813, %v822, %v826
      %v828 = vshrl.u32 %v763, 16
      %v830 = vrot.slane %v828, 4
      %v831 = vor.u32 %v830, %v826
      %v832 = vrot.slane %v831, 4
      %v834 = vshll.u32 %v795, 16
      %v836 = vrot.slane %v834, 5
      %v837 = vsel %vm813, %v832, %v836
      %v839 = vshrl.u32 %v764, 16
      %v841 = vrot.slane %v839, 4
      %v842 = vshll.u32 %v764, 16
      %v844 = vrot.slane %v842, 5
      %v845 = vor.u32 %v841, %v844
      %v846 = vrot.slane %v845, 4
      %v848 = vshll.u32 %v765, 16
      %v850 = vrot.slane %v848, 5
      %v851 = vsel %vm813, %v846, %v850
      %v852 = vshrl.u32 %v765, 16
      %v854 = vrot.slane %v852, 4
      %v855 = vor.u32 %v854, %v850
      %v856 = vrot.slane %v855, 4
      %v858 = vshll.u32 %v796, 16
      %v860 = vrot.slane %v858, 5
      %v861 = vsel %vm813, %v856, %v860
      %v863 = vshrl.u32 %v766, 16
      %v865 = vrot.slane %v863, 4
      %v866 = vshll.u32 %v766, 16
      %v868 = vrot.slane %v866, 5
      %v869 = vor.u32 %v865, %v868
      %v870 = vrot.slane %v869, 4
      %v872 = vshll.u32 %v767, 16
      %v874 = vrot.slane %v872, 5
      %v875 = vsel %vm813, %v870, %v874
      %v876 = vshrl.u32 %v767, 16
      %v878 = vrot.slane %v876, 4
      %v879 = vor.u32 %v878, %v874
      %v880 = vrot.slane %v879, 4
      %v882 = vshll.u32 %v797, 16
      %v884 = vrot.slane %v882, 5
      %v885 = vsel %vm813, %v880, %v884
      %v887 = vshrl.u32 %v768, 16
      %v889 = vrot.slane %v887, 4
      %v890 = vshll.u32 %v768, 16
      %v892 = vrot.slane %v890, 5
      %v893 = vor.u32 %v889, %v892
      %v894 = vrot.slane %v893, 4
      %v896 = vshll.u32 %v769, 16
      %v898 = vrot.slane %v896, 5
      %v899 = vsel %vm813, %v894, %v898
      %v900 = vshrl.u32 %v769, 16
      %v902 = vrot.slane %v900, 4
      %v903 = vor.u32 %v902, %v898
      %v904 = vrot.slane %v903, 4
      %v906 = vshll.u32 %v798, 16
      %v908 = vrot.slane %v906, 5
      %v909 = vsel %vm813, %v904, %v908
      %v911 = vshrl.u32 %v770, 16
      %v913 = vrot.slane %v911, 4
      %v914 = vshll.u32 %v770, 16
      %v916 = vrot.slane %v914, 5
      %v917 = vor.u32 %v913, %v916
      %v918 = vrot.slane %v917, 4
      %v920 = vshll.u32 %v771, 16
      %v922 = vrot.slane %v920, 5
      %v923 = vsel %vm813, %v918, %v922
      %v924 = vshrl.u32 %v771, 16
      %v926 = vrot.slane %v924, 4
      %v927 = vor.u32 %v926, %v922
      %v928 = vrot.slane %v927, 4
      %v930 = vshll.u32 %v799, 16
      %v932 = vrot.slane %v930, 5
      %v933 = vsel %vm813, %v928, %v932
      %v935 = vshrl.u32 %v772, 16
      %v937 = vrot.slane %v935, 4
      %v938 = vshll.u32 %v772, 16
      %v940 = vrot.slane %v938, 5
      %v941 = vor.u32 %v937, %v940
      %v942 = vrot.slane %v941, 4
      %v944 = vshll.u32 %v773, 16
      %v946 = vrot.slane %v944, 5
      %v947 = vsel %vm813, %v942, %v946
      %v948 = vshrl.u32 %v773, 16
      %v950 = vrot.slane %v948, 4
      %v951 = vor.u32 %v950, %v946
      %v952 = vrot.slane %v951, 4
      %v954 = vshll.u32 %v800, 16
      %v956 = vrot.slane %v954, 5
      %v957 = vsel %vm813, %v952, %v956
      %v959 = vshrl.u32 %v774, 16
      %v961 = vrot.slane %v959, 4
      %v962 = vshll.u32 %v774, 16
      %v964 = vrot.slane %v962, 5
      %v965 = vor.u32 %v961, %v964
      %v966 = vrot.slane %v965, 4
      %v968 = vshll.u32 %v775, 16
      %v970 = vrot.slane %v968, 5
      %v971 = vsel %vm813, %v966, %v970
      %v972 = vshrl.u32 %v775, 16
      %v974 = vrot.slane %v972, 4
      %v975 = vor.u32 %v974, %v970
      %v976 = vrot.slane %v975, 4
      %v978 = vshll.u32 %v801, 16
      %v980 = vrot.slane %v978, 5
      %v981 = vsel %vm813, %v976, %v980
      %v983 = vshrl.u32 %v776, 16
      %v985 = vrot.slane %v983, 4
      %v986 = vshll.u32 %v776, 16
      %v988 = vrot.slane %v986, 5
      %v989 = vor.u32 %v985, %v988
      %v990 = vrot.slane %v989, 4
      %v992 = vshll.u32 %v777, 16
      %v994 = vrot.slane %v992, 5
      %v995 = vsel %vm813, %v990, %v994
      %v996 = vshrl.u32 %v777, 16
      %v998 = vrot.slane %v996, 4
      %v999 = vor.u32 %v998, %v994
      %v1000 = vrot.slane %v999, 4
      %v1002 = vshll.u32 %v802, 16
      %v1004 = vrot.slane %v1002, 5
      %v1005 = vsel %vm813, %v1000, %v1004
      %v1007 = vshrl.u32 %v778, 16
      %v1009 = vrot.slane %v1007, 4
      %v1010 = vshll.u32 %v778, 16
      %v1012 = vrot.slane %v1010, 5
      %v1013 = vor.u32 %v1009, %v1012
      %v1014 = vrot.slane %v1013, 4
      %v1016 = vshll.u32 %v779, 16
      %v1018 = vrot.slane %v1016, 5
      %v1019 = vsel %vm813, %v1014, %v1018
      %v1020 = vshrl.u32 %v779, 16
      %v1022 = vrot.slane %v1020, 4
      %v1023 = vor.u32 %v1022, %v1018
      %v1024 = vrot.slane %v1023, 4
      %v1026 = vshll.u32 %v803, 16
      %v1028 = vrot.slane %v1026, 5
      %v1029 = vsel %vm813, %v1024, %v1028
      %v1031 = vshrl.u32 %v780, 16
      %v1033 = vrot.slane %v1031, 4
      %v1034 = vshll.u32 %v780, 16
      %v1036 = vrot.slane %v1034, 5
      %v1037 = vor.u32 %v1033, %v1036
      %v1038 = vrot.slane %v1037, 4
      %v1040 = vshll.u32 %v781, 16
      %v1042 = vrot.slane %v1040, 5
      %v1043 = vsel %vm813, %v1038, %v1042
      %v1044 = vshrl.u32 %v781, 16
      %v1046 = vrot.slane %v1044, 4
      %v1047 = vor.u32 %v1046, %v1042
      %v1048 = vrot.slane %v1047, 4
      %v1050 = vshll.u32 %v804, 16
      %v1052 = vrot.slane %v1050, 5
      %v1053 = vsel %vm813, %v1048, %v1052
      %v1055 = vshrl.u32 %v782, 16
      %v1057 = vrot.slane %v1055, 4
      %v1058 = vshll.u32 %v782, 16
      %v1060 = vrot.slane %v1058, 5
      %v1061 = vor.u32 %v1057, %v1060
      %v1062 = vrot.slane %v1061, 4
      %v1064 = vshll.u32 %v783, 16
      %v1066 = vrot.slane %v1064, 5
      %v1067 = vsel %vm813, %v1062, %v1066
      %v1068 = vshrl.u32 %v783, 16
      %v1070 = vrot.slane %v1068, 4
      %v1071 = vor.u32 %v1070, %v1066
      %v1072 = vrot.slane %v1071, 4
      %v1074 = vshll.u32 %v805, 16
      %v1076 = vrot.slane %v1074, 5
      %v1077 = vsel %vm813, %v1072, %v1076
      %v1079 = vshrl.u32 %v784, 16
      %v1081 = vrot.slane %v1079, 4
      %v1082 = vshll.u32 %v784, 16
      %v1084 = vrot.slane %v1082, 5
      %v1085 = vor.u32 %v1081, %v1084
      %v1086 = vrot.slane %v1085, 4
      %v1088 = vshll.u32 %v785, 16
      %v1090 = vrot.slane %v1088, 5
      %v1091 = vsel %vm813, %v1086, %v1090
      %v1092 = vshrl.u32 %v785, 16
      %v1094 = vrot.slane %v1092, 4
      %v1095 = vor.u32 %v1094, %v1090
      %v1096 = vrot.slane %v1095, 4
      %v1098 = vshll.u32 %v806, 16
      %v1100 = vrot.slane %v1098, 5
      %v1101 = vsel %vm813, %v1096, %v1100
      %v1103 = vshrl.u32 %v786, 16
      %v1105 = vrot.slane %v1103, 4
      %v1106 = vshll.u32 %v786, 16
      %v1108 = vrot.slane %v1106, 5
      %v1109 = vor.u32 %v1105, %v1108
      %v1110 = vrot.slane %v1109, 4
      %v1112 = vshll.u32 %v787, 16
      %v1114 = vrot.slane %v1112, 5
      %v1115 = vsel %vm813, %v1110, %v1114
      %v1116 = vshrl.u32 %v787, 16
      %v1118 = vrot.slane %v1116, 4
      %v1119 = vor.u32 %v1118, %v1114
      %v1120 = vrot.slane %v1119, 4
      %v1122 = vshll.u32 %v807, 16
      %v1124 = vrot.slane %v1122, 5
      %v1125 = vsel %vm813, %v1120, %v1124
      %v1127 = vshrl.u32 %v788, 16
      %v1129 = vrot.slane %v1127, 4
      %v1130 = vshll.u32 %v788, 16
      %v1132 = vrot.slane %v1130, 5
      %v1133 = vor.u32 %v1129, %v1132
      %v1134 = vrot.slane %v1133, 4
      %v1136 = vshll.u32 %v789, 16
      %v1138 = vrot.slane %v1136, 5
      %v1139 = vsel %vm813, %v1134, %v1138
      %v1140 = vshrl.u32 %v789, 16
      %v1142 = vrot.slane %v1140, 4
      %v1143 = vor.u32 %v1142, %v1138
      %v1144 = vrot.slane %v1143, 4
      %v1146 = vshll.u32 %v808, 16
      %v1148 = vrot.slane %v1146, 5
      %v1149 = vsel %vm813, %v1144, %v1148
      %v1151 = vshrl.u32 %v790, 16
      %v1153 = vrot.slane %v1151, 4
      %v1154 = vshll.u32 %v790, 16
      %v1156 = vrot.slane %v1154, 5
      %v1157 = vor.u32 %v1153, %v1156
      %v1158 = vrot.slane %v1157, 4
      %v1160 = vshll.u32 %v791, 16
      %v1162 = vrot.slane %v1160, 5
      %v1163 = vsel %vm813, %v1158, %v1162
      %v1164 = vshrl.u32 %v791, 16
      %v1166 = vrot.slane %v1164, 4
      %v1167 = vor.u32 %v1166, %v1162
      %v1168 = vrot.slane %v1167, 4
      %v1170 = vshll.u32 %v809, 16
      %v1172 = vrot.slane %v1170, 5
      %v1173 = vsel %vm813, %v1168, %v1172
      %v1175 = vshrl.u32 %v792, 16
      %v1177 = vrot.slane %v1175, 4
      %v1178 = vshll.u32 %v792, 16
      %v1180 = vrot.slane %v1178, 5
      %v1181 = vor.u32 %v1177, %v1180
      %v1182 = vrot.slane %v1181, 4
      %v1184 = vshll.u32 %v793, 16
      %v1186 = vrot.slane %v1184, 5
      %v1187 = vsel %vm813, %v1182, %v1186
      %v1188 = vshrl.u32 %v793, 16
      %v1190 = vrot.slane %v1188, 4
      %v1191 = vor.u32 %v1190, %v1186
      %v1192 = vrot.slane %v1191, 4
      %v1194 = vshll.u32 %v810, 16
      %v1196 = vrot.slane %v1194, 5
      %v1197 = vsel %vm813, %v1192, %v1196
      %s1198 = scalar_lea.vmem %s1, 2
      %v1199 = vld [vmem:[%s1198] sm:$0x3]
      %v1200 = vunpack.c.l.b16 %v827
      %v1201 = vunpack.c.l.b16 %v837
      %v1202 = vunpack.c.l.b16 %v851
      %v1203 = vunpack.c.l.b16 %v861
      %v1204 = vunpack.c.l.b16 %v875
      %v1205 = vunpack.c.l.b16 %v885
      %v1206 = vunpack.c.l.b16 %v899
      %v1207 = vunpack.c.l.b16 %v909
      %v1208 = vunpack.c.l.b16 %v923
      %v1209 = vunpack.c.l.b16 %v933
      %v1210 = vunpack.c.l.b16 %v947
      %v1211 = vunpack.c.l.b16 %v957
      %v1212 = vunpack.c.l.b16 %v971
      %v1213 = vunpack.c.l.b16 %v981
      %v1214 = vunpack.c.l.b16 %v995
      %v1215 = vunpack.c.l.b16 %v1005
      %v1216 = vunpack.c.l.b16 %v1019
      %v1217 = vunpack.c.l.b16 %v1029
      %v1218 = vunpack.c.l.b16 %v1043
      %v1219 = vunpack.c.l.b16 %v1053
      %v1220 = vunpack.c.l.b16 %v1067
      %v1221 = vunpack.c.l.b16 %v1077
      %v1222 = vunpack.c.l.b16 %v1091
      %v1223 = vunpack.c.l.b16 %v1101
      %v1224 = vunpack.c.l.b16 %v1115
      %v1225 = vunpack.c.l.b16 %v1125
      %v1226 = vunpack.c.l.b16 %v1139
      %v1227 = vunpack.c.l.b16 %v1149
      %v1228 = vunpack.c.l.b16 %v1163
      %v1229 = vunpack.c.l.b16 %v1173
      %v1230 = vunpack.c.l.b16 %v1187
      %v1231 = vunpack.c.l.b16 %v1197
      %v1232 = vpack.c.b16 %v1201, %v1200
      %v1233 = vpack.c.b16 %v1203, %v1202
      %v1234 = vpack.c.b16 %v1205, %v1204
      %v1235 = vpack.c.b16 %v1207, %v1206
      %v1236 = vpack.c.b16 %v1209, %v1208
      %v1237 = vpack.c.b16 %v1211, %v1210
      %v1238 = vpack.c.b16 %v1213, %v1212
      %v1239 = vpack.c.b16 %v1215, %v1214
      %v1240 = vpack.c.b16 %v1217, %v1216
      %v1241 = vpack.c.b16 %v1219, %v1218
      %v1242 = vpack.c.b16 %v1221, %v1220
      %v1243 = vpack.c.b16 %v1223, %v1222
      %v1244 = vpack.c.b16 %v1225, %v1224
      %v1245 = vpack.c.b16 %v1227, %v1226
      %v1246 = vpack.c.b16 %v1229, %v1228
      %v1247 = vpack.c.b16 %v1231, %v1230
      %vm1248 = vcmask 31744
      %v1250 = vsel %vm1248, %v1232, 0
      %v1253 = vsel %vm1248, %v1233, 0
      %v1256 = vsel %vm1248, %v1234, 0
      %v1259 = vsel %vm1248, %v1235, 0
      %v1262 = vsel %vm1248, %v1236, 0
      %v1265 = vsel %vm1248, %v1237, 0
      %v1268 = vsel %vm1248, %v1238, 0
      %v1271 = vsel %vm1248, %v1239, 0
      %v1274 = vsel %vm1248, %v1240, 0
      %v1277 = vsel %vm1248, %v1241, 0
      %v1280 = vsel %vm1248, %v1242, 0
      %v1283 = vsel %vm1248, %v1243, 0
      %v1286 = vsel %vm1248, %v1244, 0
      %v1289 = vsel %vm1248, %v1245, 0
      %v1292 = vsel %vm1248, %v1246, 0
      %v1295 = vsel %vm1248, %v1247, 0
      %vm1297 = vcmask 1041408
      %v1299 = vsel %vm1297, %v1199, 0
      %1301 = vmatpush.bf16.msra.mxu0 0
      %1302 = vmatpush.bf16.msra.mxu0 0
      %1303 = vmatpush.bf16.msra.mxu0 0
      %1304 = vmatpush.bf16.msra.mxu0 0
      %1305 = vmatpush.bf16.msra.mxu0 0
      %1306 = vmatpush.bf16.msra.mxu0 0
      %1307 = vmatpush.bf16.msra.mxu0 0
      %1308 = vmatpush.bf16.msra.mxu0 %v1299
      %1309 = vmatmul.bf16.gmra.mxu0 %v1250
      %v1310 = vpop.f32.mrf.mxu0
      %v1311 = vadd.f32 0.0, %v1310
      %v1312 = vpop.f32.mrf.mxu0
      %v1313 = vadd.f32 0.0, %v1312
      %1314 = vmatmul.bf16.gmra.mxu0 %v1253
      %v1315 = vpop.f32.mrf.mxu0
      %v1316 = vadd.f32 0.0, %v1315
      %v1317 = vpop.f32.mrf.mxu0
      %v1318 = vadd.f32 0.0, %v1317
      %1319 = vmatmul.bf16.gmra.mxu0 %v1256
      %v1320 = vpop.f32.mrf.mxu0
      %v1321 = vadd.f32 0.0, %v1320
      %v1322 = vpop.f32.mrf.mxu0
      %v1323 = vadd.f32 0.0, %v1322
      %1324 = vmatmul.bf16.gmra.mxu0 %v1259
      %v1325 = vpop.f32.mrf.mxu0
      %v1326 = vadd.f32 0.0, %v1325
      %v1327 = vpop.f32.mrf.mxu0
      %v1328 = vadd.f32 0.0, %v1327
      %1329 = vmatmul.bf16.gmra.mxu0 %v1262
      %v1330 = vpop.f32.mrf.mxu0
      %v1331 = vadd.f32 0.0, %v1330
      %v1332 = vpop.f32.mrf.mxu0
      %v1333 = vadd.f32 0.0, %v1332
      %1334 = vmatmul.bf16.gmra.mxu0 %v1265
      %v1335 = vpop.f32.mrf.mxu0
      %v1336 = vadd.f32 0.0, %v1335
      %v1337 = vpop.f32.mrf.mxu0
      %v1338 = vadd.f32 0.0, %v1337
      %1339 = vmatmul.bf16.gmra.mxu0 %v1268
      %v1340 = vpop.f32.mrf.mxu0
      %v1341 = vadd.f32 0.0, %v1340
      %v1342 = vpop.f32.mrf.mxu0
      %v1343 = vadd.f32 0.0, %v1342
      %1344 = vmatmul.bf16.gmra.mxu0 %v1271
      %v1345 = vpop.f32.mrf.mxu0
      %v1346 = vadd.f32 0.0, %v1345
      %v1347 = vpop.f32.mrf.mxu0
      %v1348 = vadd.f32 0.0, %v1347
      %1349 = vmatmul.bf16.gmra.mxu0 %v1274
      %v1350 = vpop.f32.mrf.mxu0
      %v1351 = vadd.f32 0.0, %v1350
      %v1352 = vpop.f32.mrf.mxu0
      %v1353 = vadd.f32 0.0, %v1352
      %1354 = vmatmul.bf16.gmra.mxu0 %v1277
      %v1355 = vpop.f32.mrf.mxu0
      %v1356 = vadd.f32 0.0, %v1355
      %v1357 = vpop.f32.mrf.mxu0
      %v1358 = vadd.f32 0.0, %v1357
      %1359 = vmatmul.bf16.gmra.mxu0 %v1280
      %v1360 = vpop.f32.mrf.mxu0
      %v1361 = vadd.f32 0.0, %v1360
      %v1362 = vpop.f32.mrf.mxu0
      %v1363 = vadd.f32 0.0, %v1362
      %1364 = vmatmul.bf16.gmra.mxu0 %v1283
      %v1365 = vpop.f32.mrf.mxu0
      %v1366 = vadd.f32 0.0, %v1365
      %v1367 = vpop.f32.mrf.mxu0
      %v1368 = vadd.f32 0.0, %v1367
      %1369 = vmatmul.bf16.gmra.mxu0 %v1286
      %v1370 = vpop.f32.mrf.mxu0
      %v1371 = vadd.f32 0.0, %v1370
      %v1372 = vpop.f32.mrf.mxu0
      %v1373 = vadd.f32 0.0, %v1372
      %1374 = vmatmul.bf16.gmra.mxu0 %v1289
      %v1375 = vpop.f32.mrf.mxu0
      %v1376 = vadd.f32 0.0, %v1375
      %v1377 = vpop.f32.mrf.mxu0
      %v1378 = vadd.f32 0.0, %v1377
      %1379 = vmatmul.bf16.gmra.mxu0 %v1292
      %v1380 = vpop.f32.mrf.mxu0
      %v1381 = vadd.f32 0.0, %v1380
      %v1382 = vpop.f32.mrf.mxu0
      %v1383 = vadd.f32 0.0, %v1382
      %1384 = vmatmul.bf16.gmra.mxu0 %v1295
      %v1385 = vpop.f32.mrf.mxu0
      %v1386 = vadd.f32 0.0, %v1385
      %v1387 = vpop.f32.mrf.mxu0
      %v1388 = vadd.f32 0.0, %v1387
      %1389 = vdwg.mxu0
      %v1422 = vunpack.c.l.b16 %v762
      %v1423 = vunpack.c.l.b16 %v763
      %v1424 = vunpack.c.l.b16 %v764
      %v1425 = vunpack.c.l.b16 %v765
      %v1426 = vunpack.c.l.b16 %v766
      %v1427 = vunpack.c.l.b16 %v767
      %v1428 = vunpack.c.l.b16 %v768
      %v1429 = vunpack.c.l.b16 %v769
      %v1430 = vunpack.c.l.b16 %v770
      %v1431 = vunpack.c.l.b16 %v771
      %v1432 = vunpack.c.l.b16 %v772
      %v1433 = vunpack.c.l.b16 %v773
      %v1434 = vunpack.c.l.b16 %v774
      %v1435 = vunpack.c.l.b16 %v775
      %v1436 = vunpack.c.l.b16 %v776
      %v1437 = vunpack.c.l.b16 %v777
      %v1438 = vunpack.c.l.b16 %v778
      %v1439 = vunpack.c.l.b16 %v779
      %v1440 = vunpack.c.l.b16 %v780
      %v1441 = vunpack.c.l.b16 %v781
      %v1442 = vunpack.c.l.b16 %v782
      %v1443 = vunpack.c.l.b16 %v783
      %v1444 = vunpack.c.l.b16 %v784
      %v1445 = vunpack.c.l.b16 %v785
      %v1446 = vunpack.c.l.b16 %v786
      %v1447 = vunpack.c.l.b16 %v787
      %v1448 = vunpack.c.l.b16 %v788
      %v1449 = vunpack.c.l.b16 %v789
      %v1450 = vunpack.c.l.b16 %v790
      %v1451 = vunpack.c.l.b16 %v791
      %v1452 = vunpack.c.l.b16 %v792
      %v1453 = vunpack.c.l.b16 %v793
      %v1454 = vpack.c.b16 %v1423, %v1422
      %v1455 = vpack.c.b16 %v1425, %v1424
      %v1456 = vpack.c.b16 %v1427, %v1426
      %v1457 = vpack.c.b16 %v1429, %v1428
      %v1458 = vpack.c.b16 %v1431, %v1430
      %v1459 = vpack.c.b16 %v1433, %v1432
      %v1460 = vpack.c.b16 %v1435, %v1434
      %v1461 = vpack.c.b16 %v1437, %v1436
      %v1462 = vpack.c.b16 %v1439, %v1438
      %v1463 = vpack.c.b16 %v1441, %v1440
      %v1464 = vpack.c.b16 %v1443, %v1442
      %v1465 = vpack.c.b16 %v1445, %v1444
      %v1466 = vpack.c.b16 %v1447, %v1446
      %v1467 = vpack.c.b16 %v1449, %v1448
      %v1468 = vpack.c.b16 %v1451, %v1450
      %v1469 = vpack.c.b16 %v1453, %v1452
      %v1471 = vsel %vm1248, %v1454, 0
      %v1474 = vsel %vm1248, %v1455, 0
      %v1477 = vsel %vm1248, %v1456, 0
      %v1480 = vsel %vm1248, %v1457, 0
      %v1483 = vsel %vm1248, %v1458, 0
      %v1486 = vsel %vm1248, %v1459, 0
      %v1489 = vsel %vm1248, %v1460, 0
      %v1492 = vsel %vm1248, %v1461, 0
      %v1495 = vsel %vm1248, %v1462, 0
      %v1498 = vsel %vm1248, %v1463, 0
      %v1501 = vsel %vm1248, %v1464, 0
      %v1504 = vsel %vm1248, %v1465, 0
      %v1507 = vsel %vm1248, %v1466, 0
      %v1510 = vsel %vm1248, %v1467, 0
      %v1513 = vsel %vm1248, %v1468, 0
      %v1516 = vsel %vm1248, %v1469, 0
      %v1519 = vsel %vm1297, %v794, 0
      %1521 = vmatpush.bf16.msra.mxu0 0
      %1522 = vmatpush.bf16.msra.mxu0 0
      %1523 = vmatpush.bf16.msra.mxu0 0
      %1524 = vmatpush.bf16.msra.mxu0 0
      %1525 = vmatpush.bf16.msra.mxu0 0
      %1526 = vmatpush.bf16.msra.mxu0 0
      %1527 = vmatpush.bf16.msra.mxu0 0
      %1528 = vmatpush.bf16.msra.mxu0 %v1519
      %1529 = vmatmul.bf16.gmra.mxu0 %v1471
      %v1530 = vpop.f32.mrf.mxu0
      %v1531 = vadd.f32 %v1311, %v1530
      %v1532 = vpop.f32.mrf.mxu0
      %v1533 = vadd.f32 %v1313, %v1532
      %1534 = vmatmul.bf16.gmra.mxu0 %v1474
      %v1535 = vpop.f32.mrf.mxu0
      %v1536 = vadd.f32 %v1316, %v1535
      %v1537 = vpop.f32.mrf.mxu0
      %v1538 = vadd.f32 %v1318, %v1537
      %1539 = vmatmul.bf16.gmra.mxu0 %v1477
      %v1540 = vpop.f32.mrf.mxu0
      %v1541 = vadd.f32 %v1321, %v1540
      %v1542 = vpop.f32.mrf.mxu0
      %v1543 = vadd.f32 %v1323, %v1542
      %1544 = vmatmul.bf16.gmra.mxu0 %v1480
      %v1545 = vpop.f32.mrf.mxu0
      %v1546 = vadd.f32 %v1326, %v1545
      %v1547 = vpop.f32.mrf.mxu0
      %v1548 = vadd.f32 %v1328, %v1547
      %1549 = vmatmul.bf16.gmra.mxu0 %v1483
      %v1550 = vpop.f32.mrf.mxu0
      %v1551 = vadd.f32 %v1331, %v1550
      %v1552 = vpop.f32.mrf.mxu0
      %v1553 = vadd.f32 %v1333, %v1552
      %1554 = vmatmul.bf16.gmra.mxu0 %v1486
      %v1555 = vpop.f32.mrf.mxu0
      %v1556 = vadd.f32 %v1336, %v1555
      %v1557 = vpop.f32.mrf.mxu0
      %v1558 = vadd.f32 %v1338, %v1557
      %1559 = vmatmul.bf16.gmra.mxu0 %v1489
      %v1560 = vpop.f32.mrf.mxu0
      %v1561 = vadd.f32 %v1341, %v1560
      %v1562 = vpop.f32.mrf.mxu0
      %v1563 = vadd.f32 %v1343, %v1562
      %1564 = vmatmul.bf16.gmra.mxu0 %v1492
      %v1565 = vpop.f32.mrf.mxu0
      %v1566 = vadd.f32 %v1346, %v1565
      %v1567 = vpop.f32.mrf.mxu0
      %v1568 = vadd.f32 %v1348, %v1567
      %1569 = vmatmul.bf16.gmra.mxu0 %v1495
      %v1570 = vpop.f32.mrf.mxu0
      %v1571 = vadd.f32 %v1351, %v1570
      %v1572 = vpop.f32.mrf.mxu0
      %v1573 = vadd.f32 %v1353, %v1572
      %1574 = vmatmul.bf16.gmra.mxu0 %v1498
      %v1575 = vpop.f32.mrf.mxu0
      %v1576 = vadd.f32 %v1356, %v1575
      %v1577 = vpop.f32.mrf.mxu0
      %v1578 = vadd.f32 %v1358, %v1577
      %1579 = vmatmul.bf16.gmra.mxu0 %v1501
      %v1580 = vpop.f32.mrf.mxu0
      %v1581 = vadd.f32 %v1361, %v1580
      %v1582 = vpop.f32.mrf.mxu0
      %v1583 = vadd.f32 %v1363, %v1582
      %1584 = vmatmul.bf16.gmra.mxu0 %v1504
      %v1585 = vpop.f32.mrf.mxu0
      %v1586 = vadd.f32 %v1366, %v1585
      %v1587 = vpop.f32.mrf.mxu0
      %v1588 = vadd.f32 %v1368, %v1587
      %1589 = vmatmul.bf16.gmra.mxu0 %v1507
      %v1590 = vpop.f32.mrf.mxu0
      %v1591 = vadd.f32 %v1371, %v1590
      %v1592 = vpop.f32.mrf.mxu0
      %v1593 = vadd.f32 %v1373, %v1592
      %1594 = vmatmul.bf16.gmra.mxu0 %v1510
      %v1595 = vpop.f32.mrf.mxu0
      %v1596 = vadd.f32 %v1376, %v1595
      %v1597 = vpop.f32.mrf.mxu0
      %v1598 = vadd.f32 %v1378, %v1597
      %1599 = vmatmul.bf16.gmra.mxu0 %v1513
      %v1600 = vpop.f32.mrf.mxu0
      %v1601 = vadd.f32 %v1381, %v1600
      %v1602 = vpop.f32.mrf.mxu0
      %v1603 = vadd.f32 %v1383, %v1602
      %1604 = vmatmul.bf16.gmra.mxu0 %v1516
      %v1605 = vpop.f32.mrf.mxu0
      %v1606 = vadd.f32 %v1386, %v1605
      %v1607 = vpop.f32.mrf.mxu0
      %v1608 = vadd.f32 %v1388, %v1607
      %1609 = vdwg.mxu0
      %v1610 = vld [vmem:[#allocation2] sm:$0xe]
      %v1611 = vld [vmem:[#allocation2 + $0xc] sm:$0xe]
      %v1612 = vld [vmem:[#allocation2 + $0x18] sm:$0xe]
      %v1613 = vld [vmem:[#allocation2 + $0x24] sm:$0xe]
      %v1614 = vld [vmem:[#allocation2 + $0x30] sm:$0xe]
      %v1615 = vld [vmem:[#allocation2 + $0x3c] sm:$0xe]
      %v1616 = vld [vmem:[#allocation2 + $0x48] sm:$0xe]
      %v1617 = vld [vmem:[#allocation2 + $0x54] sm:$0xe]
      %v1618 = vld [vmem:[#allocation2 + $0x60] sm:$0xe]
      %v1619 = vld [vmem:[#allocation2 + $0x6c] sm:$0xe]
      %v1620 = vld [vmem:[#allocation2 + $0x78] sm:$0xe]
      %v1621 = vld [vmem:[#allocation2 + $0x84] sm:$0xe]
      %v1622 = vld [vmem:[#allocation2 + $0x90] sm:$0xe]
      %v1623 = vld [vmem:[#allocation2 + $0x9c] sm:$0xe]
      %v1624 = vld [vmem:[#allocation2 + $0xa8] sm:$0xe]
      %v1625 = vld [vmem:[#allocation2 + $0xb4] sm:$0xe]
      %vm1658 = vcmask 1042432
      %vm1659 = vcmask 1046532
      %vm1660 = vmor %vm1658, %vm1659
      %v1661 = vrot.slane %v1610, 5
      %v1662 = vrot.slane %v1661, 4
      %v1663 = vrot.slane %v763, 5
      %v1664 = vsel %vm1660, %v1662, %v1663
      %v1665 = vrot.slane %v1663, 4
      %v1666 = vrot.slane %v795, 5
      %v1667 = vsel %vm1660, %v1665, %v1666
      %v1668 = vrot.slane %v1611, 5
      %v1669 = vrot.slane %v1668, 4
      %v1670 = vrot.slane %v765, 5
      %v1671 = vsel %vm1660, %v1669, %v1670
      %v1672 = vrot.slane %v1670, 4
      %v1673 = vrot.slane %v796, 5
      %v1674 = vsel %vm1660, %v1672, %v1673
      %v1675 = vrot.slane %v1612, 5
      %v1676 = vrot.slane %v1675, 4
      %v1677 = vrot.slane %v767, 5
      %v1678 = vsel %vm1660, %v1676, %v1677
      %v1679 = vrot.slane %v1677, 4
      %v1680 = vrot.slane %v797, 5
      %v1681 = vsel %vm1660, %v1679, %v1680
      %v1682 = vrot.slane %v1613, 5
      %v1683 = vrot.slane %v1682, 4
      %v1684 = vrot.slane %v769, 5
      %v1685 = vsel %vm1660, %v1683, %v1684
      %v1686 = vrot.slane %v1684, 4
      %v1687 = vrot.slane %v798, 5
      %v1688 = vsel %vm1660, %v1686, %v1687
      %v1689 = vrot.slane %v1614, 5
      %v1690 = vrot.slane %v1689, 4
      %v1691 = vrot.slane %v771, 5
      %v1692 = vsel %vm1660, %v1690, %v1691
      %v1693 = vrot.slane %v1691, 4
      %v1694 = vrot.slane %v799, 5
      %v1695 = vsel %vm1660, %v1693, %v1694
      %v1696 = vrot.slane %v1615, 5
      %v1697 = vrot.slane %v1696, 4
      %v1698 = vrot.slane %v773, 5
      %v1699 = vsel %vm1660, %v1697, %v1698
      %v1700 = vrot.slane %v1698, 4
      %v1701 = vrot.slane %v800, 5
      %v1702 = vsel %vm1660, %v1700, %v1701
      %v1703 = vrot.slane %v1616, 5
      %v1704 = vrot.slane %v1703, 4
      %v1705 = vrot.slane %v775, 5
      %v1706 = vsel %vm1660, %v1704, %v1705
      %v1707 = vrot.slane %v1705, 4
      %v1708 = vrot.slane %v801, 5
      %v1709 = vsel %vm1660, %v1707, %v1708
      %v1710 = vrot.slane %v1617, 5
      %v1711 = vrot.slane %v1710, 4
      %v1712 = vrot.slane %v777, 5
      %v1713 = vsel %vm1660, %v1711, %v1712
      %v1714 = vrot.slane %v1712, 4
      %v1715 = vrot.slane %v802, 5
      %v1716 = vsel %vm1660, %v1714, %v1715
      %v1717 = vrot.slane %v1618, 5
      %v1718 = vrot.slane %v1717, 4
      %v1719 = vrot.slane %v779, 5
      %v1720 = vsel %vm1660, %v1718, %v1719
      %v1721 = vrot.slane %v1719, 4
      %v1722 = vrot.slane %v803, 5
      %v1723 = vsel %vm1660, %v1721, %v1722
      %v1724 = vrot.slane %v1619, 5
      %v1725 = vrot.slane %v1724, 4
      %v1726 = vrot.slane %v781, 5
      %v1727 = vsel %vm1660, %v1725, %v1726
      %v1728 = vrot.slane %v1726, 4
      %v1729 = vrot.slane %v804, 5
      %v1730 = vsel %vm1660, %v1728, %v1729
      %v1731 = vrot.slane %v1620, 5
      %v1732 = vrot.slane %v1731, 4
      %v1733 = vrot.slane %v783, 5
      %v1734 = vsel %vm1660, %v1732, %v1733
      %v1735 = vrot.slane %v1733, 4
      %v1736 = vrot.slane %v805, 5
      %v1737 = vsel %vm1660, %v1735, %v1736
      %v1738 = vrot.slane %v1621, 5
      %v1739 = vrot.slane %v1738, 4
      %v1740 = vrot.slane %v785, 5
      %v1741 = vsel %vm1660, %v1739, %v1740
      %v1742 = vrot.slane %v1740, 4
      %v1743 = vrot.slane %v806, 5
      %v1744 = vsel %vm1660, %v1742, %v1743
      %v1745 = vrot.slane %v1622, 5
      %v1746 = vrot.slane %v1745, 4
      %v1747 = vrot.slane %v787, 5
      %v1748 = vsel %vm1660, %v1746, %v1747
      %v1749 = vrot.slane %v1747, 4
      %v1750 = vrot.slane %v807, 5
      %v1751 = vsel %vm1660, %v1749, %v1750
      %v1752 = vrot.slane %v1623, 5
      %v1753 = vrot.slane %v1752, 4
      %v1754 = vrot.slane %v789, 5
      %v1755 = vsel %vm1660, %v1753, %v1754
      %v1756 = vrot.slane %v1754, 4
      %v1757 = vrot.slane %v808, 5
      %v1758 = vsel %vm1660, %v1756, %v1757
      %v1759 = vrot.slane %v1624, 5
      %v1760 = vrot.slane %v1759, 4
      %v1761 = vrot.slane %v791, 5
      %v1762 = vsel %vm1660, %v1760, %v1761
      %v1763 = vrot.slane %v1761, 4
      %v1764 = vrot.slane %v809, 5
      %v1765 = vsel %vm1660, %v1763, %v1764
      %v1766 = vrot.slane %v1625, 5
      %v1767 = vrot.slane %v1766, 4
      %v1768 = vrot.slane %v793, 5
      %v1769 = vsel %vm1660, %v1767, %v1768
      %v1770 = vrot.slane %v1768, 4
      %v1771 = vrot.slane %v810, 5
      %v1772 = vsel %vm1660, %v1770, %v1771
      %s1773 = scalar_lea.vmem %s1, 4
      %v1774 = vld [vmem:[%s1773] sm:$0x3]
      %v1775 = vunpack.c.l.b16 %v1664
      %v1776 = vunpack.c.l.b16 %v1667
      %v1777 = vunpack.c.l.b16 %v1671
      %v1778 = vunpack.c.l.b16 %v1674
      %v1779 = vunpack.c.l.b16 %v1678
      %v1780 = vunpack.c.l.b16 %v1681
      %v1781 = vunpack.c.l.b16 %v1685
      %v1782 = vunpack.c.l.b16 %v1688
      %v1783 = vunpack.c.l.b16 %v1692
      %v1784 = vunpack.c.l.b16 %v1695
      %v1785 = vunpack.c.l.b16 %v1699
      %v1786 = vunpack.c.l.b16 %v1702
      %v1787 = vunpack.c.l.b16 %v1706
      %v1788 = vunpack.c.l.b16 %v1709
      %v1789 = vunpack.c.l.b16 %v1713
      %v1790 = vunpack.c.l.b16 %v1716
      %v1791 = vunpack.c.l.b16 %v1720
      %v1792 = vunpack.c.l.b16 %v1723
      %v1793 = vunpack.c.l.b16 %v1727
      %v1794 = vunpack.c.l.b16 %v1730
      %v1795 = vunpack.c.l.b16 %v1734
      %v1796 = vunpack.c.l.b16 %v1737
      %v1797 = vunpack.c.l.b16 %v1741
      %v1798 = vunpack.c.l.b16 %v1744
      %v1799 = vunpack.c.l.b16 %v1748
      %v1800 = vunpack.c.l.b16 %v1751
      %v1801 = vunpack.c.l.b16 %v1755
      %v1802 = vunpack.c.l.b16 %v1758
      %v1803 = vunpack.c.l.b16 %v1762
      %v1804 = vunpack.c.l.b16 %v1765
      %v1805 = vunpack.c.l.b16 %v1769
      %v1806 = vunpack.c.l.b16 %v1772
      %v1807 = vpack.c.b16 %v1776, %v1775
      %v1808 = vpack.c.b16 %v1778, %v1777
      %v1809 = vpack.c.b16 %v1780, %v1779
      %v1810 = vpack.c.b16 %v1782, %v1781
      %v1811 = vpack.c.b16 %v1784, %v1783
      %v1812 = vpack.c.b16 %v1786, %v1785
      %v1813 = vpack.c.b16 %v1788, %v1787
      %v1814 = vpack.c.b16 %v1790, %v1789
      %v1815 = vpack.c.b16 %v1792, %v1791
      %v1816 = vpack.c.b16 %v1794, %v1793
      %v1817 = vpack.c.b16 %v1796, %v1795
      %v1818 = vpack.c.b16 %v1798, %v1797
      %v1819 = vpack.c.b16 %v1800, %v1799
      %v1820 = vpack.c.b16 %v1802, %v1801
      %v1821 = vpack.c.b16 %v1804, %v1803
      %v1822 = vpack.c.b16 %v1806, %v1805
      %v1824 = vsel %vm1248, %v1807, 0
      %v1827 = vsel %vm1248, %v1808, 0
      %v1830 = vsel %vm1248, %v1809, 0
      %v1833 = vsel %vm1248, %v1810, 0
      %v1836 = vsel %vm1248, %v1811, 0
      %v1839 = vsel %vm1248, %v1812, 0
      %v1842 = vsel %vm1248, %v1813, 0
      %v1845 = vsel %vm1248, %v1814, 0
      %v1848 = vsel %vm1248, %v1815, 0
      %v1851 = vsel %vm1248, %v1816, 0
      %v1854 = vsel %vm1248, %v1817, 0
      %v1857 = vsel %vm1248, %v1818, 0
      %v1860 = vsel %vm1248, %v1819, 0
      %v1863 = vsel %vm1248, %v1820, 0
      %v1866 = vsel %vm1248, %v1821, 0
      %v1869 = vsel %vm1248, %v1822, 0
      %v1872 = vsel %vm1297, %v1774, 0
      %1874 = vmatpush.bf16.msra.mxu0 0
      %1875 = vmatpush.bf16.msra.mxu0 0
      %1876 = vmatpush.bf16.msra.mxu0 0
      %1877 = vmatpush.bf16.msra.mxu0 0
      %1878 = vmatpush.bf16.msra.mxu0 0
      %1879 = vmatpush.bf16.msra.mxu0 0
      %1880 = vmatpush.bf16.msra.mxu0 0
      %1881 = vmatpush.bf16.msra.mxu0 %v1872
      %1882 = vmatmul.bf16.gmra.mxu0 %v1824
      %v1883 = vpop.f32.mrf.mxu0
      %v1884 = vadd.f32 0.0, %v1883
      %v1885 = vpop.f32.mrf.mxu0
      %v1886 = vadd.f32 0.0, %v1885
      %1887 = vmatmul.bf16.gmra.mxu0 %v1827
      %v1888 = vpop.f32.mrf.mxu0
      %v1889 = vadd.f32 0.0, %v1888
      %v1890 = vpop.f32.mrf.mxu0
      %v1891 = vadd.f32 0.0, %v1890
      %1892 = vmatmul.bf16.gmra.mxu0 %v1830
      %v1893 = vpop.f32.mrf.mxu0
      %v1894 = vadd.f32 0.0, %v1893
      %v1895 = vpop.f32.mrf.mxu0
      %v1896 = vadd.f32 0.0, %v1895
      %1897 = vmatmul.bf16.gmra.mxu0 %v1833
      %v1898 = vpop.f32.mrf.mxu0
      %v1899 = vadd.f32 0.0, %v1898
      %v1900 = vpop.f32.mrf.mxu0
      %v1901 = vadd.f32 0.0, %v1900
      %1902 = vmatmul.bf16.gmra.mxu0 %v1836
      %v1903 = vpop.f32.mrf.mxu0
      %v1904 = vadd.f32 0.0, %v1903
      %v1905 = vpop.f32.mrf.mxu0
      %v1906 = vadd.f32 0.0, %v1905
      %1907 = vmatmul.bf16.gmra.mxu0 %v1839
      %v1908 = vpop.f32.mrf.mxu0
      %v1909 = vadd.f32 0.0, %v1908
      %v1910 = vpop.f32.mrf.mxu0
      %v1911 = vadd.f32 0.0, %v1910
      %1912 = vmatmul.bf16.gmra.mxu0 %v1842
      %v1913 = vpop.f32.mrf.mxu0
      %v1914 = vadd.f32 0.0, %v1913
      %v1915 = vpop.f32.mrf.mxu0
      %v1916 = vadd.f32 0.0, %v1915
      %1917 = vmatmul.bf16.gmra.mxu0 %v1845
      %v1918 = vpop.f32.mrf.mxu0
      %v1919 = vadd.f32 0.0, %v1918
      %v1920 = vpop.f32.mrf.mxu0
      %v1921 = vadd.f32 0.0, %v1920
      %1922 = vmatmul.bf16.gmra.mxu0 %v1848
      %v1923 = vpop.f32.mrf.mxu0
      %v1924 = vadd.f32 0.0, %v1923
      %v1925 = vpop.f32.mrf.mxu0
      %v1926 = vadd.f32 0.0, %v1925
      %1927 = vmatmul.bf16.gmra.mxu0 %v1851
      %v1928 = vpop.f32.mrf.mxu0
      %v1929 = vadd.f32 0.0, %v1928
      %v1930 = vpop.f32.mrf.mxu0
      %v1931 = vadd.f32 0.0, %v1930
      %1932 = vmatmul.bf16.gmra.mxu0 %v1854
      %v1933 = vpop.f32.mrf.mxu0
      %v1934 = vadd.f32 0.0, %v1933
      %v1935 = vpop.f32.mrf.mxu0
      %v1936 = vadd.f32 0.0, %v1935
      %1937 = vmatmul.bf16.gmra.mxu0 %v1857
      %v1938 = vpop.f32.mrf.mxu0
      %v1939 = vadd.f32 0.0, %v1938
      %v1940 = vpop.f32.mrf.mxu0
      %v1941 = vadd.f32 0.0, %v1940
      %1942 = vmatmul.bf16.gmra.mxu0 %v1860
      %v1943 = vpop.f32.mrf.mxu0
      %v1944 = vadd.f32 0.0, %v1943
      %v1945 = vpop.f32.mrf.mxu0
      %v1946 = vadd.f32 0.0, %v1945
      %1947 = vmatmul.bf16.gmra.mxu0 %v1863
      %v1948 = vpop.f32.mrf.mxu0
      %v1949 = vadd.f32 0.0, %v1948
      %v1950 = vpop.f32.mrf.mxu0
      %v1951 = vadd.f32 0.0, %v1950
      %1952 = vmatmul.bf16.gmra.mxu0 %v1866
      %v1953 = vpop.f32.mrf.mxu0
      %v1954 = vadd.f32 0.0, %v1953
      %v1955 = vpop.f32.mrf.mxu0
      %v1956 = vadd.f32 0.0, %v1955
      %1957 = vmatmul.bf16.gmra.mxu0 %v1869
      %v1958 = vpop.f32.mrf.mxu0
      %v1959 = vadd.f32 0.0, %v1958
      %v1960 = vpop.f32.mrf.mxu0
      %v1961 = vadd.f32 0.0, %v1960
      %1962 = vdwg.mxu0
      %v1963 = vadd.f32 %v1531, %v1884
      %v1964 = vadd.f32 %v1533, %v1886
      %v1965 = vadd.f32 %v1536, %v1889
      %v1966 = vadd.f32 %v1538, %v1891
      %v1967 = vadd.f32 %v1541, %v1894
      %v1968 = vadd.f32 %v1543, %v1896
      %v1969 = vadd.f32 %v1546, %v1899
      %v1970 = vadd.f32 %v1548, %v1901
      %v1971 = vadd.f32 %v1551, %v1904
      %v1972 = vadd.f32 %v1553, %v1906
      %v1973 = vadd.f32 %v1556, %v1909
      %v1974 = vadd.f32 %v1558, %v1911
      %v1975 = vadd.f32 %v1561, %v1914
      %v1976 = vadd.f32 %v1563, %v1916
      %v1977 = vadd.f32 %v1566, %v1919
      %v1978 = vadd.f32 %v1568, %v1921
      %v1979 = vadd.f32 %v1571, %v1924
      %v1980 = vadd.f32 %v1573, %v1926
      %v1981 = vadd.f32 %v1576, %v1929
      %v1982 = vadd.f32 %v1578, %v1931
      %v1983 = vadd.f32 %v1581, %v1934
      %v1984 = vadd.f32 %v1583, %v1936
      %v1985 = vadd.f32 %v1586, %v1939
      %v1986 = vadd.f32 %v1588, %v1941
      %v1987 = vadd.f32 %v1591, %v1944
      %v1988 = vadd.f32 %v1593, %v1946
      %v1989 = vadd.f32 %v1596, %v1949
      %v1990 = vadd.f32 %v1598, %v1951
      %v1991 = vadd.f32 %v1601, %v1954
      %v1992 = vadd.f32 %v1603, %v1956
      %v1993 = vadd.f32 %v1606, %v1959
      %v1994 = vadd.f32 %v1608, %v1961
      %v1995 = vld [vmem:[%s224] sm:$0xf]
      %v1996 = vld [vmem:[%s224 + $0x4] sm:$0xf]
      %v1997 = vld [vmem:[%s224 + $0xc] sm:$0xf]
      %v1998 = vld [vmem:[%s224 + $0x10] sm:$0xf]
      %v1999 = vld [vmem:[%s224 + $0x18] sm:$0xf]
      %v2000 = vld [vmem:[%s224 + $0x1c] sm:$0xf]
      %v2001 = vld [vmem:[%s224 + $0x24] sm:$0xf]
      %v2002 = vld [vmem:[%s224 + $0x28] sm:$0xf]
      %v2003 = vld [vmem:[%s224 + $0x30] sm:$0xf]
      %v2004 = vld [vmem:[%s224 + $0x34] sm:$0xf]
      %v2005 = vld [vmem:[%s224 + $0x3c] sm:$0xf]
      %v2006 = vld [vmem:[%s224 + $0x40] sm:$0xf]
      %v2007 = vld [vmem:[%s224 + $0x48] sm:$0xf]
      %v2008 = vld [vmem:[%s224 + $0x4c] sm:$0xf]
      %v2009 = vld [vmem:[%s224 + $0x54] sm:$0xf]
      %v2010 = vld [vmem:[%s224 + $0x58] sm:$0xf]
      %v2011 = vld [vmem:[%s224 + $0x60] sm:$0xf]
      %v2012 = vld [vmem:[%s224 + $0x64] sm:$0xf]
      %v2013 = vld [vmem:[%s224 + $0x6c] sm:$0xf]
      %v2014 = vld [vmem:[%s224 + $0x70] sm:$0xf]
      %v2015 = vld [vmem:[%s224 + $0x78] sm:$0xf]
      %v2016 = vld [vmem:[%s224 + $0x7c] sm:$0xf]
      %v2017 = vld [vmem:[%s224 + $0x84] sm:$0xf]
      %v2018 = vld [vmem:[%s224 + $0x88] sm:$0xf]
      %v2019 = vld [vmem:[%s224 + $0x90] sm:$0xf]
      %v2020 = vld [vmem:[%s224 + $0x94] sm:$0xf]
      %v2021 = vld [vmem:[%s224 + $0x9c] sm:$0xf]
      %v2022 = vld [vmem:[%s224 + $0xa0] sm:$0xf]
      %v2023 = vld [vmem:[%s224 + $0xa8] sm:$0xf]
      %v2024 = vld [vmem:[%s224 + $0xac] sm:$0xf]
      %v2025 = vld [vmem:[%s224 + $0xb4] sm:$0xf]
      %v2026 = vld [vmem:[%s224 + $0xb8] sm:$0xf]
      %s2027 = scalar_lea.vmem %s1, 6
      %v2028 = vld [vmem:[%s2027] sm:$0x3]
      %v2061 = vunpack.c.l.b16 %v1995
      %v2062 = vunpack.c.l.b16 %v1996
      %v2063 = vunpack.c.l.b16 %v1997
      %v2064 = vunpack.c.l.b16 %v1998
      %v2065 = vunpack.c.l.b16 %v1999
      %v2066 = vunpack.c.l.b16 %v2000
      %v2067 = vunpack.c.l.b16 %v2001
      %v2068 = vunpack.c.l.b16 %v2002
      %v2069 = vunpack.c.l.b16 %v2003
      %v2070 = vunpack.c.l.b16 %v2004
      %v2071 = vunpack.c.l.b16 %v2005
      %v2072 = vunpack.c.l.b16 %v2006
      %v2073 = vunpack.c.l.b16 %v2007
      %v2074 = vunpack.c.l.b16 %v2008
      %v2075 = vunpack.c.l.b16 %v2009
      %v2076 = vunpack.c.l.b16 %v2010
      %v2077 = vunpack.c.l.b16 %v2011
      %v2078 = vunpack.c.l.b16 %v2012
      %v2079 = vunpack.c.l.b16 %v2013
      %v2080 = vunpack.c.l.b16 %v2014
      %v2081 = vunpack.c.l.b16 %v2015
      %v2082 = vunpack.c.l.b16 %v2016
      %v2083 = vunpack.c.l.b16 %v2017
      %v2084 = vunpack.c.l.b16 %v2018
      %v2085 = vunpack.c.l.b16 %v2019
      %v2086 = vunpack.c.l.b16 %v2020
      %v2087 = vunpack.c.l.b16 %v2021
      %v2088 = vunpack.c.l.b16 %v2022
      %v2089 = vunpack.c.l.b16 %v2023
      %v2090 = vunpack.c.l.b16 %v2024
      %v2091 = vunpack.c.l.b16 %v2025
      %v2092 = vunpack.c.l.b16 %v2026
      %v2093 = vpack.c.b16 %v2062, %v2061
      %v2094 = vpack.c.b16 %v2064, %v2063
      %v2095 = vpack.c.b16 %v2066, %v2065
      %v2096 = vpack.c.b16 %v2068, %v2067
      %v2097 = vpack.c.b16 %v2070, %v2069
      %v2098 = vpack.c.b16 %v2072, %v2071
      %v2099 = vpack.c.b16 %v2074, %v2073
      %v2100 = vpack.c.b16 %v2076, %v2075
      %v2101 = vpack.c.b16 %v2078, %v2077
      %v2102 = vpack.c.b16 %v2080, %v2079
      %v2103 = vpack.c.b16 %v2082, %v2081
      %v2104 = vpack.c.b16 %v2084, %v2083
      %v2105 = vpack.c.b16 %v2086, %v2085
      %v2106 = vpack.c.b16 %v2088, %v2087
      %v2107 = vpack.c.b16 %v2090, %v2089
      %v2108 = vpack.c.b16 %v2092, %v2091
      %v2110 = vsel %vm1248, %v2093, 0
      %v2113 = vsel %vm1248, %v2094, 0
      %v2116 = vsel %vm1248, %v2095, 0
      %v2119 = vsel %vm1248, %v2096, 0
      %v2122 = vsel %vm1248, %v2097, 0
      %v2125 = vsel %vm1248, %v2098, 0
      %v2128 = vsel %vm1248, %v2099, 0
      %v2131 = vsel %vm1248, %v2100, 0
      %v2134 = vsel %vm1248, %v2101, 0
      %v2137 = vsel %vm1248, %v2102, 0
      %v2140 = vsel %vm1248, %v2103, 0
      %v2143 = vsel %vm1248, %v2104, 0
      %v2146 = vsel %vm1248, %v2105, 0
      %v2149 = vsel %vm1248, %v2106, 0
      %v2152 = vsel %vm1248, %v2107, 0
      %v2155 = vsel %vm1248, %v2108, 0
      %v2158 = vsel %vm1297, %v2028, 0
      %2160 = vmatpush.bf16.msra.mxu0 0
      %2161 = vmatpush.bf16.msra.mxu0 0
      %2162 = vmatpush.bf16.msra.mxu0 0
      %2163 = vmatpush.bf16.msra.mxu0 0
      %2164 = vmatpush.bf16.msra.mxu0 0
      %2165 = vmatpush.bf16.msra.mxu0 0
      %2166 = vmatpush.bf16.msra.mxu0 0
      %2167 = vmatpush.bf16.msra.mxu0 %v2158
      %2168 = vmatmul.bf16.gmra.mxu0 %v2110
      %v2169 = vpop.f32.mrf.mxu0
      %v2170 = vadd.f32 0.0, %v2169
      %v2171 = vpop.f32.mrf.mxu0
      %v2172 = vadd.f32 0.0, %v2171
      %2173 = vmatmul.bf16.gmra.mxu0 %v2113
      %v2174 = vpop.f32.mrf.mxu0
      %v2175 = vadd.f32 0.0, %v2174
      %v2176 = vpop.f32.mrf.mxu0
      %v2177 = vadd.f32 0.0, %v2176
      %2178 = vmatmul.bf16.gmra.mxu0 %v2116
      %v2179 = vpop.f32.mrf.mxu0
      %v2180 = vadd.f32 0.0, %v2179
      %v2181 = vpop.f32.mrf.mxu0
      %v2182 = vadd.f32 0.0, %v2181
      %2183 = vmatmul.bf16.gmra.mxu0 %v2119
      %v2184 = vpop.f32.mrf.mxu0
      %v2185 = vadd.f32 0.0, %v2184
      %v2186 = vpop.f32.mrf.mxu0
      %v2187 = vadd.f32 0.0, %v2186
      %2188 = vmatmul.bf16.gmra.mxu0 %v2122
      %v2189 = vpop.f32.mrf.mxu0
      %v2190 = vadd.f32 0.0, %v2189
      %v2191 = vpop.f32.mrf.mxu0
      %v2192 = vadd.f32 0.0, %v2191
      %2193 = vmatmul.bf16.gmra.mxu0 %v2125
      %v2194 = vpop.f32.mrf.mxu0
      %v2195 = vadd.f32 0.0, %v2194
      %v2196 = vpop.f32.mrf.mxu0
      %v2197 = vadd.f32 0.0, %v2196
      %2198 = vmatmul.bf16.gmra.mxu0 %v2128
      %v2199 = vpop.f32.mrf.mxu0
      %v2200 = vadd.f32 0.0, %v2199
      %v2201 = vpop.f32.mrf.mxu0
      %v2202 = vadd.f32 0.0, %v2201
      %2203 = vmatmul.bf16.gmra.mxu0 %v2131
      %v2204 = vpop.f32.mrf.mxu0
      %v2205 = vadd.f32 0.0, %v2204
      %v2206 = vpop.f32.mrf.mxu0
      %v2207 = vadd.f32 0.0, %v2206
      %2208 = vmatmul.bf16.gmra.mxu0 %v2134
      %v2209 = vpop.f32.mrf.mxu0
      %v2210 = vadd.f32 0.0, %v2209
      %v2211 = vpop.f32.mrf.mxu0
      %v2212 = vadd.f32 0.0, %v2211
      %2213 = vmatmul.bf16.gmra.mxu0 %v2137
      %v2214 = vpop.f32.mrf.mxu0
      %v2215 = vadd.f32 0.0, %v2214
      %v2216 = vpop.f32.mrf.mxu0
      %v2217 = vadd.f32 0.0, %v2216
      %2218 = vmatmul.bf16.gmra.mxu0 %v2140
      %v2219 = vpop.f32.mrf.mxu0
      %v2220 = vadd.f32 0.0, %v2219
      %v2221 = vpop.f32.mrf.mxu0
      %v2222 = vadd.f32 0.0, %v2221
      %2223 = vmatmul.bf16.gmra.mxu0 %v2143
      %v2224 = vpop.f32.mrf.mxu0
      %v2225 = vadd.f32 0.0, %v2224
      %v2226 = vpop.f32.mrf.mxu0
      %v2227 = vadd.f32 0.0, %v2226
      %2228 = vmatmul.bf16.gmra.mxu0 %v2146
      %v2229 = vpop.f32.mrf.mxu0
      %v2230 = vadd.f32 0.0, %v2229
      %v2231 = vpop.f32.mrf.mxu0
      %v2232 = vadd.f32 0.0, %v2231
      %2233 = vmatmul.bf16.gmra.mxu0 %v2149
      %v2234 = vpop.f32.mrf.mxu0
      %v2235 = vadd.f32 0.0, %v2234
      %v2236 = vpop.f32.mrf.mxu0
      %v2237 = vadd.f32 0.0, %v2236
      %2238 = vmatmul.bf16.gmra.mxu0 %v2152
      %v2239 = vpop.f32.mrf.mxu0
      %v2240 = vadd.f32 0.0, %v2239
      %v2241 = vpop.f32.mrf.mxu0
      %v2242 = vadd.f32 0.0, %v2241
      %2243 = vmatmul.bf16.gmra.mxu0 %v2155
      %v2244 = vpop.f32.mrf.mxu0
      %v2245 = vadd.f32 0.0, %v2244
      %v2246 = vpop.f32.mrf.mxu0
      %v2247 = vadd.f32 0.0, %v2246
      %2248 = vdwg.mxu0
      %v2249 = vadd.f32 %v1963, %v2170
      %v2250 = vadd.f32 %v1964, %v2172
      %v2251 = vadd.f32 %v1965, %v2175
      %v2252 = vadd.f32 %v1966, %v2177
      %v2253 = vadd.f32 %v1967, %v2180
      %v2254 = vadd.f32 %v1968, %v2182
      %v2255 = vadd.f32 %v1969, %v2185
      %v2256 = vadd.f32 %v1970, %v2187
      %v2257 = vadd.f32 %v1971, %v2190
      %v2258 = vadd.f32 %v1972, %v2192
      %v2259 = vadd.f32 %v1973, %v2195
      %v2260 = vadd.f32 %v1974, %v2197
      %v2261 = vadd.f32 %v1975, %v2200
      %v2262 = vadd.f32 %v1976, %v2202
      %v2263 = vadd.f32 %v1977, %v2205
      %v2264 = vadd.f32 %v1978, %v2207
      %v2265 = vadd.f32 %v1979, %v2210
      %v2266 = vadd.f32 %v1980, %v2212
      %v2267 = vadd.f32 %v1981, %v2215
      %v2268 = vadd.f32 %v1982, %v2217
      %v2269 = vadd.f32 %v1983, %v2220
      %v2270 = vadd.f32 %v1984, %v2222
      %v2271 = vadd.f32 %v1985, %v2225
      %v2272 = vadd.f32 %v1986, %v2227
      %v2273 = vadd.f32 %v1987, %v2230
      %v2274 = vadd.f32 %v1988, %v2232
      %v2275 = vadd.f32 %v1989, %v2235
      %v2276 = vadd.f32 %v1990, %v2237
      %v2277 = vadd.f32 %v1991, %v2240
      %v2278 = vadd.f32 %v1992, %v2242
      %v2279 = vadd.f32 %v1993, %v2245
      %v2280 = vadd.f32 %v1994, %v2247
      %v2281 = vld [vmem:[%s224] sm:$0xf]
      %v2282 = vld [vmem:[%s224 + $0x4] sm:$0xf]
      %v2283 = vld [vmem:[%s224 + $0x8] sm:$0x1]
      %v2284 = vld [vmem:[%s224 + $0xc] sm:$0xf]
      %v2285 = vld [vmem:[%s224 + $0x10] sm:$0xf]
      %v2286 = vld [vmem:[%s224 + $0x14] sm:$0x1]
      %v2287 = vld [vmem:[%s224 + $0x18] sm:$0xf]
      %v2288 = vld [vmem:[%s224 + $0x1c] sm:$0xf]
      %v2289 = vld [vmem:[%s224 + $0x20] sm:$0x1]
      %v2290 = vld [vmem:[%s224 + $0x24] sm:$0xf]
      %v2291 = vld [vmem:[%s224 + $0x28] sm:$0xf]
      %v2292 = vld [vmem:[%s224 + $0x2c] sm:$0x1]
      %v2293 = vld [vmem:[%s224 + $0x30] sm:$0xf]
      %v2294 = vld [vmem:[%s224 + $0x34] sm:$0xf]
      %v2295 = vld [vmem:[%s224 + $0x38] sm:$0x1]
      %v2296 = vld [vmem:[%s224 + $0x3c] sm:$0xf]
      %v2297 = vld [vmem:[%s224 + $0x40] sm:$0xf]
      %v2298 = vld [vmem:[%s224 + $0x44] sm:$0x1]
      %v2299 = vld [vmem:[%s224 + $0x48] sm:$0xf]
      %v2300 = vld [vmem:[%s224 + $0x4c] sm:$0xf]
      %v2301 = vld [vmem:[%s224 + $0x50] sm:$0x1]
      %v2302 = vld [vmem:[%s224 + $0x54] sm:$0xf]
      %v2303 = vld [vmem:[%s224 + $0x58] sm:$0xf]
      %v2304 = vld [vmem:[%s224 + $0x5c] sm:$0x1]
      %v2305 = vld [vmem:[%s224 + $0x60] sm:$0xf]
      %v2306 = vld [vmem:[%s224 + $0x64] sm:$0xf]
      %v2307 = vld [vmem:[%s224 + $0x68] sm:$0x1]
      %v2308 = vld [vmem:[%s224 + $0x6c] sm:$0xf]
      %v2309 = vld [vmem:[%s224 + $0x70] sm:$0xf]
      %v2310 = vld [vmem:[%s224 + $0x74] sm:$0x1]
      %v2311 = vld [vmem:[%s224 + $0x78] sm:$0xf]
      %v2312 = vld [vmem:[%s224 + $0x7c] sm:$0xf]
      %v2313 = vld [vmem:[%s224 + $0x80] sm:$0x1]
      %v2314 = vld [vmem:[%s224 + $0x84] sm:$0xf]
      %v2315 = vld [vmem:[%s224 + $0x88] sm:$0xf]
      %v2316 = vld [vmem:[%s224 + $0x8c] sm:$0x1]
      %v2317 = vld [vmem:[%s224 + $0x90] sm:$0xf]
      %v2318 = vld [vmem:[%s224 + $0x94] sm:$0xf]
      %v2319 = vld [vmem:[%s224 + $0x98] sm:$0x1]
      %v2320 = vld [vmem:[%s224 + $0x9c] sm:$0xf]
      %v2321 = vld [vmem:[%s224 + $0xa0] sm:$0xf]
      %v2322 = vld [vmem:[%s224 + $0xa4] sm:$0x1]
      %v2323 = vld [vmem:[%s224 + $0xa8] sm:$0xf]
      %v2324 = vld [vmem:[%s224 + $0xac] sm:$0xf]
      %v2325 = vld [vmem:[%s224 + $0xb0] sm:$0x1]
      %v2326 = vld [vmem:[%s224 + $0xb4] sm:$0xf]
      %v2327 = vld [vmem:[%s224 + $0xb8] sm:$0xf]
      %v2328 = vld [vmem:[%s224 + $0xbc] sm:$0x1]
      %v2330 = vshrl.u32 %v2281, 16
      %v2332 = vrot.slane %v2330, 4
      %v2333 = vshll.u32 %v2281, 16
      %v2335 = vrot.slane %v2333, 5
      %v2336 = vor.u32 %v2332, %v2335
      %v2337 = vrot.slane %v2336, 4
      %v2339 = vshll.u32 %v2282, 16
      %v2341 = vrot.slane %v2339, 5
      %v2342 = vsel %vm813, %v2337, %v2341
      %v2343 = vshrl.u32 %v2282, 16
      %v2345 = vrot.slane %v2343, 4
      %v2346 = vor.u32 %v2345, %v2341
      %v2347 = vrot.slane %v2346, 4
      %v2349 = vshll.u32 %v2283, 16
      %v2351 = vrot.slane %v2349, 5
      %v2352 = vsel %vm813, %v2347, %v2351
      %v2354 = vshrl.u32 %v2284, 16
      %v2356 = vrot.slane %v2354, 4
      %v2357 = vshll.u32 %v2284, 16
      %v2359 = vrot.slane %v2357, 5
      %v2360 = vor.u32 %v2356, %v2359
      %v2361 = vrot.slane %v2360, 4
      %v2363 = vshll.u32 %v2285, 16
      %v2365 = vrot.slane %v2363, 5
      %v2366 = vsel %vm813, %v2361, %v2365
      %v2367 = vshrl.u32 %v2285, 16
      %v2369 = vrot.slane %v2367, 4
      %v2370 = vor.u32 %v2369, %v2365
      %v2371 = vrot.slane %v2370, 4
      %v2373 = vshll.u32 %v2286, 16
      %v2375 = vrot.slane %v2373, 5
      %v2376 = vsel %vm813, %v2371, %v2375
      %v2378 = vshrl.u32 %v2287, 16
      %v2380 = vrot.slane %v2378, 4
      %v2381 = vshll.u32 %v2287, 16
      %v2383 = vrot.slane %v2381, 5
      %v2384 = vor.u32 %v2380, %v2383
      %v2385 = vrot.slane %v2384, 4
      %v2387 = vshll.u32 %v2288, 16
      %v2389 = vrot.slane %v2387, 5
      %v2390 = vsel %vm813, %v2385, %v2389
      %v2391 = vshrl.u32 %v2288, 16
      %v2393 = vrot.slane %v2391, 4
      %v2394 = vor.u32 %v2393, %v2389
      %v2395 = vrot.slane %v2394, 4
      %v2397 = vshll.u32 %v2289, 16
      %v2399 = vrot.slane %v2397, 5
      %v2400 = vsel %vm813, %v2395, %v2399
      %v2402 = vshrl.u32 %v2290, 16
      %v2404 = vrot.slane %v2402, 4
      %v2405 = vshll.u32 %v2290, 16
      %v2407 = vrot.slane %v2405, 5
      %v2408 = vor.u32 %v2404, %v2407
      %v2409 = vrot.slane %v2408, 4
      %v2411 = vshll.u32 %v2291, 16
      %v2413 = vrot.slane %v2411, 5
      %v2414 = vsel %vm813, %v2409, %v2413
      %v2415 = vshrl.u32 %v2291, 16
      %v2417 = vrot.slane %v2415, 4
      %v2418 = vor.u32 %v2417, %v2413
      %v2419 = vrot.slane %v2418, 4
      %v2421 = vshll.u32 %v2292, 16
      %v2423 = vrot.slane %v2421, 5
      %v2424 = vsel %vm813, %v2419, %v2423
      %v2426 = vshrl.u32 %v2293, 16
      %v2428 = vrot.slane %v2426, 4
      %v2429 = vshll.u32 %v2293, 16
      %v2431 = vrot.slane %v2429, 5
      %v2432 = vor.u32 %v2428, %v2431
      %v2433 = vrot.slane %v2432, 4
      %v2435 = vshll.u32 %v2294, 16
      %v2437 = vrot.slane %v2435, 5
      %v2438 = vsel %vm813, %v2433, %v2437
      %v2439 = vshrl.u32 %v2294, 16
      %v2441 = vrot.slane %v2439, 4
      %v2442 = vor.u32 %v2441, %v2437
      %v2443 = vrot.slane %v2442, 4
      %v2445 = vshll.u32 %v2295, 16
      %v2447 = vrot.slane %v2445, 5
      %v2448 = vsel %vm813, %v2443, %v2447
      %v2450 = vshrl.u32 %v2296, 16
      %v2452 = vrot.slane %v2450, 4
      %v2453 = vshll.u32 %v2296, 16
      %v2455 = vrot.slane %v2453, 5
      %v2456 = vor.u32 %v2452, %v2455
      %v2457 = vrot.slane %v2456, 4
      %v2459 = vshll.u32 %v2297, 16
      %v2461 = vrot.slane %v2459, 5
      %v2462 = vsel %vm813, %v2457, %v2461
      %v2463 = vshrl.u32 %v2297, 16
      %v2465 = vrot.slane %v2463, 4
      %v2466 = vor.u32 %v2465, %v2461
      %v2467 = vrot.slane %v2466, 4
      %v2469 = vshll.u32 %v2298, 16
      %v2471 = vrot.slane %v2469, 5
      %v2472 = vsel %vm813, %v2467, %v2471
      %v2474 = vshrl.u32 %v2299, 16
      %v2476 = vrot.slane %v2474, 4
      %v2477 = vshll.u32 %v2299, 16
      %v2479 = vrot.slane %v2477, 5
      %v2480 = vor.u32 %v2476, %v2479
      %v2481 = vrot.slane %v2480, 4
      %v2483 = vshll.u32 %v2300, 16
      %v2485 = vrot.slane %v2483, 5
      %v2486 = vsel %vm813, %v2481, %v2485
      %v2487 = vshrl.u32 %v2300, 16
      %v2489 = vrot.slane %v2487, 4
      %v2490 = vor.u32 %v2489, %v2485
      %v2491 = vrot.slane %v2490, 4
      %v2493 = vshll.u32 %v2301, 16
      %v2495 = vrot.slane %v2493, 5
      %v2496 = vsel %vm813, %v2491, %v2495
      %v2498 = vshrl.u32 %v2302, 16
      %v2500 = vrot.slane %v2498, 4
      %v2501 = vshll.u32 %v2302, 16
      %v2503 = vrot.slane %v2501, 5
      %v2504 = vor.u32 %v2500, %v2503
      %v2505 = vrot.slane %v2504, 4
      %v2507 = vshll.u32 %v2303, 16
      %v2509 = vrot.slane %v2507, 5
      %v2510 = vsel %vm813, %v2505, %v2509
      %v2511 = vshrl.u32 %v2303, 16
      %v2513 = vrot.slane %v2511, 4
      %v2514 = vor.u32 %v2513, %v2509
      %v2515 = vrot.slane %v2514, 4
      %v2517 = vshll.u32 %v2304, 16
      %v2519 = vrot.slane %v2517, 5
      %v2520 = vsel %vm813, %v2515, %v2519
      %v2522 = vshrl.u32 %v2305, 16
      %v2524 = vrot.slane %v2522, 4
      %v2525 = vshll.u32 %v2305, 16
      %v2527 = vrot.slane %v2525, 5
      %v2528 = vor.u32 %v2524, %v2527
      %v2529 = vrot.slane %v2528, 4
      %v2531 = vshll.u32 %v2306, 16
      %v2533 = vrot.slane %v2531, 5
      %v2534 = vsel %vm813, %v2529, %v2533
      %v2535 = vshrl.u32 %v2306, 16
      %v2537 = vrot.slane %v2535, 4
      %v2538 = vor.u32 %v2537, %v2533
      %v2539 = vrot.slane %v2538, 4
      %v2541 = vshll.u32 %v2307, 16
      %v2543 = vrot.slane %v2541, 5
      %v2544 = vsel %vm813, %v2539, %v2543
      %v2546 = vshrl.u32 %v2308, 16
      %v2548 = vrot.slane %v2546, 4
      %v2549 = vshll.u32 %v2308, 16
      %v2551 = vrot.slane %v2549, 5
      %v2552 = vor.u32 %v2548, %v2551
      %v2553 = vrot.slane %v2552, 4
      %v2555 = vshll.u32 %v2309, 16
      %v2557 = vrot.slane %v2555, 5
      %v2558 = vsel %vm813, %v2553, %v2557
      %v2559 = vshrl.u32 %v2309, 16
      %v2561 = vrot.slane %v2559, 4
      %v2562 = vor.u32 %v2561, %v2557
      %v2563 = vrot.slane %v2562, 4
      %v2565 = vshll.u32 %v2310, 16
      %v2567 = vrot.slane %v2565, 5
      %v2568 = vsel %vm813, %v2563, %v2567
      %v2570 = vshrl.u32 %v2311, 16
      %v2572 = vrot.slane %v2570, 4
      %v2573 = vshll.u32 %v2311, 16
      %v2575 = vrot.slane %v2573, 5
      %v2576 = vor.u32 %v2572, %v2575
      %v2577 = vrot.slane %v2576, 4
      %v2579 = vshll.u32 %v2312, 16
      %v2581 = vrot.slane %v2579, 5
      %v2582 = vsel %vm813, %v2577, %v2581
      %v2583 = vshrl.u32 %v2312, 16
      %v2585 = vrot.slane %v2583, 4
      %v2586 = vor.u32 %v2585, %v2581
      %v2587 = vrot.slane %v2586, 4
      %v2589 = vshll.u32 %v2313, 16
      %v2591 = vrot.slane %v2589, 5
      %v2592 = vsel %vm813, %v2587, %v2591
      %v2594 = vshrl.u32 %v2314, 16
      %v2596 = vrot.slane %v2594, 4
      %v2597 = vshll.u32 %v2314, 16
      %v2599 = vrot.slane %v2597, 5
      %v2600 = vor.u32 %v2596, %v2599
      %v2601 = vrot.slane %v2600, 4
      %v2603 = vshll.u32 %v2315, 16
      %v2605 = vrot.slane %v2603, 5
      %v2606 = vsel %vm813, %v2601, %v2605
      %v2607 = vshrl.u32 %v2315, 16
      %v2609 = vrot.slane %v2607, 4
      %v2610 = vor.u32 %v2609, %v2605
      %v2611 = vrot.slane %v2610, 4
      %v2613 = vshll.u32 %v2316, 16
      %v2615 = vrot.slane %v2613, 5
      %v2616 = vsel %vm813, %v2611, %v2615
      %v2618 = vshrl.u32 %v2317, 16
      %v2620 = vrot.slane %v2618, 4
      %v2621 = vshll.u32 %v2317, 16
      %v2623 = vrot.slane %v2621, 5
      %v2624 = vor.u32 %v2620, %v2623
      %v2625 = vrot.slane %v2624, 4
      %v2627 = vshll.u32 %v2318, 16
      %v2629 = vrot.slane %v2627, 5
      %v2630 = vsel %vm813, %v2625, %v2629
      %v2631 = vshrl.u32 %v2318, 16
      %v2633 = vrot.slane %v2631, 4
      %v2634 = vor.u32 %v2633, %v2629
      %v2635 = vrot.slane %v2634, 4
      %v2637 = vshll.u32 %v2319, 16
      %v2639 = vrot.slane %v2637, 5
      %v2640 = vsel %vm813, %v2635, %v2639
      %v2642 = vshrl.u32 %v2320, 16
      %v2644 = vrot.slane %v2642, 4
      %v2645 = vshll.u32 %v2320, 16
      %v2647 = vrot.slane %v2645, 5
      %v2648 = vor.u32 %v2644, %v2647
      %v2649 = vrot.slane %v2648, 4
      %v2651 = vshll.u32 %v2321, 16
      %v2653 = vrot.slane %v2651, 5
      %v2654 = vsel %vm813, %v2649, %v2653
      %v2655 = vshrl.u32 %v2321, 16
      %v2657 = vrot.slane %v2655, 4
      %v2658 = vor.u32 %v2657, %v2653
      %v2659 = vrot.slane %v2658, 4
      %v2661 = vshll.u32 %v2322, 16
      %v2663 = vrot.slane %v2661, 5
      %v2664 = vsel %vm813, %v2659, %v2663
      %v2666 = vshrl.u32 %v2323, 16
      %v2668 = vrot.slane %v2666, 4
      %v2669 = vshll.u32 %v2323, 16
      %v2671 = vrot.slane %v2669, 5
      %v2672 = vor.u32 %v2668, %v2671
      %v2673 = vrot.slane %v2672, 4
      %v2675 = vshll.u32 %v2324, 16
      %v2677 = vrot.slane %v2675, 5
      %v2678 = vsel %vm813, %v2673, %v2677
      %v2679 = vshrl.u32 %v2324, 16
      %v2681 = vrot.slane %v2679, 4
      %v2682 = vor.u32 %v2681, %v2677
      %v2683 = vrot.slane %v2682, 4
      %v2685 = vshll.u32 %v2325, 16
      %v2687 = vrot.slane %v2685, 5
      %v2688 = vsel %vm813, %v2683, %v2687
      %v2690 = vshrl.u32 %v2326, 16
      %v2692 = vrot.slane %v2690, 4
      %v2693 = vshll.u32 %v2326, 16
      %v2695 = vrot.slane %v2693, 5
      %v2696 = vor.u32 %v2692, %v2695
      %v2697 = vrot.slane %v2696, 4
      %v2699 = vshll.u32 %v2327, 16
      %v2701 = vrot.slane %v2699, 5
      %v2702 = vsel %vm813, %v2697, %v2701
      %v2703 = vshrl.u32 %v2327, 16
      %v2705 = vrot.slane %v2703, 4
      %v2706 = vor.u32 %v2705, %v2701
      %v2707 = vrot.slane %v2706, 4
      %v2709 = vshll.u32 %v2328, 16
      %v2711 = vrot.slane %v2709, 5
      %v2712 = vsel %vm813, %v2707, %v2711
      %s2713 = scalar_lea.vmem %s1, 8
      %v2714 = vld [vmem:[%s2713] sm:$0x3]
      %v2715 = vunpack.c.l.b16 %v2342
      %v2716 = vunpack.c.l.b16 %v2352
      %v2717 = vunpack.c.l.b16 %v2366
      %v2718 = vunpack.c.l.b16 %v2376
      %v2719 = vunpack.c.l.b16 %v2390
      %v2720 = vunpack.c.l.b16 %v2400
      %v2721 = vunpack.c.l.b16 %v2414
      %v2722 = vunpack.c.l.b16 %v2424
      %v2723 = vunpack.c.l.b16 %v2438
      %v2724 = vunpack.c.l.b16 %v2448
      %v2725 = vunpack.c.l.b16 %v2462
      %v2726 = vunpack.c.l.b16 %v2472
      %v2727 = vunpack.c.l.b16 %v2486
      %v2728 = vunpack.c.l.b16 %v2496
      %v2729 = vunpack.c.l.b16 %v2510
      %v2730 = vunpack.c.l.b16 %v2520
      %v2731 = vunpack.c.l.b16 %v2534
      %v2732 = vunpack.c.l.b16 %v2544
      %v2733 = vunpack.c.l.b16 %v2558
      %v2734 = vunpack.c.l.b16 %v2568
      %v2735 = vunpack.c.l.b16 %v2582
      %v2736 = vunpack.c.l.b16 %v2592
      %v2737 = vunpack.c.l.b16 %v2606
      %v2738 = vunpack.c.l.b16 %v2616
      %v2739 = vunpack.c.l.b16 %v2630
      %v2740 = vunpack.c.l.b16 %v2640
      %v2741 = vunpack.c.l.b16 %v2654
      %v2742 = vunpack.c.l.b16 %v2664
      %v2743 = vunpack.c.l.b16 %v2678
      %v2744 = vunpack.c.l.b16 %v2688
      %v2745 = vunpack.c.l.b16 %v2702
      %v2746 = vunpack.c.l.b16 %v2712
      %v2747 = vpack.c.b16 %v2716, %v2715
      %v2748 = vpack.c.b16 %v2718, %v2717
      %v2749 = vpack.c.b16 %v2720, %v2719
      %v2750 = vpack.c.b16 %v2722, %v2721
      %v2751 = vpack.c.b16 %v2724, %v2723
      %v2752 = vpack.c.b16 %v2726, %v2725
      %v2753 = vpack.c.b16 %v2728, %v2727
      %v2754 = vpack.c.b16 %v2730, %v2729
      %v2755 = vpack.c.b16 %v2732, %v2731
      %v2756 = vpack.c.b16 %v2734, %v2733
      %v2757 = vpack.c.b16 %v2736, %v2735
      %v2758 = vpack.c.b16 %v2738, %v2737
      %v2759 = vpack.c.b16 %v2740, %v2739
      %v2760 = vpack.c.b16 %v2742, %v2741
      %v2761 = vpack.c.b16 %v2744, %v2743
      %v2762 = vpack.c.b16 %v2746, %v2745
      %v2764 = vsel %vm1248, %v2747, 0
      %v2767 = vsel %vm1248, %v2748, 0
      %v2770 = vsel %vm1248, %v2749, 0
      %v2773 = vsel %vm1248, %v2750, 0
      %v2776 = vsel %vm1248, %v2751, 0
      %v2779 = vsel %vm1248, %v2752, 0
      %v2782 = vsel %vm1248, %v2753, 0
      %v2785 = vsel %vm1248, %v2754, 0
      %v2788 = vsel %vm1248, %v2755, 0
      %v2791 = vsel %vm1248, %v2756, 0
      %v2794 = vsel %vm1248, %v2757, 0
      %v2797 = vsel %vm1248, %v2758, 0
      %v2800 = vsel %vm1248, %v2759, 0
      %v2803 = vsel %vm1248, %v2760, 0
      %v2806 = vsel %vm1248, %v2761, 0
      %v2809 = vsel %vm1248, %v2762, 0
      %v2812 = vsel %vm1297, %v2714, 0
      %2814 = vmatpush.bf16.msra.mxu0 0
      %2815 = vmatpush.bf16.msra.mxu0 0
      %2816 = vmatpush.bf16.msra.mxu0 0
      %2817 = vmatpush.bf16.msra.mxu0 0
      %2818 = vmatpush.bf16.msra.mxu0 0
      %2819 = vmatpush.bf16.msra.mxu0 0
      %2820 = vmatpush.bf16.msra.mxu0 0
      %2821 = vmatpush.bf16.msra.mxu0 %v2812
      %2822 = vmatmul.bf16.gmra.mxu0 %v2764
      %v2823 = vpop.f32.mrf.mxu0
      %v2824 = vadd.f32 0.0, %v2823
      %v2825 = vpop.f32.mrf.mxu0
      %v2826 = vadd.f32 0.0, %v2825
      %2827 = vmatmul.bf16.gmra.mxu0 %v2767
      %v2828 = vpop.f32.mrf.mxu0
      %v2829 = vadd.f32 0.0, %v2828
      %v2830 = vpop.f32.mrf.mxu0
      %v2831 = vadd.f32 0.0, %v2830
      %2832 = vmatmul.bf16.gmra.mxu0 %v2770
      %v2833 = vpop.f32.mrf.mxu0
      %v2834 = vadd.f32 0.0, %v2833
      %v2835 = vpop.f32.mrf.mxu0
      %v2836 = vadd.f32 0.0, %v2835
      %2837 = vmatmul.bf16.gmra.mxu0 %v2773
      %v2838 = vpop.f32.mrf.mxu0
      %v2839 = vadd.f32 0.0, %v2838
      %v2840 = vpop.f32.mrf.mxu0
      %v2841 = vadd.f32 0.0, %v2840
      %2842 = vmatmul.bf16.gmra.mxu0 %v2776
      %v2843 = vpop.f32.mrf.mxu0
      %v2844 = vadd.f32 0.0, %v2843
      %v2845 = vpop.f32.mrf.mxu0
      %v2846 = vadd.f32 0.0, %v2845
      %2847 = vmatmul.bf16.gmra.mxu0 %v2779
      %v2848 = vpop.f32.mrf.mxu0
      %v2849 = vadd.f32 0.0, %v2848
      %v2850 = vpop.f32.mrf.mxu0
      %v2851 = vadd.f32 0.0, %v2850
      %2852 = vmatmul.bf16.gmra.mxu0 %v2782
      %v2853 = vpop.f32.mrf.mxu0
      %v2854 = vadd.f32 0.0, %v2853
      %v2855 = vpop.f32.mrf.mxu0
      %v2856 = vadd.f32 0.0, %v2855
      %2857 = vmatmul.bf16.gmra.mxu0 %v2785
      %v2858 = vpop.f32.mrf.mxu0
      %v2859 = vadd.f32 0.0, %v2858
      %v2860 = vpop.f32.mrf.mxu0
      %v2861 = vadd.f32 0.0, %v2860
      %2862 = vmatmul.bf16.gmra.mxu0 %v2788
      %v2863 = vpop.f32.mrf.mxu0
      %v2864 = vadd.f32 0.0, %v2863
      %v2865 = vpop.f32.mrf.mxu0
      %v2866 = vadd.f32 0.0, %v2865
      %2867 = vmatmul.bf16.gmra.mxu0 %v2791
      %v2868 = vpop.f32.mrf.mxu0
      %v2869 = vadd.f32 0.0, %v2868
      %v2870 = vpop.f32.mrf.mxu0
      %v2871 = vadd.f32 0.0, %v2870
      %2872 = vmatmul.bf16.gmra.mxu0 %v2794
      %v2873 = vpop.f32.mrf.mxu0
      %v2874 = vadd.f32 0.0, %v2873
      %v2875 = vpop.f32.mrf.mxu0
      %v2876 = vadd.f32 0.0, %v2875
      %2877 = vmatmul.bf16.gmra.mxu0 %v2797
      %v2878 = vpop.f32.mrf.mxu0
      %v2879 = vadd.f32 0.0, %v2878
      %v2880 = vpop.f32.mrf.mxu0
      %v2881 = vadd.f32 0.0, %v2880
      %2882 = vmatmul.bf16.gmra.mxu0 %v2800
      %v2883 = vpop.f32.mrf.mxu0
      %v2884 = vadd.f32 0.0, %v2883
      %v2885 = vpop.f32.mrf.mxu0
      %v2886 = vadd.f32 0.0, %v2885
      %2887 = vmatmul.bf16.gmra.mxu0 %v2803
      %v2888 = vpop.f32.mrf.mxu0
      %v2889 = vadd.f32 0.0, %v2888
      %v2890 = vpop.f32.mrf.mxu0
      %v2891 = vadd.f32 0.0, %v2890
      %2892 = vmatmul.bf16.gmra.mxu0 %v2806
      %v2893 = vpop.f32.mrf.mxu0
      %v2894 = vadd.f32 0.0, %v2893
      %v2895 = vpop.f32.mrf.mxu0
      %v2896 = vadd.f32 0.0, %v2895
      %2897 = vmatmul.bf16.gmra.mxu0 %v2809
      %v2898 = vpop.f32.mrf.mxu0
      %v2899 = vadd.f32 0.0, %v2898
      %v2900 = vpop.f32.mrf.mxu0
      %v2901 = vadd.f32 0.0, %v2900
      %2902 = vdwg.mxu0
      %v2903 = vadd.f32 %v2249, %v2824
      %v2904 = vadd.f32 %v2250, %v2826
      %v2905 = vadd.f32 %v2251, %v2829
      %v2906 = vadd.f32 %v2252, %v2831
      %v2907 = vadd.f32 %v2253, %v2834
      %v2908 = vadd.f32 %v2254, %v2836
      %v2909 = vadd.f32 %v2255, %v2839
      %v2910 = vadd.f32 %v2256, %v2841
      %v2911 = vadd.f32 %v2257, %v2844
      %v2912 = vadd.f32 %v2258, %v2846
      %v2913 = vadd.f32 %v2259, %v2849
      %v2914 = vadd.f32 %v2260, %v2851
      %v2915 = vadd.f32 %v2261, %v2854
      %v2916 = vadd.f32 %v2262, %v2856
      %v2917 = vadd.f32 %v2263, %v2859
      %v2918 = vadd.f32 %v2264, %v2861
      %v2919 = vadd.f32 %v2265, %v2864
      %v2920 = vadd.f32 %v2266, %v2866
      %v2921 = vadd.f32 %v2267, %v2869
      %v2922 = vadd.f32 %v2268, %v2871
      %v2923 = vadd.f32 %v2269, %v2874
      %v2924 = vadd.f32 %v2270, %v2876
      %v2925 = vadd.f32 %v2271, %v2879
      %v2926 = vadd.f32 %v2272, %v2881
      %v2927 = vadd.f32 %v2273, %v2884
      %v2928 = vadd.f32 %v2274, %v2886
      %v2929 = vadd.f32 %v2275, %v2889
      %v2930 = vadd.f32 %v2276, %v2891
      %v2931 = vadd.f32 %v2277, %v2894
      %v2932 = vadd.f32 %v2278, %v2896
      %v2933 = vadd.f32 %v2279, %v2899
      %v2934 = vadd.f32 %v2280, %v2901
      %v2935 = vld [vmem:[%s224] sm:$0xe]
      %v2936 = vld [vmem:[%s224 + $0xc] sm:$0xe]
      %v2937 = vld [vmem:[%s224 + $0x18] sm:$0xe]
      %v2938 = vld [vmem:[%s224 + $0x24] sm:$0xe]
      %v2939 = vld [vmem:[%s224 + $0x30] sm:$0xe]
      %v2940 = vld [vmem:[%s224 + $0x3c] sm:$0xe]
      %v2941 = vld [vmem:[%s224 + $0x48] sm:$0xe]
      %v2942 = vld [vmem:[%s224 + $0x54] sm:$0xe]
      %v2943 = vld [vmem:[%s224 + $0x60] sm:$0xe]
      %v2944 = vld [vmem:[%s224 + $0x6c] sm:$0xe]
      %v2945 = vld [vmem:[%s224 + $0x78] sm:$0xe]
      %v2946 = vld [vmem:[%s224 + $0x84] sm:$0xe]
      %v2947 = vld [vmem:[%s224 + $0x90] sm:$0xe]
      %v2948 = vld [vmem:[%s224 + $0x9c] sm:$0xe]
      %v2949 = vld [vmem:[%s224 + $0xa8] sm:$0xe]
      %v2950 = vld [vmem:[%s224 + $0xb4] sm:$0xe]
      %v2999 = vrot.slane %v2935, 5
      %v3000 = vrot.slane %v2999, 4
      %v3001 = vrot.slane %v2282, 5
      %v3002 = vsel %vm1660, %v3000, %v3001
      %v3003 = vrot.slane %v3001, 4
      %v3004 = vrot.slane %v2283, 5
      %v3005 = vsel %vm1660, %v3003, %v3004
      %v3006 = vrot.slane %v2936, 5
      %v3007 = vrot.slane %v3006, 4
      %v3008 = vrot.slane %v2285, 5
      %v3009 = vsel %vm1660, %v3007, %v3008
      %v3010 = vrot.slane %v3008, 4
      %v3011 = vrot.slane %v2286, 5
      %v3012 = vsel %vm1660, %v3010, %v3011
      %v3013 = vrot.slane %v2937, 5
      %v3014 = vrot.slane %v3013, 4
      %v3015 = vrot.slane %v2288, 5
      %v3016 = vsel %vm1660, %v3014, %v3015
      %v3017 = vrot.slane %v3015, 4
      %v3018 = vrot.slane %v2289, 5
      %v3019 = vsel %vm1660, %v3017, %v3018
      %v3020 = vrot.slane %v2938, 5
      %v3021 = vrot.slane %v3020, 4
      %v3022 = vrot.slane %v2291, 5
      %v3023 = vsel %vm1660, %v3021, %v3022
      %v3024 = vrot.slane %v3022, 4
      %v3025 = vrot.slane %v2292, 5
      %v3026 = vsel %vm1660, %v3024, %v3025
      %v3027 = vrot.slane %v2939, 5
      %v3028 = vrot.slane %v3027, 4
      %v3029 = vrot.slane %v2294, 5
      %v3030 = vsel %vm1660, %v3028, %v3029
      %v3031 = vrot.slane %v3029, 4
      %v3032 = vrot.slane %v2295, 5
      %v3033 = vsel %vm1660, %v3031, %v3032
      %v3034 = vrot.slane %v2940, 5
      %v3035 = vrot.slane %v3034, 4
      %v3036 = vrot.slane %v2297, 5
      %v3037 = vsel %vm1660, %v3035, %v3036
      %v3038 = vrot.slane %v3036, 4
      %v3039 = vrot.slane %v2298, 5
      %v3040 = vsel %vm1660, %v3038, %v3039
      %v3041 = vrot.slane %v2941, 5
      %v3042 = vrot.slane %v3041, 4
      %v3043 = vrot.slane %v2300, 5
      %v3044 = vsel %vm1660, %v3042, %v3043
      %v3045 = vrot.slane %v3043, 4
      %v3046 = vrot.slane %v2301, 5
      %v3047 = vsel %vm1660, %v3045, %v3046
      %v3048 = vrot.slane %v2942, 5
      %v3049 = vrot.slane %v3048, 4
      %v3050 = vrot.slane %v2303, 5
      %v3051 = vsel %vm1660, %v3049, %v3050
      %v3052 = vrot.slane %v3050, 4
      %v3053 = vrot.slane %v2304, 5
      %v3054 = vsel %vm1660, %v3052, %v3053
      %v3055 = vrot.slane %v2943, 5
      %v3056 = vrot.slane %v3055, 4
      %v3057 = vrot.slane %v2306, 5
      %v3058 = vsel %vm1660, %v3056, %v3057
      %v3059 = vrot.slane %v3057, 4
      %v3060 = vrot.slane %v2307, 5
      %v3061 = vsel %vm1660, %v3059, %v3060
      %v3062 = vrot.slane %v2944, 5
      %v3063 = vrot.slane %v3062, 4
      %v3064 = vrot.slane %v2309, 5
      %v3065 = vsel %vm1660, %v3063, %v3064
      %v3066 = vrot.slane %v3064, 4
      %v3067 = vrot.slane %v2310, 5
      %v3068 = vsel %vm1660, %v3066, %v3067
      %v3069 = vrot.slane %v2945, 5
      %v3070 = vrot.slane %v3069, 4
      %v3071 = vrot.slane %v2312, 5
      %v3072 = vsel %vm1660, %v3070, %v3071
      %v3073 = vrot.slane %v3071, 4
      %v3074 = vrot.slane %v2313, 5
      %v3075 = vsel %vm1660, %v3073, %v3074
      %v3076 = vrot.slane %v2946, 5
      %v3077 = vrot.slane %v3076, 4
      %v3078 = vrot.slane %v2315, 5
      %v3079 = vsel %vm1660, %v3077, %v3078
      %v3080 = vrot.slane %v3078, 4
      %v3081 = vrot.slane %v2316, 5
      %v3082 = vsel %vm1660, %v3080, %v3081
      %v3083 = vrot.slane %v2947, 5
      %v3084 = vrot.slane %v3083, 4
      %v3085 = vrot.slane %v2318, 5
      %v3086 = vsel %vm1660, %v3084, %v3085
      %v3087 = vrot.slane %v3085, 4
      %v3088 = vrot.slane %v2319, 5
      %v3089 = vsel %vm1660, %v3087, %v3088
      %v3090 = vrot.slane %v2948, 5
      %v3091 = vrot.slane %v3090, 4
      %v3092 = vrot.slane %v2321, 5
      %v3093 = vsel %vm1660, %v3091, %v3092
      %v3094 = vrot.slane %v3092, 4
      %v3095 = vrot.slane %v2322, 5
      %v3096 = vsel %vm1660, %v3094, %v3095
      %v3097 = vrot.slane %v2949, 5
      %v3098 = vrot.slane %v3097, 4
      %v3099 = vrot.slane %v2324, 5
      %v3100 = vsel %vm1660, %v3098, %v3099
      %v3101 = vrot.slane %v3099, 4
      %v3102 = vrot.slane %v2325, 5
      %v3103 = vsel %vm1660, %v3101, %v3102
      %v3104 = vrot.slane %v2950, 5
      %v3105 = vrot.slane %v3104, 4
      %v3106 = vrot.slane %v2327, 5
      %v3107 = vsel %vm1660, %v3105, %v3106
      %v3108 = vrot.slane %v3106, 4
      %v3109 = vrot.slane %v2328, 5
      %v3110 = vsel %vm1660, %v3108, %v3109
      %s3111 = scalar_lea.vmem %s1, 10
      %v3112 = vld [vmem:[%s3111] sm:$0x3]
      %v3113 = vunpack.c.l.b16 %v3002
      %v3114 = vunpack.c.l.b16 %v3005
      %v3115 = vunpack.c.l.b16 %v3009
      %v3116 = vunpack.c.l.b16 %v3012
      %v3117 = vunpack.c.l.b16 %v3016
      %v3118 = vunpack.c.l.b16 %v3019
      %v3119 = vunpack.c.l.b16 %v3023
      %v3120 = vunpack.c.l.b16 %v3026
      %v3121 = vunpack.c.l.b16 %v3030
      %v3122 = vunpack.c.l.b16 %v3033
      %v3123 = vunpack.c.l.b16 %v3037
      %v3124 = vunpack.c.l.b16 %v3040
      %v3125 = vunpack.c.l.b16 %v3044
      %v3126 = vunpack.c.l.b16 %v3047
      %v3127 = vunpack.c.l.b16 %v3051
      %v3128 = vunpack.c.l.b16 %v3054
      %v3129 = vunpack.c.l.b16 %v3058
      %v3130 = vunpack.c.l.b16 %v3061
      %v3131 = vunpack.c.l.b16 %v3065
      %v3132 = vunpack.c.l.b16 %v3068
      %v3133 = vunpack.c.l.b16 %v3072
      %v3134 = vunpack.c.l.b16 %v3075
      %v3135 = vunpack.c.l.b16 %v3079
      %v3136 = vunpack.c.l.b16 %v3082
      %v3137 = vunpack.c.l.b16 %v3086
      %v3138 = vunpack.c.l.b16 %v3089
      %v3139 = vunpack.c.l.b16 %v3093
      %v3140 = vunpack.c.l.b16 %v3096
      %v3141 = vunpack.c.l.b16 %v3100
      %v3142 = vunpack.c.l.b16 %v3103
      %v3143 = vunpack.c.l.b16 %v3107
      %v3144 = vunpack.c.l.b16 %v3110
      %v3145 = vpack.c.b16 %v3114, %v3113
      %v3146 = vpack.c.b16 %v3116, %v3115
      %v3147 = vpack.c.b16 %v3118, %v3117
      %v3148 = vpack.c.b16 %v3120, %v3119
      %v3149 = vpack.c.b16 %v3122, %v3121
      %v3150 = vpack.c.b16 %v3124, %v3123
      %v3151 = vpack.c.b16 %v3126, %v3125
      %v3152 = vpack.c.b16 %v3128, %v3127
      %v3153 = vpack.c.b16 %v3130, %v3129
      %v3154 = vpack.c.b16 %v3132, %v3131
      %v3155 = vpack.c.b16 %v3134, %v3133
      %v3156 = vpack.c.b16 %v3136, %v3135
      %v3157 = vpack.c.b16 %v3138, %v3137
      %v3158 = vpack.c.b16 %v3140, %v3139
      %v3159 = vpack.c.b16 %v3142, %v3141
      %v3160 = vpack.c.b16 %v3144, %v3143
      %v3162 = vsel %vm1248, %v3145, 0
      %v3165 = vsel %vm1248, %v3146, 0
      %v3168 = vsel %vm1248, %v3147, 0
      %v3171 = vsel %vm1248, %v3148, 0
      %v3174 = vsel %vm1248, %v3149, 0
      %v3177 = vsel %vm1248, %v3150, 0
      %v3180 = vsel %vm1248, %v3151, 0
      %v3183 = vsel %vm1248, %v3152, 0
      %v3186 = vsel %vm1248, %v3153, 0
      %v3189 = vsel %vm1248, %v3154, 0
      %v3192 = vsel %vm1248, %v3155, 0
      %v3195 = vsel %vm1248, %v3156, 0
      %v3198 = vsel %vm1248, %v3157, 0
      %v3201 = vsel %vm1248, %v3158, 0
      %v3204 = vsel %vm1248, %v3159, 0
      %v3207 = vsel %vm1248, %v3160, 0
      %v3210 = vsel %vm1297, %v3112, 0
      %3212 = vmatpush.bf16.msra.mxu0 0
      %3213 = vmatpush.bf16.msra.mxu0 0
      %3214 = vmatpush.bf16.msra.mxu0 0
      %3215 = vmatpush.bf16.msra.mxu0 0
      %3216 = vmatpush.bf16.msra.mxu0 0
      %3217 = vmatpush.bf16.msra.mxu0 0
      %3218 = vmatpush.bf16.msra.mxu0 0
      %3219 = vmatpush.bf16.msra.mxu0 %v3210
      %3220 = vmatmul.bf16.gmra.mxu0 %v3162
      %v3221 = vpop.f32.mrf.mxu0
      %v3222 = vadd.f32 0.0, %v3221
      %v3223 = vpop.f32.mrf.mxu0
      %v3224 = vadd.f32 0.0, %v3223
      %3225 = vmatmul.bf16.gmra.mxu0 %v3165
      %v3226 = vpop.f32.mrf.mxu0
      %v3227 = vadd.f32 0.0, %v3226
      %v3228 = vpop.f32.mrf.mxu0
      %v3229 = vadd.f32 0.0, %v3228
      %3230 = vmatmul.bf16.gmra.mxu0 %v3168
      %v3231 = vpop.f32.mrf.mxu0
      %v3232 = vadd.f32 0.0, %v3231
      %v3233 = vpop.f32.mrf.mxu0
      %v3234 = vadd.f32 0.0, %v3233
      %3235 = vmatmul.bf16.gmra.mxu0 %v3171
      %v3236 = vpop.f32.mrf.mxu0
      %v3237 = vadd.f32 0.0, %v3236
      %v3238 = vpop.f32.mrf.mxu0
      %v3239 = vadd.f32 0.0, %v3238
      %3240 = vmatmul.bf16.gmra.mxu0 %v3174
      %v3241 = vpop.f32.mrf.mxu0
      %v3242 = vadd.f32 0.0, %v3241
      %v3243 = vpop.f32.mrf.mxu0
      %v3244 = vadd.f32 0.0, %v3243
      %3245 = vmatmul.bf16.gmra.mxu0 %v3177
      %v3246 = vpop.f32.mrf.mxu0
      %v3247 = vadd.f32 0.0, %v3246
      %v3248 = vpop.f32.mrf.mxu0
      %v3249 = vadd.f32 0.0, %v3248
      %3250 = vmatmul.bf16.gmra.mxu0 %v3180
      %v3251 = vpop.f32.mrf.mxu0
      %v3252 = vadd.f32 0.0, %v3251
      %v3253 = vpop.f32.mrf.mxu0
      %v3254 = vadd.f32 0.0, %v3253
      %3255 = vmatmul.bf16.gmra.mxu0 %v3183
      %v3256 = vpop.f32.mrf.mxu0
      %v3257 = vadd.f32 0.0, %v3256
      %v3258 = vpop.f32.mrf.mxu0
      %v3259 = vadd.f32 0.0, %v3258
      %3260 = vmatmul.bf16.gmra.mxu0 %v3186
      %v3261 = vpop.f32.mrf.mxu0
      %v3262 = vadd.f32 0.0, %v3261
      %v3263 = vpop.f32.mrf.mxu0
      %v3264 = vadd.f32 0.0, %v3263
      %3265 = vmatmul.bf16.gmra.mxu0 %v3189
      %v3266 = vpop.f32.mrf.mxu0
      %v3267 = vadd.f32 0.0, %v3266
      %v3268 = vpop.f32.mrf.mxu0
      %v3269 = vadd.f32 0.0, %v3268
      %3270 = vmatmul.bf16.gmra.mxu0 %v3192
      %v3271 = vpop.f32.mrf.mxu0
      %v3272 = vadd.f32 0.0, %v3271
      %v3273 = vpop.f32.mrf.mxu0
      %v3274 = vadd.f32 0.0, %v3273
      %3275 = vmatmul.bf16.gmra.mxu0 %v3195
      %v3276 = vpop.f32.mrf.mxu0
      %v3277 = vadd.f32 0.0, %v3276
      %v3278 = vpop.f32.mrf.mxu0
      %v3279 = vadd.f32 0.0, %v3278
      %3280 = vmatmul.bf16.gmra.mxu0 %v3198
      %v3281 = vpop.f32.mrf.mxu0
      %v3282 = vadd.f32 0.0, %v3281
      %v3283 = vpop.f32.mrf.mxu0
      %v3284 = vadd.f32 0.0, %v3283
      %3285 = vmatmul.bf16.gmra.mxu0 %v3201
      %v3286 = vpop.f32.mrf.mxu0
      %v3287 = vadd.f32 0.0, %v3286
      %v3288 = vpop.f32.mrf.mxu0
      %v3289 = vadd.f32 0.0, %v3288
      %3290 = vmatmul.bf16.gmra.mxu0 %v3204
      %v3291 = vpop.f32.mrf.mxu0
      %v3292 = vadd.f32 0.0, %v3291
      %v3293 = vpop.f32.mrf.mxu0
      %v3294 = vadd.f32 0.0, %v3293
      %3295 = vmatmul.bf16.gmra.mxu0 %v3207
      %v3296 = vpop.f32.mrf.mxu0
      %v3297 = vadd.f32 0.0, %v3296
      %v3298 = vpop.f32.mrf.mxu0
      %v3299 = vadd.f32 0.0, %v3298
      %3300 = vdwg.mxu0
      %v3301 = vadd.f32 %v2903, %v3222
      %v3302 = vadd.f32 %v2904, %v3224
      %v3303 = vadd.f32 %v2905, %v3227
      %v3304 = vadd.f32 %v2906, %v3229
      %v3305 = vadd.f32 %v2907, %v3232
      %v3306 = vadd.f32 %v2908, %v3234
      %v3307 = vadd.f32 %v2909, %v3237
      %v3308 = vadd.f32 %v2910, %v3239
      %v3309 = vadd.f32 %v2911, %v3242
      %v3310 = vadd.f32 %v2912, %v3244
      %v3311 = vadd.f32 %v2913, %v3247
      %v3312 = vadd.f32 %v2914, %v3249
      %v3313 = vadd.f32 %v2915, %v3252
      %v3314 = vadd.f32 %v2916, %v3254
      %v3315 = vadd.f32 %v2917, %v3257
      %v3316 = vadd.f32 %v2918, %v3259
      %v3317 = vadd.f32 %v2919, %v3262
      %v3318 = vadd.f32 %v2920, %v3264
      %v3319 = vadd.f32 %v2921, %v3267
      %v3320 = vadd.f32 %v2922, %v3269
      %v3321 = vadd.f32 %v2923, %v3272
      %v3322 = vadd.f32 %v2924, %v3274
      %v3323 = vadd.f32 %v2925, %v3277
      %v3324 = vadd.f32 %v2926, %v3279
      %v3325 = vadd.f32 %v2927, %v3282
      %v3326 = vadd.f32 %v2928, %v3284
      %v3327 = vadd.f32 %v2929, %v3287
      %v3328 = vadd.f32 %v2930, %v3289
      %v3329 = vadd.f32 %v2931, %v3292
      %v3330 = vadd.f32 %v2932, %v3294
      %v3331 = vadd.f32 %v2933, %v3297
      %v3332 = vadd.f32 %v2934, %v3299
      %s3333 = scalar_lea.vmem [#allocation2], 24
      %v3334 = vld [vmem:[%s3333] sm:$0xf]
      %v3335 = vld [vmem:[%s3333 + $0x4] sm:$0xf]
      %v3336 = vld [vmem:[%s3333 + $0xc] sm:$0xf]
      %v3337 = vld [vmem:[%s3333 + $0x10] sm:$0xf]
      %v3338 = vld [vmem:[%s3333 + $0x18] sm:$0xf]
      %v3339 = vld [vmem:[%s3333 + $0x1c] sm:$0xf]
      %v3340 = vld [vmem:[%s3333 + $0x24] sm:$0xf]
      %v3341 = vld [vmem:[%s3333 + $0x28] sm:$0xf]
      %v3342 = vld [vmem:[%s3333 + $0x30] sm:$0xf]
      %v3343 = vld [vmem:[%s3333 + $0x34] sm:$0xf]
      %v3344 = vld [vmem:[%s3333 + $0x3c] sm:$0xf]
      %v3345 = vld [vmem:[%s3333 + $0x40] sm:$0xf]
      %v3346 = vld [vmem:[%s3333 + $0x48] sm:$0xf]
      %v3347 = vld [vmem:[%s3333 + $0x4c] sm:$0xf]
      %v3348 = vld [vmem:[%s3333 + $0x54] sm:$0xf]
      %v3349 = vld [vmem:[%s3333 + $0x58] sm:$0xf]
      %v3350 = vld [vmem:[%s3333 + $0x60] sm:$0xf]
      %v3351 = vld [vmem:[%s3333 + $0x64] sm:$0xf]
      %v3352 = vld [vmem:[%s3333 + $0x6c] sm:$0xf]
      %v3353 = vld [vmem:[%s3333 + $0x70] sm:$0xf]
      %v3354 = vld [vmem:[%s3333 + $0x78] sm:$0xf]
      %v3355 = vld [vmem:[%s3333 + $0x7c] sm:$0xf]
      %v3356 = vld [vmem:[%s3333 + $0x84] sm:$0xf]
      %v3357 = vld [vmem:[%s3333 + $0x88] sm:$0xf]
      %v3358 = vld [vmem:[%s3333 + $0x90] sm:$0xf]
      %v3359 = vld [vmem:[%s3333 + $0x94] sm:$0xf]
      %v3360 = vld [vmem:[%s3333 + $0x9c] sm:$0xf]
      %v3361 = vld [vmem:[%s3333 + $0xa0] sm:$0xf]
      %v3362 = vld [vmem:[%s3333 + $0xa8] sm:$0xf]
      %v3363 = vld [vmem:[%s3333 + $0xac] sm:$0xf]
      %v3364 = vld [vmem:[%s3333 + $0xb4] sm:$0xf]
      %v3365 = vld [vmem:[%s3333 + $0xb8] sm:$0xf]
      %s3366 = scalar_lea.vmem %s1, 12
      %v3367 = vld [vmem:[%s3366] sm:$0x3]
      %v3400 = vunpack.c.l.b16 %v3334
      %v3401 = vunpack.c.l.b16 %v3335
      %v3402 = vunpack.c.l.b16 %v3336
      %v3403 = vunpack.c.l.b16 %v3337
      %v3404 = vunpack.c.l.b16 %v3338
      %v3405 = vunpack.c.l.b16 %v3339
      %v3406 = vunpack.c.l.b16 %v3340
      %v3407 = vunpack.c.l.b16 %v3341
      %v3408 = vunpack.c.l.b16 %v3342
      %v3409 = vunpack.c.l.b16 %v3343
      %v3410 = vunpack.c.l.b16 %v3344
      %v3411 = vunpack.c.l.b16 %v3345
      %v3412 = vunpack.c.l.b16 %v3346
      %v3413 = vunpack.c.l.b16 %v3347
      %v3414 = vunpack.c.l.b16 %v3348
      %v3415 = vunpack.c.l.b16 %v3349
      %v3416 = vunpack.c.l.b16 %v3350
      %v3417 = vunpack.c.l.b16 %v3351
      %v3418 = vunpack.c.l.b16 %v3352
      %v3419 = vunpack.c.l.b16 %v3353
      %v3420 = vunpack.c.l.b16 %v3354
      %v3421 = vunpack.c.l.b16 %v3355
      %v3422 = vunpack.c.l.b16 %v3356
      %v3423 = vunpack.c.l.b16 %v3357
      %v3424 = vunpack.c.l.b16 %v3358
      %v3425 = vunpack.c.l.b16 %v3359
      %v3426 = vunpack.c.l.b16 %v3360
      %v3427 = vunpack.c.l.b16 %v3361
      %v3428 = vunpack.c.l.b16 %v3362
      %v3429 = vunpack.c.l.b16 %v3363
      %v3430 = vunpack.c.l.b16 %v3364
      %v3431 = vunpack.c.l.b16 %v3365
      %v3432 = vpack.c.b16 %v3401, %v3400
      %v3433 = vpack.c.b16 %v3403, %v3402
      %v3434 = vpack.c.b16 %v3405, %v3404
      %v3435 = vpack.c.b16 %v3407, %v3406
      %v3436 = vpack.c.b16 %v3409, %v3408
      %v3437 = vpack.c.b16 %v3411, %v3410
      %v3438 = vpack.c.b16 %v3413, %v3412
      %v3439 = vpack.c.b16 %v3415, %v3414
      %v3440 = vpack.c.b16 %v3417, %v3416
      %v3441 = vpack.c.b16 %v3419, %v3418
      %v3442 = vpack.c.b16 %v3421, %v3420
      %v3443 = vpack.c.b16 %v3423, %v3422
      %v3444 = vpack.c.b16 %v3425, %v3424
      %v3445 = vpack.c.b16 %v3427, %v3426
      %v3446 = vpack.c.b16 %v3429, %v3428
      %v3447 = vpack.c.b16 %v3431, %v3430
      %v3449 = vsel %vm1248, %v3432, 0
      %v3452 = vsel %vm1248, %v3433, 0
      %v3455 = vsel %vm1248, %v3434, 0
      %v3458 = vsel %vm1248, %v3435, 0
      %v3461 = vsel %vm1248, %v3436, 0
      %v3464 = vsel %vm1248, %v3437, 0
      %v3467 = vsel %vm1248, %v3438, 0
      %v3470 = vsel %vm1248, %v3439, 0
      %v3473 = vsel %vm1248, %v3440, 0
      %v3476 = vsel %vm1248, %v3441, 0
      %v3479 = vsel %vm1248, %v3442, 0
      %v3482 = vsel %vm1248, %v3443, 0
      %v3485 = vsel %vm1248, %v3444, 0
      %v3488 = vsel %vm1248, %v3445, 0
      %v3491 = vsel %vm1248, %v3446, 0
      %v3494 = vsel %vm1248, %v3447, 0
      %v3497 = vsel %vm1297, %v3367, 0
      %3499 = vmatpush.bf16.msra.mxu0 0
      %3500 = vmatpush.bf16.msra.mxu0 0
      %3501 = vmatpush.bf16.msra.mxu0 0
      %3502 = vmatpush.bf16.msra.mxu0 0
      %3503 = vmatpush.bf16.msra.mxu0 0
      %3504 = vmatpush.bf16.msra.mxu0 0
      %3505 = vmatpush.bf16.msra.mxu0 0
      %3506 = vmatpush.bf16.msra.mxu0 %v3497
      %3507 = vmatmul.bf16.gmra.mxu0 %v3449
      %v3508 = vpop.f32.mrf.mxu0
      %v3509 = vadd.f32 0.0, %v3508
      %v3510 = vpop.f32.mrf.mxu0
      %v3511 = vadd.f32 0.0, %v3510
      %3512 = vmatmul.bf16.gmra.mxu0 %v3452
      %v3513 = vpop.f32.mrf.mxu0
      %v3514 = vadd.f32 0.0, %v3513
      %v3515 = vpop.f32.mrf.mxu0
      %v3516 = vadd.f32 0.0, %v3515
      %3517 = vmatmul.bf16.gmra.mxu0 %v3455
      %v3518 = vpop.f32.mrf.mxu0
      %v3519 = vadd.f32 0.0, %v3518
      %v3520 = vpop.f32.mrf.mxu0
      %v3521 = vadd.f32 0.0, %v3520
      %3522 = vmatmul.bf16.gmra.mxu0 %v3458
      %v3523 = vpop.f32.mrf.mxu0
      %v3524 = vadd.f32 0.0, %v3523
      %v3525 = vpop.f32.mrf.mxu0
      %v3526 = vadd.f32 0.0, %v3525
      %3527 = vmatmul.bf16.gmra.mxu0 %v3461
      %v3528 = vpop.f32.mrf.mxu0
      %v3529 = vadd.f32 0.0, %v3528
      %v3530 = vpop.f32.mrf.mxu0
      %v3531 = vadd.f32 0.0, %v3530
      %3532 = vmatmul.bf16.gmra.mxu0 %v3464
      %v3533 = vpop.f32.mrf.mxu0
      %v3534 = vadd.f32 0.0, %v3533
      %v3535 = vpop.f32.mrf.mxu0
      %v3536 = vadd.f32 0.0, %v3535
      %3537 = vmatmul.bf16.gmra.mxu0 %v3467
      %v3538 = vpop.f32.mrf.mxu0
      %v3539 = vadd.f32 0.0, %v3538
      %v3540 = vpop.f32.mrf.mxu0
      %v3541 = vadd.f32 0.0, %v3540
      %3542 = vmatmul.bf16.gmra.mxu0 %v3470
      %v3543 = vpop.f32.mrf.mxu0
      %v3544 = vadd.f32 0.0, %v3543
      %v3545 = vpop.f32.mrf.mxu0
      %v3546 = vadd.f32 0.0, %v3545
      %3547 = vmatmul.bf16.gmra.mxu0 %v3473
      %v3548 = vpop.f32.mrf.mxu0
      %v3549 = vadd.f32 0.0, %v3548
      %v3550 = vpop.f32.mrf.mxu0
      %v3551 = vadd.f32 0.0, %v3550
      %3552 = vmatmul.bf16.gmra.mxu0 %v3476
      %v3553 = vpop.f32.mrf.mxu0
      %v3554 = vadd.f32 0.0, %v3553
      %v3555 = vpop.f32.mrf.mxu0
      %v3556 = vadd.f32 0.0, %v3555
      %3557 = vmatmul.bf16.gmra.mxu0 %v3479
      %v3558 = vpop.f32.mrf.mxu0
      %v3559 = vadd.f32 0.0, %v3558
      %v3560 = vpop.f32.mrf.mxu0
      %v3561 = vadd.f32 0.0, %v3560
      %3562 = vmatmul.bf16.gmra.mxu0 %v3482
      %v3563 = vpop.f32.mrf.mxu0
      %v3564 = vadd.f32 0.0, %v3563
      %v3565 = vpop.f32.mrf.mxu0
      %v3566 = vadd.f32 0.0, %v3565
      %3567 = vmatmul.bf16.gmra.mxu0 %v3485
      %v3568 = vpop.f32.mrf.mxu0
      %v3569 = vadd.f32 0.0, %v3568
      %v3570 = vpop.f32.mrf.mxu0
      %v3571 = vadd.f32 0.0, %v3570
      %3572 = vmatmul.bf16.gmra.mxu0 %v3488
      %v3573 = vpop.f32.mrf.mxu0
      %v3574 = vadd.f32 0.0, %v3573
      %v3575 = vpop.f32.mrf.mxu0
      %v3576 = vadd.f32 0.0, %v3575
      %3577 = vmatmul.bf16.gmra.mxu0 %v3491
      %v3578 = vpop.f32.mrf.mxu0
      %v3579 = vadd.f32 0.0, %v3578
      %v3580 = vpop.f32.mrf.mxu0
      %v3581 = vadd.f32 0.0, %v3580
      %3582 = vmatmul.bf16.gmra.mxu0 %v3494
      %v3583 = vpop.f32.mrf.mxu0
      %v3584 = vadd.f32 0.0, %v3583
      %v3585 = vpop.f32.mrf.mxu0
      %v3586 = vadd.f32 0.0, %v3585
      %3587 = vdwg.mxu0
      %v3588 = vadd.f32 %v3301, %v3509
      %v3589 = vadd.f32 %v3302, %v3511
      %v3590 = vadd.f32 %v3303, %v3514
      %v3591 = vadd.f32 %v3304, %v3516
      %v3592 = vadd.f32 %v3305, %v3519
      %v3593 = vadd.f32 %v3306, %v3521
      %v3594 = vadd.f32 %v3307, %v3524
      %v3595 = vadd.f32 %v3308, %v3526
      %v3596 = vadd.f32 %v3309, %v3529
      %v3597 = vadd.f32 %v3310, %v3531
      %v3598 = vadd.f32 %v3311, %v3534
      %v3599 = vadd.f32 %v3312, %v3536
      %v3600 = vadd.f32 %v3313, %v3539
      %v3601 = vadd.f32 %v3314, %v3541
      %v3602 = vadd.f32 %v3315, %v3544
      %v3603 = vadd.f32 %v3316, %v3546
      %v3604 = vadd.f32 %v3317, %v3549
      %v3605 = vadd.f32 %v3318, %v3551
      %v3606 = vadd.f32 %v3319, %v3554
      %v3607 = vadd.f32 %v3320, %v3556
      %v3608 = vadd.f32 %v3321, %v3559
      %v3609 = vadd.f32 %v3322, %v3561
      %v3610 = vadd.f32 %v3323, %v3564
      %v3611 = vadd.f32 %v3324, %v3566
      %v3612 = vadd.f32 %v3325, %v3569
      %v3613 = vadd.f32 %v3326, %v3571
      %v3614 = vadd.f32 %v3327, %v3574
      %v3615 = vadd.f32 %v3328, %v3576
      %v3616 = vadd.f32 %v3329, %v3579
      %v3617 = vadd.f32 %v3330, %v3581
      %v3618 = vadd.f32 %v3331, %v3584
      %v3619 = vadd.f32 %v3332, %v3586
      %v3620 = vld [vmem:[%s3333] sm:$0xf]
      %v3621 = vld [vmem:[%s3333 + $0x4] sm:$0xf]
      %v3622 = vld [vmem:[%s3333 + $0x8] sm:$0x1]
      %v3623 = vld [vmem:[%s3333 + $0xc] sm:$0xf]
      %v3624 = vld [vmem:[%s3333 + $0x10] sm:$0xf]
      %v3625 = vld [vmem:[%s3333 + $0x14] sm:$0x1]
      %v3626 = vld [vmem:[%s3333 + $0x18] sm:$0xf]
      %v3627 = vld [vmem:[%s3333 + $0x1c] sm:$0xf]
      %v3628 = vld [vmem:[%s3333 + $0x20] sm:$0x1]
      %v3629 = vld [vmem:[%s3333 + $0x24] sm:$0xf]
      %v3630 = vld [vmem:[%s3333 + $0x28] sm:$0xf]
      %v3631 = vld [vmem:[%s3333 + $0x2c] sm:$0x1]
      %v3632 = vld [vmem:[%s3333 + $0x30] sm:$0xf]
      %v3633 = vld [vmem:[%s3333 + $0x34] sm:$0xf]
      %v3634 = vld [vmem:[%s3333 + $0x38] sm:$0x1]
      %v3635 = vld [vmem:[%s3333 + $0x3c] sm:$0xf]
      %v3636 = vld [vmem:[%s3333 + $0x40] sm:$0xf]
      %v3637 = vld [vmem:[%s3333 + $0x44] sm:$0x1]
      %v3638 = vld [vmem:[%s3333 + $0x48] sm:$0xf]
      %v3639 = vld [vmem:[%s3333 + $0x4c] sm:$0xf]
      %v3640 = vld [vmem:[%s3333 + $0x50] sm:$0x1]
      %v3641 = vld [vmem:[%s3333 + $0x54] sm:$0xf]
      %v3642 = vld [vmem:[%s3333 + $0x58] sm:$0xf]
      %v3643 = vld [vmem:[%s3333 + $0x5c] sm:$0x1]
      %v3644 = vld [vmem:[%s3333 + $0x60] sm:$0xf]
      %v3645 = vld [vmem:[%s3333 + $0x64] sm:$0xf]
      %v3646 = vld [vmem:[%s3333 + $0x68] sm:$0x1]
      %v3647 = vld [vmem:[%s3333 + $0x6c] sm:$0xf]
      %v3648 = vld [vmem:[%s3333 + $0x70] sm:$0xf]
      %v3649 = vld [vmem:[%s3333 + $0x74] sm:$0x1]
      %v3650 = vld [vmem:[%s3333 + $0x78] sm:$0xf]
      %v3651 = vld [vmem:[%s3333 + $0x7c] sm:$0xf]
      %v3652 = vld [vmem:[%s3333 + $0x80] sm:$0x1]
      %v3653 = vld [vmem:[%s3333 + $0x84] sm:$0xf]
      %v3654 = vld [vmem:[%s3333 + $0x88] sm:$0xf]
      %v3655 = vld [vmem:[%s3333 + $0x8c] sm:$0x1]
      %v3656 = vld [vmem:[%s3333 + $0x90] sm:$0xf]
      %v3657 = vld [vmem:[%s3333 + $0x94] sm:$0xf]
      %v3658 = vld [vmem:[%s3333 + $0x98] sm:$0x1]
      %v3659 = vld [vmem:[%s3333 + $0x9c] sm:$0xf]
      %v3660 = vld [vmem:[%s3333 + $0xa0] sm:$0xf]
      %v3661 = vld [vmem:[%s3333 + $0xa4] sm:$0x1]
      %v3662 = vld [vmem:[%s3333 + $0xa8] sm:$0xf]
      %v3663 = vld [vmem:[%s3333 + $0xac] sm:$0xf]
      %v3664 = vld [vmem:[%s3333 + $0xb0] sm:$0x1]
      %v3665 = vld [vmem:[%s3333 + $0xb4] sm:$0xf]
      %v3666 = vld [vmem:[%s3333 + $0xb8] sm:$0xf]
      %v3667 = vld [vmem:[%s3333 + $0xbc] sm:$0x1]
      %v3669 = vshrl.u32 %v3620, 16
      %v3671 = vrot.slane %v3669, 4
      %v3672 = vshll.u32 %v3620, 16
      %v3674 = vrot.slane %v3672, 5
      %v3675 = vor.u32 %v3671, %v3674
      %v3676 = vrot.slane %v3675, 4
      %v3678 = vshll.u32 %v3621, 16
      %v3680 = vrot.slane %v3678, 5
      %v3681 = vsel %vm813, %v3676, %v3680
      %v3682 = vshrl.u32 %v3621, 16
      %v3684 = vrot.slane %v3682, 4
      %v3685 = vor.u32 %v3684, %v3680
      %v3686 = vrot.slane %v3685, 4
      %v3688 = vshll.u32 %v3622, 16
      %v3690 = vrot.slane %v3688, 5
      %v3691 = vsel %vm813, %v3686, %v3690
      %v3693 = vshrl.u32 %v3623, 16
      %v3695 = vrot.slane %v3693, 4
      %v3696 = vshll.u32 %v3623, 16
      %v3698 = vrot.slane %v3696, 5
      %v3699 = vor.u32 %v3695, %v3698
      %v3700 = vrot.slane %v3699, 4
      %v3702 = vshll.u32 %v3624, 16
      %v3704 = vrot.slane %v3702, 5
      %v3705 = vsel %vm813, %v3700, %v3704
      %v3706 = vshrl.u32 %v3624, 16
      %v3708 = vrot.slane %v3706, 4
      %v3709 = vor.u32 %v3708, %v3704
      %v3710 = vrot.slane %v3709, 4
      %v3712 = vshll.u32 %v3625, 16
      %v3714 = vrot.slane %v3712, 5
      %v3715 = vsel %vm813, %v3710, %v3714
      %v3717 = vshrl.u32 %v3626, 16
      %v3719 = vrot.slane %v3717, 4
      %v3720 = vshll.u32 %v3626, 16
      %v3722 = vrot.slane %v3720, 5
      %v3723 = vor.u32 %v3719, %v3722
      %v3724 = vrot.slane %v3723, 4
      %v3726 = vshll.u32 %v3627, 16
      %v3728 = vrot.slane %v3726, 5
      %v3729 = vsel %vm813, %v3724, %v3728
      %v3730 = vshrl.u32 %v3627, 16
      %v3732 = vrot.slane %v3730, 4
      %v3733 = vor.u32 %v3732, %v3728
      %v3734 = vrot.slane %v3733, 4
      %v3736 = vshll.u32 %v3628, 16
      %v3738 = vrot.slane %v3736, 5
      %v3739 = vsel %vm813, %v3734, %v3738
      %v3741 = vshrl.u32 %v3629, 16
      %v3743 = vrot.slane %v3741, 4
      %v3744 = vshll.u32 %v3629, 16
      %v3746 = vrot.slane %v3744, 5
      %v3747 = vor.u32 %v3743, %v3746
      %v3748 = vrot.slane %v3747, 4
      %v3750 = vshll.u32 %v3630, 16
      %v3752 = vrot.slane %v3750, 5
      %v3753 = vsel %vm813, %v3748, %v3752
      %v3754 = vshrl.u32 %v3630, 16
      %v3756 = vrot.slane %v3754, 4
      %v3757 = vor.u32 %v3756, %v3752
      %v3758 = vrot.slane %v3757, 4
      %v3760 = vshll.u32 %v3631, 16
      %v3762 = vrot.slane %v3760, 5
      %v3763 = vsel %vm813, %v3758, %v3762
      %v3765 = vshrl.u32 %v3632, 16
      %v3767 = vrot.slane %v3765, 4
      %v3768 = vshll.u32 %v3632, 16
      %v3770 = vrot.slane %v3768, 5
      %v3771 = vor.u32 %v3767, %v3770
      %v3772 = vrot.slane %v3771, 4
      %v3774 = vshll.u32 %v3633, 16
      %v3776 = vrot.slane %v3774, 5
      %v3777 = vsel %vm813, %v3772, %v3776
      %v3778 = vshrl.u32 %v3633, 16
      %v3780 = vrot.slane %v3778, 4
      %v3781 = vor.u32 %v3780, %v3776
      %v3782 = vrot.slane %v3781, 4
      %v3784 = vshll.u32 %v3634, 16
      %v3786 = vrot.slane %v3784, 5
      %v3787 = vsel %vm813, %v3782, %v3786
      %v3789 = vshrl.u32 %v3635, 16
      %v3791 = vrot.slane %v3789, 4
      %v3792 = vshll.u32 %v3635, 16
      %v3794 = vrot.slane %v3792, 5
      %v3795 = vor.u32 %v3791, %v3794
      %v3796 = vrot.slane %v3795, 4
      %v3798 = vshll.u32 %v3636, 16
      %v3800 = vrot.slane %v3798, 5
      %v3801 = vsel %vm813, %v3796, %v3800
      %v3802 = vshrl.u32 %v3636, 16
      %v3804 = vrot.slane %v3802, 4
      %v3805 = vor.u32 %v3804, %v3800
      %v3806 = vrot.slane %v3805, 4
      %v3808 = vshll.u32 %v3637, 16
      %v3810 = vrot.slane %v3808, 5
      %v3811 = vsel %vm813, %v3806, %v3810
      %v3813 = vshrl.u32 %v3638, 16
      %v3815 = vrot.slane %v3813, 4
      %v3816 = vshll.u32 %v3638, 16
      %v3818 = vrot.slane %v3816, 5
      %v3819 = vor.u32 %v3815, %v3818
      %v3820 = vrot.slane %v3819, 4
      %v3822 = vshll.u32 %v3639, 16
      %v3824 = vrot.slane %v3822, 5
      %v3825 = vsel %vm813, %v3820, %v3824
      %v3826 = vshrl.u32 %v3639, 16
      %v3828 = vrot.slane %v3826, 4
      %v3829 = vor.u32 %v3828, %v3824
      %v3830 = vrot.slane %v3829, 4
      %v3832 = vshll.u32 %v3640, 16
      %v3834 = vrot.slane %v3832, 5
      %v3835 = vsel %vm813, %v3830, %v3834
      %v3837 = vshrl.u32 %v3641, 16
      %v3839 = vrot.slane %v3837, 4
      %v3840 = vshll.u32 %v3641, 16
      %v3842 = vrot.slane %v3840, 5
      %v3843 = vor.u32 %v3839, %v3842
      %v3844 = vrot.slane %v3843, 4
      %v3846 = vshll.u32 %v3642, 16
      %v3848 = vrot.slane %v3846, 5
      %v3849 = vsel %vm813, %v3844, %v3848
      %v3850 = vshrl.u32 %v3642, 16
      %v3852 = vrot.slane %v3850, 4
      %v3853 = vor.u32 %v3852, %v3848
      %v3854 = vrot.slane %v3853, 4
      %v3856 = vshll.u32 %v3643, 16
      %v3858 = vrot.slane %v3856, 5
      %v3859 = vsel %vm813, %v3854, %v3858
      %v3861 = vshrl.u32 %v3644, 16
      %v3863 = vrot.slane %v3861, 4
      %v3864 = vshll.u32 %v3644, 16
      %v3866 = vrot.slane %v3864, 5
      %v3867 = vor.u32 %v3863, %v3866
      %v3868 = vrot.slane %v3867, 4
      %v3870 = vshll.u32 %v3645, 16
      %v3872 = vrot.slane %v3870, 5
      %v3873 = vsel %vm813, %v3868, %v3872
      %v3874 = vshrl.u32 %v3645, 16
      %v3876 = vrot.slane %v3874, 4
      %v3877 = vor.u32 %v3876, %v3872
      %v3878 = vrot.slane %v3877, 4
      %v3880 = vshll.u32 %v3646, 16
      %v3882 = vrot.slane %v3880, 5
      %v3883 = vsel %vm813, %v3878, %v3882
      %v3885 = vshrl.u32 %v3647, 16
      %v3887 = vrot.slane %v3885, 4
      %v3888 = vshll.u32 %v3647, 16
      %v3890 = vrot.slane %v3888, 5
      %v3891 = vor.u32 %v3887, %v3890
      %v3892 = vrot.slane %v3891, 4
      %v3894 = vshll.u32 %v3648, 16
      %v3896 = vrot.slane %v3894, 5
      %v3897 = vsel %vm813, %v3892, %v3896
      %v3898 = vshrl.u32 %v3648, 16
      %v3900 = vrot.slane %v3898, 4
      %v3901 = vor.u32 %v3900, %v3896
      %v3902 = vrot.slane %v3901, 4
      %v3904 = vshll.u32 %v3649, 16
      %v3906 = vrot.slane %v3904, 5
      %v3907 = vsel %vm813, %v3902, %v3906
      %v3909 = vshrl.u32 %v3650, 16
      %v3911 = vrot.slane %v3909, 4
      %v3912 = vshll.u32 %v3650, 16
      %v3914 = vrot.slane %v3912, 5
      %v3915 = vor.u32 %v3911, %v3914
      %v3916 = vrot.slane %v3915, 4
      %v3918 = vshll.u32 %v3651, 16
      %v3920 = vrot.slane %v3918, 5
      %v3921 = vsel %vm813, %v3916, %v3920
      %v3922 = vshrl.u32 %v3651, 16
      %v3924 = vrot.slane %v3922, 4
      %v3925 = vor.u32 %v3924, %v3920
      %v3926 = vrot.slane %v3925, 4
      %v3928 = vshll.u32 %v3652, 16
      %v3930 = vrot.slane %v3928, 5
      %v3931 = vsel %vm813, %v3926, %v3930
      %v3933 = vshrl.u32 %v3653, 16
      %v3935 = vrot.slane %v3933, 4
      %v3936 = vshll.u32 %v3653, 16
      %v3938 = vrot.slane %v3936, 5
      %v3939 = vor.u32 %v3935, %v3938
      %v3940 = vrot.slane %v3939, 4
      %v3942 = vshll.u32 %v3654, 16
      %v3944 = vrot.slane %v3942, 5
      %v3945 = vsel %vm813, %v3940, %v3944
      %v3946 = vshrl.u32 %v3654, 16
      %v3948 = vrot.slane %v3946, 4
      %v3949 = vor.u32 %v3948, %v3944
      %v3950 = vrot.slane %v3949, 4
      %v3952 = vshll.u32 %v3655, 16
      %v3954 = vrot.slane %v3952, 5
      %v3955 = vsel %vm813, %v3950, %v3954
      %v3957 = vshrl.u32 %v3656, 16
      %v3959 = vrot.slane %v3957, 4
      %v3960 = vshll.u32 %v3656, 16
      %v3962 = vrot.slane %v3960, 5
      %v3963 = vor.u32 %v3959, %v3962
      %v3964 = vrot.slane %v3963, 4
      %v3966 = vshll.u32 %v3657, 16
      %v3968 = vrot.slane %v3966, 5
      %v3969 = vsel %vm813, %v3964, %v3968
      %v3970 = vshrl.u32 %v3657, 16
      %v3972 = vrot.slane %v3970, 4
      %v3973 = vor.u32 %v3972, %v3968
      %v3974 = vrot.slane %v3973, 4
      %v3976 = vshll.u32 %v3658, 16
      %v3978 = vrot.slane %v3976, 5
      %v3979 = vsel %vm813, %v3974, %v3978
      %v3981 = vshrl.u32 %v3659, 16
      %v3983 = vrot.slane %v3981, 4
      %v3984 = vshll.u32 %v3659, 16
      %v3986 = vrot.slane %v3984, 5
      %v3987 = vor.u32 %v3983, %v3986
      %v3988 = vrot.slane %v3987, 4
      %v3990 = vshll.u32 %v3660, 16
      %v3992 = vrot.slane %v3990, 5
      %v3993 = vsel %vm813, %v3988, %v3992
      %v3994 = vshrl.u32 %v3660, 16
      %v3996 = vrot.slane %v3994, 4
      %v3997 = vor.u32 %v3996, %v3992
      %v3998 = vrot.slane %v3997, 4
      %v4000 = vshll.u32 %v3661, 16
      %v4002 = vrot.slane %v4000, 5
      %v4003 = vsel %vm813, %v3998, %v4002
      %v4005 = vshrl.u32 %v3662, 16
      %v4007 = vrot.slane %v4005, 4
      %v4008 = vshll.u32 %v3662, 16
      %v4010 = vrot.slane %v4008, 5
      %v4011 = vor.u32 %v4007, %v4010
      %v4012 = vrot.slane %v4011, 4
      %v4014 = vshll.u32 %v3663, 16
      %v4016 = vrot.slane %v4014, 5
      %v4017 = vsel %vm813, %v4012, %v4016
      %v4018 = vshrl.u32 %v3663, 16
      %v4020 = vrot.slane %v4018, 4
      %v4021 = vor.u32 %v4020, %v4016
      %v4022 = vrot.slane %v4021, 4
      %v4024 = vshll.u32 %v3664, 16
      %v4026 = vrot.slane %v4024, 5
      %v4027 = vsel %vm813, %v4022, %v4026
      %v4029 = vshrl.u32 %v3665, 16
      %v4031 = vrot.slane %v4029, 4
      %v4032 = vshll.u32 %v3665, 16
      %v4034 = vrot.slane %v4032, 5
      %v4035 = vor.u32 %v4031, %v4034
      %v4036 = vrot.slane %v4035, 4
      %v4038 = vshll.u32 %v3666, 16
      %v4040 = vrot.slane %v4038, 5
      %v4041 = vsel %vm813, %v4036, %v4040
      %v4042 = vshrl.u32 %v3666, 16
      %v4044 = vrot.slane %v4042, 4
      %v4045 = vor.u32 %v4044, %v4040
      %v4046 = vrot.slane %v4045, 4
      %v4048 = vshll.u32 %v3667, 16
      %v4050 = vrot.slane %v4048, 5
      %v4051 = vsel %vm813, %v4046, %v4050
      %s4052 = scalar_lea.vmem %s1, 14
      %v4053 = vld [vmem:[%s4052] sm:$0x3]
      %v4054 = vunpack.c.l.b16 %v3681
      %v4055 = vunpack.c.l.b16 %v3691
      %v4056 = vunpack.c.l.b16 %v3705
      %v4057 = vunpack.c.l.b16 %v3715
      %v4058 = vunpack.c.l.b16 %v3729
      %v4059 = vunpack.c.l.b16 %v3739
      %v4060 = vunpack.c.l.b16 %v3753
      %v4061 = vunpack.c.l.b16 %v3763
      %v4062 = vunpack.c.l.b16 %v3777
      %v4063 = vunpack.c.l.b16 %v3787
      %v4064 = vunpack.c.l.b16 %v3801
      %v4065 = vunpack.c.l.b16 %v3811
      %v4066 = vunpack.c.l.b16 %v3825
      %v4067 = vunpack.c.l.b16 %v3835
      %v4068 = vunpack.c.l.b16 %v3849
      %v4069 = vunpack.c.l.b16 %v3859
      %v4070 = vunpack.c.l.b16 %v3873
      %v4071 = vunpack.c.l.b16 %v3883
      %v4072 = vunpack.c.l.b16 %v3897
      %v4073 = vunpack.c.l.b16 %v3907
      %v4074 = vunpack.c.l.b16 %v3921
      %v4075 = vunpack.c.l.b16 %v3931
      %v4076 = vunpack.c.l.b16 %v3945
      %v4077 = vunpack.c.l.b16 %v3955
      %v4078 = vunpack.c.l.b16 %v3969
      %v4079 = vunpack.c.l.b16 %v3979
      %v4080 = vunpack.c.l.b16 %v3993
      %v4081 = vunpack.c.l.b16 %v4003
      %v4082 = vunpack.c.l.b16 %v4017
      %v4083 = vunpack.c.l.b16 %v4027
      %v4084 = vunpack.c.l.b16 %v4041
      %v4085 = vunpack.c.l.b16 %v4051
      %v4086 = vpack.c.b16 %v4055, %v4054
      %v4087 = vpack.c.b16 %v4057, %v4056
      %v4088 = vpack.c.b16 %v4059, %v4058
      %v4089 = vpack.c.b16 %v4061, %v4060
      %v4090 = vpack.c.b16 %v4063, %v4062
      %v4091 = vpack.c.b16 %v4065, %v4064
      %v4092 = vpack.c.b16 %v4067, %v4066
      %v4093 = vpack.c.b16 %v4069, %v4068
      %v4094 = vpack.c.b16 %v4071, %v4070
      %v4095 = vpack.c.b16 %v4073, %v4072
      %v4096 = vpack.c.b16 %v4075, %v4074
      %v4097 = vpack.c.b16 %v4077, %v4076
      %v4098 = vpack.c.b16 %v4079, %v4078
      %v4099 = vpack.c.b16 %v4081, %v4080
      %v4100 = vpack.c.b16 %v4083, %v4082
      %v4101 = vpack.c.b16 %v4085, %v4084
      %v4103 = vsel %vm1248, %v4086, 0
      %v4106 = vsel %vm1248, %v4087, 0
      %v4109 = vsel %vm1248, %v4088, 0
      %v4112 = vsel %vm1248, %v4089, 0
      %v4115 = vsel %vm1248, %v4090, 0
      %v4118 = vsel %vm1248, %v4091, 0
      %v4121 = vsel %vm1248, %v4092, 0
      %v4124 = vsel %vm1248, %v4093, 0
      %v4127 = vsel %vm1248, %v4094, 0
      %v4130 = vsel %vm1248, %v4095, 0
      %v4133 = vsel %vm1248, %v4096, 0
      %v4136 = vsel %vm1248, %v4097, 0
      %v4139 = vsel %vm1248, %v4098, 0
      %v4142 = vsel %vm1248, %v4099, 0
      %v4145 = vsel %vm1248, %v4100, 0
      %v4148 = vsel %vm1248, %v4101, 0
      %v4151 = vsel %vm1297, %v4053, 0
      %4153 = vmatpush.bf16.msra.mxu0 0
      %4154 = vmatpush.bf16.msra.mxu0 0
      %4155 = vmatpush.bf16.msra.mxu0 0
      %4156 = vmatpush.bf16.msra.mxu0 0
      %4157 = vmatpush.bf16.msra.mxu0 0
      %4158 = vmatpush.bf16.msra.mxu0 0
      %4159 = vmatpush.bf16.msra.mxu0 0
      %4160 = vmatpush.bf16.msra.mxu0 %v4151
      %4161 = vmatmul.bf16.gmra.mxu0 %v4103
      %v4162 = vpop.f32.mrf.mxu0
      %v4163 = vadd.f32 0.0, %v4162
      %v4164 = vpop.f32.mrf.mxu0
      %v4165 = vadd.f32 0.0, %v4164
      %4166 = vmatmul.bf16.gmra.mxu0 %v4106
      %v4167 = vpop.f32.mrf.mxu0
      %v4168 = vadd.f32 0.0, %v4167
      %v4169 = vpop.f32.mrf.mxu0
      %v4170 = vadd.f32 0.0, %v4169
      %4171 = vmatmul.bf16.gmra.mxu0 %v4109
      %v4172 = vpop.f32.mrf.mxu0
      %v4173 = vadd.f32 0.0, %v4172
      %v4174 = vpop.f32.mrf.mxu0
      %v4175 = vadd.f32 0.0, %v4174
      %4176 = vmatmul.bf16.gmra.mxu0 %v4112
      %v4177 = vpop.f32.mrf.mxu0
      %v4178 = vadd.f32 0.0, %v4177
      %v4179 = vpop.f32.mrf.mxu0
      %v4180 = vadd.f32 0.0, %v4179
      %4181 = vmatmul.bf16.gmra.mxu0 %v4115
      %v4182 = vpop.f32.mrf.mxu0
      %v4183 = vadd.f32 0.0, %v4182
      %v4184 = vpop.f32.mrf.mxu0
      %v4185 = vadd.f32 0.0, %v4184
      %4186 = vmatmul.bf16.gmra.mxu0 %v4118
      %v4187 = vpop.f32.mrf.mxu0
      %v4188 = vadd.f32 0.0, %v4187
      %v4189 = vpop.f32.mrf.mxu0
      %v4190 = vadd.f32 0.0, %v4189
      %4191 = vmatmul.bf16.gmra.mxu0 %v4121
      %v4192 = vpop.f32.mrf.mxu0
      %v4193 = vadd.f32 0.0, %v4192
      %v4194 = vpop.f32.mrf.mxu0
      %v4195 = vadd.f32 0.0, %v4194
      %4196 = vmatmul.bf16.gmra.mxu0 %v4124
      %v4197 = vpop.f32.mrf.mxu0
      %v4198 = vadd.f32 0.0, %v4197
      %v4199 = vpop.f32.mrf.mxu0
      %v4200 = vadd.f32 0.0, %v4199
      %4201 = vmatmul.bf16.gmra.mxu0 %v4127
      %v4202 = vpop.f32.mrf.mxu0
      %v4203 = vadd.f32 0.0, %v4202
      %v4204 = vpop.f32.mrf.mxu0
      %v4205 = vadd.f32 0.0, %v4204
      %4206 = vmatmul.bf16.gmra.mxu0 %v4130
      %v4207 = vpop.f32.mrf.mxu0
      %v4208 = vadd.f32 0.0, %v4207
      %v4209 = vpop.f32.mrf.mxu0
      %v4210 = vadd.f32 0.0, %v4209
      %4211 = vmatmul.bf16.gmra.mxu0 %v4133
      %v4212 = vpop.f32.mrf.mxu0
      %v4213 = vadd.f32 0.0, %v4212
      %v4214 = vpop.f32.mrf.mxu0
      %v4215 = vadd.f32 0.0, %v4214
      %4216 = vmatmul.bf16.gmra.mxu0 %v4136
      %v4217 = vpop.f32.mrf.mxu0
      %v4218 = vadd.f32 0.0, %v4217
      %v4219 = vpop.f32.mrf.mxu0
      %v4220 = vadd.f32 0.0, %v4219
      %4221 = vmatmul.bf16.gmra.mxu0 %v4139
      %v4222 = vpop.f32.mrf.mxu0
      %v4223 = vadd.f32 0.0, %v4222
      %v4224 = vpop.f32.mrf.mxu0
      %v4225 = vadd.f32 0.0, %v4224
      %4226 = vmatmul.bf16.gmra.mxu0 %v4142
      %v4227 = vpop.f32.mrf.mxu0
      %v4228 = vadd.f32 0.0, %v4227
      %v4229 = vpop.f32.mrf.mxu0
      %v4230 = vadd.f32 0.0, %v4229
      %4231 = vmatmul.bf16.gmra.mxu0 %v4145
      %v4232 = vpop.f32.mrf.mxu0
      %v4233 = vadd.f32 0.0, %v4232
      %v4234 = vpop.f32.mrf.mxu0
      %v4235 = vadd.f32 0.0, %v4234
      %4236 = vmatmul.bf16.gmra.mxu0 %v4148
      %v4237 = vpop.f32.mrf.mxu0
      %v4238 = vadd.f32 0.0, %v4237
      %v4239 = vpop.f32.mrf.mxu0
      %v4240 = vadd.f32 0.0, %v4239
      %4241 = vdwg.mxu0
      %v4242 = vadd.f32 %v3588, %v4163
      %v4243 = vadd.f32 %v3589, %v4165
      %v4244 = vadd.f32 %v3590, %v4168
      %v4245 = vadd.f32 %v3591, %v4170
      %v4246 = vadd.f32 %v3592, %v4173
      %v4247 = vadd.f32 %v3593, %v4175
      %v4248 = vadd.f32 %v3594, %v4178
      %v4249 = vadd.f32 %v3595, %v4180
      %v4250 = vadd.f32 %v3596, %v4183
      %v4251 = vadd.f32 %v3597, %v4185
      %v4252 = vadd.f32 %v3598, %v4188
      %v4253 = vadd.f32 %v3599, %v4190
      %v4254 = vadd.f32 %v3600, %v4193
      %v4255 = vadd.f32 %v3601, %v4195
      %v4256 = vadd.f32 %v3602, %v4198
      %v4257 = vadd.f32 %v3603, %v4200
      %v4258 = vadd.f32 %v3604, %v4203
      %v4259 = vadd.f32 %v3605, %v4205
      %v4260 = vadd.f32 %v3606, %v4208
      %v4261 = vadd.f32 %v3607, %v4210
      %v4262 = vadd.f32 %v3608, %v4213
      %v4263 = vadd.f32 %v3609, %v4215
      %v4264 = vadd.f32 %v3610, %v4218
      %v4265 = vadd.f32 %v3611, %v4220
      %v4266 = vadd.f32 %v3612, %v4223
      %v4267 = vadd.f32 %v3613, %v4225
      %v4268 = vadd.f32 %v3614, %v4228
      %v4269 = vadd.f32 %v3615, %v4230
      %v4270 = vadd.f32 %v3616, %v4233
      %v4271 = vadd.f32 %v3617, %v4235
      %v4272 = vadd.f32 %v3618, %v4238
      %v4273 = vadd.f32 %v3619, %v4240
      %v4274 = vld [vmem:[%s3333] sm:$0xe]
      %v4275 = vld [vmem:[%s3333 + $0xc] sm:$0xe]
      %v4276 = vld [vmem:[%s3333 + $0x18] sm:$0xe]
      %v4277 = vld [vmem:[%s3333 + $0x24] sm:$0xe]
      %v4278 = vld [vmem:[%s3333 + $0x30] sm:$0xe]
      %v4279 = vld [vmem:[%s3333 + $0x3c] sm:$0xe]
      %v4280 = vld [vmem:[%s3333 + $0x48] sm:$0xe]
      %v4281 = vld [vmem:[%s3333 + $0x54] sm:$0xe]
      %v4282 = vld [vmem:[%s3333 + $0x60] sm:$0xe]
      %v4283 = vld [vmem:[%s3333 + $0x6c] sm:$0xe]
      %v4284 = vld [vmem:[%s3333 + $0x78] sm:$0xe]
      %v4285 = vld [vmem:[%s3333 + $0x84] sm:$0xe]
      %v4286 = vld [vmem:[%s3333 + $0x90] sm:$0xe]
      %v4287 = vld [vmem:[%s3333 + $0x9c] sm:$0xe]
      %v4288 = vld [vmem:[%s3333 + $0xa8] sm:$0xe]
      %v4289 = vld [vmem:[%s3333 + $0xb4] sm:$0xe]
      %v4338 = vrot.slane %v4274, 5
      %v4339 = vrot.slane %v4338, 4
      %v4340 = vrot.slane %v3621, 5
      %v4341 = vsel %vm1660, %v4339, %v4340
      %v4342 = vrot.slane %v4340, 4
      %v4343 = vrot.slane %v3622, 5
      %v4344 = vsel %vm1660, %v4342, %v4343
      %v4345 = vrot.slane %v4275, 5
      %v4346 = vrot.slane %v4345, 4
      %v4347 = vrot.slane %v3624, 5
      %v4348 = vsel %vm1660, %v4346, %v4347
      %v4349 = vrot.slane %v4347, 4
      %v4350 = vrot.slane %v3625, 5
      %v4351 = vsel %vm1660, %v4349, %v4350
      %v4352 = vrot.slane %v4276, 5
      %v4353 = vrot.slane %v4352, 4
      %v4354 = vrot.slane %v3627, 5
      %v4355 = vsel %vm1660, %v4353, %v4354
      %v4356 = vrot.slane %v4354, 4
      %v4357 = vrot.slane %v3628, 5
      %v4358 = vsel %vm1660, %v4356, %v4357
      %v4359 = vrot.slane %v4277, 5
      %v4360 = vrot.slane %v4359, 4
      %v4361 = vrot.slane %v3630, 5
      %v4362 = vsel %vm1660, %v4360, %v4361
      %v4363 = vrot.slane %v4361, 4
      %v4364 = vrot.slane %v3631, 5
      %v4365 = vsel %vm1660, %v4363, %v4364
      %v4366 = vrot.slane %v4278, 5
      %v4367 = vrot.slane %v4366, 4
      %v4368 = vrot.slane %v3633, 5
      %v4369 = vsel %vm1660, %v4367, %v4368
      %v4370 = vrot.slane %v4368, 4
      %v4371 = vrot.slane %v3634, 5
      %v4372 = vsel %vm1660, %v4370, %v4371
      %v4373 = vrot.slane %v4279, 5
      %v4374 = vrot.slane %v4373, 4
      %v4375 = vrot.slane %v3636, 5
      %v4376 = vsel %vm1660, %v4374, %v4375
      %v4377 = vrot.slane %v4375, 4
      %v4378 = vrot.slane %v3637, 5
      %v4379 = vsel %vm1660, %v4377, %v4378
      %v4380 = vrot.slane %v4280, 5
      %v4381 = vrot.slane %v4380, 4
      %v4382 = vrot.slane %v3639, 5
      %v4383 = vsel %vm1660, %v4381, %v4382
      %v4384 = vrot.slane %v4382, 4
      %v4385 = vrot.slane %v3640, 5
      %v4386 = vsel %vm1660, %v4384, %v4385
      %v4387 = vrot.slane %v4281, 5
      %v4388 = vrot.slane %v4387, 4
      %v4389 = vrot.slane %v3642, 5
      %v4390 = vsel %vm1660, %v4388, %v4389
      %v4391 = vrot.slane %v4389, 4
      %v4392 = vrot.slane %v3643, 5
      %v4393 = vsel %vm1660, %v4391, %v4392
      %v4394 = vrot.slane %v4282, 5
      %v4395 = vrot.slane %v4394, 4
      %v4396 = vrot.slane %v3645, 5
      %v4397 = vsel %vm1660, %v4395, %v4396
      %v4398 = vrot.slane %v4396, 4
      %v4399 = vrot.slane %v3646, 5
      %v4400 = vsel %vm1660, %v4398, %v4399
      %v4401 = vrot.slane %v4283, 5
      %v4402 = vrot.slane %v4401, 4
      %v4403 = vrot.slane %v3648, 5
      %v4404 = vsel %vm1660, %v4402, %v4403
      %v4405 = vrot.slane %v4403, 4
      %v4406 = vrot.slane %v3649, 5
      %v4407 = vsel %vm1660, %v4405, %v4406
      %v4408 = vrot.slane %v4284, 5
      %v4409 = vrot.slane %v4408, 4
      %v4410 = vrot.slane %v3651, 5
      %v4411 = vsel %vm1660, %v4409, %v4410
      %v4412 = vrot.slane %v4410, 4
      %v4413 = vrot.slane %v3652, 5
      %v4414 = vsel %vm1660, %v4412, %v4413
      %v4415 = vrot.slane %v4285, 5
      %v4416 = vrot.slane %v4415, 4
      %v4417 = vrot.slane %v3654, 5
      %v4418 = vsel %vm1660, %v4416, %v4417
      %v4419 = vrot.slane %v4417, 4
      %v4420 = vrot.slane %v3655, 5
      %v4421 = vsel %vm1660, %v4419, %v4420
      %v4422 = vrot.slane %v4286, 5
      %v4423 = vrot.slane %v4422, 4
      %v4424 = vrot.slane %v3657, 5
      %v4425 = vsel %vm1660, %v4423, %v4424
      %v4426 = vrot.slane %v4424, 4
      %v4427 = vrot.slane %v3658, 5
      %v4428 = vsel %vm1660, %v4426, %v4427
      %v4429 = vrot.slane %v4287, 5
      %v4430 = vrot.slane %v4429, 4
      %v4431 = vrot.slane %v3660, 5
      %v4432 = vsel %vm1660, %v4430, %v4431
      %v4433 = vrot.slane %v4431, 4
      %v4434 = vrot.slane %v3661, 5
      %v4435 = vsel %vm1660, %v4433, %v4434
      %v4436 = vrot.slane %v4288, 5
      %v4437 = vrot.slane %v4436, 4
      %v4438 = vrot.slane %v3663, 5
      %v4439 = vsel %vm1660, %v4437, %v4438
      %v4440 = vrot.slane %v4438, 4
      %v4441 = vrot.slane %v3664, 5
      %v4442 = vsel %vm1660, %v4440, %v4441
      %v4443 = vrot.slane %v4289, 5
      %v4444 = vrot.slane %v4443, 4
      %v4445 = vrot.slane %v3666, 5
      %v4446 = vsel %vm1660, %v4444, %v4445
      %v4447 = vrot.slane %v4445, 4
      %v4448 = vrot.slane %v3667, 5
      %v4449 = vsel %vm1660, %v4447, %v4448
      %s4450 = scalar_lea.vmem %s1, 16
      %v4451 = vld [vmem:[%s4450] sm:$0x3]
      %v4452 = vunpack.c.l.b16 %v4341
      %v4453 = vunpack.c.l.b16 %v4344
      %v4454 = vunpack.c.l.b16 %v4348
      %v4455 = vunpack.c.l.b16 %v4351
      %v4456 = vunpack.c.l.b16 %v4355
      %v4457 = vunpack.c.l.b16 %v4358
      %v4458 = vunpack.c.l.b16 %v4362
      %v4459 = vunpack.c.l.b16 %v4365
      %v4460 = vunpack.c.l.b16 %v4369
      %v4461 = vunpack.c.l.b16 %v4372
      %v4462 = vunpack.c.l.b16 %v4376
      %v4463 = vunpack.c.l.b16 %v4379
      %v4464 = vunpack.c.l.b16 %v4383
      %v4465 = vunpack.c.l.b16 %v4386
      %v4466 = vunpack.c.l.b16 %v4390
      %v4467 = vunpack.c.l.b16 %v4393
      %v4468 = vunpack.c.l.b16 %v4397
      %v4469 = vunpack.c.l.b16 %v4400
      %v4470 = vunpack.c.l.b16 %v4404
      %v4471 = vunpack.c.l.b16 %v4407
      %v4472 = vunpack.c.l.b16 %v4411
      %v4473 = vunpack.c.l.b16 %v4414
      %v4474 = vunpack.c.l.b16 %v4418
      %v4475 = vunpack.c.l.b16 %v4421
      %v4476 = vunpack.c.l.b16 %v4425
      %v4477 = vunpack.c.l.b16 %v4428
      %v4478 = vunpack.c.l.b16 %v4432
      %v4479 = vunpack.c.l.b16 %v4435
      %v4480 = vunpack.c.l.b16 %v4439
      %v4481 = vunpack.c.l.b16 %v4442
      %v4482 = vunpack.c.l.b16 %v4446
      %v4483 = vunpack.c.l.b16 %v4449
      %v4484 = vpack.c.b16 %v4453, %v4452
      %v4485 = vpack.c.b16 %v4455, %v4454
      %v4486 = vpack.c.b16 %v4457, %v4456
      %v4487 = vpack.c.b16 %v4459, %v4458
      %v4488 = vpack.c.b16 %v4461, %v4460
      %v4489 = vpack.c.b16 %v4463, %v4462
      %v4490 = vpack.c.b16 %v4465, %v4464
      %v4491 = vpack.c.b16 %v4467, %v4466
      %v4492 = vpack.c.b16 %v4469, %v4468
      %v4493 = vpack.c.b16 %v4471, %v4470
      %v4494 = vpack.c.b16 %v4473, %v4472
      %v4495 = vpack.c.b16 %v4475, %v4474
      %v4496 = vpack.c.b16 %v4477, %v4476
      %v4497 = vpack.c.b16 %v4479, %v4478
      %v4498 = vpack.c.b16 %v4481, %v4480
      %v4499 = vpack.c.b16 %v4483, %v4482
      %v4501 = vsel %vm1248, %v4484, 0
      %v4504 = vsel %vm1248, %v4485, 0
      %v4507 = vsel %vm1248, %v4486, 0
      %v4510 = vsel %vm1248, %v4487, 0
      %v4513 = vsel %vm1248, %v4488, 0
      %v4516 = vsel %vm1248, %v4489, 0
      %v4519 = vsel %vm1248, %v4490, 0
      %v4522 = vsel %vm1248, %v4491, 0
      %v4525 = vsel %vm1248, %v4492, 0
      %v4528 = vsel %vm1248, %v4493, 0
      %v4531 = vsel %vm1248, %v4494, 0
      %v4534 = vsel %vm1248, %v4495, 0
      %v4537 = vsel %vm1248, %v4496, 0
      %v4540 = vsel %vm1248, %v4497, 0
      %v4543 = vsel %vm1248, %v4498, 0
      %v4546 = vsel %vm1248, %v4499, 0
      %v4549 = vsel %vm1297, %v4451, 0
      %4551 = vmatpush.bf16.msra.mxu0 0
      %4552 = vmatpush.bf16.msra.mxu0 0
      %4553 = vmatpush.bf16.msra.mxu0 0
      %4554 = vmatpush.bf16.msra.mxu0 0
      %4555 = vmatpush.bf16.msra.mxu0 0
      %4556 = vmatpush.bf16.msra.mxu0 0
      %4557 = vmatpush.bf16.msra.mxu0 0
      %4558 = vmatpush.bf16.msra.mxu0 %v4549
      %4559 = vmatmul.bf16.gmra.mxu0 %v4501
      %v4560 = vpop.f32.mrf.mxu0
      %v4561 = vadd.f32 0.0, %v4560
      %v4562 = vpop.f32.mrf.mxu0
      %v4563 = vadd.f32 0.0, %v4562
      %4564 = vmatmul.bf16.gmra.mxu0 %v4504
      %v4565 = vpop.f32.mrf.mxu0
      %v4566 = vadd.f32 0.0, %v4565
      %v4567 = vpop.f32.mrf.mxu0
      %v4568 = vadd.f32 0.0, %v4567
      %4569 = vmatmul.bf16.gmra.mxu0 %v4507
      %v4570 = vpop.f32.mrf.mxu0
      %v4571 = vadd.f32 0.0, %v4570
      %v4572 = vpop.f32.mrf.mxu0
      %v4573 = vadd.f32 0.0, %v4572
      %4574 = vmatmul.bf16.gmra.mxu0 %v4510
      %v4575 = vpop.f32.mrf.mxu0
      %v4576 = vadd.f32 0.0, %v4575
      %v4577 = vpop.f32.mrf.mxu0
      %v4578 = vadd.f32 0.0, %v4577
      %4579 = vmatmul.bf16.gmra.mxu0 %v4513
      %v4580 = vpop.f32.mrf.mxu0
      %v4581 = vadd.f32 0.0, %v4580
      %v4582 = vpop.f32.mrf.mxu0
      %v4583 = vadd.f32 0.0, %v4582
      %4584 = vmatmul.bf16.gmra.mxu0 %v4516
      %v4585 = vpop.f32.mrf.mxu0
      %v4586 = vadd.f32 0.0, %v4585
      %v4587 = vpop.f32.mrf.mxu0
      %v4588 = vadd.f32 0.0, %v4587
      %4589 = vmatmul.bf16.gmra.mxu0 %v4519
      %v4590 = vpop.f32.mrf.mxu0
      %v4591 = vadd.f32 0.0, %v4590
      %v4592 = vpop.f32.mrf.mxu0
      %v4593 = vadd.f32 0.0, %v4592
      %4594 = vmatmul.bf16.gmra.mxu0 %v4522
      %v4595 = vpop.f32.mrf.mxu0
      %v4596 = vadd.f32 0.0, %v4595
      %v4597 = vpop.f32.mrf.mxu0
      %v4598 = vadd.f32 0.0, %v4597
      %4599 = vmatmul.bf16.gmra.mxu0 %v4525
      %v4600 = vpop.f32.mrf.mxu0
      %v4601 = vadd.f32 0.0, %v4600
      %v4602 = vpop.f32.mrf.mxu0
      %v4603 = vadd.f32 0.0, %v4602
      %4604 = vmatmul.bf16.gmra.mxu0 %v4528
      %v4605 = vpop.f32.mrf.mxu0
      %v4606 = vadd.f32 0.0, %v4605
      %v4607 = vpop.f32.mrf.mxu0
      %v4608 = vadd.f32 0.0, %v4607
      %4609 = vmatmul.bf16.gmra.mxu0 %v4531
      %v4610 = vpop.f32.mrf.mxu0
      %v4611 = vadd.f32 0.0, %v4610
      %v4612 = vpop.f32.mrf.mxu0
      %v4613 = vadd.f32 0.0, %v4612
      %4614 = vmatmul.bf16.gmra.mxu0 %v4534
      %v4615 = vpop.f32.mrf.mxu0
      %v4616 = vadd.f32 0.0, %v4615
      %v4617 = vpop.f32.mrf.mxu0
      %v4618 = vadd.f32 0.0, %v4617
      %4619 = vmatmul.bf16.gmra.mxu0 %v4537
      %v4620 = vpop.f32.mrf.mxu0
      %v4621 = vadd.f32 0.0, %v4620
      %v4622 = vpop.f32.mrf.mxu0
      %v4623 = vadd.f32 0.0, %v4622
      %4624 = vmatmul.bf16.gmra.mxu0 %v4540
      %v4625 = vpop.f32.mrf.mxu0
      %v4626 = vadd.f32 0.0, %v4625
      %v4627 = vpop.f32.mrf.mxu0
      %v4628 = vadd.f32 0.0, %v4627
      %4629 = vmatmul.bf16.gmra.mxu0 %v4543
      %v4630 = vpop.f32.mrf.mxu0
      %v4631 = vadd.f32 0.0, %v4630
      %v4632 = vpop.f32.mrf.mxu0
      %v4633 = vadd.f32 0.0, %v4632
      %4634 = vmatmul.bf16.gmra.mxu0 %v4546
      %v4635 = vpop.f32.mrf.mxu0
      %v4636 = vadd.f32 0.0, %v4635
      %v4637 = vpop.f32.mrf.mxu0
      %v4638 = vadd.f32 0.0, %v4637
      %4639 = vdwg.mxu0
      %v4640 = vadd.f32 %v4242, %v4561
      %v4641 = vadd.f32 %v4243, %v4563
      %v4642 = vadd.f32 %v4244, %v4566
      %v4643 = vadd.f32 %v4245, %v4568
      %v4644 = vadd.f32 %v4246, %v4571
      %v4645 = vadd.f32 %v4247, %v4573
      %v4646 = vadd.f32 %v4248, %v4576
      %v4647 = vadd.f32 %v4249, %v4578
      %v4648 = vadd.f32 %v4250, %v4581
      %v4649 = vadd.f32 %v4251, %v4583
      %v4650 = vadd.f32 %v4252, %v4586
      %v4651 = vadd.f32 %v4253, %v4588
      %v4652 = vadd.f32 %v4254, %v4591
      %v4653 = vadd.f32 %v4255, %v4593
      %v4654 = vadd.f32 %v4256, %v4596
      %v4655 = vadd.f32 %v4257, %v4598
      %v4656 = vadd.f32 %v4258, %v4601
      %v4657 = vadd.f32 %v4259, %v4603
      %v4658 = vadd.f32 %v4260, %v4606
      %v4659 = vadd.f32 %v4261, %v4608
      %v4660 = vadd.f32 %v4262, %v4611
      %v4661 = vadd.f32 %v4263, %v4613
      %v4662 = vadd.f32 %v4264, %v4616
      %v4663 = vadd.f32 %v4265, %v4618
      %v4664 = vadd.f32 %v4266, %v4621
      %v4665 = vadd.f32 %v4267, %v4623
      %v4666 = vadd.f32 %v4268, %v4626
      %v4667 = vadd.f32 %v4269, %v4628
      %v4668 = vadd.f32 %v4270, %v4631
      %v4669 = vadd.f32 %v4271, %v4633
      %v4670 = vadd.f32 %v4272, %v4636
      %v4671 = vadd.f32 %v4273, %v4638
      %v4672 = vpack.c.bf16 %v4640, %v4640
      %v4673 = vpack.c.bf16 %v4641, %v4641
      %v4674 = vpack.c.bf16 %v4642, %v4642
      %v4675 = vpack.c.bf16 %v4643, %v4643
      %v4676 = vpack.c.bf16 %v4644, %v4644
      %v4677 = vpack.c.bf16 %v4645, %v4645
      %v4678 = vpack.c.bf16 %v4646, %v4646
      %v4679 = vpack.c.bf16 %v4647, %v4647
      %v4680 = vpack.c.bf16 %v4648, %v4648
      %v4681 = vpack.c.bf16 %v4649, %v4649
      %v4682 = vpack.c.bf16 %v4650, %v4650
      %v4683 = vpack.c.bf16 %v4651, %v4651
      %v4684 = vpack.c.bf16 %v4652, %v4652
      %v4685 = vpack.c.bf16 %v4653, %v4653
      %v4686 = vpack.c.bf16 %v4654, %v4654
      %v4687 = vpack.c.bf16 %v4655, %v4655
      %v4688 = vpack.c.bf16 %v4656, %v4656
      %v4689 = vpack.c.bf16 %v4657, %v4657
      %v4690 = vpack.c.bf16 %v4658, %v4658
      %v4691 = vpack.c.bf16 %v4659, %v4659
      %v4692 = vpack.c.bf16 %v4660, %v4660
      %v4693 = vpack.c.bf16 %v4661, %v4661
      %v4694 = vpack.c.bf16 %v4662, %v4662
      %v4695 = vpack.c.bf16 %v4663, %v4663
      %v4696 = vpack.c.bf16 %v4664, %v4664
      %v4697 = vpack.c.bf16 %v4665, %v4665
      %v4698 = vpack.c.bf16 %v4666, %v4666
      %v4699 = vpack.c.bf16 %v4667, %v4667
      %v4700 = vpack.c.bf16 %v4668, %v4668
      %v4701 = vpack.c.bf16 %v4669, %v4669
      %v4702 = vpack.c.bf16 %v4670, %v4670
      %v4703 = vpack.c.bf16 %v4671, %v4671
      %vm4704 = vcmask 60416
      %4705 = vst.msk [vmem:[%s177] sm:$0xf] %vm4704, %v4672
      %4706 = vst.msk [vmem:[%s177 + $0x4] sm:$0xf] %vm4704, %v4673
      %4707 = vst.msk [vmem:[%s177 + $0x8] sm:$0xf] %vm4704, %v4674
      %4708 = vst.msk [vmem:[%s177 + $0xc] sm:$0xf] %vm4704, %v4675
      %4709 = vst.msk [vmem:[%s177 + $0x10] sm:$0xf] %vm4704, %v4676
      %4710 = vst.msk [vmem:[%s177 + $0x14] sm:$0xf] %vm4704, %v4677
      %4711 = vst.msk [vmem:[%s177 + $0x18] sm:$0xf] %vm4704, %v4678
      %4712 = vst.msk [vmem:[%s177 + $0x1c] sm:$0xf] %vm4704, %v4679
      %4713 = vst.msk [vmem:[%s177 + $0x20] sm:$0xf] %vm4704, %v4680
      %4714 = vst.msk [vmem:[%s177 + $0x24] sm:$0xf] %vm4704, %v4681
      %4715 = vst.msk [vmem:[%s177 + $0x28] sm:$0xf] %vm4704, %v4682
      %4716 = vst.msk [vmem:[%s177 + $0x2c] sm:$0xf] %vm4704, %v4683
      %4717 = vst.msk [vmem:[%s177 + $0x30] sm:$0xf] %vm4704, %v4684
      %4718 = vst.msk [vmem:[%s177 + $0x34] sm:$0xf] %vm4704, %v4685
      %4719 = vst.msk [vmem:[%s177 + $0x38] sm:$0xf] %vm4704, %v4686
      %4720 = vst.msk [vmem:[%s177 + $0x3c] sm:$0xf] %vm4704, %v4687
      %4721 = vst.msk [vmem:[%s177 + $0x40] sm:$0xf] %vm4704, %v4688
      %4722 = vst.msk [vmem:[%s177 + $0x44] sm:$0xf] %vm4704, %v4689
      %4723 = vst.msk [vmem:[%s177 + $0x48] sm:$0xf] %vm4704, %v4690
      %4724 = vst.msk [vmem:[%s177 + $0x4c] sm:$0xf] %vm4704, %v4691
      %4725 = vst.msk [vmem:[%s177 + $0x50] sm:$0xf] %vm4704, %v4692
      %4726 = vst.msk [vmem:[%s177 + $0x54] sm:$0xf] %vm4704, %v4693
      %4727 = vst.msk [vmem:[%s177 + $0x58] sm:$0xf] %vm4704, %v4694
      %4728 = vst.msk [vmem:[%s177 + $0x5c] sm:$0xf] %vm4704, %v4695
      %4729 = vst.msk [vmem:[%s177 + $0x60] sm:$0xf] %vm4704, %v4696
      %4730 = vst.msk [vmem:[%s177 + $0x64] sm:$0xf] %vm4704, %v4697
      %4731 = vst.msk [vmem:[%s177 + $0x68] sm:$0xf] %vm4704, %v4698
      %4732 = vst.msk [vmem:[%s177 + $0x6c] sm:$0xf] %vm4704, %v4699
      %4733 = vst.msk [vmem:[%s177 + $0x70] sm:$0xf] %vm4704, %v4700
      %4734 = vst.msk [vmem:[%s177 + $0x74] sm:$0xf] %vm4704, %v4701
      %4735 = vst.msk [vmem:[%s177 + $0x78] sm:$0xf] %vm4704, %v4702
      %4736 = vst.msk [vmem:[%s177 + $0x7c] sm:$0xf] %vm4704, %v4703
      %vm4737 = vcmask 64512
      %v4738 = vsel %vm4737, %v4640, 0.0
      %v4739 = vsel %vm4737, %v4641, 0.0
      %v4740 = vadd.f32 %v4738, %v4739
      %v4741 = vsel %vm4737, %v4642, 0.0
      %v4742 = vadd.f32 %v4740, %v4741
      %v4743 = vsel %vm4737, %v4643, 0.0
      %v4744 = vadd.f32 %v4742, %v4743
      %v4745 = vsel %vm4737, %v4644, 0.0
      %v4746 = vadd.f32 %v4744, %v4745
      %v4747 = vsel %vm4737, %v4645, 0.0
      %v4748 = vadd.f32 %v4746, %v4747
      %v4749 = vsel %vm4737, %v4646, 0.0
      %v4750 = vadd.f32 %v4748, %v4749
      %v4751 = vsel %vm4737, %v4647, 0.0
      %v4752 = vadd.f32 %v4750, %v4751
      %v4753 = vsel %vm4737, %v4648, 0.0
      %v4754 = vadd.f32 %v4752, %v4753
      %v4755 = vsel %vm4737, %v4649, 0.0
      %v4756 = vadd.f32 %v4754, %v4755
      %v4757 = vsel %vm4737, %v4650, 0.0
      %v4758 = vadd.f32 %v4756, %v4757
      %v4759 = vsel %vm4737, %v4651, 0.0
      %v4760 = vadd.f32 %v4758, %v4759
      %v4761 = vsel %vm4737, %v4652, 0.0
      %v4762 = vadd.f32 %v4760, %v4761
      %v4763 = vsel %vm4737, %v4653, 0.0
      %v4764 = vadd.f32 %v4762, %v4763
      %v4765 = vsel %vm4737, %v4654, 0.0
      %v4766 = vadd.f32 %v4764, %v4765
      %v4767 = vsel %vm4737, %v4655, 0.0
      %v4768 = vadd.f32 %v4766, %v4767
      %v4769 = vsel %vm4737, %v4656, 0.0
      %v4770 = vadd.f32 %v4768, %v4769
      %v4771 = vsel %vm4737, %v4657, 0.0
      %v4772 = vadd.f32 %v4770, %v4771
      %v4773 = vsel %vm4737, %v4658, 0.0
      %v4774 = vadd.f32 %v4772, %v4773
      %v4775 = vsel %vm4737, %v4659, 0.0
      %v4776 = vadd.f32 %v4774, %v4775
      %v4777 = vsel %vm4737, %v4660, 0.0
      %v4778 = vadd.f32 %v4776, %v4777
      %v4779 = vsel %vm4737, %v4661, 0.0
      %v4780 = vadd.f32 %v4778, %v4779
      %v4781 = vsel %vm4737, %v4662, 0.0
      %v4782 = vadd.f32 %v4780, %v4781
      %v4783 = vsel %vm4737, %v4663, 0.0
      %v4784 = vadd.f32 %v4782, %v4783
      %v4785 = vsel %vm4737, %v4664, 0.0
      %v4786 = vadd.f32 %v4784, %v4785
      %v4787 = vsel %vm4737, %v4665, 0.0
      %v4788 = vadd.f32 %v4786, %v4787
      %v4789 = vsel %vm4737, %v4666, 0.0
      %v4790 = vadd.f32 %v4788, %v4789
      %v4791 = vsel %vm4737, %v4667, 0.0
      %v4792 = vadd.f32 %v4790, %v4791
      %v4793 = vsel %vm4737, %v4668, 0.0
      %v4794 = vadd.f32 %v4792, %v4793
      %v4795 = vsel %vm4737, %v4669, 0.0
      %v4796 = vadd.f32 %v4794, %v4795
      %v4797 = vsel %vm4737, %v4670, 0.0
      %v4798 = vadd.f32 %v4796, %v4797
      %v4799 = vsel %vm4737, %v4671, 0.0
      %v4800 = vadd.f32 %v4798, %v4799
      %v4801 = vrot.slane %v4800, 4
      %v4802 = vadd.f32 %v4800, %v4801
      %v4803 = vrot.slane %v4802, 2
      %v4804 = vadd.f32 %v4802, %v4803
      %v4805 = vrot.slane %v4804, 1
      %v4806 = vadd.f32 %v4804, %v4805
      %v4807 = vmul.f32 %v4806, 0.00390625
      %v4808 = vsub.f32 %v4640, %v4807
      %v4809 = vsub.f32 %v4641, %v4807
      %v4810 = vsub.f32 %v4642, %v4807
      %v4811 = vsub.f32 %v4643, %v4807
      %v4812 = vsub.f32 %v4644, %v4807
      %v4813 = vsub.f32 %v4645, %v4807
      %v4814 = vsub.f32 %v4646, %v4807
      %v4815 = vsub.f32 %v4647, %v4807
      %v4816 = vsub.f32 %v4648, %v4807
      %v4817 = vsub.f32 %v4649, %v4807
      %v4818 = vsub.f32 %v4650, %v4807
      %v4819 = vsub.f32 %v4651, %v4807
      %v4820 = vsub.f32 %v4652, %v4807
      %v4821 = vsub.f32 %v4653, %v4807
      %v4822 = vsub.f32 %v4654, %v4807
      %v4823 = vsub.f32 %v4655, %v4807
      %v4824 = vsub.f32 %v4656, %v4807
      %v4825 = vsub.f32 %v4657, %v4807
      %v4826 = vsub.f32 %v4658, %v4807
      %v4827 = vsub.f32 %v4659, %v4807
      %v4828 = vsub.f32 %v4660, %v4807
      %v4829 = vsub.f32 %v4661, %v4807
      %v4830 = vsub.f32 %v4662, %v4807
      %v4831 = vsub.f32 %v4663, %v4807
      %v4832 = vsub.f32 %v4664, %v4807
      %v4833 = vsub.f32 %v4665, %v4807
      %v4834 = vsub.f32 %v4666, %v4807
      %v4835 = vsub.f32 %v4667, %v4807
      %v4836 = vsub.f32 %v4668, %v4807
      %v4837 = vsub.f32 %v4669, %v4807
      %v4838 = vsub.f32 %v4670, %v4807
      %v4839 = vsub.f32 %v4671, %v4807
      %v4840 = vmul.f32 %v4808, %v4808
      %v4841 = vmul.f32 %v4809, %v4809
      %v4842 = vmul.f32 %v4810, %v4810
      %v4843 = vmul.f32 %v4811, %v4811
      %v4844 = vmul.f32 %v4812, %v4812
      %v4845 = vmul.f32 %v4813, %v4813
      %v4846 = vmul.f32 %v4814, %v4814
      %v4847 = vmul.f32 %v4815, %v4815
      %v4848 = vmul.f32 %v4816, %v4816
      %v4849 = vmul.f32 %v4817, %v4817
      %v4850 = vmul.f32 %v4818, %v4818
      %v4851 = vmul.f32 %v4819, %v4819
      %v4852 = vmul.f32 %v4820, %v4820
      %v4853 = vmul.f32 %v4821, %v4821
      %v4854 = vmul.f32 %v4822, %v4822
      %v4855 = vmul.f32 %v4823, %v4823
      %v4856 = vmul.f32 %v4824, %v4824
      %v4857 = vmul.f32 %v4825, %v4825
      %v4858 = vmul.f32 %v4826, %v4826
      %v4859 = vmul.f32 %v4827, %v4827
      %v4860 = vmul.f32 %v4828, %v4828
      %v4861 = vmul.f32 %v4829, %v4829
      %v4862 = vmul.f32 %v4830, %v4830
      %v4863 = vmul.f32 %v4831, %v4831
      %v4864 = vmul.f32 %v4832, %v4832
      %v4865 = vmul.f32 %v4833, %v4833
      %v4866 = vmul.f32 %v4834, %v4834
      %v4867 = vmul.f32 %v4835, %v4835
      %v4868 = vmul.f32 %v4836, %v4836
      %v4869 = vmul.f32 %v4837, %v4837
      %v4870 = vmul.f32 %v4838, %v4838
      %v4871 = vmul.f32 %v4839, %v4839
      %v4872 = vsel %vm4737, %v4840, 0.0
      %v4873 = vsel %vm4737, %v4841, 0.0
      %v4874 = vadd.f32 %v4872, %v4873
      %v4875 = vsel %vm4737, %v4842, 0.0
      %v4876 = vadd.f32 %v4874, %v4875
      %v4877 = vsel %vm4737, %v4843, 0.0
      %v4878 = vadd.f32 %v4876, %v4877
      %v4879 = vsel %vm4737, %v4844, 0.0
      %v4880 = vadd.f32 %v4878, %v4879
      %v4881 = vsel %vm4737, %v4845, 0.0
      %v4882 = vadd.f32 %v4880, %v4881
      %v4883 = vsel %vm4737, %v4846, 0.0
      %v4884 = vadd.f32 %v4882, %v4883
      %v4885 = vsel %vm4737, %v4847, 0.0
      %v4886 = vadd.f32 %v4884, %v4885
      %v4887 = vsel %vm4737, %v4848, 0.0
      %v4888 = vadd.f32 %v4886, %v4887
      %v4889 = vsel %vm4737, %v4849, 0.0
      %v4890 = vadd.f32 %v4888, %v4889
      %v4891 = vsel %vm4737, %v4850, 0.0
      %v4892 = vadd.f32 %v4890, %v4891
      %v4893 = vsel %vm4737, %v4851, 0.0
      %v4894 = vadd.f32 %v4892, %v4893
      %v4895 = vsel %vm4737, %v4852, 0.0
      %v4896 = vadd.f32 %v4894, %v4895
      %v4897 = vsel %vm4737, %v4853, 0.0
      %v4898 = vadd.f32 %v4896, %v4897
      %v4899 = vsel %vm4737, %v4854, 0.0
      %v4900 = vadd.f32 %v4898, %v4899
      %v4901 = vsel %vm4737, %v4855, 0.0
      %v4902 = vadd.f32 %v4900, %v4901
      %v4903 = vsel %vm4737, %v4856, 0.0
      %v4904 = vadd.f32 %v4902, %v4903
      %v4905 = vsel %vm4737, %v4857, 0.0
      %v4906 = vadd.f32 %v4904, %v4905
      %v4907 = vsel %vm4737, %v4858, 0.0
      %v4908 = vadd.f32 %v4906, %v4907
      %v4909 = vsel %vm4737, %v4859, 0.0
      %v4910 = vadd.f32 %v4908, %v4909
      %v4911 = vsel %vm4737, %v4860, 0.0
      %v4912 = vadd.f32 %v4910, %v4911
      %v4913 = vsel %vm4737, %v4861, 0.0
      %v4914 = vadd.f32 %v4912, %v4913
      %v4915 = vsel %vm4737, %v4862, 0.0
      %v4916 = vadd.f32 %v4914, %v4915
      %v4917 = vsel %vm4737, %v4863, 0.0
      %v4918 = vadd.f32 %v4916, %v4917
      %v4919 = vsel %vm4737, %v4864, 0.0
      %v4920 = vadd.f32 %v4918, %v4919
      %v4921 = vsel %vm4737, %v4865, 0.0
      %v4922 = vadd.f32 %v4920, %v4921
      %v4923 = vsel %vm4737, %v4866, 0.0
      %v4924 = vadd.f32 %v4922, %v4923
      %v4925 = vsel %vm4737, %v4867, 0.0
      %v4926 = vadd.f32 %v4924, %v4925
      %v4927 = vsel %vm4737, %v4868, 0.0
      %v4928 = vadd.f32 %v4926, %v4927
      %v4929 = vsel %vm4737, %v4869, 0.0
      %v4930 = vadd.f32 %v4928, %v4929
      %v4931 = vsel %vm4737, %v4870, 0.0
      %v4932 = vadd.f32 %v4930, %v4931
      %v4933 = vsel %vm4737, %v4871, 0.0
      %v4934 = vadd.f32 %v4932, %v4933
      %v4935 = vrot.slane %v4934, 4
      %v4936 = vadd.f32 %v4934, %v4935
      %v4937 = vrot.slane %v4936, 2
      %v4938 = vadd.f32 %v4936, %v4937
      %v4939 = vrot.slane %v4938, 1
      %v4940 = vadd.f32 %v4938, %v4939
      %vm4941 = vcmask 1040384
      %v4942 = vsel %vm4941, %v4806, %v4940
      %vm4943 = vcmask 58368
      %4944 = vst.msk [vmem:[%s181] sm:$0x3] %vm4943, %v4942
      %p4945 = scmp.lt.s32.totalorder %s15, 1
      %s4946 = scalar_select %p4945, %s15, 1
      %s4947 = smul.addr %s4946, 32
      %s4948 = smul.addr %s4947, 4
      %s4949 = scalar_lea.vmem %s2, %s4948
      %p4950 = scmp.lt.s32.totalorder %s15, 1
      %s4951 = scalar_select %p4950, %s15, 1
      %s4952 = smul.addr %s4951, 2
      %s4953 = scalar_lea.vmem %s3, %s4952
      // Predicated region
      $region29: #{contracting_block_forward.3} parent=27 // pred_check
        %p4954 = pneg %p80
      $region30: #{contracting_block_forward.3} parent=27 // pred_check_branch
        %4956 = sbr.rel (%p4954) target = $region32
      $region31: #{contracting_block_forward.3} parent=27 // pred_region
        _
      $region32: #{contracting_block_forward.3} parent=27 // pred_fallthru
        _
      // Predicated region
      $region33: #{contracting_block_forward.3} parent=27 // pred_check
        %p4957 = pneg %p106
      $region34: #{contracting_block_forward.3} parent=27 // pred_check_branch
        %4959 = sbr.rel (%p4957) target = $region36
      $region35: #{contracting_block_forward.3} parent=27 // pred_region
        _
      $region36: #{contracting_block_forward.3} parent=27 // pred_fallthru
        _
    $region28: #{contracting_block_forward.3} parent=5 // pred_fallthru
      _
    %p4960 = scmp.le.s32.totalorder 2, %s10
    // Predicated region
    $region37: #{contracting_block_forward.3} parent=5 // pred_check
      %p4961 = pneg %p4960
    $region38: #{contracting_block_forward.3} parent=5 // pred_check_branch
      %4963 = sbr.rel (%p4961) target = $region40
    $region39: #{contracting_block_forward.3} parent=5 // pred_region
      %s4964 = ssub.s32 %s10, 2
      // Predicated region
      $region41: #{contracting_block_forward.3} parent=39 // pred_check
        %p4965 = pneg %p86
      $region42: #{contracting_block_forward.3} parent=39 // pred_check_branch
        %4967 = sbr.rel (%p4965) target = $region44
      $region43: #{contracting_block_forward.3} parent=39 // pred_region
        %p4968 = scmp.lt.s32.totalorder %s16, 1
        %s4969 = scalar_select %p4968, %s16, 1
        %s4970 = smul.addr %s4969, 32
        %s4971 = smul.addr %s4970, 4
        %s4972 = scalar_lea.vmem %s2, %s4971
      $region44: #{contracting_block_forward.3} parent=39 // pred_fallthru
        _
      // Predicated region
      $region45: #{contracting_block_forward.3} parent=39 // pred_check
        %p4973 = pneg %p112
      $region46: #{contracting_block_forward.3} parent=39 // pred_check_branch
        %4975 = sbr.rel (%p4973) target = $region48
      $region47: #{contracting_block_forward.3} parent=39 // pred_region
        %p4976 = scmp.lt.s32.totalorder %s16, 1
        %s4977 = scalar_select %p4976, %s16, 1
        %s4978 = smul.addr %s4977, 2
        %s4979 = scalar_lea.vmem %s3, %s4978
      $region48: #{contracting_block_forward.3} parent=39 // pred_fallthru
        _
    $region40: #{contracting_block_forward.3} parent=5 // pred_fallthru
      _
  $region6: #{contracting_block_forward.3} parent=0 // loop_footer
    %s14 = sadd.s32 1, %s10
  $region7: #{contracting_block_forward.3} parent=0 // loop_footer_branch
    %9 = sbr.rel target = $region3
  $region8: #{contracting_block_forward.3} parent=0 // loop_exit
    _

// kernel: contracting_block_forward.4
$region0: #{contracting_block_forward.4}
  #allocation0 [shape = 'u32[]', space=smem, size = 0x4, offset = 0x4, fixed_abs, tag = 'smem constant byte address 0x4 - core index']
  #allocation1 [shape = 'u32[72,128]{1,0:T(1,128)}', space=vmem, size = 0x9000, scoped, tag = 'internal scratch']
  #allocation2 [shape = 'bf16[18,18,8]{2,1,0:T(8,128)(2,1)}', space=vmem, size = 0x1b000, scoped, tag = 'scratch operand']
  %s0 = inlined_call_operand.vmem [shape: bf16[2,16,16,8], index: 0, kind: input, shape index: {}]
  %s1 = inlined_call_operand.vmem [shape: f32[1,8], index: 1, kind: input, shape index: {}]
  %s2 = inlined_call_operand.vmem [shape: f32[1,8], index: 2, kind: input, shape index: {}]
  %s3 = inlined_call_operand.vmem [shape: bf16[9,8,8], index: 3, kind: input, shape index: {}]
  %s4 = inlined_call_operand.vmem [shape: bf16[2,16,16,8], index: 4, kind: output, shape index: {0}]
  %s5 = inlined_call_operand.vmem [shape: f32[2,2,8], index: 5, kind: output, shape index: {1}]
  %6 = xla_tuple %s4, %s5
  %s7 = sld [smem:[#allocation0]]
  $region57: #{contracting_block_forward.4} parent=0
    _
  %s9 = ssub.s32 1, %s7
  %s10 = scalar_select 0, %s9, %s7
  loop: start=0, step=1, limit=4
  $region2: #{contracting_block_forward.4} parent=0 // loop_pre_header
    _
  $region3: #{contracting_block_forward.4} parent=0 // loop_header
    %s12 = sphi 0, %s16
    %p13 = scmp.ge.s32.totalorder %s12, 4
    %s22 = sphi 0, %s24
    %s25 = sphi 0, %s22
    %s26 = sphi 0, %s25
    %s42 = sphi 0, %s26
    %s46 = sphi 0, %s46
    %s48 = sphi 0, %s46
    %s49 = sphi 0, %s48
    %s63 = sphi 0, %s49
    %s67 = sphi 0, %s67
    %s69 = sphi 0, %s67
    %s70 = sphi 0, %s69
    %s84 = sphi 0, %s70
    %s88 = sphi 0, %s88
    %s90 = sphi 0, %s88
    %s91 = sphi 0, %s90
    %s105 = sphi 0, %s91
    %s111 = sphi 0, %s113
    %s114 = sphi 0, %s111
    %s115 = sphi 0, %s114
    %s131 = sphi 0, %s115
    %s137 = sphi 0, %s139
    %s140 = sphi 0, %s137
    %s141 = sphi 0, %s140
    %s157 = sphi 0, %s141
  $region4: #{contracting_block_forward.4} parent=0 // loop_header_branch
    %15 = sbr.rel (%p13) target = $region8
  $region5: #{contracting_block_forward.4} parent=0 // loop_body
    %s17 = ssub.s32 %s12, 1
    %s18 = ssub.s32 %s12, 2
    %s19 = sadd.s32 %s12, 1
    %s20 = ssub.s32 %s12, %s19
    %p21 = scmp.eq.s32.totalorder %s20, 0
    %s23 = sadd.s32 %s22, 1
    %s24 = scalar_select %p21, %s22, %s23
    %p27 = pneg %p21
    %p28 = scmp.eq.s32.totalorder %s12, 1
    %p29 = por %p27, %p28
    %p30 = scmp.ne.s32.totalorder %s22, %s25
    %p31 = scmp.eq.s32.totalorder %s12, 0
    %p32 = por %p30, %p31
    %p33 = scmp.ne.s32.totalorder %s22, %s25
    %p34 = scmp.eq.s32.totalorder %s17, 1
    %p35 = por %p33, %p34
    %p36 = scmp.ne.s32.totalorder %s25, %s26
    %p37 = scmp.eq.s32.totalorder %s17, 0
    %p38 = por %p36, %p37
    %p39 = scmp.ne.s32.totalorder %s25, %s26
    %p40 = scmp.eq.s32.totalorder %s18, 1
    %p41 = por %p39, %p40
    %p43 = scmp.ne.s32.totalorder %s26, %s42
    %p44 = scmp.eq.s32.totalorder %s18, 0
    %p45 = por %p43, %p44
    %s47 = sadd.s32 %s46, 1
    %p50 = scmp.eq.s32.totalorder %s12, 1
    %p51 = scmp.ne.s32.totalorder %s46, %s48
    %p52 = scmp.eq.s32.totalorder %s12, 0
    %p53 = por %p51, %p52
    %p54 = scmp.ne.s32.totalorder %s46, %s48
    %p55 = scmp.eq.s32.totalorder %s17, 1
    %p56 = por %p54, %p55
    %p57 = scmp.ne.s32.totalorder %s48, %s49
    %p58 = scmp.eq.s32.totalorder %s17, 0
    %p59 = por %p57, %p58
    %p60 = scmp.ne.s32.totalorder %s48, %s49
    %p61 = scmp.eq.s32.totalorder %s18, 1
    %p62 = por %p60, %p61
    %p64 = scmp.ne.s32.totalorder %s49, %s63
    %p65 = scmp.eq.s32.totalorder %s18, 0
    %p66 = por %p64, %p65
    %s68 = sadd.s32 %s67, 1
    %p71 = scmp.eq.s32.totalorder %s12, 1
    %p72 = scmp.ne.s32.totalorder %s67, %s69
    %p73 = scmp.eq.s32.totalorder %s12, 0
    %p74 = por %p72, %p73
    %p75 = scmp.ne.s32.totalorder %s67, %s69
    %p76 = scmp.eq.s32.totalorder %s17, 1
    %p77 = por %p75, %p76
    %p78 = scmp.ne.s32.totalorder %s69, %s70
    %p79 = scmp.eq.s32.totalorder %s17, 0
    %p80 = por %p78, %p79
    %p81 = scmp.ne.s32.totalorder %s69, %s70
    %p82 = scmp.eq.s32.totalorder %s18, 1
    %p83 = por %p81, %p82
    %p85 = scmp.ne.s32.totalorder %s70, %s84
    %p86 = scmp.eq.s32.totalorder %s18, 0
    %p87 = por %p85, %p86
    %s89 = sadd.s32 %s88, 1
    %p92 = scmp.eq.s32.totalorder %s12, 1
    %p93 = scmp.ne.s32.totalorder %s88, %s90
    %p94 = scmp.eq.s32.totalorder %s12, 0
    %p95 = por %p93, %p94
    %p96 = scmp.ne.s32.totalorder %s88, %s90
    %p97 = scmp.eq.s32.totalorder %s17, 1
    %p98 = por %p96, %p97
    %p99 = scmp.ne.s32.totalorder %s90, %s91
    %p100 = scmp.eq.s32.totalorder %s17, 0
    %p101 = por %p99, %p100
    %p102 = scmp.ne.s32.totalorder %s90, %s91
    %p103 = scmp.eq.s32.totalorder %s18, 1
    %p104 = por %p102, %p103
    %p106 = scmp.ne.s32.totalorder %s91, %s105
    %p107 = scmp.eq.s32.totalorder %s18, 0
    %p108 = por %p106, %p107
    %s109 = ssub.s32 %s12, %s19
    %p110 = scmp.eq.s32.totalorder %s109, 0
    %s112 = sadd.s32 %s111, 1
    %s113 = scalar_select %p110, %s111, %s112
    %p116 = pneg %p110
    %p117 = scmp.eq.s32.totalorder %s12, 1
    %p118 = por %p116, %p117
    %p119 = scmp.ne.s32.totalorder %s111, %s114
    %p120 = scmp.eq.s32.totalorder %s12, 0
    %p121 = por %p119, %p120
    %p122 = scmp.ne.s32.totalorder %s111, %s114
    %p123 = scmp.eq.s32.totalorder %s17, 1
    %p124 = por %p122, %p123
    %p125 = scmp.ne.s32.totalorder %s114, %s115
    %p126 = scmp.eq.s32.totalorder %s17, 0
    %p127 = por %p125, %p126
    %p128 = scmp.ne.s32.totalorder %s114, %s115
    %p129 = scmp.eq.s32.totalorder %s18, 1
    %p130 = por %p128, %p129
    %p132 = scmp.ne.s32.totalorder %s115, %s131
    %p133 = scmp.eq.s32.totalorder %s18, 0
    %p134 = por %p132, %p133
    %s135 = ssub.s32 %s12, %s19
    %p136 = scmp.eq.s32.totalorder %s135, 0
    %s138 = sadd.s32 %s137, 1
    %s139 = scalar_select %p136, %s137, %s138
    %p142 = pneg %p136
    %p143 = scmp.eq.s32.totalorder %s12, 1
    %p144 = por %p142, %p143
    %p145 = scmp.ne.s32.totalorder %s137, %s140
    %p146 = scmp.eq.s32.totalorder %s12, 0
    %p147 = por %p145, %p146
    %p148 = scmp.ne.s32.totalorder %s137, %s140
    %p149 = scmp.eq.s32.totalorder %s17, 1
    %p150 = por %p148, %p149
    %p151 = scmp.ne.s32.totalorder %s140, %s141
    %p152 = scmp.eq.s32.totalorder %s17, 0
    %p153 = por %p151, %p152
    %p154 = scmp.ne.s32.totalorder %s140, %s141
    %p155 = scmp.eq.s32.totalorder %s18, 1
    %p156 = por %p154, %p155
    %p158 = scmp.ne.s32.totalorder %s141, %s157
    %p159 = scmp.eq.s32.totalorder %s18, 0
    %p160 = por %p158, %p159
    %p161 = scmp.le.s32.totalorder 1, %s12
    %p162 = scmp.lt.s32.totalorder %s12, 3
    %p163 = pnand %p161, %p162
    %p164 = pneg %p163
    // Predicated region
    $region9: #{contracting_block_forward.4} parent=5 // pred_check
      _
    $region10: #{contracting_block_forward.4} parent=5 // pred_check_branch
      %166 = sbr.rel (%p163) target = $region12
    $region11: #{contracting_block_forward.4} parent=5 // pred_region
      %s167 = ssub.s32 %s12, 1
      // Predicated region
      $region13: #{contracting_block_forward.4} parent=11 // pred_check
        %p168 = pneg %p59
      $region14: #{contracting_block_forward.4} parent=11 // pred_check_branch
        %170 = sbr.rel (%p168) target = $region16
      $region15: #{contracting_block_forward.4} parent=11 // pred_region
        _
      $region16: #{contracting_block_forward.4} parent=11 // pred_fallthru
        _
      // Predicated region
      $region17: #{contracting_block_forward.4} parent=11 // pred_check
        %p171 = pneg %p80
      $region18: #{contracting_block_forward.4} parent=11 // pred_check_branch
        %173 = sbr.rel (%p171) target = $region20
      $region19: #{contracting_block_forward.4} parent=11 // pred_region
        _
      $region20: #{contracting_block_forward.4} parent=11 // pred_fallthru
        _
      // Predicated region
      $region21: #{contracting_block_forward.4} parent=11 // pred_check
        %p174 = pneg %p101
      $region22: #{contracting_block_forward.4} parent=11 // pred_check_branch
        %176 = sbr.rel (%p174) target = $region24
      $region23: #{contracting_block_forward.4} parent=11 // pred_region
        _
      $region24: #{contracting_block_forward.4} parent=11 // pred_fallthru
        _
    $region12: #{contracting_block_forward.4} parent=5 // pred_fallthru
      _
    %p177 = scmp.lt.s32.totalorder %s12, 2
    // Predicated region
    $region25: #{contracting_block_forward.4} parent=5 // pred_check
      %p178 = pneg %p177
    $region26: #{contracting_block_forward.4} parent=5 // pred_check_branch
      %180 = sbr.rel (%p178) target = $region28
    $region27: #{contracting_block_forward.4} parent=5 // pred_region
      // Predicated region
      $region29: #{contracting_block_forward.4} parent=27 // pred_check
        %p181 = pneg %p32
      $region30: #{contracting_block_forward.4} parent=27 // pred_check_branch
        %183 = sbr.rel (%p181) target = $region32
      $region31: #{contracting_block_forward.4} parent=27 // pred_region
        %p184 = scmp.lt.s32.totalorder %s12, 1
        %s185 = scalar_select %p184, %s12, 1
        %s186 = smul.addr %s185, 32
        %s187 = smul.addr %s186, 4
        %s188 = scalar_lea.vmem %s0, %s187
      $region32: #{contracting_block_forward.4} parent=27 // pred_fallthru
        _
    $region28: #{contracting_block_forward.4} parent=5 // pred_fallthru
      _
    %p189 = scmp.le.s32.totalorder 1, %s12
    %p190 = scmp.lt.s32.totalorder %s12, 3
    %p191 = pnand %p189, %p190
    %p192 = pneg %p191
    // Predicated region
    $region33: #{contracting_block_forward.4} parent=5 // pred_check
      _
    $region34: #{contracting_block_forward.4} parent=5 // pred_check_branch
      %194 = sbr.rel (%p191) target = $region36
    $region35: #{contracting_block_forward.4} parent=5 // pred_region
      %s195 = ssub.s32 %s12, 1
      %p196 = scmp.lt.s32.totalorder %s17, 1
      %s197 = scalar_select %p196, %s17, 1
      %s198 = smul.addr %s197, 32
      %s199 = smul.addr %s198, 4
      %s200 = scalar_lea.vmem %s0, %s199
      %p201 = pneg %p38
      %p202 = pneg %p35
      %p203 = pneg %p59
      %p204 = pneg %p56
      %p205 = pneg %p80
      %p206 = pneg %p77
      %p207 = pneg %p101
      %p208 = pneg %p98
      %p209 = pneg %p127
      %p210 = pneg %p124
      %p211 = scmp.lt.s32.totalorder %s17, 1
      %s212 = scalar_select %p211, %s17, 1
      %s213 = smul.addr %s212, 32
      %s214 = smul.addr %s213, 4
      %s215 = scalar_lea.vmem %s4, %s214
      %p216 = pneg %p153
      %p217 = pneg %p150
      %p218 = scmp.lt.s32.totalorder %s17, 1
      %s219 = scalar_select %p218, %s17, 1
      %s220 = smul.addr %s219, 2
      %s221 = scalar_lea.vmem %s5, %s220
      %p222 = scmp.lt.s32.totalorder %s17, 1
      %s223 = scalar_select %p222, %s17, 1
      %s224 = smul.addr %s223, 32
      %s225 = smul.addr %s224, 4
      %s226 = scalar_lea.vmem %s0, %s225
      %p227 = scmp.lt.s32.totalorder %s17, 1
      %s228 = scalar_select %p227, %s17, 1
      %s229 = smul.addr %s228, 32
      %s230 = smul.addr %s229, 4
      %s231 = scalar_lea.vmem %s4, %s230
      %p232 = scmp.lt.s32.totalorder %s17, 1
      %s233 = scalar_select %p232, %s17, 1
      %s234 = smul.addr %s233, 2
      %s235 = scalar_lea.vmem %s5, %s234
      %v237 = vld [vmem:[%s226] sm:$0xf]
      %v238 = vld [vmem:[%s226 + $0x4] sm:$0xf]
      %v239 = vld [vmem:[%s226 + $0x8] sm:$0xf]
      %v240 = vld [vmem:[%s226 + $0xc] sm:$0xf]
      %v241 = vld [vmem:[%s226 + $0x10] sm:$0xf]
      %v242 = vld [vmem:[%s226 + $0x14] sm:$0xf]
      %v243 = vld [vmem:[%s226 + $0x18] sm:$0xf]
      %v244 = vld [vmem:[%s226 + $0x1c] sm:$0xf]
      %v245 = vld [vmem:[%s226 + $0x20] sm:$0xf]
      %v246 = vld [vmem:[%s226 + $0x24] sm:$0xf]
      %v247 = vld [vmem:[%s226 + $0x28] sm:$0xf]
      %v248 = vld [vmem:[%s226 + $0x2c] sm:$0xf]
      %v249 = vld [vmem:[%s226 + $0x30] sm:$0xf]
      %v250 = vld [vmem:[%s226 + $0x34] sm:$0xf]
      %v251 = vld [vmem:[%s226 + $0x38] sm:$0xf]
      %v252 = vld [vmem:[%s226 + $0x3c] sm:$0xf]
      %v253 = vld [vmem:[%s226 + $0x40] sm:$0xf]
      %v254 = vld [vmem:[%s226 + $0x44] sm:$0xf]
      %v255 = vld [vmem:[%s226 + $0x48] sm:$0xf]
      %v256 = vld [vmem:[%s226 + $0x4c] sm:$0xf]
      %v257 = vld [vmem:[%s226 + $0x50] sm:$0xf]
      %v258 = vld [vmem:[%s226 + $0x54] sm:$0xf]
      %v259 = vld [vmem:[%s226 + $0x58] sm:$0xf]
      %v260 = vld [vmem:[%s226 + $0x5c] sm:$0xf]
      %v261 = vld [vmem:[%s226 + $0x60] sm:$0xf]
      %v262 = vld [vmem:[%s226 + $0x64] sm:$0xf]
      %v263 = vld [vmem:[%s226 + $0x68] sm:$0xf]
      %v264 = vld [vmem:[%s226 + $0x6c] sm:$0xf]
      %v265 = vld [vmem:[%s226 + $0x70] sm:$0xf]
      %v266 = vld [vmem:[%s226 + $0x74] sm:$0xf]
      %v267 = vld [vmem:[%s226 + $0x78] sm:$0xf]
      %v268 = vld [vmem:[%s226 + $0x7c] sm:$0xf]
      %v269 = vunpack.c.l.bf16 %v237
      %v270 = vunpack.c.l.bf16 %v238
      %v271 = vunpack.c.l.bf16 %v239
      %v272 = vunpack.c.l.bf16 %v240
      %v273 = vunpack.c.l.bf16 %v241
      %v274 = vunpack.c.l.bf16 %v242
      %v275 = vunpack.c.l.bf16 %v243
      %v276 = vunpack.c.l.bf16 %v244
      %v277 = vunpack.c.l.bf16 %v245
      %v278 = vunpack.c.l.bf16 %v246
      %v279 = vunpack.c.l.bf16 %v247
      %v280 = vunpack.c.l.bf16 %v248
      %v281 = vunpack.c.l.bf16 %v249
      %v282 = vunpack.c.l.bf16 %v250
      %v283 = vunpack.c.l.bf16 %v251
      %v284 = vunpack.c.l.bf16 %v252
      %v285 = vunpack.c.l.bf16 %v253
      %v286 = vunpack.c.l.bf16 %v254
      %v287 = vunpack.c.l.bf16 %v255
      %v288 = vunpack.c.l.bf16 %v256
      %v289 = vunpack.c.l.bf16 %v257
      %v290 = vunpack.c.l.bf16 %v258
      %v291 = vunpack.c.l.bf16 %v259
      %v292 = vunpack.c.l.bf16 %v260
      %v293 = vunpack.c.l.bf16 %v261
      %v294 = vunpack.c.l.bf16 %v262
      %v295 = vunpack.c.l.bf16 %v263
      %v296 = vunpack.c.l.bf16 %v264
      %v297 = vunpack.c.l.bf16 %v265
      %v298 = vunpack.c.l.bf16 %v266
      %v299 = vunpack.c.l.bf16 %v267
      %v300 = vunpack.c.l.bf16 %v268
      %v301 = vld [vmem:[%s1] sm:$0x1]
      %v303 = vperm.slane %v301, 0
      %v305 = vmul.f32 %v269, %v303
      %v306 = vmul.f32 %v270, %v303
      %v307 = vmul.f32 %v271, %v303
      %v308 = vmul.f32 %v272, %v303
      %v309 = vmul.f32 %v273, %v303
      %v310 = vmul.f32 %v274, %v303
      %v311 = vmul.f32 %v275, %v303
      %v312 = vmul.f32 %v276, %v303
      %v313 = vmul.f32 %v277, %v303
      %v314 = vmul.f32 %v278, %v303
      %v315 = vmul.f32 %v279, %v303
      %v316 = vmul.f32 %v280, %v303
      %v317 = vmul.f32 %v281, %v303
      %v318 = vmul.f32 %v282, %v303
      %v319 = vmul.f32 %v283, %v303
      %v320 = vmul.f32 %v284, %v303
      %v321 = vmul.f32 %v285, %v303
      %v322 = vmul.f32 %v286, %v303
      %v323 = vmul.f32 %v287, %v303
      %v324 = vmul.f32 %v288, %v303
      %v325 = vmul.f32 %v289, %v303
      %v326 = vmul.f32 %v290, %v303
      %v327 = vmul.f32 %v291, %v303
      %v328 = vmul.f32 %v292, %v303
      %v329 = vmul.f32 %v293, %v303
      %v330 = vmul.f32 %v294, %v303
      %v331 = vmul.f32 %v295, %v303
      %v332 = vmul.f32 %v296, %v303
      %v333 = vmul.f32 %v297, %v303
      %v334 = vmul.f32 %v298, %v303
      %v335 = vmul.f32 %v299, %v303
      %v336 = vmul.f32 %v300, %v303
      %v337 = vld [vmem:[%s2] sm:$0x1]
      %v339 = vperm.slane %v337, 0
      %v341 = vadd.f32 %v305, %v339
      %v342 = vadd.f32 %v306, %v339
      %v343 = vadd.f32 %v307, %v339
      %v344 = vadd.f32 %v308, %v339
      %v345 = vadd.f32 %v309, %v339
      %v346 = vadd.f32 %v310, %v339
      %v347 = vadd.f32 %v311, %v339
      %v348 = vadd.f32 %v312, %v339
      %v349 = vadd.f32 %v313, %v339
      %v350 = vadd.f32 %v314, %v339
      %v351 = vadd.f32 %v315, %v339
      %v352 = vadd.f32 %v316, %v339
      %v353 = vadd.f32 %v317, %v339
      %v354 = vadd.f32 %v318, %v339
      %v355 = vadd.f32 %v319, %v339
      %v356 = vadd.f32 %v320, %v339
      %v357 = vadd.f32 %v321, %v339
      %v358 = vadd.f32 %v322, %v339
      %v359 = vadd.f32 %v323, %v339
      %v360 = vadd.f32 %v324, %v339
      %v361 = vadd.f32 %v325, %v339
      %v362 = vadd.f32 %v326, %v339
      %v363 = vadd.f32 %v327, %v339
      %v364 = vadd.f32 %v328, %v339
      %v365 = vadd.f32 %v329, %v339
      %v366 = vadd.f32 %v330, %v339
      %v367 = vadd.f32 %v331, %v339
      %v368 = vadd.f32 %v332, %v339
      %v369 = vadd.f32 %v333, %v339
      %v370 = vadd.f32 %v334, %v339
      %v371 = vadd.f32 %v335, %v339
      %v372 = vadd.f32 %v336, %v339
      %v373 = vmax.f32 %v341, 0.0
      %v374 = vmax.f32 %v342, 0.0
      %v375 = vmax.f32 %v343, 0.0
      %v376 = vmax.f32 %v344, 0.0
      %v377 = vmax.f32 %v345, 0.0
      %v378 = vmax.f32 %v346, 0.0
      %v379 = vmax.f32 %v347, 0.0
      %v380 = vmax.f32 %v348, 0.0
      %v381 = vmax.f32 %v349, 0.0
      %v382 = vmax.f32 %v350, 0.0
      %v383 = vmax.f32 %v351, 0.0
      %v384 = vmax.f32 %v352, 0.0
      %v385 = vmax.f32 %v353, 0.0
      %v386 = vmax.f32 %v354, 0.0
      %v387 = vmax.f32 %v355, 0.0
      %v388 = vmax.f32 %v356, 0.0
      %v389 = vmax.f32 %v357, 0.0
      %v390 = vmax.f32 %v358, 0.0
      %v391 = vmax.f32 %v359, 0.0
      %v392 = vmax.f32 %v360, 0.0
      %v393 = vmax.f32 %v361, 0.0
      %v394 = vmax.f32 %v362, 0.0
      %v395 = vmax.f32 %v363, 0.0
      %v396 = vmax.f32 %v364, 0.0
      %v397 = vmax.f32 %v365, 0.0
      %v398 = vmax.f32 %v366, 0.0
      %v399 = vmax.f32 %v367, 0.0
      %v400 = vmax.f32 %v368, 0.0
      %v401 = vmax.f32 %v369, 0.0
      %v402 = vmax.f32 %v370, 0.0
      %v403 = vmax.f32 %v371, 0.0
      %v404 = vmax.f32 %v372, 0.0
      %v405 = vpack.c.bf16 %v373, %v373
      %v406 = vpack.c.bf16 %v374, %v374
      %v407 = vpack.c.bf16 %v375, %v375
      %v408 = vpack.c.bf16 %v376, %v376
      %v409 = vpack.c.bf16 %v377, %v377
      %v410 = vpack.c.bf16 %v378, %v378
      %v411 = vpack.c.bf16 %v379, %v379
      %v412 = vpack.c.bf16 %v380, %v380
      %v413 = vpack.c.bf16 %v381, %v381
      %v414 = vpack.c.bf16 %v382, %v382
      %v415 = vpack.c.bf16 %v383, %v383
      %v416 = vpack.c.bf16 %v384, %v384
      %v417 = vpack.c.bf16 %v385, %v385
      %v418 = vpack.c.bf16 %v386, %v386
      %v419 = vpack.c.bf16 %v387, %v387
      %v420 = vpack.c.bf16 %v388, %v388
      %v421 = vpack.c.bf16 %v389, %v389
      %v422 = vpack.c.bf16 %v390, %v390
      %v423 = vpack.c.bf16 %v391, %v391
      %v424 = vpack.c.bf16 %v392, %v392
      %v425 = vpack.c.bf16 %v393, %v393
      %v426 = vpack.c.bf16 %v394, %v394
      %v427 = vpack.c.bf16 %v395, %v395
      %v428 = vpack.c.bf16 %v396, %v396
      %v429 = vpack.c.bf16 %v397, %v397
      %v430 = vpack.c.bf16 %v398, %v398
      %v431 = vpack.c.bf16 %v399, %v399
      %v432 = vpack.c.bf16 %v400, %v400
      %v433 = vpack.c.bf16 %v401, %v401
      %v434 = vpack.c.bf16 %v402, %v402
      %v435 = vpack.c.bf16 %v403, %v403
      %v436 = vpack.c.bf16 %v404, %v404
      %vm437 = vcmask 60416
      %438 = vst.msk [vmem:[#allocation2] sm:$0xf] %vm437, 0
      %439 = vst.msk [vmem:[#allocation2 + $0x4] sm:$0xf] %vm437, 0
      %vm440 = vcmask 57344
      %441 = vst.msk [vmem:[#allocation2 + $0x8] sm:$0x1] %vm440, 0
      %s442 = scalar_lea.vmem [#allocation2], 204
      %443 = vst.msk [vmem:[%s442] sm:$0xf] %vm437, 0
      %444 = vst.msk [vmem:[%s442 + $0x4] sm:$0xf] %vm437, 0
      %445 = vst.msk [vmem:[%s442 + $0x8] sm:$0x1] %vm440, 0
      %s446 = scalar_lea.vmem [#allocation2], 12
      %vm447 = vcmask 57344
      %vm448 = vsmask.f32 256
      %vm449 = vmand %vm447, %vm448
      %v450 = vld [vmem:[%s446] sm:$0x1]
      %v451 = vsel %vm449, 0, %v450
      %452 = vst [vmem:[%s446] sm:$0x1] %v451
      %v453 = vld [vmem:[%s446 + $0xc] sm:$0x1]
      %v454 = vsel %vm449, 0, %v453
      %455 = vst [vmem:[%s446 + $0xc] sm:$0x1] %v454
      %v456 = vld [vmem:[%s446 + $0x18] sm:$0x1]
      %v457 = vsel %vm449, 0, %v456
      %458 = vst [vmem:[%s446 + $0x18] sm:$0x1] %v457
      %v459 = vld [vmem:[%s446 + $0x24] sm:$0x1]
      %v460 = vsel %vm449, 0, %v459
      %461 = vst [vmem:[%s446 + $0x24] sm:$0x1] %v460
      %v462 = vld [vmem:[%s446 + $0x30] sm:$0x1]
      %v463 = vsel %vm449, 0, %v462
      %464 = vst [vmem:[%s446 + $0x30] sm:$0x1] %v463
      %v465 = vld [vmem:[%s446 + $0x3c] sm:$0x1]
      %v466 = vsel %vm449, 0, %v465
      %467 = vst [vmem:[%s446 + $0x3c] sm:$0x1] %v466
      %v468 = vld [vmem:[%s446 + $0x48] sm:$0x1]
      %v469 = vsel %vm449, 0, %v468
      %470 = vst [vmem:[%s446 + $0x48] sm:$0x1] %v469
      %v471 = vld [vmem:[%s446 + $0x54] sm:$0x1]
      %v472 = vsel %vm449, 0, %v471
      %473 = vst [vmem:[%s446 + $0x54] sm:$0x1] %v472
      %v474 = vld [vmem:[%s446 + $0x60] sm:$0x1]
      %v475 = vsel %vm449, 0, %v474
      %476 = vst [vmem:[%s446 + $0x60] sm:$0x1] %v475
      %v477 = vld [vmem:[%s446 + $0x6c] sm:$0x1]
      %v478 = vsel %vm449, 0, %v477
      %479 = vst [vmem:[%s446 + $0x6c] sm:$0x1] %v478
      %v480 = vld [vmem:[%s446 + $0x78] sm:$0x1]
      %v481 = vsel %vm449, 0, %v480
      %482 = vst [vmem:[%s446 + $0x78] sm:$0x1] %v481
      %v483 = vld [vmem:[%s446 + $0x84] sm:$0x1]
      %v484 = vsel %vm449, 0, %v483
      %485 = vst [vmem:[%s446 + $0x84] sm:$0x1] %v484
      %v486 = vld [vmem:[%s446 + $0x90] sm:$0x1]
      %v487 = vsel %vm449, 0, %v486
      %488 = vst [vmem:[%s446 + $0x90] sm:$0x1] %v487
      %v489 = vld [vmem:[%s446 + $0x9c] sm:$0x1]
      %v490 = vsel %vm449, 0, %v489
      %491 = vst [vmem:[%s446 + $0x9c] sm:$0x1] %v490
      %v492 = vld [vmem:[%s446 + $0xa8] sm:$0x1]
      %v493 = vsel %vm449, 0, %v492
      %494 = vst [vmem:[%s446 + $0xa8] sm:$0x1] %v493
      %v495 = vld [vmem:[%s446 + $0xb4] sm:$0x1]
      %v496 = vsel %vm449, 0, %v495
      %497 = vst [vmem:[%s446 + $0xb4] sm:$0x1] %v496
      %vm498 = vsmask.f32 7938
      %vm499 = vmand %vm447, %vm498
      %v500 = vld [vmem:[%s446 + $0x8] sm:$0x1]
      %v501 = vsel %vm499, 0, %v500
      %502 = vst [vmem:[%s446 + $0x8] sm:$0x1] %v501
      %v503 = vld [vmem:[%s446 + $0x14] sm:$0x1]
      %v504 = vsel %vm499, 0, %v503
      %505 = vst [vmem:[%s446 + $0x14] sm:$0x1] %v504
      %v506 = vld [vmem:[%s446 + $0x20] sm:$0x1]
      %v507 = vsel %vm499, 0, %v506
      %508 = vst [vmem:[%s446 + $0x20] sm:$0x1] %v507
      %v509 = vld [vmem:[%s446 + $0x2c] sm:$0x1]
      %v510 = vsel %vm499, 0, %v509
      %511 = vst [vmem:[%s446 + $0x2c] sm:$0x1] %v510
      %v512 = vld [vmem:[%s446 + $0x38] sm:$0x1]
      %v513 = vsel %vm499, 0, %v512
      %514 = vst [vmem:[%s446 + $0x38] sm:$0x1] %v513
      %v515 = vld [vmem:[%s446 + $0x44] sm:$0x1]
      %v516 = vsel %vm499, 0, %v515
      %517 = vst [vmem:[%s446 + $0x44] sm:$0x1] %v516
      %v518 = vld [vmem:[%s446 + $0x50] sm:$0x1]
      %v519 = vsel %vm499, 0, %v518
      %520 = vst [vmem:[%s446 + $0x50] sm:$0x1] %v519
      %v521 = vld [vmem:[%s446 + $0x5c] sm:$0x1]
      %v522 = vsel %vm499, 0, %v521
      %523 = vst [vmem:[%s446 + $0x5c] sm:$0x1] %v522
      %v524 = vld [vmem:[%s446 + $0x68] sm:$0x1]
      %v525 = vsel %vm499, 0, %v524
      %526 = vst [vmem:[%s446 + $0x68] sm:$0x1] %v525
      %v527 = vld [vmem:[%s446 + $0x74] sm:$0x1]
      %v528 = vsel %vm499, 0, %v527
      %529 = vst [vmem:[%s446 + $0x74] sm:$0x1] %v528
      %v530 = vld [vmem:[%s446 + $0x80] sm:$0x1]
      %v531 = vsel %vm499, 0, %v530
      %532 = vst [vmem:[%s446 + $0x80] sm:$0x1] %v531
      %v533 = vld [vmem:[%s446 + $0x8c] sm:$0x1]
      %v534 = vsel %vm499, 0, %v533
      %535 = vst [vmem:[%s446 + $0x8c] sm:$0x1] %v534
      %v536 = vld [vmem:[%s446 + $0x98] sm:$0x1]
      %v537 = vsel %vm499, 0, %v536
      %538 = vst [vmem:[%s446 + $0x98] sm:$0x1] %v537
      %v539 = vld [vmem:[%s446 + $0xa4] sm:$0x1]
      %v540 = vsel %vm499, 0, %v539
      %541 = vst [vmem:[%s446 + $0xa4] sm:$0x1] %v540
      %v542 = vld [vmem:[%s446 + $0xb0] sm:$0x1]
      %v543 = vsel %vm499, 0, %v542
      %544 = vst [vmem:[%s446 + $0xb0] sm:$0x1] %v543
      %v545 = vld [vmem:[%s446 + $0xbc] sm:$0x1]
      %v546 = vsel %vm499, 0, %v545
      %547 = vst [vmem:[%s446 + $0xbc] sm:$0x1] %v546
      %vm548 = vsmask.f32 4368
      %vm549 = vmor %vm448, %vm548
      %v551 = vshrl.u32 %v405, 16
      %v553 = vrot.slane %v551, 7
      %v554 = vshll.u32 %v405, 16
      %v556 = vor.u32 %v553, %v554
      %v557 = vrot.slane %v553, 4
      %v559 = vshrl.u32 %v406, 16
      %v561 = vrot.slane %v559, 7
      %v562 = vshll.u32 %v406, 16
      %v564 = vor.u32 %v561, %v562
      %v565 = vsel %vm549, %v557, %v564
      %v566 = vrot.slane %v561, 4
      %v568 = vshrl.u32 %v407, 16
      %v570 = vrot.slane %v568, 7
      %v571 = vshll.u32 %v407, 16
      %v573 = vor.u32 %v570, %v571
      %v574 = vrot.slane %v570, 4
      %v576 = vshrl.u32 %v408, 16
      %v578 = vrot.slane %v576, 7
      %v579 = vshll.u32 %v408, 16
      %v581 = vor.u32 %v578, %v579
      %v582 = vsel %vm549, %v574, %v581
      %v583 = vrot.slane %v578, 4
      %v585 = vshrl.u32 %v409, 16
      %v587 = vrot.slane %v585, 7
      %v588 = vshll.u32 %v409, 16
      %v590 = vor.u32 %v587, %v588
      %v591 = vrot.slane %v587, 4
      %v593 = vshrl.u32 %v410, 16
      %v595 = vrot.slane %v593, 7
      %v596 = vshll.u32 %v410, 16
      %v598 = vor.u32 %v595, %v596
      %v599 = vsel %vm549, %v591, %v598
      %v600 = vrot.slane %v595, 4
      %v602 = vshrl.u32 %v411, 16
      %v604 = vrot.slane %v602, 7
      %v605 = vshll.u32 %v411, 16
      %v607 = vor.u32 %v604, %v605
      %v608 = vrot.slane %v604, 4
      %v610 = vshrl.u32 %v412, 16
      %v612 = vrot.slane %v610, 7
      %v613 = vshll.u32 %v412, 16
      %v615 = vor.u32 %v612, %v613
      %v616 = vsel %vm549, %v608, %v615
      %v617 = vrot.slane %v612, 4
      %v619 = vshrl.u32 %v413, 16
      %v621 = vrot.slane %v619, 7
      %v622 = vshll.u32 %v413, 16
      %v624 = vor.u32 %v621, %v622
      %v625 = vrot.slane %v621, 4
      %v627 = vshrl.u32 %v414, 16
      %v629 = vrot.slane %v627, 7
      %v630 = vshll.u32 %v414, 16
      %v632 = vor.u32 %v629, %v630
      %v633 = vsel %vm549, %v625, %v632
      %v634 = vrot.slane %v629, 4
      %v636 = vshrl.u32 %v415, 16
      %v638 = vrot.slane %v636, 7
      %v639 = vshll.u32 %v415, 16
      %v641 = vor.u32 %v638, %v639
      %v642 = vrot.slane %v638, 4
      %v644 = vshrl.u32 %v416, 16
      %v646 = vrot.slane %v644, 7
      %v647 = vshll.u32 %v416, 16
      %v649 = vor.u32 %v646, %v647
      %v650 = vsel %vm549, %v642, %v649
      %v651 = vrot.slane %v646, 4
      %v653 = vshrl.u32 %v417, 16
      %v655 = vrot.slane %v653, 7
      %v656 = vshll.u32 %v417, 16
      %v658 = vor.u32 %v655, %v656
      %v659 = vrot.slane %v655, 4
      %v661 = vshrl.u32 %v418, 16
      %v663 = vrot.slane %v661, 7
      %v664 = vshll.u32 %v418, 16
      %v666 = vor.u32 %v663, %v664
      %v667 = vsel %vm549, %v659, %v666
      %v668 = vrot.slane %v663, 4
      %v670 = vshrl.u32 %v419, 16
      %v672 = vrot.slane %v670, 7
      %v673 = vshll.u32 %v419, 16
      %v675 = vor.u32 %v672, %v673
      %v676 = vrot.slane %v672, 4
      %v678 = vshrl.u32 %v420, 16
      %v680 = vrot.slane %v678, 7
      %v681 = vshll.u32 %v420, 16
      %v683 = vor.u32 %v680, %v681
      %v684 = vsel %vm549, %v676, %v683
      %v685 = vrot.slane %v680, 4
      %v687 = vshrl.u32 %v421, 16
      %v689 = vrot.slane %v687, 7
      %v690 = vshll.u32 %v421, 16
      %v692 = vor.u32 %v689, %v690
      %v693 = vrot.slane %v689, 4
      %v695 = vshrl.u32 %v422, 16
      %v697 = vrot.slane %v695, 7
      %v698 = vshll.u32 %v422, 16
      %v700 = vor.u32 %v697, %v698
      %v701 = vsel %vm549, %v693, %v700
      %v702 = vrot.slane %v697, 4
      %v704 = vshrl.u32 %v423, 16
      %v706 = vrot.slane %v704, 7
      %v707 = vshll.u32 %v423, 16
      %v709 = vor.u32 %v706, %v707
      %v710 = vrot.slane %v706, 4
      %v712 = vshrl.u32 %v424, 16
      %v714 = vrot.slane %v712, 7
      %v715 = vshll.u32 %v424, 16
      %v717 = vor.u32 %v714, %v715
      %v718 = vsel %vm549, %v710, %v717
      %v719 = vrot.slane %v714, 4
      %v721 = vshrl.u32 %v425, 16
      %v723 = vrot.slane %v721, 7
      %v724 = vshll.u32 %v425, 16
      %v726 = vor.u32 %v723, %v724
      %v727 = vrot.slane %v723, 4
      %v729 = vshrl.u32 %v426, 16
      %v731 = vrot.slane %v729, 7
      %v732 = vshll.u32 %v426, 16
      %v734 = vor.u32 %v731, %v732
      %v735 = vsel %vm549, %v727, %v734
      %v736 = vrot.slane %v731, 4
      %v738 = vshrl.u32 %v427, 16
      %v740 = vrot.slane %v738, 7
      %v741 = vshll.u32 %v427, 16
      %v743 = vor.u32 %v740, %v741
      %v744 = vrot.slane %v740, 4
      %v746 = vshrl.u32 %v428, 16
      %v748 = vrot.slane %v746, 7
      %v749 = vshll.u32 %v428, 16
      %v751 = vor.u32 %v748, %v749
      %v752 = vsel %vm549, %v744, %v751
      %v753 = vrot.slane %v748, 4
      %v755 = vshrl.u32 %v429, 16
      %v757 = vrot.slane %v755, 7
      %v758 = vshll.u32 %v429, 16
      %v760 = vor.u32 %v757, %v758
      %v761 = vrot.slane %v757, 4
      %v763 = vshrl.u32 %v430, 16
      %v765 = vrot.slane %v763, 7
      %v766 = vshll.u32 %v430, 16
      %v768 = vor.u32 %v765, %v766
      %v769 = vsel %vm549, %v761, %v768
      %v770 = vrot.slane %v765, 4
      %v772 = vshrl.u32 %v431, 16
      %v774 = vrot.slane %v772, 7
      %v775 = vshll.u32 %v431, 16
      %v777 = vor.u32 %v774, %v775
      %v778 = vrot.slane %v774, 4
      %v780 = vshrl.u32 %v432, 16
      %v782 = vrot.slane %v780, 7
      %v783 = vshll.u32 %v432, 16
      %v785 = vor.u32 %v782, %v783
      %v786 = vsel %vm549, %v778, %v785
      %v787 = vrot.slane %v782, 4
      %v789 = vshrl.u32 %v433, 16
      %v791 = vrot.slane %v789, 7
      %v792 = vshll.u32 %v433, 16
      %v794 = vor.u32 %v791, %v792
      %v795 = vrot.slane %v791, 4
      %v797 = vshrl.u32 %v434, 16
      %v799 = vrot.slane %v797, 7
      %v800 = vshll.u32 %v434, 16
      %v802 = vor.u32 %v799, %v800
      %v803 = vsel %vm549, %v795, %v802
      %v804 = vrot.slane %v799, 4
      %v806 = vshrl.u32 %v435, 16
      %v808 = vrot.slane %v806, 7
      %v809 = vshll.u32 %v435, 16
      %v811 = vor.u32 %v808, %v809
      %v812 = vrot.slane %v808, 4
      %v814 = vshrl.u32 %v436, 16
      %v816 = vrot.slane %v814, 7
      %v817 = vshll.u32 %v436, 16
      %v819 = vor.u32 %v816, %v817
      %v820 = vsel %vm549, %v812, %v819
      %v821 = vrot.slane %v816, 4
      %vm870 = vcmask 60416
      %vm871 = vmand %vm870, %vm498
      %v872 = vld [vmem:[%s446] sm:$0xf]
      %v873 = vsel %vm871, %v556, %v872
      %874 = vst [vmem:[%s446] sm:$0xf] %v873
      %875 = vst.msk [vmem:[%s446 + $0x4] sm:$0xf] %vm437, %v565
      %v876 = vld [vmem:[%s446 + $0x8] sm:$0x1]
      %v877 = vsel %vm449, %v566, %v876
      %878 = vst [vmem:[%s446 + $0x8] sm:$0x1] %v877
      %v879 = vld [vmem:[%s446 + $0xc] sm:$0xf]
      %v880 = vsel %vm871, %v573, %v879
      %881 = vst [vmem:[%s446 + $0xc] sm:$0xf] %v880
      %882 = vst.msk [vmem:[%s446 + $0x10] sm:$0xf] %vm437, %v582
      %v883 = vld [vmem:[%s446 + $0x14] sm:$0x1]
      %v884 = vsel %vm449, %v583, %v883
      %885 = vst [vmem:[%s446 + $0x14] sm:$0x1] %v884
      %v886 = vld [vmem:[%s446 + $0x18] sm:$0xf]
      %v887 = vsel %vm871, %v590, %v886
      %888 = vst [vmem:[%s446 + $0x18] sm:$0xf] %v887
      %889 = vst.msk [vmem:[%s446 + $0x1c] sm:$0xf] %vm437, %v599
      %v890 = vld [vmem:[%s446 + $0x20] sm:$0x1]
      %v891 = vsel %vm449, %v600, %v890
      %892 = vst [vmem:[%s446 + $0x20] sm:$0x1] %v891
      %v893 = vld [vmem:[%s446 + $0x24] sm:$0xf]
      %v894 = vsel %vm871, %v607, %v893
      %895 = vst [vmem:[%s446 + $0x24] sm:$0xf] %v894
      %896 = vst.msk [vmem:[%s446 + $0x28] sm:$0xf] %vm437, %v616
      %v897 = vld [vmem:[%s446 + $0x2c] sm:$0x1]
      %v898 = vsel %vm449, %v617, %v897
      %899 = vst [vmem:[%s446 + $0x2c] sm:$0x1] %v898
      %v900 = vld [vmem:[%s446 + $0x30] sm:$0xf]
      %v901 = vsel %vm871, %v624, %v900
      %902 = vst [vmem:[%s446 + $0x30] sm:$0xf] %v901
      %903 = vst.msk [vmem:[%s446 + $0x34] sm:$0xf] %vm437, %v633
      %v904 = vld [vmem:[%s446 + $0x38] sm:$0x1]
      %v905 = vsel %vm449, %v634, %v904
      %906 = vst [vmem:[%s446 + $0x38] sm:$0x1] %v905
      %v907 = vld [vmem:[%s446 + $0x3c] sm:$0xf]
      %v908 = vsel %vm871, %v641, %v907
      %909 = vst [vmem:[%s446 + $0x3c] sm:$0xf] %v908
      %910 = vst.msk [vmem:[%s446 + $0x40] sm:$0xf] %vm437, %v650
      %v911 = vld [vmem:[%s446 + $0x44] sm:$0x1]
      %v912 = vsel %vm449, %v651, %v911
      %913 = vst [vmem:[%s446 + $0x44] sm:$0x1] %v912
      %v914 = vld [vmem:[%s446 + $0x48] sm:$0xf]
      %v915 = vsel %vm871, %v658, %v914
      %916 = vst [vmem:[%s446 + $0x48] sm:$0xf] %v915
      %917 = vst.msk [vmem:[%s446 + $0x4c] sm:$0xf] %vm437, %v667
      %v918 = vld [vmem:[%s446 + $0x50] sm:$0x1]
      %v919 = vsel %vm449, %v668, %v918
      %920 = vst [vmem:[%s446 + $0x50] sm:$0x1] %v919
      %v921 = vld [vmem:[%s446 + $0x54] sm:$0xf]
      %v922 = vsel %vm871, %v675, %v921
      %923 = vst [vmem:[%s446 + $0x54] sm:$0xf] %v922
      %924 = vst.msk [vmem:[%s446 + $0x58] sm:$0xf] %vm437, %v684
      %v925 = vld [vmem:[%s446 + $0x5c] sm:$0x1]
      %v926 = vsel %vm449, %v685, %v925
      %927 = vst [vmem:[%s446 + $0x5c] sm:$0x1] %v926
      %v928 = vld [vmem:[%s446 + $0x60] sm:$0xf]
      %v929 = vsel %vm871, %v692, %v928
      %930 = vst [vmem:[%s446 + $0x60] sm:$0xf] %v929
      %931 = vst.msk [vmem:[%s446 + $0x64] sm:$0xf] %vm437, %v701
      %v932 = vld [vmem:[%s446 + $0x68] sm:$0x1]
      %v933 = vsel %vm449, %v702, %v932
      %934 = vst [vmem:[%s446 + $0x68] sm:$0x1] %v933
      %v935 = vld [vmem:[%s446 + $0x6c] sm:$0xf]
      %v936 = vsel %vm871, %v709, %v935
      %937 = vst [vmem:[%s446 + $0x6c] sm:$0xf] %v936
      %938 = vst.msk [vmem:[%s446 + $0x70] sm:$0xf] %vm437, %v718
      %v939 = vld [vmem:[%s446 + $0x74] sm:$0x1]
      %v940 = vsel %vm449, %v719, %v939
      %941 = vst [vmem:[%s446 + $0x74] sm:$0x1] %v940
      %v942 = vld [vmem:[%s446 + $0x78] sm:$0xf]
      %v943 = vsel %vm871, %v726, %v942
      %944 = vst [vmem:[%s446 + $0x78] sm:$0xf] %v943
      %945 = vst.msk [vmem:[%s446 + $0x7c] sm:$0xf] %vm437, %v735
      %v946 = vld [vmem:[%s446 + $0x80] sm:$0x1]
      %v947 = vsel %vm449, %v736, %v946
      %948 = vst [vmem:[%s446 + $0x80] sm:$0x1] %v947
      %v949 = vld [vmem:[%s446 + $0x84] sm:$0xf]
      %v950 = vsel %vm871, %v743, %v949
      %951 = vst [vmem:[%s446 + $0x84] sm:$0xf] %v950
      %952 = vst.msk [vmem:[%s446 + $0x88] sm:$0xf] %vm437, %v752
      %v953 = vld [vmem:[%s446 + $0x8c] sm:$0x1]
      %v954 = vsel %vm449, %v753, %v953
      %955 = vst [vmem:[%s446 + $0x8c] sm:$0x1] %v954
      %v956 = vld [vmem:[%s446 + $0x90] sm:$0xf]
      %v957 = vsel %vm871, %v760, %v956
      %958 = vst [vmem:[%s446 + $0x90] sm:$0xf] %v957
      %959 = vst.msk [vmem:[%s446 + $0x94] sm:$0xf] %vm437, %v769
      %v960 = vld [vmem:[%s446 + $0x98] sm:$0x1]
      %v961 = vsel %vm449, %v770, %v960
      %962 = vst [vmem:[%s446 + $0x98] sm:$0x1] %v961
      %v963 = vld [vmem:[%s446 + $0x9c] sm:$0xf]
      %v964 = vsel %vm871, %v777, %v963
      %965 = vst [vmem:[%s446 + $0x9c] sm:$0xf] %v964
      %966 = vst.msk [vmem:[%s446 + $0xa0] sm:$0xf] %vm437, %v786
      %v967 = vld [vmem:[%s446 + $0xa4] sm:$0x1]
      %v968 = vsel %vm449, %v787, %v967
      %969 = vst [vmem:[%s446 + $0xa4] sm:$0x1] %v968
      %v970 = vld [vmem:[%s446 + $0xa8] sm:$0xf]
      %v971 = vsel %vm871, %v794, %v970
      %972 = vst [vmem:[%s446 + $0xa8] sm:$0xf] %v971
      %973 = vst.msk [vmem:[%s446 + $0xac] sm:$0xf] %vm437, %v803
      %v974 = vld [vmem:[%s446 + $0xb0] sm:$0x1]
      %v975 = vsel %vm449, %v804, %v974
      %976 = vst [vmem:[%s446 + $0xb0] sm:$0x1] %v975
      %v977 = vld [vmem:[%s446 + $0xb4] sm:$0xf]
      %v978 = vsel %vm871, %v811, %v977
      %979 = vst [vmem:[%s446 + $0xb4] sm:$0xf] %v978
      %980 = vst.msk [vmem:[%s446 + $0xb8] sm:$0xf] %vm437, %v820
      %v981 = vld [vmem:[%s446 + $0xbc] sm:$0x1]
      %v982 = vsel %vm449, %v821, %v981
      %983 = vst [vmem:[%s446 + $0xbc] sm:$0x1] %v982
      %v984 = vld [vmem:[#allocation2] sm:$0xf]
      %v985 = vld [vmem:[#allocation2 + $0x4] sm:$0xf]
      %v986 = vld [vmem:[#allocation2 + $0xc] sm:$0xf]
      %v987 = vld [vmem:[#allocation2 + $0x10] sm:$0xf]
      %v988 = vld [vmem:[#allocation2 + $0x18] sm:$0xf]
      %v989 = vld [vmem:[#allocation2 + $0x1c] sm:$0xf]
      %v990 = vld [vmem:[#allocation2 + $0x24] sm:$0xf]
      %v991 = vld [vmem:[#allocation2 + $0x28] sm:$0xf]
      %v992 = vld [vmem:[#allocation2 + $0x30] sm:$0xf]
      %v993 = vld [vmem:[#allocation2 + $0x34] sm:$0xf]
      %v994 = vld [vmem:[#allocation2 + $0x3c] sm:$0xf]
      %v995 = vld [vmem:[#allocation2 + $0x40] sm:$0xf]
      %v996 = vld [vmem:[#allocation2 + $0x48] sm:$0xf]
      %v997 = vld [vmem:[#allocation2 + $0x4c] sm:$0xf]
      %v998 = vld [vmem:[#allocation2 + $0x54] sm:$0xf]
      %v999 = vld [vmem:[#allocation2 + $0x58] sm:$0xf]
      %v1000 = vld [vmem:[#allocation2 + $0x60] sm:$0xf]
      %v1001 = vld [vmem:[#allocation2 + $0x64] sm:$0xf]
      %v1002 = vld [vmem:[#allocation2 + $0x6c] sm:$0xf]
      %v1003 = vld [vmem:[#allocation2 + $0x70] sm:$0xf]
      %v1004 = vld [vmem:[#allocation2 + $0x78] sm:$0xf]
      %v1005 = vld [vmem:[#allocation2 + $0x7c] sm:$0xf]
      %v1006 = vld [vmem:[#allocation2 + $0x84] sm:$0xf]
      %v1007 = vld [vmem:[#allocation2 + $0x88] sm:$0xf]
      %v1008 = vld [vmem:[#allocation2 + $0x90] sm:$0xf]
      %v1009 = vld [vmem:[#allocation2 + $0x94] sm:$0xf]
      %v1010 = vld [vmem:[#allocation2 + $0x9c] sm:$0xf]
      %v1011 = vld [vmem:[#allocation2 + $0xa0] sm:$0xf]
      %v1012 = vld [vmem:[#allocation2 + $0xa8] sm:$0xf]
      %v1013 = vld [vmem:[#allocation2 + $0xac] sm:$0xf]
      %v1014 = vld [vmem:[#allocation2 + $0xb4] sm:$0xf]
      %v1015 = vld [vmem:[#allocation2 + $0xb8] sm:$0xf]
      %v1016 = vld [vmem:[%s3] sm:$0xf]
      %v1017 = vld [vmem:[#allocation2 + $0x8] sm:$0x1]
      %v1018 = vld [vmem:[#allocation2 + $0x14] sm:$0x1]
      %v1019 = vld [vmem:[#allocation2 + $0x20] sm:$0x1]
      %v1020 = vld [vmem:[#allocation2 + $0x2c] sm:$0x1]
      %v1021 = vld [vmem:[#allocation2 + $0x38] sm:$0x1]
      %v1022 = vld [vmem:[#allocation2 + $0x44] sm:$0x1]
      %v1023 = vld [vmem:[#allocation2 + $0x50] sm:$0x1]
      %v1024 = vld [vmem:[#allocation2 + $0x5c] sm:$0x1]
      %v1025 = vld [vmem:[#allocation2 + $0x68] sm:$0x1]
      %v1026 = vld [vmem:[#allocation2 + $0x74] sm:$0x1]
      %v1027 = vld [vmem:[#allocation2 + $0x80] sm:$0x1]
      %v1028 = vld [vmem:[#allocation2 + $0x8c] sm:$0x1]
      %v1029 = vld [vmem:[#allocation2 + $0x98] sm:$0x1]
      %v1030 = vld [vmem:[#allocation2 + $0xa4] sm:$0x1]
      %v1031 = vld [vmem:[#allocation2 + $0xb0] sm:$0x1]
      %v1032 = vld [vmem:[#allocation2 + $0xbc] sm:$0x1]
      %vm1033 = vsmask.f32 3328
      %vm1034 = vsmask.f32 7440
      %vm1035 = vmor %vm1033, %vm1034
      %v1037 = vshrl.u32 %v984, 16
      %v1039 = vrot.slane %v1037, 4
      %v1040 = vshll.u32 %v984, 16
      %v1042 = vrot.slane %v1040, 5
      %v1043 = vor.u32 %v1039, %v1042
      %v1044 = vrot.slane %v1043, 4
      %v1046 = vshll.u32 %v985, 16
      %v1048 = vrot.slane %v1046, 5
      %v1049 = vsel %vm1035, %v1044, %v1048
      %v1050 = vshrl.u32 %v985, 16
      %v1052 = vrot.slane %v1050, 4
      %v1053 = vor.u32 %v1052, %v1048
      %v1054 = vrot.slane %v1053, 4
      %v1056 = vshll.u32 %v1017, 16
      %v1058 = vrot.slane %v1056, 5
      %v1059 = vsel %vm1035, %v1054, %v1058
      %v1061 = vshrl.u32 %v986, 16
      %v1063 = vrot.slane %v1061, 4
      %v1064 = vshll.u32 %v986, 16
      %v1066 = vrot.slane %v1064, 5
      %v1067 = vor.u32 %v1063, %v1066
      %v1068 = vrot.slane %v1067, 4
      %v1070 = vshll.u32 %v987, 16
      %v1072 = vrot.slane %v1070, 5
      %v1073 = vsel %vm1035, %v1068, %v1072
      %v1074 = vshrl.u32 %v987, 16
      %v1076 = vrot.slane %v1074, 4
      %v1077 = vor.u32 %v1076, %v1072
      %v1078 = vrot.slane %v1077, 4
      %v1080 = vshll.u32 %v1018, 16
      %v1082 = vrot.slane %v1080, 5
      %v1083 = vsel %vm1035, %v1078, %v1082
      %v1085 = vshrl.u32 %v988, 16
      %v1087 = vrot.slane %v1085, 4
      %v1088 = vshll.u32 %v988, 16
      %v1090 = vrot.slane %v1088, 5
      %v1091 = vor.u32 %v1087, %v1090
      %v1092 = vrot.slane %v1091, 4
      %v1094 = vshll.u32 %v989, 16
      %v1096 = vrot.slane %v1094, 5
      %v1097 = vsel %vm1035, %v1092, %v1096
      %v1098 = vshrl.u32 %v989, 16
      %v1100 = vrot.slane %v1098, 4
      %v1101 = vor.u32 %v1100, %v1096
      %v1102 = vrot.slane %v1101, 4
      %v1104 = vshll.u32 %v1019, 16
      %v1106 = vrot.slane %v1104, 5
      %v1107 = vsel %vm1035, %v1102, %v1106
      %v1109 = vshrl.u32 %v990, 16
      %v1111 = vrot.slane %v1109, 4
      %v1112 = vshll.u32 %v990, 16
      %v1114 = vrot.slane %v1112, 5
      %v1115 = vor.u32 %v1111, %v1114
      %v1116 = vrot.slane %v1115, 4
      %v1118 = vshll.u32 %v991, 16
      %v1120 = vrot.slane %v1118, 5
      %v1121 = vsel %vm1035, %v1116, %v1120
      %v1122 = vshrl.u32 %v991, 16
      %v1124 = vrot.slane %v1122, 4
      %v1125 = vor.u32 %v1124, %v1120
      %v1126 = vrot.slane %v1125, 4
      %v1128 = vshll.u32 %v1020, 16
      %v1130 = vrot.slane %v1128, 5
      %v1131 = vsel %vm1035, %v1126, %v1130
      %v1133 = vshrl.u32 %v992, 16
      %v1135 = vrot.slane %v1133, 4
      %v1136 = vshll.u32 %v992, 16
      %v1138 = vrot.slane %v1136, 5
      %v1139 = vor.u32 %v1135, %v1138
      %v1140 = vrot.slane %v1139, 4
      %v1142 = vshll.u32 %v993, 16
      %v1144 = vrot.slane %v1142, 5
      %v1145 = vsel %vm1035, %v1140, %v1144
      %v1146 = vshrl.u32 %v993, 16
      %v1148 = vrot.slane %v1146, 4
      %v1149 = vor.u32 %v1148, %v1144
      %v1150 = vrot.slane %v1149, 4
      %v1152 = vshll.u32 %v1021, 16
      %v1154 = vrot.slane %v1152, 5
      %v1155 = vsel %vm1035, %v1150, %v1154
      %v1157 = vshrl.u32 %v994, 16
      %v1159 = vrot.slane %v1157, 4
      %v1160 = vshll.u32 %v994, 16
      %v1162 = vrot.slane %v1160, 5
      %v1163 = vor.u32 %v1159, %v1162
      %v1164 = vrot.slane %v1163, 4
      %v1166 = vshll.u32 %v995, 16
      %v1168 = vrot.slane %v1166, 5
      %v1169 = vsel %vm1035, %v1164, %v1168
      %v1170 = vshrl.u32 %v995, 16
      %v1172 = vrot.slane %v1170, 4
      %v1173 = vor.u32 %v1172, %v1168
      %v1174 = vrot.slane %v1173, 4
      %v1176 = vshll.u32 %v1022, 16
      %v1178 = vrot.slane %v1176, 5
      %v1179 = vsel %vm1035, %v1174, %v1178
      %v1181 = vshrl.u32 %v996, 16
      %v1183 = vrot.slane %v1181, 4
      %v1184 = vshll.u32 %v996, 16
      %v1186 = vrot.slane %v1184, 5
      %v1187 = vor.u32 %v1183, %v1186
      %v1188 = vrot.slane %v1187, 4
      %v1190 = vshll.u32 %v997, 16
      %v1192 = vrot.slane %v1190, 5
      %v1193 = vsel %vm1035, %v1188, %v1192
      %v1194 = vshrl.u32 %v997, 16
      %v1196 = vrot.slane %v1194, 4
      %v1197 = vor.u32 %v1196, %v1192
      %v1198 = vrot.slane %v1197, 4
      %v1200 = vshll.u32 %v1023, 16
      %v1202 = vrot.slane %v1200, 5
      %v1203 = vsel %vm1035, %v1198, %v1202
      %v1205 = vshrl.u32 %v998, 16
      %v1207 = vrot.slane %v1205, 4
      %v1208 = vshll.u32 %v998, 16
      %v1210 = vrot.slane %v1208, 5
      %v1211 = vor.u32 %v1207, %v1210
      %v1212 = vrot.slane %v1211, 4
      %v1214 = vshll.u32 %v999, 16
      %v1216 = vrot.slane %v1214, 5
      %v1217 = vsel %vm1035, %v1212, %v1216
      %v1218 = vshrl.u32 %v999, 16
      %v1220 = vrot.slane %v1218, 4
      %v1221 = vor.u32 %v1220, %v1216
      %v1222 = vrot.slane %v1221, 4
      %v1224 = vshll.u32 %v1024, 16
      %v1226 = vrot.slane %v1224, 5
      %v1227 = vsel %vm1035, %v1222, %v1226
      %v1229 = vshrl.u32 %v1000, 16
      %v1231 = vrot.slane %v1229, 4
      %v1232 = vshll.u32 %v1000, 16
      %v1234 = vrot.slane %v1232, 5
      %v1235 = vor.u32 %v1231, %v1234
      %v1236 = vrot.slane %v1235, 4
      %v1238 = vshll.u32 %v1001, 16
      %v1240 = vrot.slane %v1238, 5
      %v1241 = vsel %vm1035, %v1236, %v1240
      %v1242 = vshrl.u32 %v1001, 16
      %v1244 = vrot.slane %v1242, 4
      %v1245 = vor.u32 %v1244, %v1240
      %v1246 = vrot.slane %v1245, 4
      %v1248 = vshll.u32 %v1025, 16
      %v1250 = vrot.slane %v1248, 5
      %v1251 = vsel %vm1035, %v1246, %v1250
      %v1253 = vshrl.u32 %v1002, 16
      %v1255 = vrot.slane %v1253, 4
      %v1256 = vshll.u32 %v1002, 16
      %v1258 = vrot.slane %v1256, 5
      %v1259 = vor.u32 %v1255, %v1258
      %v1260 = vrot.slane %v1259, 4
      %v1262 = vshll.u32 %v1003, 16
      %v1264 = vrot.slane %v1262, 5
      %v1265 = vsel %vm1035, %v1260, %v1264
      %v1266 = vshrl.u32 %v1003, 16
      %v1268 = vrot.slane %v1266, 4
      %v1269 = vor.u32 %v1268, %v1264
      %v1270 = vrot.slane %v1269, 4
      %v1272 = vshll.u32 %v1026, 16
      %v1274 = vrot.slane %v1272, 5
      %v1275 = vsel %vm1035, %v1270, %v1274
      %v1277 = vshrl.u32 %v1004, 16
      %v1279 = vrot.slane %v1277, 4
      %v1280 = vshll.u32 %v1004, 16
      %v1282 = vrot.slane %v1280, 5
      %v1283 = vor.u32 %v1279, %v1282
      %v1284 = vrot.slane %v1283, 4
      %v1286 = vshll.u32 %v1005, 16
      %v1288 = vrot.slane %v1286, 5
      %v1289 = vsel %vm1035, %v1284, %v1288
      %v1290 = vshrl.u32 %v1005, 16
      %v1292 = vrot.slane %v1290, 4
      %v1293 = vor.u32 %v1292, %v1288
      %v1294 = vrot.slane %v1293, 4
      %v1296 = vshll.u32 %v1027, 16
      %v1298 = vrot.slane %v1296, 5
      %v1299 = vsel %vm1035, %v1294, %v1298
      %v1301 = vshrl.u32 %v1006, 16
      %v1303 = vrot.slane %v1301, 4
      %v1304 = vshll.u32 %v1006, 16
      %v1306 = vrot.slane %v1304, 5
      %v1307 = vor.u32 %v1303, %v1306
      %v1308 = vrot.slane %v1307, 4
      %v1310 = vshll.u32 %v1007, 16
      %v1312 = vrot.slane %v1310, 5
      %v1313 = vsel %vm1035, %v1308, %v1312
      %v1314 = vshrl.u32 %v1007, 16
      %v1316 = vrot.slane %v1314, 4
      %v1317 = vor.u32 %v1316, %v1312
      %v1318 = vrot.slane %v1317, 4
      %v1320 = vshll.u32 %v1028, 16
      %v1322 = vrot.slane %v1320, 5
      %v1323 = vsel %vm1035, %v1318, %v1322
      %v1325 = vshrl.u32 %v1008, 16
      %v1327 = vrot.slane %v1325, 4
      %v1328 = vshll.u32 %v1008, 16
      %v1330 = vrot.slane %v1328, 5
      %v1331 = vor.u32 %v1327, %v1330
      %v1332 = vrot.slane %v1331, 4
      %v1334 = vshll.u32 %v1009, 16
      %v1336 = vrot.slane %v1334, 5
      %v1337 = vsel %vm1035, %v1332, %v1336
      %v1338 = vshrl.u32 %v1009, 16
      %v1340 = vrot.slane %v1338, 4
      %v1341 = vor.u32 %v1340, %v1336
      %v1342 = vrot.slane %v1341, 4
      %v1344 = vshll.u32 %v1029, 16
      %v1346 = vrot.slane %v1344, 5
      %v1347 = vsel %vm1035, %v1342, %v1346
      %v1349 = vshrl.u32 %v1010, 16
      %v1351 = vrot.slane %v1349, 4
      %v1352 = vshll.u32 %v1010, 16
      %v1354 = vrot.slane %v1352, 5
      %v1355 = vor.u32 %v1351, %v1354
      %v1356 = vrot.slane %v1355, 4
      %v1358 = vshll.u32 %v1011, 16
      %v1360 = vrot.slane %v1358, 5
      %v1361 = vsel %vm1035, %v1356, %v1360
      %v1362 = vshrl.u32 %v1011, 16
      %v1364 = vrot.slane %v1362, 4
      %v1365 = vor.u32 %v1364, %v1360
      %v1366 = vrot.slane %v1365, 4
      %v1368 = vshll.u32 %v1030, 16
      %v1370 = vrot.slane %v1368, 5
      %v1371 = vsel %vm1035, %v1366, %v1370
      %v1373 = vshrl.u32 %v1012, 16
      %v1375 = vrot.slane %v1373, 4
      %v1376 = vshll.u32 %v1012, 16
      %v1378 = vrot.slane %v1376, 5
      %v1379 = vor.u32 %v1375, %v1378
      %v1380 = vrot.slane %v1379, 4
      %v1382 = vshll.u32 %v1013, 16
      %v1384 = vrot.slane %v1382, 5
      %v1385 = vsel %vm1035, %v1380, %v1384
      %v1386 = vshrl.u32 %v1013, 16
      %v1388 = vrot.slane %v1386, 4
      %v1389 = vor.u32 %v1388, %v1384
      %v1390 = vrot.slane %v1389, 4
      %v1392 = vshll.u32 %v1031, 16
      %v1394 = vrot.slane %v1392, 5
      %v1395 = vsel %vm1035, %v1390, %v1394
      %v1397 = vshrl.u32 %v1014, 16
      %v1399 = vrot.slane %v1397, 4
      %v1400 = vshll.u32 %v1014, 16
      %v1402 = vrot.slane %v1400, 5
      %v1403 = vor.u32 %v1399, %v1402
      %v1404 = vrot.slane %v1403, 4
      %v1406 = vshll.u32 %v1015, 16
      %v1408 = vrot.slane %v1406, 5
      %v1409 = vsel %vm1035, %v1404, %v1408
      %v1410 = vshrl.u32 %v1015, 16
      %v1412 = vrot.slane %v1410, 4
      %v1413 = vor.u32 %v1412, %v1408
      %v1414 = vrot.slane %v1413, 4
      %v1416 = vshll.u32 %v1032, 16
      %v1418 = vrot.slane %v1416, 5
      %v1419 = vsel %vm1035, %v1414, %v1418
      %s1420 = scalar_lea.vmem %s3, 4
      %v1421 = vld [vmem:[%s1420] sm:$0xf]
      %v1422 = vunpack.c.l.b16 %v1049
      %v1423 = vunpack.c.l.b16 %v1059
      %v1424 = vunpack.c.l.b16 %v1073
      %v1425 = vunpack.c.l.b16 %v1083
      %v1426 = vunpack.c.l.b16 %v1097
      %v1427 = vunpack.c.l.b16 %v1107
      %v1428 = vunpack.c.l.b16 %v1121
      %v1429 = vunpack.c.l.b16 %v1131
      %v1430 = vunpack.c.l.b16 %v1145
      %v1431 = vunpack.c.l.b16 %v1155
      %v1432 = vunpack.c.l.b16 %v1169
      %v1433 = vunpack.c.l.b16 %v1179
      %v1434 = vunpack.c.l.b16 %v1193
      %v1435 = vunpack.c.l.b16 %v1203
      %v1436 = vunpack.c.l.b16 %v1217
      %v1437 = vunpack.c.l.b16 %v1227
      %v1438 = vunpack.c.l.b16 %v1241
      %v1439 = vunpack.c.l.b16 %v1251
      %v1440 = vunpack.c.l.b16 %v1265
      %v1441 = vunpack.c.l.b16 %v1275
      %v1442 = vunpack.c.l.b16 %v1289
      %v1443 = vunpack.c.l.b16 %v1299
      %v1444 = vunpack.c.l.b16 %v1313
      %v1445 = vunpack.c.l.b16 %v1323
      %v1446 = vunpack.c.l.b16 %v1337
      %v1447 = vunpack.c.l.b16 %v1347
      %v1448 = vunpack.c.l.b16 %v1361
      %v1449 = vunpack.c.l.b16 %v1371
      %v1450 = vunpack.c.l.b16 %v1385
      %v1451 = vunpack.c.l.b16 %v1395
      %v1452 = vunpack.c.l.b16 %v1409
      %v1453 = vunpack.c.l.b16 %v1419
      %v1454 = vpack.c.b16 %v1423, %v1422
      %v1455 = vpack.c.b16 %v1425, %v1424
      %v1456 = vpack.c.b16 %v1427, %v1426
      %v1457 = vpack.c.b16 %v1429, %v1428
      %v1458 = vpack.c.b16 %v1431, %v1430
      %v1459 = vpack.c.b16 %v1433, %v1432
      %v1460 = vpack.c.b16 %v1435, %v1434
      %v1461 = vpack.c.b16 %v1437, %v1436
      %v1462 = vpack.c.b16 %v1439, %v1438
      %v1463 = vpack.c.b16 %v1441, %v1440
      %v1464 = vpack.c.b16 %v1443, %v1442
      %v1465 = vpack.c.b16 %v1445, %v1444
      %v1466 = vpack.c.b16 %v1447, %v1446
      %v1467 = vpack.c.b16 %v1449, %v1448
      %v1468 = vpack.c.b16 %v1451, %v1450
      %v1469 = vpack.c.b16 %v1453, %v1452
      %vm1470 = vcmask 64512
      %v1472 = vsel %vm1470, %v1454, 0
      %v1475 = vsel %vm1470, %v1455, 0
      %v1478 = vsel %vm1470, %v1456, 0
      %v1481 = vsel %vm1470, %v1457, 0
      %v1484 = vsel %vm1470, %v1458, 0
      %v1487 = vsel %vm1470, %v1459, 0
      %v1490 = vsel %vm1470, %v1460, 0
      %v1493 = vsel %vm1470, %v1461, 0
      %v1496 = vsel %vm1470, %v1462, 0
      %v1499 = vsel %vm1470, %v1463, 0
      %v1502 = vsel %vm1470, %v1464, 0
      %v1505 = vsel %vm1470, %v1465, 0
      %v1508 = vsel %vm1470, %v1466, 0
      %v1511 = vsel %vm1470, %v1467, 0
      %v1514 = vsel %vm1470, %v1468, 0
      %v1517 = vsel %vm1470, %v1469, 0
      %vm1519 = vcmask 1043456
      %v1521 = vsel %vm1519, %v1421, 0
      %1523 = vmatpush.bf16.msra.mxu0 0
      %1524 = vmatpush.bf16.msra.mxu0 0
      %1525 = vmatpush.bf16.msra.mxu0 0
      %1526 = vmatpush.bf16.msra.mxu0 0
      %1527 = vmatpush.bf16.msra.mxu0 0
      %1528 = vmatpush.bf16.msra.mxu0 0
      %1529 = vmatpush.bf16.msra.mxu0 0
      %1530 = vmatpush.bf16.msra.mxu0 %v1521
      %1531 = vmatmul.bf16.gmra.mxu0 %v1472
      %v1532 = vpop.f32.mrf.mxu0
      %v1533 = vadd.f32 0.0, %v1532
      %v1534 = vpop.f32.mrf.mxu0
      %v1535 = vadd.f32 0.0, %v1534
      %1536 = vmatmul.bf16.gmra.mxu0 %v1475
      %v1537 = vpop.f32.mrf.mxu0
      %v1538 = vadd.f32 0.0, %v1537
      %v1539 = vpop.f32.mrf.mxu0
      %v1540 = vadd.f32 0.0, %v1539
      %1541 = vmatmul.bf16.gmra.mxu0 %v1478
      %v1542 = vpop.f32.mrf.mxu0
      %v1543 = vadd.f32 0.0, %v1542
      %v1544 = vpop.f32.mrf.mxu0
      %v1545 = vadd.f32 0.0, %v1544
      %1546 = vmatmul.bf16.gmra.mxu0 %v1481
      %v1547 = vpop.f32.mrf.mxu0
      %v1548 = vadd.f32 0.0, %v1547
      %v1549 = vpop.f32.mrf.mxu0
      %v1550 = vadd.f32 0.0, %v1549
      %1551 = vmatmul.bf16.gmra.mxu0 %v1484
      %v1552 = vpop.f32.mrf.mxu0
      %v1553 = vadd.f32 0.0, %v1552
      %v1554 = vpop.f32.mrf.mxu0
      %v1555 = vadd.f32 0.0, %v1554
      %1556 = vmatmul.bf16.gmra.mxu0 %v1487
      %v1557 = vpop.f32.mrf.mxu0
      %v1558 = vadd.f32 0.0, %v1557
      %v1559 = vpop.f32.mrf.mxu0
      %v1560 = vadd.f32 0.0, %v1559
      %1561 = vmatmul.bf16.gmra.mxu0 %v1490
      %v1562 = vpop.f32.mrf.mxu0
      %v1563 = vadd.f32 0.0, %v1562
      %v1564 = vpop.f32.mrf.mxu0
      %v1565 = vadd.f32 0.0, %v1564
      %1566 = vmatmul.bf16.gmra.mxu0 %v1493
      %v1567 = vpop.f32.mrf.mxu0
      %v1568 = vadd.f32 0.0, %v1567
      %v1569 = vpop.f32.mrf.mxu0
      %v1570 = vadd.f32 0.0, %v1569
      %1571 = vmatmul.bf16.gmra.mxu0 %v1496
      %v1572 = vpop.f32.mrf.mxu0
      %v1573 = vadd.f32 0.0, %v1572
      %v1574 = vpop.f32.mrf.mxu0
      %v1575 = vadd.f32 0.0, %v1574
      %1576 = vmatmul.bf16.gmra.mxu0 %v1499
      %v1577 = vpop.f32.mrf.mxu0
      %v1578 = vadd.f32 0.0, %v1577
      %v1579 = vpop.f32.mrf.mxu0
      %v1580 = vadd.f32 0.0, %v1579
      %1581 = vmatmul.bf16.gmra.mxu0 %v1502
      %v1582 = vpop.f32.mrf.mxu0
      %v1583 = vadd.f32 0.0, %v1582
      %v1584 = vpop.f32.mrf.mxu0
      %v1585 = vadd.f32 0.0, %v1584
      %1586 = vmatmul.bf16.gmra.mxu0 %v1505
      %v1587 = vpop.f32.mrf.mxu0
      %v1588 = vadd.f32 0.0, %v1587
      %v1589 = vpop.f32.mrf.mxu0
      %v1590 = vadd.f32 0.0, %v1589
      %1591 = vmatmul.bf16.gmra.mxu0 %v1508
      %v1592 = vpop.f32.mrf.mxu0
      %v1593 = vadd.f32 0.0, %v1592
      %v1594 = vpop.f32.mrf.mxu0
      %v1595 = vadd.f32 0.0, %v1594
      %1596 = vmatmul.bf16.gmra.mxu0 %v1511
      %v1597 = vpop.f32.mrf.mxu0
      %v1598 = vadd.f32 0.0, %v1597
      %v1599 = vpop.f32.mrf.mxu0
      %v1600 = vadd.f32 0.0, %v1599
      %1601 = vmatmul.bf16.gmra.mxu0 %v1514
      %v1602 = vpop.f32.mrf.mxu0
      %v1603 = vadd.f32 0.0, %v1602
      %v1604 = vpop.f32.mrf.mxu0
      %v1605 = vadd.f32 0.0, %v1604
      %1606 = vmatmul.bf16.gmra.mxu0 %v1517
      %v1607 = vpop.f32.mrf.mxu0
      %v1608 = vadd.f32 0.0, %v1607
      %v1609 = vpop.f32.mrf.mxu0
      %v1610 = vadd.f32 0.0, %v1609
      %1611 = vdwg.mxu0
      %v1644 = vunpack.c.l.b16 %v984
      %v1645 = vunpack.c.l.b16 %v985
      %v1646 = vunpack.c.l.b16 %v986
      %v1647 = vunpack.c.l.b16 %v987
      %v1648 = vunpack.c.l.b16 %v988
      %v1649 = vunpack.c.l.b16 %v989
      %v1650 = vunpack.c.l.b16 %v990
      %v1651 = vunpack.c.l.b16 %v991
      %v1652 = vunpack.c.l.b16 %v992
      %v1653 = vunpack.c.l.b16 %v993
      %v1654 = vunpack.c.l.b16 %v994
      %v1655 = vunpack.c.l.b16 %v995
      %v1656 = vunpack.c.l.b16 %v996
      %v1657 = vunpack.c.l.b16 %v997
      %v1658 = vunpack.c.l.b16 %v998
      %v1659 = vunpack.c.l.b16 %v999
      %v1660 = vunpack.c.l.b16 %v1000
      %v1661 = vunpack.c.l.b16 %v1001
      %v1662 = vunpack.c.l.b16 %v1002
      %v1663 = vunpack.c.l.b16 %v1003
      %v1664 = vunpack.c.l.b16 %v1004
      %v1665 = vunpack.c.l.b16 %v1005
      %v1666 = vunpack.c.l.b16 %v1006
      %v1667 = vunpack.c.l.b16 %v1007
      %v1668 = vunpack.c.l.b16 %v1008
      %v1669 = vunpack.c.l.b16 %v1009
      %v1670 = vunpack.c.l.b16 %v1010
      %v1671 = vunpack.c.l.b16 %v1011
      %v1672 = vunpack.c.l.b16 %v1012
      %v1673 = vunpack.c.l.b16 %v1013
      %v1674 = vunpack.c.l.b16 %v1014
      %v1675 = vunpack.c.l.b16 %v1015
      %v1676 = vpack.c.b16 %v1645, %v1644
      %v1677 = vpack.c.b16 %v1647, %v1646
      %v1678 = vpack.c.b16 %v1649, %v1648
      %v1679 = vpack.c.b16 %v1651, %v1650
      %v1680 = vpack.c.b16 %v1653, %v1652
      %v1681 = vpack.c.b16 %v1655, %v1654
      %v1682 = vpack.c.b16 %v1657, %v1656
      %v1683 = vpack.c.b16 %v1659, %v1658
      %v1684 = vpack.c.b16 %v1661, %v1660
      %v1685 = vpack.c.b16 %v1663, %v1662
      %v1686 = vpack.c.b16 %v1665, %v1664
      %v1687 = vpack.c.b16 %v1667, %v1666
      %v1688 = vpack.c.b16 %v1669, %v1668
      %v1689 = vpack.c.b16 %v1671, %v1670
      %v1690 = vpack.c.b16 %v1673, %v1672
      %v1691 = vpack.c.b16 %v1675, %v1674
      %v1693 = vsel %vm1470, %v1676, 0
      %v1696 = vsel %vm1470, %v1677, 0
      %v1699 = vsel %vm1470, %v1678, 0
      %v1702 = vsel %vm1470, %v1679, 0
      %v1705 = vsel %vm1470, %v1680, 0
      %v1708 = vsel %vm1470, %v1681, 0
      %v1711 = vsel %vm1470, %v1682, 0
      %v1714 = vsel %vm1470, %v1683, 0
      %v1717 = vsel %vm1470, %v1684, 0
      %v1720 = vsel %vm1470, %v1685, 0
      %v1723 = vsel %vm1470, %v1686, 0
      %v1726 = vsel %vm1470, %v1687, 0
      %v1729 = vsel %vm1470, %v1688, 0
      %v1732 = vsel %vm1470, %v1689, 0
      %v1735 = vsel %vm1470, %v1690, 0
      %v1738 = vsel %vm1470, %v1691, 0
      %v1741 = vsel %vm1519, %v1016, 0
      %1743 = vmatpush.bf16.msra.mxu0 0
      %1744 = vmatpush.bf16.msra.mxu0 0
      %1745 = vmatpush.bf16.msra.mxu0 0
      %1746 = vmatpush.bf16.msra.mxu0 0
      %1747 = vmatpush.bf16.msra.mxu0 0
      %1748 = vmatpush.bf16.msra.mxu0 0
      %1749 = vmatpush.bf16.msra.mxu0 0
      %1750 = vmatpush.bf16.msra.mxu0 %v1741
      %1751 = vmatmul.bf16.gmra.mxu0 %v1693
      %v1752 = vpop.f32.mrf.mxu0
      %v1753 = vadd.f32 %v1533, %v1752
      %v1754 = vpop.f32.mrf.mxu0
      %v1755 = vadd.f32 %v1535, %v1754
      %1756 = vmatmul.bf16.gmra.mxu0 %v1696
      %v1757 = vpop.f32.mrf.mxu0
      %v1758 = vadd.f32 %v1538, %v1757
      %v1759 = vpop.f32.mrf.mxu0
      %v1760 = vadd.f32 %v1540, %v1759
      %1761 = vmatmul.bf16.gmra.mxu0 %v1699
      %v1762 = vpop.f32.mrf.mxu0
      %v1763 = vadd.f32 %v1543, %v1762
      %v1764 = vpop.f32.mrf.mxu0
      %v1765 = vadd.f32 %v1545, %v1764
      %1766 = vmatmul.bf16.gmra.mxu0 %v1702
      %v1767 = vpop.f32.mrf.mxu0
      %v1768 = vadd.f32 %v1548, %v1767
      %v1769 = vpop.f32.mrf.mxu0
      %v1770 = vadd.f32 %v1550, %v1769
      %1771 = vmatmul.bf16.gmra.mxu0 %v1705
      %v1772 = vpop.f32.mrf.mxu0
      %v1773 = vadd.f32 %v1553, %v1772
      %v1774 = vpop.f32.mrf.mxu0
      %v1775 = vadd.f32 %v1555, %v1774
      %1776 = vmatmul.bf16.gmra.mxu0 %v1708
      %v1777 = vpop.f32.mrf.mxu0
      %v1778 = vadd.f32 %v1558, %v1777
      %v1779 = vpop.f32.mrf.mxu0
      %v1780 = vadd.f32 %v1560, %v1779
      %1781 = vmatmul.bf16.gmra.mxu0 %v1711
      %v1782 = vpop.f32.mrf.mxu0
      %v1783 = vadd.f32 %v1563, %v1782
      %v1784 = vpop.f32.mrf.mxu0
      %v1785 = vadd.f32 %v1565, %v1784
      %1786 = vmatmul.bf16.gmra.mxu0 %v1714
      %v1787 = vpop.f32.mrf.mxu0
      %v1788 = vadd.f32 %v1568, %v1787
      %v1789 = vpop.f32.mrf.mxu0
      %v1790 = vadd.f32 %v1570, %v1789
      %1791 = vmatmul.bf16.gmra.mxu0 %v1717
      %v1792 = vpop.f32.mrf.mxu0
      %v1793 = vadd.f32 %v1573, %v1792
      %v1794 = vpop.f32.mrf.mxu0
      %v1795 = vadd.f32 %v1575, %v1794
      %1796 = vmatmul.bf16.gmra.mxu0 %v1720
      %v1797 = vpop.f32.mrf.mxu0
      %v1798 = vadd.f32 %v1578, %v1797
      %v1799 = vpop.f32.mrf.mxu0
      %v1800 = vadd.f32 %v1580, %v1799
      %1801 = vmatmul.bf16.gmra.mxu0 %v1723
      %v1802 = vpop.f32.mrf.mxu0
      %v1803 = vadd.f32 %v1583, %v1802
      %v1804 = vpop.f32.mrf.mxu0
      %v1805 = vadd.f32 %v1585, %v1804
      %1806 = vmatmul.bf16.gmra.mxu0 %v1726
      %v1807 = vpop.f32.mrf.mxu0
      %v1808 = vadd.f32 %v1588, %v1807
      %v1809 = vpop.f32.mrf.mxu0
      %v1810 = vadd.f32 %v1590, %v1809
      %1811 = vmatmul.bf16.gmra.mxu0 %v1729
      %v1812 = vpop.f32.mrf.mxu0
      %v1813 = vadd.f32 %v1593, %v1812
      %v1814 = vpop.f32.mrf.mxu0
      %v1815 = vadd.f32 %v1595, %v1814
      %1816 = vmatmul.bf16.gmra.mxu0 %v1732
      %v1817 = vpop.f32.mrf.mxu0
      %v1818 = vadd.f32 %v1598, %v1817
      %v1819 = vpop.f32.mrf.mxu0
      %v1820 = vadd.f32 %v1600, %v1819
      %1821 = vmatmul.bf16.gmra.mxu0 %v1735
      %v1822 = vpop.f32.mrf.mxu0
      %v1823 = vadd.f32 %v1603, %v1822
      %v1824 = vpop.f32.mrf.mxu0
      %v1825 = vadd.f32 %v1605, %v1824
      %1826 = vmatmul.bf16.gmra.mxu0 %v1738
      %v1827 = vpop.f32.mrf.mxu0
      %v1828 = vadd.f32 %v1608, %v1827
      %v1829 = vpop.f32.mrf.mxu0
      %v1830 = vadd.f32 %v1610, %v1829
      %1831 = vdwg.mxu0
      %v1832 = vld [vmem:[#allocation2] sm:$0xe]
      %v1833 = vld [vmem:[#allocation2 + $0xc] sm:$0xe]
      %v1834 = vld [vmem:[#allocation2 + $0x18] sm:$0xe]
      %v1835 = vld [vmem:[#allocation2 + $0x24] sm:$0xe]
      %v1836 = vld [vmem:[#allocation2 + $0x30] sm:$0xe]
      %v1837 = vld [vmem:[#allocation2 + $0x3c] sm:$0xe]
      %v1838 = vld [vmem:[#allocation2 + $0x48] sm:$0xe]
      %v1839 = vld [vmem:[#allocation2 + $0x54] sm:$0xe]
      %v1840 = vld [vmem:[#allocation2 + $0x60] sm:$0xe]
      %v1841 = vld [vmem:[#allocation2 + $0x6c] sm:$0xe]
      %v1842 = vld [vmem:[#allocation2 + $0x78] sm:$0xe]
      %v1843 = vld [vmem:[#allocation2 + $0x84] sm:$0xe]
      %v1844 = vld [vmem:[#allocation2 + $0x90] sm:$0xe]
      %v1845 = vld [vmem:[#allocation2 + $0x9c] sm:$0xe]
      %v1846 = vld [vmem:[#allocation2 + $0xa8] sm:$0xe]
      %v1847 = vld [vmem:[#allocation2 + $0xb4] sm:$0xe]
      %vm1880 = vcmask 1042432
      %vm1881 = vcmask 1046532
      %vm1882 = vmor %vm1880, %vm1881
      %v1883 = vrot.slane %v1832, 5
      %v1884 = vrot.slane %v1883, 4
      %v1885 = vrot.slane %v985, 5
      %v1886 = vsel %vm1882, %v1884, %v1885
      %v1887 = vrot.slane %v1885, 4
      %v1888 = vrot.slane %v1017, 5
      %v1889 = vsel %vm1882, %v1887, %v1888
      %v1890 = vrot.slane %v1833, 5
      %v1891 = vrot.slane %v1890, 4
      %v1892 = vrot.slane %v987, 5
      %v1893 = vsel %vm1882, %v1891, %v1892
      %v1894 = vrot.slane %v1892, 4
      %v1895 = vrot.slane %v1018, 5
      %v1896 = vsel %vm1882, %v1894, %v1895
      %v1897 = vrot.slane %v1834, 5
      %v1898 = vrot.slane %v1897, 4
      %v1899 = vrot.slane %v989, 5
      %v1900 = vsel %vm1882, %v1898, %v1899
      %v1901 = vrot.slane %v1899, 4
      %v1902 = vrot.slane %v1019, 5
      %v1903 = vsel %vm1882, %v1901, %v1902
      %v1904 = vrot.slane %v1835, 5
      %v1905 = vrot.slane %v1904, 4
      %v1906 = vrot.slane %v991, 5
      %v1907 = vsel %vm1882, %v1905, %v1906
      %v1908 = vrot.slane %v1906, 4
      %v1909 = vrot.slane %v1020, 5
      %v1910 = vsel %vm1882, %v1908, %v1909
      %v1911 = vrot.slane %v1836, 5
      %v1912 = vrot.slane %v1911, 4
      %v1913 = vrot.slane %v993, 5
      %v1914 = vsel %vm1882, %v1912, %v1913
      %v1915 = vrot.slane %v1913, 4
      %v1916 = vrot.slane %v1021, 5
      %v1917 = vsel %vm1882, %v1915, %v1916
      %v1918 = vrot.slane %v1837, 5
      %v1919 = vrot.slane %v1918, 4
      %v1920 = vrot.slane %v995, 5
      %v1921 = vsel %vm1882, %v1919, %v1920
      %v1922 = vrot.slane %v1920, 4
      %v1923 = vrot.slane %v1022, 5
      %v1924 = vsel %vm1882, %v1922, %v1923
      %v1925 = vrot.slane %v1838, 5
      %v1926 = vrot.slane %v1925, 4
      %v1927 = vrot.slane %v997, 5
      %v1928 = vsel %vm1882, %v1926, %v1927
      %v1929 = vrot.slane %v1927, 4
      %v1930 = vrot.slane %v1023, 5
      %v1931 = vsel %vm1882, %v1929, %v1930
      %v1932 = vrot.slane %v1839, 5
      %v1933 = vrot.slane %v1932, 4
      %v1934 = vrot.slane %v999, 5
      %v1935 = vsel %vm1882, %v1933, %v1934
      %v1936 = vrot.slane %v1934, 4
      %v1937 = vrot.slane %v1024, 5
      %v1938 = vsel %vm1882, %v1936, %v1937
      %v1939 = vrot.slane %v1840, 5
      %v1940 = vrot.slane %v1939, 4
      %v1941 = vrot.slane %v1001, 5
      %v1942 = vsel %vm1882, %v1940, %v1941
      %v1943 = vrot.slane %v1941, 4
      %v1944 = vrot.slane %v1025, 5
      %v1945 = vsel %vm1882, %v1943, %v1944
      %v1946 = vrot.slane %v1841, 5
      %v1947 = vrot.slane %v1946, 4
      %v1948 = vrot.slane %v1003, 5
      %v1949 = vsel %vm1882, %v1947, %v1948
      %v1950 = vrot.slane %v1948, 4
      %v1951 = vrot.slane %v1026, 5
      %v1952 = vsel %vm1882, %v1950, %v1951
      %v1953 = vrot.slane %v1842, 5
      %v1954 = vrot.slane %v1953, 4
      %v1955 = vrot.slane %v1005, 5
      %v1956 = vsel %vm1882, %v1954, %v1955
      %v1957 = vrot.slane %v1955, 4
      %v1958 = vrot.slane %v1027, 5
      %v1959 = vsel %vm1882, %v1957, %v1958
      %v1960 = vrot.slane %v1843, 5
      %v1961 = vrot.slane %v1960, 4
      %v1962 = vrot.slane %v1007, 5
      %v1963 = vsel %vm1882, %v1961, %v1962
      %v1964 = vrot.slane %v1962, 4
      %v1965 = vrot.slane %v1028, 5
      %v1966 = vsel %vm1882, %v1964, %v1965
      %v1967 = vrot.slane %v1844, 5
      %v1968 = vrot.slane %v1967, 4
      %v1969 = vrot.slane %v1009, 5
      %v1970 = vsel %vm1882, %v1968, %v1969
      %v1971 = vrot.slane %v1969, 4
      %v1972 = vrot.slane %v1029, 5
      %v1973 = vsel %vm1882, %v1971, %v1972
      %v1974 = vrot.slane %v1845, 5
      %v1975 = vrot.slane %v1974, 4
      %v1976 = vrot.slane %v1011, 5
      %v1977 = vsel %vm1882, %v1975, %v1976
      %v1978 = vrot.slane %v1976, 4
      %v1979 = vrot.slane %v1030, 5
      %v1980 = vsel %vm1882, %v1978, %v1979
      %v1981 = vrot.slane %v1846, 5
      %v1982 = vrot.slane %v1981, 4
      %v1983 = vrot.slane %v1013, 5
      %v1984 = vsel %vm1882, %v1982, %v1983
      %v1985 = vrot.slane %v1983, 4
      %v1986 = vrot.slane %v1031, 5
      %v1987 = vsel %vm1882, %v1985, %v1986
      %v1988 = vrot.slane %v1847, 5
      %v1989 = vrot.slane %v1988, 4
      %v1990 = vrot.slane %v1015, 5
      %v1991 = vsel %vm1882, %v1989, %v1990
      %v1992 = vrot.slane %v1990, 4
      %v1993 = vrot.slane %v1032, 5
      %v1994 = vsel %vm1882, %v1992, %v1993
      %s1995 = scalar_lea.vmem %s3, 8
      %v1996 = vld [vmem:[%s1995] sm:$0xf]
      %v1997 = vunpack.c.l.b16 %v1886
      %v1998 = vunpack.c.l.b16 %v1889
      %v1999 = vunpack.c.l.b16 %v1893
      %v2000 = vunpack.c.l.b16 %v1896
      %v2001 = vunpack.c.l.b16 %v1900
      %v2002 = vunpack.c.l.b16 %v1903
      %v2003 = vunpack.c.l.b16 %v1907
      %v2004 = vunpack.c.l.b16 %v1910
      %v2005 = vunpack.c.l.b16 %v1914
      %v2006 = vunpack.c.l.b16 %v1917
      %v2007 = vunpack.c.l.b16 %v1921
      %v2008 = vunpack.c.l.b16 %v1924
      %v2009 = vunpack.c.l.b16 %v1928
      %v2010 = vunpack.c.l.b16 %v1931
      %v2011 = vunpack.c.l.b16 %v1935
      %v2012 = vunpack.c.l.b16 %v1938
      %v2013 = vunpack.c.l.b16 %v1942
      %v2014 = vunpack.c.l.b16 %v1945
      %v2015 = vunpack.c.l.b16 %v1949
      %v2016 = vunpack.c.l.b16 %v1952
      %v2017 = vunpack.c.l.b16 %v1956
      %v2018 = vunpack.c.l.b16 %v1959
      %v2019 = vunpack.c.l.b16 %v1963
      %v2020 = vunpack.c.l.b16 %v1966
      %v2021 = vunpack.c.l.b16 %v1970
      %v2022 = vunpack.c.l.b16 %v1973
      %v2023 = vunpack.c.l.b16 %v1977
      %v2024 = vunpack.c.l.b16 %v1980
      %v2025 = vunpack.c.l.b16 %v1984
      %v2026 = vunpack.c.l.b16 %v1987
      %v2027 = vunpack.c.l.b16 %v1991
      %v2028 = vunpack.c.l.b16 %v1994
      %v2029 = vpack.c.b16 %v1998, %v1997
      %v2030 = vpack.c.b16 %v2000, %v1999
      %v2031 = vpack.c.b16 %v2002, %v2001
      %v2032 = vpack.c.b16 %v2004, %v2003
      %v2033 = vpack.c.b16 %v2006, %v2005
      %v2034 = vpack.c.b16 %v2008, %v2007
      %v2035 = vpack.c.b16 %v2010, %v2009
      %v2036 = vpack.c.b16 %v2012, %v2011
      %v2037 = vpack.c.b16 %v2014, %v2013
      %v2038 = vpack.c.b16 %v2016, %v2015
      %v2039 = vpack.c.b16 %v2018, %v2017
      %v2040 = vpack.c.b16 %v2020, %v2019
      %v2041 = vpack.c.b16 %v2022, %v2021
      %v2042 = vpack.c.b16 %v2024, %v2023
      %v2043 = vpack.c.b16 %v2026, %v2025
      %v2044 = vpack.c.b16 %v2028, %v2027
      %v2046 = vsel %vm1470, %v2029, 0
      %v2049 = vsel %vm1470, %v2030, 0
      %v2052 = vsel %vm1470, %v2031, 0
      %v2055 = vsel %vm1470, %v2032, 0
      %v2058 = vsel %vm1470, %v2033, 0
      %v2061 = vsel %vm1470, %v2034, 0
      %v2064 = vsel %vm1470, %v2035, 0
      %v2067 = vsel %vm1470, %v2036, 0
      %v2070 = vsel %vm1470, %v2037, 0
      %v2073 = vsel %vm1470, %v2038, 0
      %v2076 = vsel %vm1470, %v2039, 0
      %v2079 = vsel %vm1470, %v2040, 0
      %v2082 = vsel %vm1470, %v2041, 0
      %v2085 = vsel %vm1470, %v2042, 0
      %v2088 = vsel %vm1470, %v2043, 0
      %v2091 = vsel %vm1470, %v2044, 0
      %v2094 = vsel %vm1519, %v1996, 0
      %2096 = vmatpush.bf16.msra.mxu0 0
      %2097 = vmatpush.bf16.msra.mxu0 0
      %2098 = vmatpush.bf16.msra.mxu0 0
      %2099 = vmatpush.bf16.msra.mxu0 0
      %2100 = vmatpush.bf16.msra.mxu0 0
      %2101 = vmatpush.bf16.msra.mxu0 0
      %2102 = vmatpush.bf16.msra.mxu0 0
      %2103 = vmatpush.bf16.msra.mxu0 %v2094
      %2104 = vmatmul.bf16.gmra.mxu0 %v2046
      %v2105 = vpop.f32.mrf.mxu0
      %v2106 = vadd.f32 0.0, %v2105
      %v2107 = vpop.f32.mrf.mxu0
      %v2108 = vadd.f32 0.0, %v2107
      %2109 = vmatmul.bf16.gmra.mxu0 %v2049
      %v2110 = vpop.f32.mrf.mxu0
      %v2111 = vadd.f32 0.0, %v2110
      %v2112 = vpop.f32.mrf.mxu0
      %v2113 = vadd.f32 0.0, %v2112
      %2114 = vmatmul.bf16.gmra.mxu0 %v2052
      %v2115 = vpop.f32.mrf.mxu0
      %v2116 = vadd.f32 0.0, %v2115
      %v2117 = vpop.f32.mrf.mxu0
      %v2118 = vadd.f32 0.0, %v2117
      %2119 = vmatmul.bf16.gmra.mxu0 %v2055
      %v2120 = vpop.f32.mrf.mxu0
      %v2121 = vadd.f32 0.0, %v2120
      %v2122 = vpop.f32.mrf.mxu0
      %v2123 = vadd.f32 0.0, %v2122
      %2124 = vmatmul.bf16.gmra.mxu0 %v2058
      %v2125 = vpop.f32.mrf.mxu0
      %v2126 = vadd.f32 0.0, %v2125
      %v2127 = vpop.f32.mrf.mxu0
      %v2128 = vadd.f32 0.0, %v2127
      %2129 = vmatmul.bf16.gmra.mxu0 %v2061
      %v2130 = vpop.f32.mrf.mxu0
      %v2131 = vadd.f32 0.0, %v2130
      %v2132 = vpop.f32.mrf.mxu0
      %v2133 = vadd.f32 0.0, %v2132
      %2134 = vmatmul.bf16.gmra.mxu0 %v2064
      %v2135 = vpop.f32.mrf.mxu0
      %v2136 = vadd.f32 0.0, %v2135
      %v2137 = vpop.f32.mrf.mxu0
      %v2138 = vadd.f32 0.0, %v2137
      %2139 = vmatmul.bf16.gmra.mxu0 %v2067
      %v2140 = vpop.f32.mrf.mxu0
      %v2141 = vadd.f32 0.0, %v2140
      %v2142 = vpop.f32.mrf.mxu0
      %v2143 = vadd.f32 0.0, %v2142
      %2144 = vmatmul.bf16.gmra.mxu0 %v2070
      %v2145 = vpop.f32.mrf.mxu0
      %v2146 = vadd.f32 0.0, %v2145
      %v2147 = vpop.f32.mrf.mxu0
      %v2148 = vadd.f32 0.0, %v2147
      %2149 = vmatmul.bf16.gmra.mxu0 %v2073
      %v2150 = vpop.f32.mrf.mxu0
      %v2151 = vadd.f32 0.0, %v2150
      %v2152 = vpop.f32.mrf.mxu0
      %v2153 = vadd.f32 0.0, %v2152
      %2154 = vmatmul.bf16.gmra.mxu0 %v2076
      %v2155 = vpop.f32.mrf.mxu0
      %v2156 = vadd.f32 0.0, %v2155
      %v2157 = vpop.f32.mrf.mxu0
      %v2158 = vadd.f32 0.0, %v2157
      %2159 = vmatmul.bf16.gmra.mxu0 %v2079
      %v2160 = vpop.f32.mrf.mxu0
      %v2161 = vadd.f32 0.0, %v2160
      %v2162 = vpop.f32.mrf.mxu0
      %v2163 = vadd.f32 0.0, %v2162
      %2164 = vmatmul.bf16.gmra.mxu0 %v2082
      %v2165 = vpop.f32.mrf.mxu0
      %v2166 = vadd.f32 0.0, %v2165
      %v2167 = vpop.f32.mrf.mxu0
      %v2168 = vadd.f32 0.0, %v2167
      %2169 = vmatmul.bf16.gmra.mxu0 %v2085
      %v2170 = vpop.f32.mrf.mxu0
      %v2171 = vadd.f32 0.0, %v2170
      %v2172 = vpop.f32.mrf.mxu0
      %v2173 = vadd.f32 0.0, %v2172
      %2174 = vmatmul.bf16.gmra.mxu0 %v2088
      %v2175 = vpop.f32.mrf.mxu0
      %v2176 = vadd.f32 0.0, %v2175
      %v2177 = vpop.f32.mrf.mxu0
      %v2178 = vadd.f32 0.0, %v2177
      %2179 = vmatmul.bf16.gmra.mxu0 %v2091
      %v2180 = vpop.f32.mrf.mxu0
      %v2181 = vadd.f32 0.0, %v2180
      %v2182 = vpop.f32.mrf.mxu0
      %v2183 = vadd.f32 0.0, %v2182
      %2184 = vdwg.mxu0
      %v2185 = vadd.f32 %v1753, %v2106
      %v2186 = vadd.f32 %v1755, %v2108
      %v2187 = vadd.f32 %v1758, %v2111
      %v2188 = vadd.f32 %v1760, %v2113
      %v2189 = vadd.f32 %v1763, %v2116
      %v2190 = vadd.f32 %v1765, %v2118
      %v2191 = vadd.f32 %v1768, %v2121
      %v2192 = vadd.f32 %v1770, %v2123
      %v2193 = vadd.f32 %v1773, %v2126
      %v2194 = vadd.f32 %v1775, %v2128
      %v2195 = vadd.f32 %v1778, %v2131
      %v2196 = vadd.f32 %v1780, %v2133
      %v2197 = vadd.f32 %v1783, %v2136
      %v2198 = vadd.f32 %v1785, %v2138
      %v2199 = vadd.f32 %v1788, %v2141
      %v2200 = vadd.f32 %v1790, %v2143
      %v2201 = vadd.f32 %v1793, %v2146
      %v2202 = vadd.f32 %v1795, %v2148
      %v2203 = vadd.f32 %v1798, %v2151
      %v2204 = vadd.f32 %v1800, %v2153
      %v2205 = vadd.f32 %v1803, %v2156
      %v2206 = vadd.f32 %v1805, %v2158
      %v2207 = vadd.f32 %v1808, %v2161
      %v2208 = vadd.f32 %v1810, %v2163
      %v2209 = vadd.f32 %v1813, %v2166
      %v2210 = vadd.f32 %v1815, %v2168
      %v2211 = vadd.f32 %v1818, %v2171
      %v2212 = vadd.f32 %v1820, %v2173
      %v2213 = vadd.f32 %v1823, %v2176
      %v2214 = vadd.f32 %v1825, %v2178
      %v2215 = vadd.f32 %v1828, %v2181
      %v2216 = vadd.f32 %v1830, %v2183
      %v2217 = vld [vmem:[%s446] sm:$0xf]
      %v2218 = vld [vmem:[%s446 + $0x4] sm:$0xf]
      %v2219 = vld [vmem:[%s446 + $0xc] sm:$0xf]
      %v2220 = vld [vmem:[%s446 + $0x10] sm:$0xf]
      %v2221 = vld [vmem:[%s446 + $0x18] sm:$0xf]
      %v2222 = vld [vmem:[%s446 + $0x1c] sm:$0xf]
      %v2223 = vld [vmem:[%s446 + $0x24] sm:$0xf]
      %v2224 = vld [vmem:[%s446 + $0x28] sm:$0xf]
      %v2225 = vld [vmem:[%s446 + $0x30] sm:$0xf]
      %v2226 = vld [vmem:[%s446 + $0x34] sm:$0xf]
      %v2227 = vld [vmem:[%s446 + $0x3c] sm:$0xf]
      %v2228 = vld [vmem:[%s446 + $0x40] sm:$0xf]
      %v2229 = vld [vmem:[%s446 + $0x48] sm:$0xf]
      %v2230 = vld [vmem:[%s446 + $0x4c] sm:$0xf]
      %v2231 = vld [vmem:[%s446 + $0x54] sm:$0xf]
      %v2232 = vld [vmem:[%s446 + $0x58] sm:$0xf]
      %v2233 = vld [vmem:[%s446 + $0x60] sm:$0xf]
      %v2234 = vld [vmem:[%s446 + $0x64] sm:$0xf]
      %v2235 = vld [vmem:[%s446 + $0x6c] sm:$0xf]
      %v2236 = vld [vmem:[%s446 + $0x70] sm:$0xf]
      %v2237 = vld [vmem:[%s446 + $0x78] sm:$0xf]
      %v2238 = vld [vmem:[%s446 + $0x7c] sm:$0xf]
      %v2239 = vld [vmem:[%s446 + $0x84] sm:$0xf]
      %v2240 = vld [vmem:[%s446 + $0x88] sm:$0xf]
      %v2241 = vld [vmem:[%s446 + $0x90] sm:$0xf]
      %v2242 = vld [vmem:[%s446 + $0x94] sm:$0xf]
      %v2243 = vld [vmem:[%s446 + $0x9c] sm:$0xf]
      %v2244 = vld [vmem:[%s446 + $0xa0] sm:$0xf]
      %v2245 = vld [vmem:[%s446 + $0xa8] sm:$0xf]
      %v2246 = vld [vmem:[%s446 + $0xac] sm:$0xf]
      %v2247 = vld [vmem:[%s446 + $0xb4] sm:$0xf]
      %v2248 = vld [vmem:[%s446 + $0xb8] sm:$0xf]
      %s2249 = scalar_lea.vmem %s3, 12
      %v2250 = vld [vmem:[%s2249] sm:$0xf]
      %v2283 = vunpack.c.l.b16 %v2217
      %v2284 = vunpack.c.l.b16 %v2218
      %v2285 = vunpack.c.l.b16 %v2219
      %v2286 = vunpack.c.l.b16 %v2220
      %v2287 = vunpack.c.l.b16 %v2221
      %v2288 = vunpack.c.l.b16 %v2222
      %v2289 = vunpack.c.l.b16 %v2223
      %v2290 = vunpack.c.l.b16 %v2224
      %v2291 = vunpack.c.l.b16 %v2225
      %v2292 = vunpack.c.l.b16 %v2226
      %v2293 = vunpack.c.l.b16 %v2227
      %v2294 = vunpack.c.l.b16 %v2228
      %v2295 = vunpack.c.l.b16 %v2229
      %v2296 = vunpack.c.l.b16 %v2230
      %v2297 = vunpack.c.l.b16 %v2231
      %v2298 = vunpack.c.l.b16 %v2232
      %v2299 = vunpack.c.l.b16 %v2233
      %v2300 = vunpack.c.l.b16 %v2234
      %v2301 = vunpack.c.l.b16 %v2235
      %v2302 = vunpack.c.l.b16 %v2236
      %v2303 = vunpack.c.l.b16 %v2237
      %v2304 = vunpack.c.l.b16 %v2238
      %v2305 = vunpack.c.l.b16 %v2239
      %v2306 = vunpack.c.l.b16 %v2240
      %v2307 = vunpack.c.l.b16 %v2241
      %v2308 = vunpack.c.l.b16 %v2242
      %v2309 = vunpack.c.l.b16 %v2243
      %v2310 = vunpack.c.l.b16 %v2244
      %v2311 = vunpack.c.l.b16 %v2245
      %v2312 = vunpack.c.l.b16 %v2246
      %v2313 = vunpack.c.l.b16 %v2247
      %v2314 = vunpack.c.l.b16 %v2248
      %v2315 = vpack.c.b16 %v2284, %v2283
      %v2316 = vpack.c.b16 %v2286, %v2285
      %v2317 = vpack.c.b16 %v2288, %v2287
      %v2318 = vpack.c.b16 %v2290, %v2289
      %v2319 = vpack.c.b16 %v2292, %v2291
      %v2320 = vpack.c.b16 %v2294, %v2293
      %v2321 = vpack.c.b16 %v2296, %v2295
      %v2322 = vpack.c.b16 %v2298, %v2297
      %v2323 = vpack.c.b16 %v2300, %v2299
      %v2324 = vpack.c.b16 %v2302, %v2301
      %v2325 = vpack.c.b16 %v2304, %v2303
      %v2326 = vpack.c.b16 %v2306, %v2305
      %v2327 = vpack.c.b16 %v2308, %v2307
      %v2328 = vpack.c.b16 %v2310, %v2309
      %v2329 = vpack.c.b16 %v2312, %v2311
      %v2330 = vpack.c.b16 %v2314, %v2313
      %v2332 = vsel %vm1470, %v2315, 0
      %v2335 = vsel %vm1470, %v2316, 0
      %v2338 = vsel %vm1470, %v2317, 0
      %v2341 = vsel %vm1470, %v2318, 0
      %v2344 = vsel %vm1470, %v2319, 0
      %v2347 = vsel %vm1470, %v2320, 0
      %v2350 = vsel %vm1470, %v2321, 0
      %v2353 = vsel %vm1470, %v2322, 0
      %v2356 = vsel %vm1470, %v2323, 0
      %v2359 = vsel %vm1470, %v2324, 0
      %v2362 = vsel %vm1470, %v2325, 0
      %v2365 = vsel %vm1470, %v2326, 0
      %v2368 = vsel %vm1470, %v2327, 0
      %v2371 = vsel %vm1470, %v2328, 0
      %v2374 = vsel %vm1470, %v2329, 0
      %v2377 = vsel %vm1470, %v2330, 0
      %v2380 = vsel %vm1519, %v2250, 0
      %2382 = vmatpush.bf16.msra.mxu0 0
      %2383 = vmatpush.bf16.msra.mxu0 0
      %2384 = vmatpush.bf16.msra.mxu0 0
      %2385 = vmatpush.bf16.msra.mxu0 0
      %2386 = vmatpush.bf16.msra.mxu0 0
      %2387 = vmatpush.bf16.msra.mxu0 0
      %2388 = vmatpush.bf16.msra.mxu0 0
      %2389 = vmatpush.bf16.msra.mxu0 %v2380
      %2390 = vmatmul.bf16.gmra.mxu0 %v2332
      %v2391 = vpop.f32.mrf.mxu0
      %v2392 = vadd.f32 0.0, %v2391
      %v2393 = vpop.f32.mrf.mxu0
      %v2394 = vadd.f32 0.0, %v2393
      %2395 = vmatmul.bf16.gmra.mxu0 %v2335
      %v2396 = vpop.f32.mrf.mxu0
      %v2397 = vadd.f32 0.0, %v2396
      %v2398 = vpop.f32.mrf.mxu0
      %v2399 = vadd.f32 0.0, %v2398
      %2400 = vmatmul.bf16.gmra.mxu0 %v2338
      %v2401 = vpop.f32.mrf.mxu0
      %v2402 = vadd.f32 0.0, %v2401
      %v2403 = vpop.f32.mrf.mxu0
      %v2404 = vadd.f32 0.0, %v2403
      %2405 = vmatmul.bf16.gmra.mxu0 %v2341
      %v2406 = vpop.f32.mrf.mxu0
      %v2407 = vadd.f32 0.0, %v2406
      %v2408 = vpop.f32.mrf.mxu0
      %v2409 = vadd.f32 0.0, %v2408
      %2410 = vmatmul.bf16.gmra.mxu0 %v2344
      %v2411 = vpop.f32.mrf.mxu0
      %v2412 = vadd.f32 0.0, %v2411
      %v2413 = vpop.f32.mrf.mxu0
      %v2414 = vadd.f32 0.0, %v2413
      %2415 = vmatmul.bf16.gmra.mxu0 %v2347
      %v2416 = vpop.f32.mrf.mxu0
      %v2417 = vadd.f32 0.0, %v2416
      %v2418 = vpop.f32.mrf.mxu0
      %v2419 = vadd.f32 0.0, %v2418
      %2420 = vmatmul.bf16.gmra.mxu0 %v2350
      %v2421 = vpop.f32.mrf.mxu0
      %v2422 = vadd.f32 0.0, %v2421
      %v2423 = vpop.f32.mrf.mxu0
      %v2424 = vadd.f32 0.0, %v2423
      %2425 = vmatmul.bf16.gmra.mxu0 %v2353
      %v2426 = vpop.f32.mrf.mxu0
      %v2427 = vadd.f32 0.0, %v2426
      %v2428 = vpop.f32.mrf.mxu0
      %v2429 = vadd.f32 0.0, %v2428
      %2430 = vmatmul.bf16.gmra.mxu0 %v2356
      %v2431 = vpop.f32.mrf.mxu0
      %v2432 = vadd.f32 0.0, %v2431
      %v2433 = vpop.f32.mrf.mxu0
      %v2434 = vadd.f32 0.0, %v2433
      %2435 = vmatmul.bf16.gmra.mxu0 %v2359
      %v2436 = vpop.f32.mrf.mxu0
      %v2437 = vadd.f32 0.0, %v2436
      %v2438 = vpop.f32.mrf.mxu0
      %v2439 = vadd.f32 0.0, %v2438
      %2440 = vmatmul.bf16.gmra.mxu0 %v2362
      %v2441 = vpop.f32.mrf.mxu0
      %v2442 = vadd.f32 0.0, %v2441
      %v2443 = vpop.f32.mrf.mxu0
      %v2444 = vadd.f32 0.0, %v2443
      %2445 = vmatmul.bf16.gmra.mxu0 %v2365
      %v2446 = vpop.f32.mrf.mxu0
      %v2447 = vadd.f32 0.0, %v2446
      %v2448 = vpop.f32.mrf.mxu0
      %v2449 = vadd.f32 0.0, %v2448
      %2450 = vmatmul.bf16.gmra.mxu0 %v2368
      %v2451 = vpop.f32.mrf.mxu0
      %v2452 = vadd.f32 0.0, %v2451
      %v2453 = vpop.f32.mrf.mxu0
      %v2454 = vadd.f32 0.0, %v2453
      %2455 = vmatmul.bf16.gmra.mxu0 %v2371
      %v2456 = vpop.f32.mrf.mxu0
      %v2457 = vadd.f32 0.0, %v2456
      %v2458 = vpop.f32.mrf.mxu0
      %v2459 = vadd.f32 0.0, %v2458
      %2460 = vmatmul.bf16.gmra.mxu0 %v2374
      %v2461 = vpop.f32.mrf.mxu0
      %v2462 = vadd.f32 0.0, %v2461
      %v2463 = vpop.f32.mrf.mxu0
      %v2464 = vadd.f32 0.0, %v2463
      %2465 = vmatmul.bf16.gmra.mxu0 %v2377
      %v2466 = vpop.f32.mrf.mxu0
      %v2467 = vadd.f32 0.0, %v2466
      %v2468 = vpop.f32.mrf.mxu0
      %v2469 = vadd.f32 0.0, %v2468
      %2470 = vdwg.mxu0
      %v2471 = vadd.f32 %v2185, %v2392
      %v2472 = vadd.f32 %v2186, %v2394
      %v2473 = vadd.f32 %v2187, %v2397
      %v2474 = vadd.f32 %v2188, %v2399
      %v2475 = vadd.f32 %v2189, %v2402
      %v2476 = vadd.f32 %v2190, %v2404
      %v2477 = vadd.f32 %v2191, %v2407
      %v2478 = vadd.f32 %v2192, %v2409
      %v2479 = vadd.f32 %v2193, %v2412
      %v2480 = vadd.f32 %v2194, %v2414
      %v2481 = vadd.f32 %v2195, %v2417
      %v2482 = vadd.f32 %v2196, %v2419
      %v2483 = vadd.f32 %v2197, %v2422
      %v2484 = vadd.f32 %v2198, %v2424
      %v2485 = vadd.f32 %v2199, %v2427
      %v2486 = vadd.f32 %v2200, %v2429
      %v2487 = vadd.f32 %v2201, %v2432
      %v2488 = vadd.f32 %v2202, %v2434
      %v2489 = vadd.f32 %v2203, %v2437
      %v2490 = vadd.f32 %v2204, %v2439
      %v2491 = vadd.f32 %v2205, %v2442
      %v2492 = vadd.f32 %v2206, %v2444
      %v2493 = vadd.f32 %v2207, %v2447
      %v2494 = vadd.f32 %v2208, %v2449
      %v2495 = vadd.f32 %v2209, %v2452
      %v2496 = vadd.f32 %v2210, %v2454
      %v2497 = vadd.f32 %v2211, %v2457
      %v2498 = vadd.f32 %v2212, %v2459
      %v2499 = vadd.f32 %v2213, %v2462
      %v2500 = vadd.f32 %v2214, %v2464
      %v2501 = vadd.f32 %v2215, %v2467
      %v2502 = vadd.f32 %v2216, %v2469
      %v2503 = vld [vmem:[%s446] sm:$0xf]
      %v2504 = vld [vmem:[%s446 + $0x4] sm:$0xf]
      %v2505 = vld [vmem:[%s446 + $0x8] sm:$0x1]
      %v2506 = vld [vmem:[%s446 + $0xc] sm:$0xf]
      %v2507 = vld [vmem:[%s446 + $0x10] sm:$0xf]
      %v2508 = vld [vmem:[%s446 + $0x14] sm:$0x1]
      %v2509 = vld [vmem:[%s446 + $0x18] sm:$0xf]
      %v2510 = vld [vmem:[%s446 + $0x1c] sm:$0xf]
      %v2511 = vld [vmem:[%s446 + $0x20] sm:$0x1]
      %v2512 = vld [vmem:[%s446 + $0x24] sm:$0xf]
      %v2513 = vld [vmem:[%s446 + $0x28] sm:$0xf]
      %v2514 = vld [vmem:[%s446 + $0x2c] sm:$0x1]
      %v2515 = vld [vmem:[%s446 + $0x30] sm:$0xf]
      %v2516 = vld [vmem:[%s446 + $0x34] sm:$0xf]
      %v2517 = vld [vmem:[%s446 + $0x38] sm:$0x1]
      %v2518 = vld [vmem:[%s446 + $0x3c] sm:$0xf]
      %v2519 = vld [vmem:[%s446 + $0x40] sm:$0xf]
      %v2520 = vld [vmem:[%s446 + $0x44] sm:$0x1]
      %v2521 = vld [vmem:[%s446 + $0x48] sm:$0xf]
      %v2522 = vld [vmem:[%s446 + $0x4c] sm:$0xf]
      %v2523 = vld [vmem:[%s446 + $0x50] sm:$0x1]
      %v2524 = vld [vmem:[%s446 + $0x54] sm:$0xf]
      %v2525 = vld [vmem:[%s446 + $0x58] sm:$0xf]
      %v2526 = vld [vmem:[%s446 + $0x5c] sm:$0x1]
      %v2527 = vld [vmem:[%s446 + $0x60] sm:$0xf]
      %v2528 = vld [vmem:[%s446 + $0x64] sm:$0xf]
      %v2529 = vld [vmem:[%s446 + $0x68] sm:$0x1]
      %v2530 = vld [vmem:[%s446 + $0x6c] sm:$0xf]
      %v2531 = vld [vmem:[%s446 + $0x70] sm:$0xf]
      %v2532 = vld [vmem:[%s446 + $0x74] sm:$0x1]
      %v2533 = vld [vmem:[%s446 + $0x78] sm:$0xf]
      %v2534 = vld [vmem:[%s446 + $0x7c] sm:$0xf]
      %v2535 = vld [vmem:[%s446 + $0x80] sm:$0x1]
      %v2536 = vld [vmem:[%s446 + $0x84] sm:$0xf]
      %v2537 = vld [vmem:[%s446 + $0x88] sm:$0xf]
      %v2538 = vld [vmem:[%s446 + $0x8c] sm:$0x1]
      %v2539 = vld [vmem:[%s446 + $0x90] sm:$0xf]
      %v2540 = vld [vmem:[%s446 + $0x94] sm:$0xf]
      %v2541 = vld [vmem:[%s446 + $0x98] sm:$0x1]
      %v2542 = vld [vmem:[%s446 + $0x9c] sm:$0xf]
      %v2543 = vld [vmem:[%s446 + $0xa0] sm:$0xf]
      %v2544 = vld [vmem:[%s446 + $0xa4] sm:$0x1]
      %v2545 = vld [vmem:[%s446 + $0xa8] sm:$0xf]
      %v2546 = vld [vmem:[%s446 + $0xac] sm:$0xf]
      %v2547 = vld [vmem:[%s446 + $0xb0] sm:$0x1]
      %v2548 = vld [vmem:[%s446 + $0xb4] sm:$0xf]
      %v2549 = vld [vmem:[%s446 + $0xb8] sm:$0xf]
      %v2550 = vld [vmem:[%s446 + $0xbc] sm:$0x1]
      %v2552 = vshrl.u32 %v2503, 16
      %v2554 = vrot.slane %v2552, 4
      %v2555 = vshll.u32 %v2503, 16
      %v2557 = vrot.slane %v2555, 5
      %v2558 = vor.u32 %v2554, %v2557
      %v2559 = vrot.slane %v2558, 4
      %v2561 = vshll.u32 %v2504, 16
      %v2563 = vrot.slane %v2561, 5
      %v2564 = vsel %vm1035, %v2559, %v2563
      %v2565 = vshrl.u32 %v2504, 16
      %v2567 = vrot.slane %v2565, 4
      %v2568 = vor.u32 %v2567, %v2563
      %v2569 = vrot.slane %v2568, 4
      %v2571 = vshll.u32 %v2505, 16
      %v2573 = vrot.slane %v2571, 5
      %v2574 = vsel %vm1035, %v2569, %v2573
      %v2576 = vshrl.u32 %v2506, 16
      %v2578 = vrot.slane %v2576, 4
      %v2579 = vshll.u32 %v2506, 16
      %v2581 = vrot.slane %v2579, 5
      %v2582 = vor.u32 %v2578, %v2581
      %v2583 = vrot.slane %v2582, 4
      %v2585 = vshll.u32 %v2507, 16
      %v2587 = vrot.slane %v2585, 5
      %v2588 = vsel %vm1035, %v2583, %v2587
      %v2589 = vshrl.u32 %v2507, 16
      %v2591 = vrot.slane %v2589, 4
      %v2592 = vor.u32 %v2591, %v2587
      %v2593 = vrot.slane %v2592, 4
      %v2595 = vshll.u32 %v2508, 16
      %v2597 = vrot.slane %v2595, 5
      %v2598 = vsel %vm1035, %v2593, %v2597
      %v2600 = vshrl.u32 %v2509, 16
      %v2602 = vrot.slane %v2600, 4
      %v2603 = vshll.u32 %v2509, 16
      %v2605 = vrot.slane %v2603, 5
      %v2606 = vor.u32 %v2602, %v2605
      %v2607 = vrot.slane %v2606, 4
      %v2609 = vshll.u32 %v2510, 16
      %v2611 = vrot.slane %v2609, 5
      %v2612 = vsel %vm1035, %v2607, %v2611
      %v2613 = vshrl.u32 %v2510, 16
      %v2615 = vrot.slane %v2613, 4
      %v2616 = vor.u32 %v2615, %v2611
      %v2617 = vrot.slane %v2616, 4
      %v2619 = vshll.u32 %v2511, 16
      %v2621 = vrot.slane %v2619, 5
      %v2622 = vsel %vm1035, %v2617, %v2621
      %v2624 = vshrl.u32 %v2512, 16
      %v2626 = vrot.slane %v2624, 4
      %v2627 = vshll.u32 %v2512, 16
      %v2629 = vrot.slane %v2627, 5
      %v2630 = vor.u32 %v2626, %v2629
      %v2631 = vrot.slane %v2630, 4
      %v2633 = vshll.u32 %v2513, 16
      %v2635 = vrot.slane %v2633, 5
      %v2636 = vsel %vm1035, %v2631, %v2635
      %v2637 = vshrl.u32 %v2513, 16
      %v2639 = vrot.slane %v2637, 4
      %v2640 = vor.u32 %v2639, %v2635
      %v2641 = vrot.slane %v2640, 4
      %v2643 = vshll.u32 %v2514, 16
      %v2645 = vrot.slane %v2643, 5
      %v2646 = vsel %vm1035, %v2641, %v2645
      %v2648 = vshrl.u32 %v2515, 16
      %v2650 = vrot.slane %v2648, 4
      %v2651 = vshll.u32 %v2515, 16
      %v2653 = vrot.slane %v2651, 5
      %v2654 = vor.u32 %v2650, %v2653
      %v2655 = vrot.slane %v2654, 4
      %v2657 = vshll.u32 %v2516, 16
      %v2659 = vrot.slane %v2657, 5
      %v2660 = vsel %vm1035, %v2655, %v2659
      %v2661 = vshrl.u32 %v2516, 16
      %v2663 = vrot.slane %v2661, 4
      %v2664 = vor.u32 %v2663, %v2659
      %v2665 = vrot.slane %v2664, 4
      %v2667 = vshll.u32 %v2517, 16
      %v2669 = vrot.slane %v2667, 5
      %v2670 = vsel %vm1035, %v2665, %v2669
      %v2672 = vshrl.u32 %v2518, 16
      %v2674 = vrot.slane %v2672, 4
      %v2675 = vshll.u32 %v2518, 16
      %v2677 = vrot.slane %v2675, 5
      %v2678 = vor.u32 %v2674, %v2677
      %v2679 = vrot.slane %v2678, 4
      %v2681 = vshll.u32 %v2519, 16
      %v2683 = vrot.slane %v2681, 5
      %v2684 = vsel %vm1035, %v2679, %v2683
      %v2685 = vshrl.u32 %v2519, 16
      %v2687 = vrot.slane %v2685, 4
      %v2688 = vor.u32 %v2687, %v2683
      %v2689 = vrot.slane %v2688, 4
      %v2691 = vshll.u32 %v2520, 16
      %v2693 = vrot.slane %v2691, 5
      %v2694 = vsel %vm1035, %v2689, %v2693
      %v2696 = vshrl.u32 %v2521, 16
      %v2698 = vrot.slane %v2696, 4
      %v2699 = vshll.u32 %v2521, 16
      %v2701 = vrot.slane %v2699, 5
      %v2702 = vor.u32 %v2698, %v2701
      %v2703 = vrot.slane %v2702, 4
      %v2705 = vshll.u32 %v2522, 16
      %v2707 = vrot.slane %v2705, 5
      %v2708 = vsel %vm1035, %v2703, %v2707
      %v2709 = vshrl.u32 %v2522, 16
      %v2711 = vrot.slane %v2709, 4
      %v2712 = vor.u32 %v2711, %v2707
      %v2713 = vrot.slane %v2712, 4
      %v2715 = vshll.u32 %v2523, 16
      %v2717 = vrot.slane %v2715, 5
      %v2718 = vsel %vm1035, %v2713, %v2717
      %v2720 = vshrl.u32 %v2524, 16
      %v2722 = vrot.slane %v2720, 4
      %v2723 = vshll.u32 %v2524, 16
      %v2725 = vrot.slane %v2723, 5
      %v2726 = vor.u32 %v2722, %v2725
      %v2727 = vrot.slane %v2726, 4
      %v2729 = vshll.u32 %v2525, 16
      %v2731 = vrot.slane %v2729, 5
      %v2732 = vsel %vm1035, %v2727, %v2731
      %v2733 = vshrl.u32 %v2525, 16
      %v2735 = vrot.slane %v2733, 4
      %v2736 = vor.u32 %v2735, %v2731
      %v2737 = vrot.slane %v2736, 4
      %v2739 = vshll.u32 %v2526, 16
      %v2741 = vrot.slane %v2739, 5
      %v2742 = vsel %vm1035, %v2737, %v2741
      %v2744 = vshrl.u32 %v2527, 16
      %v2746 = vrot.slane %v2744, 4
      %v2747 = vshll.u32 %v2527, 16
      %v2749 = vrot.slane %v2747, 5
      %v2750 = vor.u32 %v2746, %v2749
      %v2751 = vrot.slane %v2750, 4
      %v2753 = vshll.u32 %v2528, 16
      %v2755 = vrot.slane %v2753, 5
      %v2756 = vsel %vm1035, %v2751, %v2755
      %v2757 = vshrl.u32 %v2528, 16
      %v2759 = vrot.slane %v2757, 4
      %v2760 = vor.u32 %v2759, %v2755
      %v2761 = vrot.slane %v2760, 4
      %v2763 = vshll.u32 %v2529, 16
      %v2765 = vrot.slane %v2763, 5
      %v2766 = vsel %vm1035, %v2761, %v2765
      %v2768 = vshrl.u32 %v2530, 16
      %v2770 = vrot.slane %v2768, 4
      %v2771 = vshll.u32 %v2530, 16
      %v2773 = vrot.slane %v2771, 5
      %v2774 = vor.u32 %v2770, %v2773
      %v2775 = vrot.slane %v2774, 4
      %v2777 = vshll.u32 %v2531, 16
      %v2779 = vrot.slane %v2777, 5
      %v2780 = vsel %vm1035, %v2775, %v2779
      %v2781 = vshrl.u32 %v2531, 16
      %v2783 = vrot.slane %v2781, 4
      %v2784 = vor.u32 %v2783, %v2779
      %v2785 = vrot.slane %v2784, 4
      %v2787 = vshll.u32 %v2532, 16
      %v2789 = vrot.slane %v2787, 5
      %v2790 = vsel %vm1035, %v2785, %v2789
      %v2792 = vshrl.u32 %v2533, 16
      %v2794 = vrot.slane %v2792, 4
      %v2795 = vshll.u32 %v2533, 16
      %v2797 = vrot.slane %v2795, 5
      %v2798 = vor.u32 %v2794, %v2797
      %v2799 = vrot.slane %v2798, 4
      %v2801 = vshll.u32 %v2534, 16
      %v2803 = vrot.slane %v2801, 5
      %v2804 = vsel %vm1035, %v2799, %v2803
      %v2805 = vshrl.u32 %v2534, 16
      %v2807 = vrot.slane %v2805, 4
      %v2808 = vor.u32 %v2807, %v2803
      %v2809 = vrot.slane %v2808, 4
      %v2811 = vshll.u32 %v2535, 16
      %v2813 = vrot.slane %v2811, 5
      %v2814 = vsel %vm1035, %v2809, %v2813
      %v2816 = vshrl.u32 %v2536, 16
      %v2818 = vrot.slane %v2816, 4
      %v2819 = vshll.u32 %v2536, 16
      %v2821 = vrot.slane %v2819, 5
      %v2822 = vor.u32 %v2818, %v2821
      %v2823 = vrot.slane %v2822, 4
      %v2825 = vshll.u32 %v2537, 16
      %v2827 = vrot.slane %v2825, 5
      %v2828 = vsel %vm1035, %v2823, %v2827
      %v2829 = vshrl.u32 %v2537, 16
      %v2831 = vrot.slane %v2829, 4
      %v2832 = vor.u32 %v2831, %v2827
      %v2833 = vrot.slane %v2832, 4
      %v2835 = vshll.u32 %v2538, 16
      %v2837 = vrot.slane %v2835, 5
      %v2838 = vsel %vm1035, %v2833, %v2837
      %v2840 = vshrl.u32 %v2539, 16
      %v2842 = vrot.slane %v2840, 4
      %v2843 = vshll.u32 %v2539, 16
      %v2845 = vrot.slane %v2843, 5
      %v2846 = vor.u32 %v2842, %v2845
      %v2847 = vrot.slane %v2846, 4
      %v2849 = vshll.u32 %v2540, 16
      %v2851 = vrot.slane %v2849, 5
      %v2852 = vsel %vm1035, %v2847, %v2851
      %v2853 = vshrl.u32 %v2540, 16
      %v2855 = vrot.slane %v2853, 4
      %v2856 = vor.u32 %v2855, %v2851
      %v2857 = vrot.slane %v2856, 4
      %v2859 = vshll.u32 %v2541, 16
      %v2861 = vrot.slane %v2859, 5
      %v2862 = vsel %vm1035, %v2857, %v2861
      %v2864 = vshrl.u32 %v2542, 16
      %v2866 = vrot.slane %v2864, 4
      %v2867 = vshll.u32 %v2542, 16
      %v2869 = vrot.slane %v2867, 5
      %v2870 = vor.u32 %v2866, %v2869
      %v2871 = vrot.slane %v2870, 4
      %v2873 = vshll.u32 %v2543, 16
      %v2875 = vrot.slane %v2873, 5
      %v2876 = vsel %vm1035, %v2871, %v2875
      %v2877 = vshrl.u32 %v2543, 16
      %v2879 = vrot.slane %v2877, 4
      %v2880 = vor.u32 %v2879, %v2875
      %v2881 = vrot.slane %v2880, 4
      %v2883 = vshll.u32 %v2544, 16
      %v2885 = vrot.slane %v2883, 5
      %v2886 = vsel %vm1035, %v2881, %v2885
      %v2888 = vshrl.u32 %v2545, 16
      %v2890 = vrot.slane %v2888, 4
      %v2891 = vshll.u32 %v2545, 16
      %v2893 = vrot.slane %v2891, 5
      %v2894 = vor.u32 %v2890, %v2893
      %v2895 = vrot.slane %v2894, 4
      %v2897 = vshll.u32 %v2546, 16
      %v2899 = vrot.slane %v2897, 5
      %v2900 = vsel %vm1035, %v2895, %v2899
      %v2901 = vshrl.u32 %v2546, 16
      %v2903 = vrot.slane %v2901, 4
      %v2904 = vor.u32 %v2903, %v2899
      %v2905 = vrot.slane %v2904, 4
      %v2907 = vshll.u32 %v2547, 16
      %v2909 = vrot.slane %v2907, 5
      %v2910 = vsel %vm1035, %v2905, %v2909
      %v2912 = vshrl.u32 %v2548, 16
      %v2914 = vrot.slane %v2912, 4
      %v2915 = vshll.u32 %v2548, 16
      %v2917 = vrot.slane %v2915, 5
      %v2918 = vor.u32 %v2914, %v2917
      %v2919 = vrot.slane %v2918, 4
      %v2921 = vshll.u32 %v2549, 16
      %v2923 = vrot.slane %v2921, 5
      %v2924 = vsel %vm1035, %v2919, %v2923
      %v2925 = vshrl.u32 %v2549, 16
      %v2927 = vrot.slane %v2925, 4
      %v2928 = vor.u32 %v2927, %v2923
      %v2929 = vrot.slane %v2928, 4
      %v2931 = vshll.u32 %v2550, 16
      %v2933 = vrot.slane %v2931, 5
      %v2934 = vsel %vm1035, %v2929, %v2933
      %s2935 = scalar_lea.vmem %s3, 16
      %v2936 = vld [vmem:[%s2935] sm:$0xf]
      %v2937 = vunpack.c.l.b16 %v2564
      %v2938 = vunpack.c.l.b16 %v2574
      %v2939 = vunpack.c.l.b16 %v2588
      %v2940 = vunpack.c.l.b16 %v2598
      %v2941 = vunpack.c.l.b16 %v2612
      %v2942 = vunpack.c.l.b16 %v2622
      %v2943 = vunpack.c.l.b16 %v2636
      %v2944 = vunpack.c.l.b16 %v2646
      %v2945 = vunpack.c.l.b16 %v2660
      %v2946 = vunpack.c.l.b16 %v2670
      %v2947 = vunpack.c.l.b16 %v2684
      %v2948 = vunpack.c.l.b16 %v2694
      %v2949 = vunpack.c.l.b16 %v2708
      %v2950 = vunpack.c.l.b16 %v2718
      %v2951 = vunpack.c.l.b16 %v2732
      %v2952 = vunpack.c.l.b16 %v2742
      %v2953 = vunpack.c.l.b16 %v2756
      %v2954 = vunpack.c.l.b16 %v2766
      %v2955 = vunpack.c.l.b16 %v2780
      %v2956 = vunpack.c.l.b16 %v2790
      %v2957 = vunpack.c.l.b16 %v2804
      %v2958 = vunpack.c.l.b16 %v2814
      %v2959 = vunpack.c.l.b16 %v2828
      %v2960 = vunpack.c.l.b16 %v2838
      %v2961 = vunpack.c.l.b16 %v2852
      %v2962 = vunpack.c.l.b16 %v2862
      %v2963 = vunpack.c.l.b16 %v2876
      %v2964 = vunpack.c.l.b16 %v2886
      %v2965 = vunpack.c.l.b16 %v2900
      %v2966 = vunpack.c.l.b16 %v2910
      %v2967 = vunpack.c.l.b16 %v2924
      %v2968 = vunpack.c.l.b16 %v2934
      %v2969 = vpack.c.b16 %v2938, %v2937
      %v2970 = vpack.c.b16 %v2940, %v2939
      %v2971 = vpack.c.b16 %v2942, %v2941
      %v2972 = vpack.c.b16 %v2944, %v2943
      %v2973 = vpack.c.b16 %v2946, %v2945
      %v2974 = vpack.c.b16 %v2948, %v2947
      %v2975 = vpack.c.b16 %v2950, %v2949
      %v2976 = vpack.c.b16 %v2952, %v2951
      %v2977 = vpack.c.b16 %v2954, %v2953
      %v2978 = vpack.c.b16 %v2956, %v2955
      %v2979 = vpack.c.b16 %v2958, %v2957
      %v2980 = vpack.c.b16 %v2960, %v2959
      %v2981 = vpack.c.b16 %v2962, %v2961
      %v2982 = vpack.c.b16 %v2964, %v2963
      %v2983 = vpack.c.b16 %v2966, %v2965
      %v2984 = vpack.c.b16 %v2968, %v2967
      %v2986 = vsel %vm1470, %v2969, 0
      %v2989 = vsel %vm1470, %v2970, 0
      %v2992 = vsel %vm1470, %v2971, 0
      %v2995 = vsel %vm1470, %v2972, 0
      %v2998 = vsel %vm1470, %v2973, 0
      %v3001 = vsel %vm1470, %v2974, 0
      %v3004 = vsel %vm1470, %v2975, 0
      %v3007 = vsel %vm1470, %v2976, 0
      %v3010 = vsel %vm1470, %v2977, 0
      %v3013 = vsel %vm1470, %v2978, 0
      %v3016 = vsel %vm1470, %v2979, 0
      %v3019 = vsel %vm1470, %v2980, 0
      %v3022 = vsel %vm1470, %v2981, 0
      %v3025 = vsel %vm1470, %v2982, 0
      %v3028 = vsel %vm1470, %v2983, 0
      %v3031 = vsel %vm1470, %v2984, 0
      %v3034 = vsel %vm1519, %v2936, 0
      %3036 = vmatpush.bf16.msra.mxu0 0
      %3037 = vmatpush.bf16.msra.mxu0 0
      %3038 = vmatpush.bf16.msra.mxu0 0
      %3039 = vmatpush.bf16.msra.mxu0 0
      %3040 = vmatpush.bf16.msra.mxu0 0
      %3041 = vmatpush.bf16.msra.mxu0 0
      %3042 = vmatpush.bf16.msra.mxu0 0
      %3043 = vmatpush.bf16.msra.mxu0 %v3034
      %3044 = vmatmul.bf16.gmra.mxu0 %v2986
      %v3045 = vpop.f32.mrf.mxu0
      %v3046 = vadd.f32 0.0, %v3045
      %v3047 = vpop.f32.mrf.mxu0
      %v3048 = vadd.f32 0.0, %v3047
      %3049 = vmatmul.bf16.gmra.mxu0 %v2989
      %v3050 = vpop.f32.mrf.mxu0
      %v3051 = vadd.f32 0.0, %v3050
      %v3052 = vpop.f32.mrf.mxu0
      %v3053 = vadd.f32 0.0, %v3052
      %3054 = vmatmul.bf16.gmra.mxu0 %v2992
      %v3055 = vpop.f32.mrf.mxu0
      %v3056 = vadd.f32 0.0, %v3055
      %v3057 = vpop.f32.mrf.mxu0
      %v3058 = vadd.f32 0.0, %v3057
      %3059 = vmatmul.bf16.gmra.mxu0 %v2995
      %v3060 = vpop.f32.mrf.mxu0
      %v3061 = vadd.f32 0.0, %v3060
      %v3062 = vpop.f32.mrf.mxu0
      %v3063 = vadd.f32 0.0, %v3062
      %3064 = vmatmul.bf16.gmra.mxu0 %v2998
      %v3065 = vpop.f32.mrf.mxu0
      %v3066 = vadd.f32 0.0, %v3065
      %v3067 = vpop.f32.mrf.mxu0
      %v3068 = vadd.f32 0.0, %v3067
      %3069 = vmatmul.bf16.gmra.mxu0 %v3001
      %v3070 = vpop.f32.mrf.mxu0
      %v3071 = vadd.f32 0.0, %v3070
      %v3072 = vpop.f32.mrf.mxu0
      %v3073 = vadd.f32 0.0, %v3072
      %3074 = vmatmul.bf16.gmra.mxu0 %v3004
      %v3075 = vpop.f32.mrf.mxu0
      %v3076 = vadd.f32 0.0, %v3075
      %v3077 = vpop.f32.mrf.mxu0
      %v3078 = vadd.f32 0.0, %v3077
      %3079 = vmatmul.bf16.gmra.mxu0 %v3007
      %v3080 = vpop.f32.mrf.mxu0
      %v3081 = vadd.f32 0.0, %v3080
      %v3082 = vpop.f32.mrf.mxu0
      %v3083 = vadd.f32 0.0, %v3082
      %3084 = vmatmul.bf16.gmra.mxu0 %v3010
      %v3085 = vpop.f32.mrf.mxu0
      %v3086 = vadd.f32 0.0, %v3085
      %v3087 = vpop.f32.mrf.mxu0
      %v3088 = vadd.f32 0.0, %v3087
      %3089 = vmatmul.bf16.gmra.mxu0 %v3013
      %v3090 = vpop.f32.mrf.mxu0
      %v3091 = vadd.f32 0.0, %v3090
      %v3092 = vpop.f32.mrf.mxu0
      %v3093 = vadd.f32 0.0, %v3092
      %3094 = vmatmul.bf16.gmra.mxu0 %v3016
      %v3095 = vpop.f32.mrf.mxu0
      %v3096 = vadd.f32 0.0, %v3095
      %v3097 = vpop.f32.mrf.mxu0
      %v3098 = vadd.f32 0.0, %v3097
      %3099 = vmatmul.bf16.gmra.mxu0 %v3019
      %v3100 = vpop.f32.mrf.mxu0
      %v3101 = vadd.f32 0.0, %v3100
      %v3102 = vpop.f32.mrf.mxu0
      %v3103 = vadd.f32 0.0, %v3102
      %3104 = vmatmul.bf16.gmra.mxu0 %v3022
      %v3105 = vpop.f32.mrf.mxu0
      %v3106 = vadd.f32 0.0, %v3105
      %v3107 = vpop.f32.mrf.mxu0
      %v3108 = vadd.f32 0.0, %v3107
      %3109 = vmatmul.bf16.gmra.mxu0 %v3025
      %v3110 = vpop.f32.mrf.mxu0
      %v3111 = vadd.f32 0.0, %v3110
      %v3112 = vpop.f32.mrf.mxu0
      %v3113 = vadd.f32 0.0, %v3112
      %3114 = vmatmul.bf16.gmra.mxu0 %v3028
      %v3115 = vpop.f32.mrf.mxu0
      %v3116 = vadd.f32 0.0, %v3115
      %v3117 = vpop.f32.mrf.mxu0
      %v3118 = vadd.f32 0.0, %v3117
      %3119 = vmatmul.bf16.gmra.mxu0 %v3031
      %v3120 = vpop.f32.mrf.mxu0
      %v3121 = vadd.f32 0.0, %v3120
      %v3122 = vpop.f32.mrf.mxu0
      %v3123 = vadd.f32 0.0, %v3122
      %3124 = vdwg.mxu0
      %v3125 = vadd.f32 %v2471, %v3046
      %v3126 = vadd.f32 %v2472, %v3048
      %v3127 = vadd.f32 %v2473, %v3051
      %v3128 = vadd.f32 %v2474, %v3053
      %v3129 = vadd.f32 %v2475, %v3056
      %v3130 = vadd.f32 %v2476, %v3058
      %v3131 = vadd.f32 %v2477, %v3061
      %v3132 = vadd.f32 %v2478, %v3063
      %v3133 = vadd.f32 %v2479, %v3066
      %v3134 = vadd.f32 %v2480, %v3068
      %v3135 = vadd.f32 %v2481, %v3071
      %v3136 = vadd.f32 %v2482, %v3073
      %v3137 = vadd.f32 %v2483, %v3076
      %v3138 = vadd.f32 %v2484, %v3078
      %v3139 = vadd.f32 %v2485, %v3081
      %v3140 = vadd.f32 %v2486, %v3083
      %v3141 = vadd.f32 %v2487, %v3086
      %v3142 = vadd.f32 %v2488, %v3088
      %v3143 = vadd.f32 %v2489, %v3091
      %v3144 = vadd.f32 %v2490, %v3093
      %v3145 = vadd.f32 %v2491, %v3096
      %v3146 = vadd.f32 %v2492, %v3098
      %v3147 = vadd.f32 %v2493, %v3101
      %v3148 = vadd.f32 %v2494, %v3103
      %v3149 = vadd.f32 %v2495, %v3106
      %v3150 = vadd.f32 %v2496, %v3108
      %v3151 = vadd.f32 %v2497, %v3111
      %v3152 = vadd.f32 %v2498, %v3113
      %v3153 = vadd.f32 %v2499, %v3116
      %v3154 = vadd.f32 %v2500, %v3118
      %v3155 = vadd.f32 %v2501, %v3121
      %v3156 = vadd.f32 %v2502, %v3123
      %v3157 = vld [vmem:[%s446] sm:$0xe]
      %v3158 = vld [vmem:[%s446 + $0xc] sm:$0xe]
      %v3159 = vld [vmem:[%s446 + $0x18] sm:$0xe]
      %v3160 = vld [vmem:[%s446 + $0x24] sm:$0xe]
      %v3161 = vld [vmem:[%s446 + $0x30] sm:$0xe]
      %v3162 = vld [vmem:[%s446 + $0x3c] sm:$0xe]
      %v3163 = vld [vmem:[%s446 + $0x48] sm:$0xe]
      %v3164 = vld [vmem:[%s446 + $0x54] sm:$0xe]
      %v3165 = vld [vmem:[%s446 + $0x60] sm:$0xe]
      %v3166 = vld [vmem:[%s446 + $0x6c] sm:$0xe]
      %v3167 = vld [vmem:[%s446 + $0x78] sm:$0xe]
      %v3168 = vld [vmem:[%s446 + $0x84] sm:$0xe]
      %v3169 = vld [vmem:[%s446 + $0x90] sm:$0xe]
      %v3170 = vld [vmem:[%s446 + $0x9c] sm:$0xe]
      %v3171 = vld [vmem:[%s446 + $0xa8] sm:$0xe]
      %v3172 = vld [vmem:[%s446 + $0xb4] sm:$0xe]
      %v3221 = vrot.slane %v3157, 5
      %v3222 = vrot.slane %v3221, 4
      %v3223 = vrot.slane %v2504, 5
      %v3224 = vsel %vm1882, %v3222, %v3223
      %v3225 = vrot.slane %v3223, 4
      %v3226 = vrot.slane %v2505, 5
      %v3227 = vsel %vm1882, %v3225, %v3226
      %v3228 = vrot.slane %v3158, 5
      %v3229 = vrot.slane %v3228, 4
      %v3230 = vrot.slane %v2507, 5
      %v3231 = vsel %vm1882, %v3229, %v3230
      %v3232 = vrot.slane %v3230, 4
      %v3233 = vrot.slane %v2508, 5
      %v3234 = vsel %vm1882, %v3232, %v3233
      %v3235 = vrot.slane %v3159, 5
      %v3236 = vrot.slane %v3235, 4
      %v3237 = vrot.slane %v2510, 5
      %v3238 = vsel %vm1882, %v3236, %v3237
      %v3239 = vrot.slane %v3237, 4
      %v3240 = vrot.slane %v2511, 5
      %v3241 = vsel %vm1882, %v3239, %v3240
      %v3242 = vrot.slane %v3160, 5
      %v3243 = vrot.slane %v3242, 4
      %v3244 = vrot.slane %v2513, 5
      %v3245 = vsel %vm1882, %v3243, %v3244
      %v3246 = vrot.slane %v3244, 4
      %v3247 = vrot.slane %v2514, 5
      %v3248 = vsel %vm1882, %v3246, %v3247
      %v3249 = vrot.slane %v3161, 5
      %v3250 = vrot.slane %v3249, 4
      %v3251 = vrot.slane %v2516, 5
      %v3252 = vsel %vm1882, %v3250, %v3251
      %v3253 = vrot.slane %v3251, 4
      %v3254 = vrot.slane %v2517, 5
      %v3255 = vsel %vm1882, %v3253, %v3254
      %v3256 = vrot.slane %v3162, 5
      %v3257 = vrot.slane %v3256, 4
      %v3258 = vrot.slane %v2519, 5
      %v3259 = vsel %vm1882, %v3257, %v3258
      %v3260 = vrot.slane %v3258, 4
      %v3261 = vrot.slane %v2520, 5
      %v3262 = vsel %vm1882, %v3260, %v3261
      %v3263 = vrot.slane %v3163, 5
      %v3264 = vrot.slane %v3263, 4
      %v3265 = vrot.slane %v2522, 5
      %v3266 = vsel %vm1882, %v3264, %v3265
      %v3267 = vrot.slane %v3265, 4
      %v3268 = vrot.slane %v2523, 5
      %v3269 = vsel %vm1882, %v3267, %v3268
      %v3270 = vrot.slane %v3164, 5
      %v3271 = vrot.slane %v3270, 4
      %v3272 = vrot.slane %v2525, 5
      %v3273 = vsel %vm1882, %v3271, %v3272
      %v3274 = vrot.slane %v3272, 4
      %v3275 = vrot.slane %v2526, 5
      %v3276 = vsel %vm1882, %v3274, %v3275
      %v3277 = vrot.slane %v3165, 5
      %v3278 = vrot.slane %v3277, 4
      %v3279 = vrot.slane %v2528, 5
      %v3280 = vsel %vm1882, %v3278, %v3279
      %v3281 = vrot.slane %v3279, 4
      %v3282 = vrot.slane %v2529, 5
      %v3283 = vsel %vm1882, %v3281, %v3282
      %v3284 = vrot.slane %v3166, 5
      %v3285 = vrot.slane %v3284, 4
      %v3286 = vrot.slane %v2531, 5
      %v3287 = vsel %vm1882, %v3285, %v3286
      %v3288 = vrot.slane %v3286, 4
      %v3289 = vrot.slane %v2532, 5
      %v3290 = vsel %vm1882, %v3288, %v3289
      %v3291 = vrot.slane %v3167, 5
      %v3292 = vrot.slane %v3291, 4
      %v3293 = vrot.slane %v2534, 5
      %v3294 = vsel %vm1882, %v3292, %v3293
      %v3295 = vrot.slane %v3293, 4
      %v3296 = vrot.slane %v2535, 5
      %v3297 = vsel %vm1882, %v3295, %v3296
      %v3298 = vrot.slane %v3168, 5
      %v3299 = vrot.slane %v3298, 4
      %v3300 = vrot.slane %v2537, 5
      %v3301 = vsel %vm1882, %v3299, %v3300
      %v3302 = vrot.slane %v3300, 4
      %v3303 = vrot.slane %v2538, 5
      %v3304 = vsel %vm1882, %v3302, %v3303
      %v3305 = vrot.slane %v3169, 5
      %v3306 = vrot.slane %v3305, 4
      %v3307 = vrot.slane %v2540, 5
      %v3308 = vsel %vm1882, %v3306, %v3307
      %v3309 = vrot.slane %v3307, 4
      %v3310 = vrot.slane %v2541, 5
      %v3311 = vsel %vm1882, %v3309, %v3310
      %v3312 = vrot.slane %v3170, 5
      %v3313 = vrot.slane %v3312, 4
      %v3314 = vrot.slane %v2543, 5
      %v3315 = vsel %vm1882, %v3313, %v3314
      %v3316 = vrot.slane %v3314, 4
      %v3317 = vrot.slane %v2544, 5
      %v3318 = vsel %vm1882, %v3316, %v3317
      %v3319 = vrot.slane %v3171, 5
      %v3320 = vrot.slane %v3319, 4
      %v3321 = vrot.slane %v2546, 5
      %v3322 = vsel %vm1882, %v3320, %v3321
      %v3323 = vrot.slane %v3321, 4
      %v3324 = vrot.slane %v2547, 5
      %v3325 = vsel %vm1882, %v3323, %v3324
      %v3326 = vrot.slane %v3172, 5
      %v3327 = vrot.slane %v3326, 4
      %v3328 = vrot.slane %v2549, 5
      %v3329 = vsel %vm1882, %v3327, %v3328
      %v3330 = vrot.slane %v3328, 4
      %v3331 = vrot.slane %v2550, 5
      %v3332 = vsel %vm1882, %v3330, %v3331
      %s3333 = scalar_lea.vmem %s3, 20
      %v3334 = vld [vmem:[%s3333] sm:$0xf]
      %v3335 = vunpack.c.l.b16 %v3224
      %v3336 = vunpack.c.l.b16 %v3227
      %v3337 = vunpack.c.l.b16 %v3231
      %v3338 = vunpack.c.l.b16 %v3234
      %v3339 = vunpack.c.l.b16 %v3238
      %v3340 = vunpack.c.l.b16 %v3241
      %v3341 = vunpack.c.l.b16 %v3245
      %v3342 = vunpack.c.l.b16 %v3248
      %v3343 = vunpack.c.l.b16 %v3252
      %v3344 = vunpack.c.l.b16 %v3255
      %v3345 = vunpack.c.l.b16 %v3259
      %v3346 = vunpack.c.l.b16 %v3262
      %v3347 = vunpack.c.l.b16 %v3266
      %v3348 = vunpack.c.l.b16 %v3269
      %v3349 = vunpack.c.l.b16 %v3273
      %v3350 = vunpack.c.l.b16 %v3276
      %v3351 = vunpack.c.l.b16 %v3280
      %v3352 = vunpack.c.l.b16 %v3283
      %v3353 = vunpack.c.l.b16 %v3287
      %v3354 = vunpack.c.l.b16 %v3290
      %v3355 = vunpack.c.l.b16 %v3294
      %v3356 = vunpack.c.l.b16 %v3297
      %v3357 = vunpack.c.l.b16 %v3301
      %v3358 = vunpack.c.l.b16 %v3304
      %v3359 = vunpack.c.l.b16 %v3308
      %v3360 = vunpack.c.l.b16 %v3311
      %v3361 = vunpack.c.l.b16 %v3315
      %v3362 = vunpack.c.l.b16 %v3318
      %v3363 = vunpack.c.l.b16 %v3322
      %v3364 = vunpack.c.l.b16 %v3325
      %v3365 = vunpack.c.l.b16 %v3329
      %v3366 = vunpack.c.l.b16 %v3332
      %v3367 = vpack.c.b16 %v3336, %v3335
      %v3368 = vpack.c.b16 %v3338, %v3337
      %v3369 = vpack.c.b16 %v3340, %v3339
      %v3370 = vpack.c.b16 %v3342, %v3341
      %v3371 = vpack.c.b16 %v3344, %v3343
      %v3372 = vpack.c.b16 %v3346, %v3345
      %v3373 = vpack.c.b16 %v3348, %v3347
      %v3374 = vpack.c.b16 %v3350, %v3349
      %v3375 = vpack.c.b16 %v3352, %v3351
      %v3376 = vpack.c.b16 %v3354, %v3353
      %v3377 = vpack.c.b16 %v3356, %v3355
      %v3378 = vpack.c.b16 %v3358, %v3357
      %v3379 = vpack.c.b16 %v3360, %v3359
      %v3380 = vpack.c.b16 %v3362, %v3361
      %v3381 = vpack.c.b16 %v3364, %v3363
      %v3382 = vpack.c.b16 %v3366, %v3365
      %v3384 = vsel %vm1470, %v3367, 0
      %v3387 = vsel %vm1470, %v3368, 0
      %v3390 = vsel %vm1470, %v3369, 0
      %v3393 = vsel %vm1470, %v3370, 0
      %v3396 = vsel %vm1470, %v3371, 0
      %v3399 = vsel %vm1470, %v3372, 0
      %v3402 = vsel %vm1470, %v3373, 0
      %v3405 = vsel %vm1470, %v3374, 0
      %v3408 = vsel %vm1470, %v3375, 0
      %v3411 = vsel %vm1470, %v3376, 0
      %v3414 = vsel %vm1470, %v3377, 0
      %v3417 = vsel %vm1470, %v3378, 0
      %v3420 = vsel %vm1470, %v3379, 0
      %v3423 = vsel %vm1470, %v3380, 0
      %v3426 = vsel %vm1470, %v3381, 0
      %v3429 = vsel %vm1470, %v3382, 0
      %v3432 = vsel %vm1519, %v3334, 0
      %3434 = vmatpush.bf16.msra.mxu0 0
      %3435 = vmatpush.bf16.msra.mxu0 0
      %3436 = vmatpush.bf16.msra.mxu0 0
      %3437 = vmatpush.bf16.msra.mxu0 0
      %3438 = vmatpush.bf16.msra.mxu0 0
      %3439 = vmatpush.bf16.msra.mxu0 0
      %3440 = vmatpush.bf16.msra.mxu0 0
      %3441 = vmatpush.bf16.msra.mxu0 %v3432
      %3442 = vmatmul.bf16.gmra.mxu0 %v3384
      %v3443 = vpop.f32.mrf.mxu0
      %v3444 = vadd.f32 0.0, %v3443
      %v3445 = vpop.f32.mrf.mxu0
      %v3446 = vadd.f32 0.0, %v3445
      %3447 = vmatmul.bf16.gmra.mxu0 %v3387
      %v3448 = vpop.f32.mrf.mxu0
      %v3449 = vadd.f32 0.0, %v3448
      %v3450 = vpop.f32.mrf.mxu0
      %v3451 = vadd.f32 0.0, %v3450
      %3452 = vmatmul.bf16.gmra.mxu0 %v3390
      %v3453 = vpop.f32.mrf.mxu0
      %v3454 = vadd.f32 0.0, %v3453
      %v3455 = vpop.f32.mrf.mxu0
      %v3456 = vadd.f32 0.0, %v3455
      %3457 = vmatmul.bf16.gmra.mxu0 %v3393
      %v3458 = vpop.f32.mrf.mxu0
      %v3459 = vadd.f32 0.0, %v3458
      %v3460 = vpop.f32.mrf.mxu0
      %v3461 = vadd.f32 0.0, %v3460
      %3462 = vmatmul.bf16.gmra.mxu0 %v3396
      %v3463 = vpop.f32.mrf.mxu0
      %v3464 = vadd.f32 0.0, %v3463
      %v3465 = vpop.f32.mrf.mxu0
      %v3466 = vadd.f32 0.0, %v3465
      %3467 = vmatmul.bf16.gmra.mxu0 %v3399
      %v3468 = vpop.f32.mrf.mxu0
      %v3469 = vadd.f32 0.0, %v3468
      %v3470 = vpop.f32.mrf.mxu0
      %v3471 = vadd.f32 0.0, %v3470
      %3472 = vmatmul.bf16.gmra.mxu0 %v3402
      %v3473 = vpop.f32.mrf.mxu0
      %v3474 = vadd.f32 0.0, %v3473
      %v3475 = vpop.f32.mrf.mxu0
      %v3476 = vadd.f32 0.0, %v3475
      %3477 = vmatmul.bf16.gmra.mxu0 %v3405
      %v3478 = vpop.f32.mrf.mxu0
      %v3479 = vadd.f32 0.0, %v3478
      %v3480 = vpop.f32.mrf.mxu0
      %v3481 = vadd.f32 0.0, %v3480
      %3482 = vmatmul.bf16.gmra.mxu0 %v3408
      %v3483 = vpop.f32.mrf.mxu0
      %v3484 = vadd.f32 0.0, %v3483
      %v3485 = vpop.f32.mrf.mxu0
      %v3486 = vadd.f32 0.0, %v3485
      %3487 = vmatmul.bf16.gmra.mxu0 %v3411
      %v3488 = vpop.f32.mrf.mxu0
      %v3489 = vadd.f32 0.0, %v3488
      %v3490 = vpop.f32.mrf.mxu0
      %v3491 = vadd.f32 0.0, %v3490
      %3492 = vmatmul.bf16.gmra.mxu0 %v3414
      %v3493 = vpop.f32.mrf.mxu0
      %v3494 = vadd.f32 0.0, %v3493
      %v3495 = vpop.f32.mrf.mxu0
      %v3496 = vadd.f32 0.0, %v3495
      %3497 = vmatmul.bf16.gmra.mxu0 %v3417
      %v3498 = vpop.f32.mrf.mxu0
      %v3499 = vadd.f32 0.0, %v3498
      %v3500 = vpop.f32.mrf.mxu0
      %v3501 = vadd.f32 0.0, %v3500
      %3502 = vmatmul.bf16.gmra.mxu0 %v3420
      %v3503 = vpop.f32.mrf.mxu0
      %v3504 = vadd.f32 0.0, %v3503
      %v3505 = vpop.f32.mrf.mxu0
      %v3506 = vadd.f32 0.0, %v3505
      %3507 = vmatmul.bf16.gmra.mxu0 %v3423
      %v3508 = vpop.f32.mrf.mxu0
      %v3509 = vadd.f32 0.0, %v3508
      %v3510 = vpop.f32.mrf.mxu0
      %v3511 = vadd.f32 0.0, %v3510
      %3512 = vmatmul.bf16.gmra.mxu0 %v3426
      %v3513 = vpop.f32.mrf.mxu0
      %v3514 = vadd.f32 0.0, %v3513
      %v3515 = vpop.f32.mrf.mxu0
      %v3516 = vadd.f32 0.0, %v3515
      %3517 = vmatmul.bf16.gmra.mxu0 %v3429
      %v3518 = vpop.f32.mrf.mxu0
      %v3519 = vadd.f32 0.0, %v3518
      %v3520 = vpop.f32.mrf.mxu0
      %v3521 = vadd.f32 0.0, %v3520
      %3522 = vdwg.mxu0
      %v3523 = vadd.f32 %v3125, %v3444
      %v3524 = vadd.f32 %v3126, %v3446
      %v3525 = vadd.f32 %v3127, %v3449
      %v3526 = vadd.f32 %v3128, %v3451
      %v3527 = vadd.f32 %v3129, %v3454
      %v3528 = vadd.f32 %v3130, %v3456
      %v3529 = vadd.f32 %v3131, %v3459
      %v3530 = vadd.f32 %v3132, %v3461
      %v3531 = vadd.f32 %v3133, %v3464
      %v3532 = vadd.f32 %v3134, %v3466
      %v3533 = vadd.f32 %v3135, %v3469
      %v3534 = vadd.f32 %v3136, %v3471
      %v3535 = vadd.f32 %v3137, %v3474
      %v3536 = vadd.f32 %v3138, %v3476
      %v3537 = vadd.f32 %v3139, %v3479
      %v3538 = vadd.f32 %v3140, %v3481
      %v3539 = vadd.f32 %v3141, %v3484
      %v3540 = vadd.f32 %v3142, %v3486
      %v3541 = vadd.f32 %v3143, %v3489
      %v3542 = vadd.f32 %v3144, %v3491
      %v3543 = vadd.f32 %v3145, %v3494
      %v3544 = vadd.f32 %v3146, %v3496
      %v3545 = vadd.f32 %v3147, %v3499
      %v3546 = vadd.f32 %v3148, %v3501
      %v3547 = vadd.f32 %v3149, %v3504
      %v3548 = vadd.f32 %v3150, %v3506
      %v3549 = vadd.f32 %v3151, %v3509
      %v3550 = vadd.f32 %v3152, %v3511
      %v3551 = vadd.f32 %v3153, %v3514
      %v3552 = vadd.f32 %v3154, %v3516
      %v3553 = vadd.f32 %v3155, %v3519
      %v3554 = vadd.f32 %v3156, %v3521
      %s3555 = scalar_lea.vmem [#allocation2], 24
      %v3556 = vld [vmem:[%s3555] sm:$0xf]
      %v3557 = vld [vmem:[%s3555 + $0x4] sm:$0xf]
      %v3558 = vld [vmem:[%s3555 + $0xc] sm:$0xf]
      %v3559 = vld [vmem:[%s3555 + $0x10] sm:$0xf]
      %v3560 = vld [vmem:[%s3555 + $0x18] sm:$0xf]
      %v3561 = vld [vmem:[%s3555 + $0x1c] sm:$0xf]
      %v3562 = vld [vmem:[%s3555 + $0x24] sm:$0xf]
      %v3563 = vld [vmem:[%s3555 + $0x28] sm:$0xf]
      %v3564 = vld [vmem:[%s3555 + $0x30] sm:$0xf]
      %v3565 = vld [vmem:[%s3555 + $0x34] sm:$0xf]
      %v3566 = vld [vmem:[%s3555 + $0x3c] sm:$0xf]
      %v3567 = vld [vmem:[%s3555 + $0x40] sm:$0xf]
      %v3568 = vld [vmem:[%s3555 + $0x48] sm:$0xf]
      %v3569 = vld [vmem:[%s3555 + $0x4c] sm:$0xf]
      %v3570 = vld [vmem:[%s3555 + $0x54] sm:$0xf]
      %v3571 = vld [vmem:[%s3555 + $0x58] sm:$0xf]
      %v3572 = vld [vmem:[%s3555 + $0x60] sm:$0xf]
      %v3573 = vld [vmem:[%s3555 + $0x64] sm:$0xf]
      %v3574 = vld [vmem:[%s3555 + $0x6c] sm:$0xf]
      %v3575 = vld [vmem:[%s3555 + $0x70] sm:$0xf]
      %v3576 = vld [vmem:[%s3555 + $0x78] sm:$0xf]
      %v3577 = vld [vmem:[%s3555 + $0x7c] sm:$0xf]
      %v3578 = vld [vmem:[%s3555 + $0x84] sm:$0xf]
      %v3579 = vld [vmem:[%s3555 + $0x88] sm:$0xf]
      %v3580 = vld [vmem:[%s3555 + $0x90] sm:$0xf]
      %v3581 = vld [vmem:[%s3555 + $0x94] sm:$0xf]
      %v3582 = vld [vmem:[%s3555 + $0x9c] sm:$0xf]
      %v3583 = vld [vmem:[%s3555 + $0xa0] sm:$0xf]
      %v3584 = vld [vmem:[%s3555 + $0xa8] sm:$0xf]
      %v3585 = vld [vmem:[%s3555 + $0xac] sm:$0xf]
      %v3586 = vld [vmem:[%s3555 + $0xb4] sm:$0xf]
      %v3587 = vld [vmem:[%s3555 + $0xb8] sm:$0xf]
      %s3588 = scalar_lea.vmem %s3, 24
      %v3589 = vld [vmem:[%s3588] sm:$0xf]
      %v3622 = vunpack.c.l.b16 %v3556
      %v3623 = vunpack.c.l.b16 %v3557
      %v3624 = vunpack.c.l.b16 %v3558
      %v3625 = vunpack.c.l.b16 %v3559
      %v3626 = vunpack.c.l.b16 %v3560
      %v3627 = vunpack.c.l.b16 %v3561
      %v3628 = vunpack.c.l.b16 %v3562
      %v3629 = vunpack.c.l.b16 %v3563
      %v3630 = vunpack.c.l.b16 %v3564
      %v3631 = vunpack.c.l.b16 %v3565
      %v3632 = vunpack.c.l.b16 %v3566
      %v3633 = vunpack.c.l.b16 %v3567
      %v3634 = vunpack.c.l.b16 %v3568
      %v3635 = vunpack.c.l.b16 %v3569
      %v3636 = vunpack.c.l.b16 %v3570
      %v3637 = vunpack.c.l.b16 %v3571
      %v3638 = vunpack.c.l.b16 %v3572
      %v3639 = vunpack.c.l.b16 %v3573
      %v3640 = vunpack.c.l.b16 %v3574
      %v3641 = vunpack.c.l.b16 %v3575
      %v3642 = vunpack.c.l.b16 %v3576
      %v3643 = vunpack.c.l.b16 %v3577
      %v3644 = vunpack.c.l.b16 %v3578
      %v3645 = vunpack.c.l.b16 %v3579
      %v3646 = vunpack.c.l.b16 %v3580
      %v3647 = vunpack.c.l.b16 %v3581
      %v3648 = vunpack.c.l.b16 %v3582
      %v3649 = vunpack.c.l.b16 %v3583
      %v3650 = vunpack.c.l.b16 %v3584
      %v3651 = vunpack.c.l.b16 %v3585
      %v3652 = vunpack.c.l.b16 %v3586
      %v3653 = vunpack.c.l.b16 %v3587
      %v3654 = vpack.c.b16 %v3623, %v3622
      %v3655 = vpack.c.b16 %v3625, %v3624
      %v3656 = vpack.c.b16 %v3627, %v3626
      %v3657 = vpack.c.b16 %v3629, %v3628
      %v3658 = vpack.c.b16 %v3631, %v3630
      %v3659 = vpack.c.b16 %v3633, %v3632
      %v3660 = vpack.c.b16 %v3635, %v3634
      %v3661 = vpack.c.b16 %v3637, %v3636
      %v3662 = vpack.c.b16 %v3639, %v3638
      %v3663 = vpack.c.b16 %v3641, %v3640
      %v3664 = vpack.c.b16 %v3643, %v3642
      %v3665 = vpack.c.b16 %v3645, %v3644
      %v3666 = vpack.c.b16 %v3647, %v3646
      %v3667 = vpack.c.b16 %v3649, %v3648
      %v3668 = vpack.c.b16 %v3651, %v3650
      %v3669 = vpack.c.b16 %v3653, %v3652
      %v3671 = vsel %vm1470, %v3654, 0
      %v3674 = vsel %vm1470, %v3655, 0
      %v3677 = vsel %vm1470, %v3656, 0
      %v3680 = vsel %vm1470, %v3657, 0
      %v3683 = vsel %vm1470, %v3658, 0
      %v3686 = vsel %vm1470, %v3659, 0
      %v3689 = vsel %vm1470, %v3660, 0
      %v3692 = vsel %vm1470, %v3661, 0
      %v3695 = vsel %vm1470, %v3662, 0
      %v3698 = vsel %vm1470, %v3663, 0
      %v3701 = vsel %vm1470, %v3664, 0
      %v3704 = vsel %vm1470, %v3665, 0
      %v3707 = vsel %vm1470, %v3666, 0
      %v3710 = vsel %vm1470, %v3667, 0
      %v3713 = vsel %vm1470, %v3668, 0
      %v3716 = vsel %vm1470, %v3669, 0
      %v3719 = vsel %vm1519, %v3589, 0
      %3721 = vmatpush.bf16.msra.mxu0 0
      %3722 = vmatpush.bf16.msra.mxu0 0
      %3723 = vmatpush.bf16.msra.mxu0 0
      %3724 = vmatpush.bf16.msra.mxu0 0
      %3725 = vmatpush.bf16.msra.mxu0 0
      %3726 = vmatpush.bf16.msra.mxu0 0
      %3727 = vmatpush.bf16.msra.mxu0 0
      %3728 = vmatpush.bf16.msra.mxu0 %v3719
      %3729 = vmatmul.bf16.gmra.mxu0 %v3671
      %v3730 = vpop.f32.mrf.mxu0
      %v3731 = vadd.f32 0.0, %v3730
      %v3732 = vpop.f32.mrf.mxu0
      %v3733 = vadd.f32 0.0, %v3732
      %3734 = vmatmul.bf16.gmra.mxu0 %v3674
      %v3735 = vpop.f32.mrf.mxu0
      %v3736 = vadd.f32 0.0, %v3735
      %v3737 = vpop.f32.mrf.mxu0
      %v3738 = vadd.f32 0.0, %v3737
      %3739 = vmatmul.bf16.gmra.mxu0 %v3677
      %v3740 = vpop.f32.mrf.mxu0
      %v3741 = vadd.f32 0.0, %v3740
      %v3742 = vpop.f32.mrf.mxu0
      %v3743 = vadd.f32 0.0, %v3742
      %3744 = vmatmul.bf16.gmra.mxu0 %v3680
      %v3745 = vpop.f32.mrf.mxu0
      %v3746 = vadd.f32 0.0, %v3745
      %v3747 = vpop.f32.mrf.mxu0
      %v3748 = vadd.f32 0.0, %v3747
      %3749 = vmatmul.bf16.gmra.mxu0 %v3683
      %v3750 = vpop.f32.mrf.mxu0
      %v3751 = vadd.f32 0.0, %v3750
      %v3752 = vpop.f32.mrf.mxu0
      %v3753 = vadd.f32 0.0, %v3752
      %3754 = vmatmul.bf16.gmra.mxu0 %v3686
      %v3755 = vpop.f32.mrf.mxu0
      %v3756 = vadd.f32 0.0, %v3755
      %v3757 = vpop.f32.mrf.mxu0
      %v3758 = vadd.f32 0.0, %v3757
      %3759 = vmatmul.bf16.gmra.mxu0 %v3689
      %v3760 = vpop.f32.mrf.mxu0
      %v3761 = vadd.f32 0.0, %v3760
      %v3762 = vpop.f32.mrf.mxu0
      %v3763 = vadd.f32 0.0, %v3762
      %3764 = vmatmul.bf16.gmra.mxu0 %v3692
      %v3765 = vpop.f32.mrf.mxu0
      %v3766 = vadd.f32 0.0, %v3765
      %v3767 = vpop.f32.mrf.mxu0
      %v3768 = vadd.f32 0.0, %v3767
      %3769 = vmatmul.bf16.gmra.mxu0 %v3695
      %v3770 = vpop.f32.mrf.mxu0
      %v3771 = vadd.f32 0.0, %v3770
      %v3772 = vpop.f32.mrf.mxu0
      %v3773 = vadd.f32 0.0, %v3772
      %3774 = vmatmul.bf16.gmra.mxu0 %v3698
      %v3775 = vpop.f32.mrf.mxu0
      %v3776 = vadd.f32 0.0, %v3775
      %v3777 = vpop.f32.mrf.mxu0
      %v3778 = vadd.f32 0.0, %v3777
      %3779 = vmatmul.bf16.gmra.mxu0 %v3701
      %v3780 = vpop.f32.mrf.mxu0
      %v3781 = vadd.f32 0.0, %v3780
      %v3782 = vpop.f32.mrf.mxu0
      %v3783 = vadd.f32 0.0, %v3782
      %3784 = vmatmul.bf16.gmra.mxu0 %v3704
      %v3785 = vpop.f32.mrf.mxu0
      %v3786 = vadd.f32 0.0, %v3785
      %v3787 = vpop.f32.mrf.mxu0
      %v3788 = vadd.f32 0.0, %v3787
      %3789 = vmatmul.bf16.gmra.mxu0 %v3707
      %v3790 = vpop.f32.mrf.mxu0
      %v3791 = vadd.f32 0.0, %v3790
      %v3792 = vpop.f32.mrf.mxu0
      %v3793 = vadd.f32 0.0, %v3792
      %3794 = vmatmul.bf16.gmra.mxu0 %v3710
      %v3795 = vpop.f32.mrf.mxu0
      %v3796 = vadd.f32 0.0, %v3795
      %v3797 = vpop.f32.mrf.mxu0
      %v3798 = vadd.f32 0.0, %v3797
      %3799 = vmatmul.bf16.gmra.mxu0 %v3713
      %v3800 = vpop.f32.mrf.mxu0
      %v3801 = vadd.f32 0.0, %v3800
      %v3802 = vpop.f32.mrf.mxu0
      %v3803 = vadd.f32 0.0, %v3802
      %3804 = vmatmul.bf16.gmra.mxu0 %v3716
      %v3805 = vpop.f32.mrf.mxu0
      %v3806 = vadd.f32 0.0, %v3805
      %v3807 = vpop.f32.mrf.mxu0
      %v3808 = vadd.f32 0.0, %v3807
      %3809 = vdwg.mxu0
      %v3810 = vadd.f32 %v3523, %v3731
      %v3811 = vadd.f32 %v3524, %v3733
      %v3812 = vadd.f32 %v3525, %v3736
      %v3813 = vadd.f32 %v3526, %v3738
      %v3814 = vadd.f32 %v3527, %v3741
      %v3815 = vadd.f32 %v3528, %v3743
      %v3816 = vadd.f32 %v3529, %v3746
      %v3817 = vadd.f32 %v3530, %v3748
      %v3818 = vadd.f32 %v3531, %v3751
      %v3819 = vadd.f32 %v3532, %v3753
      %v3820 = vadd.f32 %v3533, %v3756
      %v3821 = vadd.f32 %v3534, %v3758
      %v3822 = vadd.f32 %v3535, %v3761
      %v3823 = vadd.f32 %v3536, %v3763
      %v3824 = vadd.f32 %v3537, %v3766
      %v3825 = vadd.f32 %v3538, %v3768
      %v3826 = vadd.f32 %v3539, %v3771
      %v3827 = vadd.f32 %v3540, %v3773
      %v3828 = vadd.f32 %v3541, %v3776
      %v3829 = vadd.f32 %v3542, %v3778
      %v3830 = vadd.f32 %v3543, %v3781
      %v3831 = vadd.f32 %v3544, %v3783
      %v3832 = vadd.f32 %v3545, %v3786
      %v3833 = vadd.f32 %v3546, %v3788
      %v3834 = vadd.f32 %v3547, %v3791
      %v3835 = vadd.f32 %v3548, %v3793
      %v3836 = vadd.f32 %v3549, %v3796
      %v3837 = vadd.f32 %v3550, %v3798
      %v3838 = vadd.f32 %v3551, %v3801
      %v3839 = vadd.f32 %v3552, %v3803
      %v3840 = vadd.f32 %v3553, %v3806
      %v3841 = vadd.f32 %v3554, %v3808
      %v3842 = vld [vmem:[%s3555] sm:$0xf]
      %v3843 = vld [vmem:[%s3555 + $0x4] sm:$0xf]
      %v3844 = vld [vmem:[%s3555 + $0x8] sm:$0x1]
      %v3845 = vld [vmem:[%s3555 + $0xc] sm:$0xf]
      %v3846 = vld [vmem:[%s3555 + $0x10] sm:$0xf]
      %v3847 = vld [vmem:[%s3555 + $0x14] sm:$0x1]
      %v3848 = vld [vmem:[%s3555 + $0x18] sm:$0xf]
      %v3849 = vld [vmem:[%s3555 + $0x1c] sm:$0xf]
      %v3850 = vld [vmem:[%s3555 + $0x20] sm:$0x1]
      %v3851 = vld [vmem:[%s3555 + $0x24] sm:$0xf]
      %v3852 = vld [vmem:[%s3555 + $0x28] sm:$0xf]
      %v3853 = vld [vmem:[%s3555 + $0x2c] sm:$0x1]
      %v3854 = vld [vmem:[%s3555 + $0x30] sm:$0xf]
      %v3855 = vld [vmem:[%s3555 + $0x34] sm:$0xf]
      %v3856 = vld [vmem:[%s3555 + $0x38] sm:$0x1]
      %v3857 = vld [vmem:[%s3555 + $0x3c] sm:$0xf]
      %v3858 = vld [vmem:[%s3555 + $0x40] sm:$0xf]
      %v3859 = vld [vmem:[%s3555 + $0x44] sm:$0x1]
      %v3860 = vld [vmem:[%s3555 + $0x48] sm:$0xf]
      %v3861 = vld [vmem:[%s3555 + $0x4c] sm:$0xf]
      %v3862 = vld [vmem:[%s3555 + $0x50] sm:$0x1]
      %v3863 = vld [vmem:[%s3555 + $0x54] sm:$0xf]
      %v3864 = vld [vmem:[%s3555 + $0x58] sm:$0xf]
      %v3865 = vld [vmem:[%s3555 + $0x5c] sm:$0x1]
      %v3866 = vld [vmem:[%s3555 + $0x60] sm:$0xf]
      %v3867 = vld [vmem:[%s3555 + $0x64] sm:$0xf]
      %v3868 = vld [vmem:[%s3555 + $0x68] sm:$0x1]
      %v3869 = vld [vmem:[%s3555 + $0x6c] sm:$0xf]
      %v3870 = vld [vmem:[%s3555 + $0x70] sm:$0xf]
      %v3871 = vld [vmem:[%s3555 + $0x74] sm:$0x1]
      %v3872 = vld [vmem:[%s3555 + $0x78] sm:$0xf]
      %v3873 = vld [vmem:[%s3555 + $0x7c] sm:$0xf]
      %v3874 = vld [vmem:[%s3555 + $0x80] sm:$0x1]
      %v3875 = vld [vmem:[%s3555 + $0x84] sm:$0xf]
      %v3876 = vld [vmem:[%s3555 + $0x88] sm:$0xf]
      %v3877 = vld [vmem:[%s3555 + $0x8c] sm:$0x1]
      %v3878 = vld [vmem:[%s3555 + $0x90] sm:$0xf]
      %v3879 = vld [vmem:[%s3555 + $0x94] sm:$0xf]
      %v3880 = vld [vmem:[%s3555 + $0x98] sm:$0x1]
      %v3881 = vld [vmem:[%s3555 + $0x9c] sm:$0xf]
      %v3882 = vld [vmem:[%s3555 + $0xa0] sm:$0xf]
      %v3883 = vld [vmem:[%s3555 + $0xa4] sm:$0x1]
      %v3884 = vld [vmem:[%s3555 + $0xa8] sm:$0xf]
      %v3885 = vld [vmem:[%s3555 + $0xac] sm:$0xf]
      %v3886 = vld [vmem:[%s3555 + $0xb0] sm:$0x1]
      %v3887 = vld [vmem:[%s3555 + $0xb4] sm:$0xf]
      %v3888 = vld [vmem:[%s3555 + $0xb8] sm:$0xf]
      %v3889 = vld [vmem:[%s3555 + $0xbc] sm:$0x1]
      %v3891 = vshrl.u32 %v3842, 16
      %v3893 = vrot.slane %v3891, 4
      %v3894 = vshll.u32 %v3842, 16
      %v3896 = vrot.slane %v3894, 5
      %v3897 = vor.u32 %v3893, %v3896
      %v3898 = vrot.slane %v3897, 4
      %v3900 = vshll.u32 %v3843, 16
      %v3902 = vrot.slane %v3900, 5
      %v3903 = vsel %vm1035, %v3898, %v3902
      %v3904 = vshrl.u32 %v3843, 16
      %v3906 = vrot.slane %v3904, 4
      %v3907 = vor.u32 %v3906, %v3902
      %v3908 = vrot.slane %v3907, 4
      %v3910 = vshll.u32 %v3844, 16
      %v3912 = vrot.slane %v3910, 5
      %v3913 = vsel %vm1035, %v3908, %v3912
      %v3915 = vshrl.u32 %v3845, 16
      %v3917 = vrot.slane %v3915, 4
      %v3918 = vshll.u32 %v3845, 16
      %v3920 = vrot.slane %v3918, 5
      %v3921 = vor.u32 %v3917, %v3920
      %v3922 = vrot.slane %v3921, 4
      %v3924 = vshll.u32 %v3846, 16
      %v3926 = vrot.slane %v3924, 5
      %v3927 = vsel %vm1035, %v3922, %v3926
      %v3928 = vshrl.u32 %v3846, 16
      %v3930 = vrot.slane %v3928, 4
      %v3931 = vor.u32 %v3930, %v3926
      %v3932 = vrot.slane %v3931, 4
      %v3934 = vshll.u32 %v3847, 16
      %v3936 = vrot.slane %v3934, 5
      %v3937 = vsel %vm1035, %v3932, %v3936
      %v3939 = vshrl.u32 %v3848, 16
      %v3941 = vrot.slane %v3939, 4
      %v3942 = vshll.u32 %v3848, 16
      %v3944 = vrot.slane %v3942, 5
      %v3945 = vor.u32 %v3941, %v3944
      %v3946 = vrot.slane %v3945, 4
      %v3948 = vshll.u32 %v3849, 16
      %v3950 = vrot.slane %v3948, 5
      %v3951 = vsel %vm1035, %v3946, %v3950
      %v3952 = vshrl.u32 %v3849, 16
      %v3954 = vrot.slane %v3952, 4
      %v3955 = vor.u32 %v3954, %v3950
      %v3956 = vrot.slane %v3955, 4
      %v3958 = vshll.u32 %v3850, 16
      %v3960 = vrot.slane %v3958, 5
      %v3961 = vsel %vm1035, %v3956, %v3960
      %v3963 = vshrl.u32 %v3851, 16
      %v3965 = vrot.slane %v3963, 4
      %v3966 = vshll.u32 %v3851, 16
      %v3968 = vrot.slane %v3966, 5
      %v3969 = vor.u32 %v3965, %v3968
      %v3970 = vrot.slane %v3969, 4
      %v3972 = vshll.u32 %v3852, 16
      %v3974 = vrot.slane %v3972, 5
      %v3975 = vsel %vm1035, %v3970, %v3974
      %v3976 = vshrl.u32 %v3852, 16
      %v3978 = vrot.slane %v3976, 4
      %v3979 = vor.u32 %v3978, %v3974
      %v3980 = vrot.slane %v3979, 4
      %v3982 = vshll.u32 %v3853, 16
      %v3984 = vrot.slane %v3982, 5
      %v3985 = vsel %vm1035, %v3980, %v3984
      %v3987 = vshrl.u32 %v3854, 16
      %v3989 = vrot.slane %v3987, 4
      %v3990 = vshll.u32 %v3854, 16
      %v3992 = vrot.slane %v3990, 5
      %v3993 = vor.u32 %v3989, %v3992
      %v3994 = vrot.slane %v3993, 4
      %v3996 = vshll.u32 %v3855, 16
      %v3998 = vrot.slane %v3996, 5
      %v3999 = vsel %vm1035, %v3994, %v3998
      %v4000 = vshrl.u32 %v3855, 16
      %v4002 = vrot.slane %v4000, 4
      %v4003 = vor.u32 %v4002, %v3998
      %v4004 = vrot.slane %v4003, 4
      %v4006 = vshll.u32 %v3856, 16
      %v4008 = vrot.slane %v4006, 5
      %v4009 = vsel %vm1035, %v4004, %v4008
      %v4011 = vshrl.u32 %v3857, 16
      %v4013 = vrot.slane %v4011, 4
      %v4014 = vshll.u32 %v3857, 16
      %v4016 = vrot.slane %v4014, 5
      %v4017 = vor.u32 %v4013, %v4016
      %v4018 = vrot.slane %v4017, 4
      %v4020 = vshll.u32 %v3858, 16
      %v4022 = vrot.slane %v4020, 5
      %v4023 = vsel %vm1035, %v4018, %v4022
      %v4024 = vshrl.u32 %v3858, 16
      %v4026 = vrot.slane %v4024, 4
      %v4027 = vor.u32 %v4026, %v4022
      %v4028 = vrot.slane %v4027, 4
      %v4030 = vshll.u32 %v3859, 16
      %v4032 = vrot.slane %v4030, 5
      %v4033 = vsel %vm1035, %v4028, %v4032
      %v4035 = vshrl.u32 %v3860, 16
      %v4037 = vrot.slane %v4035, 4
      %v4038 = vshll.u32 %v3860, 16
      %v4040 = vrot.slane %v4038, 5
      %v4041 = vor.u32 %v4037, %v4040
      %v4042 = vrot.slane %v4041, 4
      %v4044 = vshll.u32 %v3861, 16
      %v4046 = vrot.slane %v4044, 5
      %v4047 = vsel %vm1035, %v4042, %v4046
      %v4048 = vshrl.u32 %v3861, 16
      %v4050 = vrot.slane %v4048, 4
      %v4051 = vor.u32 %v4050, %v4046
      %v4052 = vrot.slane %v4051, 4
      %v4054 = vshll.u32 %v3862, 16
      %v4056 = vrot.slane %v4054, 5
      %v4057 = vsel %vm1035, %v4052, %v4056
      %v4059 = vshrl.u32 %v3863, 16
      %v4061 = vrot.slane %v4059, 4
      %v4062 = vshll.u32 %v3863, 16
      %v4064 = vrot.slane %v4062, 5
      %v4065 = vor.u32 %v4061, %v4064
      %v4066 = vrot.slane %v4065, 4
      %v4068 = vshll.u32 %v3864, 16
      %v4070 = vrot.slane %v4068, 5
      %v4071 = vsel %vm1035, %v4066, %v4070
      %v4072 = vshrl.u32 %v3864, 16
      %v4074 = vrot.slane %v4072, 4
      %v4075 = vor.u32 %v4074, %v4070
      %v4076 = vrot.slane %v4075, 4
      %v4078 = vshll.u32 %v3865, 16
      %v4080 = vrot.slane %v4078, 5
      %v4081 = vsel %vm1035, %v4076, %v4080
      %v4083 = vshrl.u32 %v3866, 16
      %v4085 = vrot.slane %v4083, 4
      %v4086 = vshll.u32 %v3866, 16
      %v4088 = vrot.slane %v4086, 5
      %v4089 = vor.u32 %v4085, %v4088
      %v4090 = vrot.slane %v4089, 4
      %v4092 = vshll.u32 %v3867, 16
      %v4094 = vrot.slane %v4092, 5
      %v4095 = vsel %vm1035, %v4090, %v4094
      %v4096 = vshrl.u32 %v3867, 16
      %v4098 = vrot.slane %v4096, 4
      %v4099 = vor.u32 %v4098, %v4094
      %v4100 = vrot.slane %v4099, 4
      %v4102 = vshll.u32 %v3868, 16
      %v4104 = vrot.slane %v4102, 5
      %v4105 = vsel %vm1035, %v4100, %v4104
      %v4107 = vshrl.u32 %v3869, 16
      %v4109 = vrot.slane %v4107, 4
      %v4110 = vshll.u32 %v3869, 16
      %v4112 = vrot.slane %v4110, 5
      %v4113 = vor.u32 %v4109, %v4112
      %v4114 = vrot.slane %v4113, 4
      %v4116 = vshll.u32 %v3870, 16
      %v4118 = vrot.slane %v4116, 5
      %v4119 = vsel %vm1035, %v4114, %v4118
      %v4120 = vshrl.u32 %v3870, 16
      %v4122 = vrot.slane %v4120, 4
      %v4123 = vor.u32 %v4122, %v4118
      %v4124 = vrot.slane %v4123, 4
      %v4126 = vshll.u32 %v3871, 16
      %v4128 = vrot.slane %v4126, 5
      %v4129 = vsel %vm1035, %v4124, %v4128
      %v4131 = vshrl.u32 %v3872, 16
      %v4133 = vrot.slane %v4131, 4
      %v4134 = vshll.u32 %v3872, 16
      %v4136 = vrot.slane %v4134, 5
      %v4137 = vor.u32 %v4133, %v4136
      %v4138 = vrot.slane %v4137, 4
      %v4140 = vshll.u32 %v3873, 16
      %v4142 = vrot.slane %v4140, 5
      %v4143 = vsel %vm1035, %v4138, %v4142
      %v4144 = vshrl.u32 %v3873, 16
      %v4146 = vrot.slane %v4144, 4
      %v4147 = vor.u32 %v4146, %v4142
      %v4148 = vrot.slane %v4147, 4
      %v4150 = vshll.u32 %v3874, 16
      %v4152 = vrot.slane %v4150, 5
      %v4153 = vsel %vm1035, %v4148, %v4152
      %v4155 = vshrl.u32 %v3875, 16
      %v4157 = vrot.slane %v4155, 4
      %v4158 = vshll.u32 %v3875, 16
      %v4160 = vrot.slane %v4158, 5
      %v4161 = vor.u32 %v4157, %v4160
      %v4162 = vrot.slane %v4161, 4
      %v4164 = vshll.u32 %v3876, 16
      %v4166 = vrot.slane %v4164, 5
      %v4167 = vsel %vm1035, %v4162, %v4166
      %v4168 = vshrl.u32 %v3876, 16
      %v4170 = vrot.slane %v4168, 4
      %v4171 = vor.u32 %v4170, %v4166
      %v4172 = vrot.slane %v4171, 4
      %v4174 = vshll.u32 %v3877, 16
      %v4176 = vrot.slane %v4174, 5
      %v4177 = vsel %vm1035, %v4172, %v4176
      %v4179 = vshrl.u32 %v3878, 16
      %v4181 = vrot.slane %v4179, 4
      %v4182 = vshll.u32 %v3878, 16
      %v4184 = vrot.slane %v4182, 5
      %v4185 = vor.u32 %v4181, %v4184
      %v4186 = vrot.slane %v4185, 4
      %v4188 = vshll.u32 %v3879, 16
      %v4190 = vrot.slane %v4188, 5
      %v4191 = vsel %vm1035, %v4186, %v4190
      %v4192 = vshrl.u32 %v3879, 16
      %v4194 = vrot.slane %v4192, 4
      %v4195 = vor.u32 %v4194, %v4190
      %v4196 = vrot.slane %v4195, 4
      %v4198 = vshll.u32 %v3880, 16
      %v4200 = vrot.slane %v4198, 5
      %v4201 = vsel %vm1035, %v4196, %v4200
      %v4203 = vshrl.u32 %v3881, 16
      %v4205 = vrot.slane %v4203, 4
      %v4206 = vshll.u32 %v3881, 16
      %v4208 = vrot.slane %v4206, 5
      %v4209 = vor.u32 %v4205, %v4208
      %v4210 = vrot.slane %v4209, 4
      %v4212 = vshll.u32 %v3882, 16
      %v4214 = vrot.slane %v4212, 5
      %v4215 = vsel %vm1035, %v4210, %v4214
      %v4216 = vshrl.u32 %v3882, 16
      %v4218 = vrot.slane %v4216, 4
      %v4219 = vor.u32 %v4218, %v4214
      %v4220 = vrot.slane %v4219, 4
      %v4222 = vshll.u32 %v3883, 16
      %v4224 = vrot.slane %v4222, 5
      %v4225 = vsel %vm1035, %v4220, %v4224
      %v4227 = vshrl.u32 %v3884, 16
      %v4229 = vrot.slane %v4227, 4
      %v4230 = vshll.u32 %v3884, 16
      %v4232 = vrot.slane %v4230, 5
      %v4233 = vor.u32 %v4229, %v4232
      %v4234 = vrot.slane %v4233, 4
      %v4236 = vshll.u32 %v3885, 16
      %v4238 = vrot.slane %v4236, 5
      %v4239 = vsel %vm1035, %v4234, %v4238
      %v4240 = vshrl.u32 %v3885, 16
      %v4242 = vrot.slane %v4240, 4
      %v4243 = vor.u32 %v4242, %v4238
      %v4244 = vrot.slane %v4243, 4
      %v4246 = vshll.u32 %v3886, 16
      %v4248 = vrot.slane %v4246, 5
      %v4249 = vsel %vm1035, %v4244, %v4248
      %v4251 = vshrl.u32 %v3887, 16
      %v4253 = vrot.slane %v4251, 4
      %v4254 = vshll.u32 %v3887, 16
      %v4256 = vrot.slane %v4254, 5
      %v4257 = vor.u32 %v4253, %v4256
      %v4258 = vrot.slane %v4257, 4
      %v4260 = vshll.u32 %v3888, 16
      %v4262 = vrot.slane %v4260, 5
      %v4263 = vsel %vm1035, %v4258, %v4262
      %v4264 = vshrl.u32 %v3888, 16
      %v4266 = vrot.slane %v4264, 4
      %v4267 = vor.u32 %v4266, %v4262
      %v4268 = vrot.slane %v4267, 4
      %v4270 = vshll.u32 %v3889, 16
      %v4272 = vrot.slane %v4270, 5
      %v4273 = vsel %vm1035, %v4268, %v4272
      %s4274 = scalar_lea.vmem %s3, 28
      %v4275 = vld [vmem:[%s4274] sm:$0xf]
      %v4276 = vunpack.c.l.b16 %v3903
      %v4277 = vunpack.c.l.b16 %v3913
      %v4278 = vunpack.c.l.b16 %v3927
      %v4279 = vunpack.c.l.b16 %v3937
      %v4280 = vunpack.c.l.b16 %v3951
      %v4281 = vunpack.c.l.b16 %v3961
      %v4282 = vunpack.c.l.b16 %v3975
      %v4283 = vunpack.c.l.b16 %v3985
      %v4284 = vunpack.c.l.b16 %v3999
      %v4285 = vunpack.c.l.b16 %v4009
      %v4286 = vunpack.c.l.b16 %v4023
      %v4287 = vunpack.c.l.b16 %v4033
      %v4288 = vunpack.c.l.b16 %v4047
      %v4289 = vunpack.c.l.b16 %v4057
      %v4290 = vunpack.c.l.b16 %v4071
      %v4291 = vunpack.c.l.b16 %v4081
      %v4292 = vunpack.c.l.b16 %v4095
      %v4293 = vunpack.c.l.b16 %v4105
      %v4294 = vunpack.c.l.b16 %v4119
      %v4295 = vunpack.c.l.b16 %v4129
      %v4296 = vunpack.c.l.b16 %v4143
      %v4297 = vunpack.c.l.b16 %v4153
      %v4298 = vunpack.c.l.b16 %v4167
      %v4299 = vunpack.c.l.b16 %v4177
      %v4300 = vunpack.c.l.b16 %v4191
      %v4301 = vunpack.c.l.b16 %v4201
      %v4302 = vunpack.c.l.b16 %v4215
      %v4303 = vunpack.c.l.b16 %v4225
      %v4304 = vunpack.c.l.b16 %v4239
      %v4305 = vunpack.c.l.b16 %v4249
      %v4306 = vunpack.c.l.b16 %v4263
      %v4307 = vunpack.c.l.b16 %v4273
      %v4308 = vpack.c.b16 %v4277, %v4276
      %v4309 = vpack.c.b16 %v4279, %v4278
      %v4310 = vpack.c.b16 %v4281, %v4280
      %v4311 = vpack.c.b16 %v4283, %v4282
      %v4312 = vpack.c.b16 %v4285, %v4284
      %v4313 = vpack.c.b16 %v4287, %v4286
      %v4314 = vpack.c.b16 %v4289, %v4288
      %v4315 = vpack.c.b16 %v4291, %v4290
      %v4316 = vpack.c.b16 %v4293, %v4292
      %v4317 = vpack.c.b16 %v4295, %v4294
      %v4318 = vpack.c.b16 %v4297, %v4296
      %v4319 = vpack.c.b16 %v4299, %v4298
      %v4320 = vpack.c.b16 %v4301, %v4300
      %v4321 = vpack.c.b16 %v4303, %v4302
      %v4322 = vpack.c.b16 %v4305, %v4304
      %v4323 = vpack.c.b16 %v4307, %v4306
      %v4325 = vsel %vm1470, %v4308, 0
      %v4328 = vsel %vm1470, %v4309, 0
      %v4331 = vsel %vm1470, %v4310, 0
      %v4334 = vsel %vm1470, %v4311, 0
      %v4337 = vsel %vm1470, %v4312, 0
      %v4340 = vsel %vm1470, %v4313, 0
      %v4343 = vsel %vm1470, %v4314, 0
      %v4346 = vsel %vm1470, %v4315, 0
      %v4349 = vsel %vm1470, %v4316, 0
      %v4352 = vsel %vm1470, %v4317, 0
      %v4355 = vsel %vm1470, %v4318, 0
      %v4358 = vsel %vm1470, %v4319, 0
      %v4361 = vsel %vm1470, %v4320, 0
      %v4364 = vsel %vm1470, %v4321, 0
      %v4367 = vsel %vm1470, %v4322, 0
      %v4370 = vsel %vm1470, %v4323, 0
      %v4373 = vsel %vm1519, %v4275, 0
      %4375 = vmatpush.bf16.msra.mxu0 0
      %4376 = vmatpush.bf16.msra.mxu0 0
      %4377 = vmatpush.bf16.msra.mxu0 0
      %4378 = vmatpush.bf16.msra.mxu0 0
      %4379 = vmatpush.bf16.msra.mxu0 0
      %4380 = vmatpush.bf16.msra.mxu0 0
      %4381 = vmatpush.bf16.msra.mxu0 0
      %4382 = vmatpush.bf16.msra.mxu0 %v4373
      %4383 = vmatmul.bf16.gmra.mxu0 %v4325
      %v4384 = vpop.f32.mrf.mxu0
      %v4385 = vadd.f32 0.0, %v4384
      %v4386 = vpop.f32.mrf.mxu0
      %v4387 = vadd.f32 0.0, %v4386
      %4388 = vmatmul.bf16.gmra.mxu0 %v4328
      %v4389 = vpop.f32.mrf.mxu0
      %v4390 = vadd.f32 0.0, %v4389
      %v4391 = vpop.f32.mrf.mxu0
      %v4392 = vadd.f32 0.0, %v4391
      %4393 = vmatmul.bf16.gmra.mxu0 %v4331
      %v4394 = vpop.f32.mrf.mxu0
      %v4395 = vadd.f32 0.0, %v4394
      %v4396 = vpop.f32.mrf.mxu0
      %v4397 = vadd.f32 0.0, %v4396
      %4398 = vmatmul.bf16.gmra.mxu0 %v4334
      %v4399 = vpop.f32.mrf.mxu0
      %v4400 = vadd.f32 0.0, %v4399
      %v4401 = vpop.f32.mrf.mxu0
      %v4402 = vadd.f32 0.0, %v4401
      %4403 = vmatmul.bf16.gmra.mxu0 %v4337
      %v4404 = vpop.f32.mrf.mxu0
      %v4405 = vadd.f32 0.0, %v4404
      %v4406 = vpop.f32.mrf.mxu0
      %v4407 = vadd.f32 0.0, %v4406
      %4408 = vmatmul.bf16.gmra.mxu0 %v4340
      %v4409 = vpop.f32.mrf.mxu0
      %v4410 = vadd.f32 0.0, %v4409
      %v4411 = vpop.f32.mrf.mxu0
      %v4412 = vadd.f32 0.0, %v4411
      %4413 = vmatmul.bf16.gmra.mxu0 %v4343
      %v4414 = vpop.f32.mrf.mxu0
      %v4415 = vadd.f32 0.0, %v4414
      %v4416 = vpop.f32.mrf.mxu0
      %v4417 = vadd.f32 0.0, %v4416
      %4418 = vmatmul.bf16.gmra.mxu0 %v4346
      %v4419 = vpop.f32.mrf.mxu0
      %v4420 = vadd.f32 0.0, %v4419
      %v4421 = vpop.f32.mrf.mxu0
      %v4422 = vadd.f32 0.0, %v4421
      %4423 = vmatmul.bf16.gmra.mxu0 %v4349
      %v4424 = vpop.f32.mrf.mxu0
      %v4425 = vadd.f32 0.0, %v4424
      %v4426 = vpop.f32.mrf.mxu0
      %v4427 = vadd.f32 0.0, %v4426
      %4428 = vmatmul.bf16.gmra.mxu0 %v4352
      %v4429 = vpop.f32.mrf.mxu0
      %v4430 = vadd.f32 0.0, %v4429
      %v4431 = vpop.f32.mrf.mxu0
      %v4432 = vadd.f32 0.0, %v4431
      %4433 = vmatmul.bf16.gmra.mxu0 %v4355
      %v4434 = vpop.f32.mrf.mxu0
      %v4435 = vadd.f32 0.0, %v4434
      %v4436 = vpop.f32.mrf.mxu0
      %v4437 = vadd.f32 0.0, %v4436
      %4438 = vmatmul.bf16.gmra.mxu0 %v4358
      %v4439 = vpop.f32.mrf.mxu0
      %v4440 = vadd.f32 0.0, %v4439
      %v4441 = vpop.f32.mrf.mxu0
      %v4442 = vadd.f32 0.0, %v4441
      %4443 = vmatmul.bf16.gmra.mxu0 %v4361
      %v4444 = vpop.f32.mrf.mxu0
      %v4445 = vadd.f32 0.0, %v4444
      %v4446 = vpop.f32.mrf.mxu0
      %v4447 = vadd.f32 0.0, %v4446
      %4448 = vmatmul.bf16.gmra.mxu0 %v4364
      %v4449 = vpop.f32.mrf.mxu0
      %v4450 = vadd.f32 0.0, %v4449
      %v4451 = vpop.f32.mrf.mxu0
      %v4452 = vadd.f32 0.0, %v4451
      %4453 = vmatmul.bf16.gmra.mxu0 %v4367
      %v4454 = vpop.f32.mrf.mxu0
      %v4455 = vadd.f32 0.0, %v4454
      %v4456 = vpop.f32.mrf.mxu0
      %v4457 = vadd.f32 0.0, %v4456
      %4458 = vmatmul.bf16.gmra.mxu0 %v4370
      %v4459 = vpop.f32.mrf.mxu0
      %v4460 = vadd.f32 0.0, %v4459
      %v4461 = vpop.f32.mrf.mxu0
      %v4462 = vadd.f32 0.0, %v4461
      %4463 = vdwg.mxu0
      %v4464 = vadd.f32 %v3810, %v4385
      %v4465 = vadd.f32 %v3811, %v4387
      %v4466 = vadd.f32 %v3812, %v4390
      %v4467 = vadd.f32 %v3813, %v4392
      %v4468 = vadd.f32 %v3814, %v4395
      %v4469 = vadd.f32 %v3815, %v4397
      %v4470 = vadd.f32 %v3816, %v4400
      %v4471 = vadd.f32 %v3817, %v4402
      %v4472 = vadd.f32 %v3818, %v4405
      %v4473 = vadd.f32 %v3819, %v4407
      %v4474 = vadd.f32 %v3820, %v4410
      %v4475 = vadd.f32 %v3821, %v4412
      %v4476 = vadd.f32 %v3822, %v4415
      %v4477 = vadd.f32 %v3823, %v4417
      %v4478 = vadd.f32 %v3824, %v4420
      %v4479 = vadd.f32 %v3825, %v4422
      %v4480 = vadd.f32 %v3826, %v4425
      %v4481 = vadd.f32 %v3827, %v4427
      %v4482 = vadd.f32 %v3828, %v4430
      %v4483 = vadd.f32 %v3829, %v4432
      %v4484 = vadd.f32 %v3830, %v4435
      %v4485 = vadd.f32 %v3831, %v4437
      %v4486 = vadd.f32 %v3832, %v4440
      %v4487 = vadd.f32 %v3833, %v4442
      %v4488 = vadd.f32 %v3834, %v4445
      %v4489 = vadd.f32 %v3835, %v4447
      %v4490 = vadd.f32 %v3836, %v4450
      %v4491 = vadd.f32 %v3837, %v4452
      %v4492 = vadd.f32 %v3838, %v4455
      %v4493 = vadd.f32 %v3839, %v4457
      %v4494 = vadd.f32 %v3840, %v4460
      %v4495 = vadd.f32 %v3841, %v4462
      %v4496 = vld [vmem:[%s3555] sm:$0xe]
      %v4497 = vld [vmem:[%s3555 + $0xc] sm:$0xe]
      %v4498 = vld [vmem:[%s3555 + $0x18] sm:$0xe]
      %v4499 = vld [vmem:[%s3555 + $0x24] sm:$0xe]
      %v4500 = vld [vmem:[%s3555 + $0x30] sm:$0xe]
      %v4501 = vld [vmem:[%s3555 + $0x3c] sm:$0xe]
      %v4502 = vld [vmem:[%s3555 + $0x48] sm:$0xe]
      %v4503 = vld [vmem:[%s3555 + $0x54] sm:$0xe]
      %v4504 = vld [vmem:[%s3555 + $0x60] sm:$0xe]
      %v4505 = vld [vmem:[%s3555 + $0x6c] sm:$0xe]
      %v4506 = vld [vmem:[%s3555 + $0x78] sm:$0xe]
      %v4507 = vld [vmem:[%s3555 + $0x84] sm:$0xe]
      %v4508 = vld [vmem:[%s3555 + $0x90] sm:$0xe]
      %v4509 = vld [vmem:[%s3555 + $0x9c] sm:$0xe]
      %v4510 = vld [vmem:[%s3555 + $0xa8] sm:$0xe]
      %v4511 = vld [vmem:[%s3555 + $0xb4] sm:$0xe]
      %v4560 = vrot.slane %v4496, 5
      %v4561 = vrot.slane %v4560, 4
      %v4562 = vrot.slane %v3843, 5
      %v4563 = vsel %vm1882, %v4561, %v4562
      %v4564 = vrot.slane %v4562, 4
      %v4565 = vrot.slane %v3844, 5
      %v4566 = vsel %vm1882, %v4564, %v4565
      %v4567 = vrot.slane %v4497, 5
      %v4568 = vrot.slane %v4567, 4
      %v4569 = vrot.slane %v3846, 5
      %v4570 = vsel %vm1882, %v4568, %v4569
      %v4571 = vrot.slane %v4569, 4
      %v4572 = vrot.slane %v3847, 5
      %v4573 = vsel %vm1882, %v4571, %v4572
      %v4574 = vrot.slane %v4498, 5
      %v4575 = vrot.slane %v4574, 4
      %v4576 = vrot.slane %v3849, 5
      %v4577 = vsel %vm1882, %v4575, %v4576
      %v4578 = vrot.slane %v4576, 4
      %v4579 = vrot.slane %v3850, 5
      %v4580 = vsel %vm1882, %v4578, %v4579
      %v4581 = vrot.slane %v4499, 5
      %v4582 = vrot.slane %v4581, 4
      %v4583 = vrot.slane %v3852, 5
      %v4584 = vsel %vm1882, %v4582, %v4583
      %v4585 = vrot.slane %v4583, 4
      %v4586 = vrot.slane %v3853, 5
      %v4587 = vsel %vm1882, %v4585, %v4586
      %v4588 = vrot.slane %v4500, 5
      %v4589 = vrot.slane %v4588, 4
      %v4590 = vrot.slane %v3855, 5
      %v4591 = vsel %vm1882, %v4589, %v4590
      %v4592 = vrot.slane %v4590, 4
      %v4593 = vrot.slane %v3856, 5
      %v4594 = vsel %vm1882, %v4592, %v4593
      %v4595 = vrot.slane %v4501, 5
      %v4596 = vrot.slane %v4595, 4
      %v4597 = vrot.slane %v3858, 5
      %v4598 = vsel %vm1882, %v4596, %v4597
      %v4599 = vrot.slane %v4597, 4
      %v4600 = vrot.slane %v3859, 5
      %v4601 = vsel %vm1882, %v4599, %v4600
      %v4602 = vrot.slane %v4502, 5
      %v4603 = vrot.slane %v4602, 4
      %v4604 = vrot.slane %v3861, 5
      %v4605 = vsel %vm1882, %v4603, %v4604
      %v4606 = vrot.slane %v4604, 4
      %v4607 = vrot.slane %v3862, 5
      %v4608 = vsel %vm1882, %v4606, %v4607
      %v4609 = vrot.slane %v4503, 5
      %v4610 = vrot.slane %v4609, 4
      %v4611 = vrot.slane %v3864, 5
      %v4612 = vsel %vm1882, %v4610, %v4611
      %v4613 = vrot.slane %v4611, 4
      %v4614 = vrot.slane %v3865, 5
      %v4615 = vsel %vm1882, %v4613, %v4614
      %v4616 = vrot.slane %v4504, 5
      %v4617 = vrot.slane %v4616, 4
      %v4618 = vrot.slane %v3867, 5
      %v4619 = vsel %vm1882, %v4617, %v4618
      %v4620 = vrot.slane %v4618, 4
      %v4621 = vrot.slane %v3868, 5
      %v4622 = vsel %vm1882, %v4620, %v4621
      %v4623 = vrot.slane %v4505, 5
      %v4624 = vrot.slane %v4623, 4
      %v4625 = vrot.slane %v3870, 5
      %v4626 = vsel %vm1882, %v4624, %v4625
      %v4627 = vrot.slane %v4625, 4
      %v4628 = vrot.slane %v3871, 5
      %v4629 = vsel %vm1882, %v4627, %v4628
      %v4630 = vrot.slane %v4506, 5
      %v4631 = vrot.slane %v4630, 4
      %v4632 = vrot.slane %v3873, 5
      %v4633 = vsel %vm1882, %v4631, %v4632
      %v4634 = vrot.slane %v4632, 4
      %v4635 = vrot.slane %v3874, 5
      %v4636 = vsel %vm1882, %v4634, %v4635
      %v4637 = vrot.slane %v4507, 5
      %v4638 = vrot.slane %v4637, 4
      %v4639 = vrot.slane %v3876, 5
      %v4640 = vsel %vm1882, %v4638, %v4639
      %v4641 = vrot.slane %v4639, 4
      %v4642 = vrot.slane %v3877, 5
      %v4643 = vsel %vm1882, %v4641, %v4642
      %v4644 = vrot.slane %v4508, 5
      %v4645 = vrot.slane %v4644, 4
      %v4646 = vrot.slane %v3879, 5
      %v4647 = vsel %vm1882, %v4645, %v4646
      %v4648 = vrot.slane %v4646, 4
      %v4649 = vrot.slane %v3880, 5
      %v4650 = vsel %vm1882, %v4648, %v4649
      %v4651 = vrot.slane %v4509, 5
      %v4652 = vrot.slane %v4651, 4
      %v4653 = vrot.slane %v3882, 5
      %v4654 = vsel %vm1882, %v4652, %v4653
      %v4655 = vrot.slane %v4653, 4
      %v4656 = vrot.slane %v3883, 5
      %v4657 = vsel %vm1882, %v4655, %v4656
      %v4658 = vrot.slane %v4510, 5
      %v4659 = vrot.slane %v4658, 4
      %v4660 = vrot.slane %v3885, 5
      %v4661 = vsel %vm1882, %v4659, %v4660
      %v4662 = vrot.slane %v4660, 4
      %v4663 = vrot.slane %v3886, 5
      %v4664 = vsel %vm1882, %v4662, %v4663
      %v4665 = vrot.slane %v4511, 5
      %v4666 = vrot.slane %v4665, 4
      %v4667 = vrot.slane %v3888, 5
      %v4668 = vsel %vm1882, %v4666, %v4667
      %v4669 = vrot.slane %v4667, 4
      %v4670 = vrot.slane %v3889, 5
      %v4671 = vsel %vm1882, %v4669, %v4670
      %s4672 = scalar_lea.vmem %s3, 32
      %v4673 = vld [vmem:[%s4672] sm:$0xf]
      %v4674 = vunpack.c.l.b16 %v4563
      %v4675 = vunpack.c.l.b16 %v4566
      %v4676 = vunpack.c.l.b16 %v4570
      %v4677 = vunpack.c.l.b16 %v4573
      %v4678 = vunpack.c.l.b16 %v4577
      %v4679 = vunpack.c.l.b16 %v4580
      %v4680 = vunpack.c.l.b16 %v4584
      %v4681 = vunpack.c.l.b16 %v4587
      %v4682 = vunpack.c.l.b16 %v4591
      %v4683 = vunpack.c.l.b16 %v4594
      %v4684 = vunpack.c.l.b16 %v4598
      %v4685 = vunpack.c.l.b16 %v4601
      %v4686 = vunpack.c.l.b16 %v4605
      %v4687 = vunpack.c.l.b16 %v4608
      %v4688 = vunpack.c.l.b16 %v4612
      %v4689 = vunpack.c.l.b16 %v4615
      %v4690 = vunpack.c.l.b16 %v4619
      %v4691 = vunpack.c.l.b16 %v4622
      %v4692 = vunpack.c.l.b16 %v4626
      %v4693 = vunpack.c.l.b16 %v4629
      %v4694 = vunpack.c.l.b16 %v4633
      %v4695 = vunpack.c.l.b16 %v4636
      %v4696 = vunpack.c.l.b16 %v4640
      %v4697 = vunpack.c.l.b16 %v4643
      %v4698 = vunpack.c.l.b16 %v4647
      %v4699 = vunpack.c.l.b16 %v4650
      %v4700 = vunpack.c.l.b16 %v4654
      %v4701 = vunpack.c.l.b16 %v4657
      %v4702 = vunpack.c.l.b16 %v4661
      %v4703 = vunpack.c.l.b16 %v4664
      %v4704 = vunpack.c.l.b16 %v4668
      %v4705 = vunpack.c.l.b16 %v4671
      %v4706 = vpack.c.b16 %v4675, %v4674
      %v4707 = vpack.c.b16 %v4677, %v4676
      %v4708 = vpack.c.b16 %v4679, %v4678
      %v4709 = vpack.c.b16 %v4681, %v4680
      %v4710 = vpack.c.b16 %v4683, %v4682
      %v4711 = vpack.c.b16 %v4685, %v4684
      %v4712 = vpack.c.b16 %v4687, %v4686
      %v4713 = vpack.c.b16 %v4689, %v4688
      %v4714 = vpack.c.b16 %v4691, %v4690
      %v4715 = vpack.c.b16 %v4693, %v4692
      %v4716 = vpack.c.b16 %v4695, %v4694
      %v4717 = vpack.c.b16 %v4697, %v4696
      %v4718 = vpack.c.b16 %v4699, %v4698
      %v4719 = vpack.c.b16 %v4701, %v4700
      %v4720 = vpack.c.b16 %v4703, %v4702
      %v4721 = vpack.c.b16 %v4705, %v4704
      %v4723 = vsel %vm1470, %v4706, 0
      %v4726 = vsel %vm1470, %v4707, 0
      %v4729 = vsel %vm1470, %v4708, 0
      %v4732 = vsel %vm1470, %v4709, 0
      %v4735 = vsel %vm1470, %v4710, 0
      %v4738 = vsel %vm1470, %v4711, 0
      %v4741 = vsel %vm1470, %v4712, 0
      %v4744 = vsel %vm1470, %v4713, 0
      %v4747 = vsel %vm1470, %v4714, 0
      %v4750 = vsel %vm1470, %v4715, 0
      %v4753 = vsel %vm1470, %v4716, 0
      %v4756 = vsel %vm1470, %v4717, 0
      %v4759 = vsel %vm1470, %v4718, 0
      %v4762 = vsel %vm1470, %v4719, 0
      %v4765 = vsel %vm1470, %v4720, 0
      %v4768 = vsel %vm1470, %v4721, 0
      %v4771 = vsel %vm1519, %v4673, 0
      %4773 = vmatpush.bf16.msra.mxu0 0
      %4774 = vmatpush.bf16.msra.mxu0 0
      %4775 = vmatpush.bf16.msra.mxu0 0
      %4776 = vmatpush.bf16.msra.mxu0 0
      %4777 = vmatpush.bf16.msra.mxu0 0
      %4778 = vmatpush.bf16.msra.mxu0 0
      %4779 = vmatpush.bf16.msra.mxu0 0
      %4780 = vmatpush.bf16.msra.mxu0 %v4771
      %4781 = vmatmul.bf16.gmra.mxu0 %v4723
      %v4782 = vpop.f32.mrf.mxu0
      %v4783 = vadd.f32 0.0, %v4782
      %v4784 = vpop.f32.mrf.mxu0
      %v4785 = vadd.f32 0.0, %v4784
      %4786 = vmatmul.bf16.gmra.mxu0 %v4726
      %v4787 = vpop.f32.mrf.mxu0
      %v4788 = vadd.f32 0.0, %v4787
      %v4789 = vpop.f32.mrf.mxu0
      %v4790 = vadd.f32 0.0, %v4789
      %4791 = vmatmul.bf16.gmra.mxu0 %v4729
      %v4792 = vpop.f32.mrf.mxu0
      %v4793 = vadd.f32 0.0, %v4792
      %v4794 = vpop.f32.mrf.mxu0
      %v4795 = vadd.f32 0.0, %v4794
      %4796 = vmatmul.bf16.gmra.mxu0 %v4732
      %v4797 = vpop.f32.mrf.mxu0
      %v4798 = vadd.f32 0.0, %v4797
      %v4799 = vpop.f32.mrf.mxu0
      %v4800 = vadd.f32 0.0, %v4799
      %4801 = vmatmul.bf16.gmra.mxu0 %v4735
      %v4802 = vpop.f32.mrf.mxu0
      %v4803 = vadd.f32 0.0, %v4802
      %v4804 = vpop.f32.mrf.mxu0
      %v4805 = vadd.f32 0.0, %v4804
      %4806 = vmatmul.bf16.gmra.mxu0 %v4738
      %v4807 = vpop.f32.mrf.mxu0
      %v4808 = vadd.f32 0.0, %v4807
      %v4809 = vpop.f32.mrf.mxu0
      %v4810 = vadd.f32 0.0, %v4809
      %4811 = vmatmul.bf16.gmra.mxu0 %v4741
      %v4812 = vpop.f32.mrf.mxu0
      %v4813 = vadd.f32 0.0, %v4812
      %v4814 = vpop.f32.mrf.mxu0
      %v4815 = vadd.f32 0.0, %v4814
      %4816 = vmatmul.bf16.gmra.mxu0 %v4744
      %v4817 = vpop.f32.mrf.mxu0
      %v4818 = vadd.f32 0.0, %v4817
      %v4819 = vpop.f32.mrf.mxu0
      %v4820 = vadd.f32 0.0, %v4819
      %4821 = vmatmul.bf16.gmra.mxu0 %v4747
      %v4822 = vpop.f32.mrf.mxu0
      %v4823 = vadd.f32 0.0, %v4822
      %v4824 = vpop.f32.mrf.mxu0
      %v4825 = vadd.f32 0.0, %v4824
      %4826 = vmatmul.bf16.gmra.mxu0 %v4750
      %v4827 = vpop.f32.mrf.mxu0
      %v4828 = vadd.f32 0.0, %v4827
      %v4829 = vpop.f32.mrf.mxu0
      %v4830 = vadd.f32 0.0, %v4829
      %4831 = vmatmul.bf16.gmra.mxu0 %v4753
      %v4832 = vpop.f32.mrf.mxu0
      %v4833 = vadd.f32 0.0, %v4832
      %v4834 = vpop.f32.mrf.mxu0
      %v4835 = vadd.f32 0.0, %v4834
      %4836 = vmatmul.bf16.gmra.mxu0 %v4756
      %v4837 = vpop.f32.mrf.mxu0
      %v4838 = vadd.f32 0.0, %v4837
      %v4839 = vpop.f32.mrf.mxu0
      %v4840 = vadd.f32 0.0, %v4839
      %4841 = vmatmul.bf16.gmra.mxu0 %v4759
      %v4842 = vpop.f32.mrf.mxu0
      %v4843 = vadd.f32 0.0, %v4842
      %v4844 = vpop.f32.mrf.mxu0
      %v4845 = vadd.f32 0.0, %v4844
      %4846 = vmatmul.bf16.gmra.mxu0 %v4762
      %v4847 = vpop.f32.mrf.mxu0
      %v4848 = vadd.f32 0.0, %v4847
      %v4849 = vpop.f32.mrf.mxu0
      %v4850 = vadd.f32 0.0, %v4849
      %4851 = vmatmul.bf16.gmra.mxu0 %v4765
      %v4852 = vpop.f32.mrf.mxu0
      %v4853 = vadd.f32 0.0, %v4852
      %v4854 = vpop.f32.mrf.mxu0
      %v4855 = vadd.f32 0.0, %v4854
      %4856 = vmatmul.bf16.gmra.mxu0 %v4768
      %v4857 = vpop.f32.mrf.mxu0
      %v4858 = vadd.f32 0.0, %v4857
      %v4859 = vpop.f32.mrf.mxu0
      %v4860 = vadd.f32 0.0, %v4859
      %4861 = vdwg.mxu0
      %v4862 = vadd.f32 %v4464, %v4783
      %v4863 = vadd.f32 %v4465, %v4785
      %v4864 = vadd.f32 %v4466, %v4788
      %v4865 = vadd.f32 %v4467, %v4790
      %v4866 = vadd.f32 %v4468, %v4793
      %v4867 = vadd.f32 %v4469, %v4795
      %v4868 = vadd.f32 %v4470, %v4798
      %v4869 = vadd.f32 %v4471, %v4800
      %v4870 = vadd.f32 %v4472, %v4803
      %v4871 = vadd.f32 %v4473, %v4805
      %v4872 = vadd.f32 %v4474, %v4808
      %v4873 = vadd.f32 %v4475, %v4810
      %v4874 = vadd.f32 %v4476, %v4813
      %v4875 = vadd.f32 %v4477, %v4815
      %v4876 = vadd.f32 %v4478, %v4818
      %v4877 = vadd.f32 %v4479, %v4820
      %v4878 = vadd.f32 %v4480, %v4823
      %v4879 = vadd.f32 %v4481, %v4825
      %v4880 = vadd.f32 %v4482, %v4828
      %v4881 = vadd.f32 %v4483, %v4830
      %v4882 = vadd.f32 %v4484, %v4833
      %v4883 = vadd.f32 %v4485, %v4835
      %v4884 = vadd.f32 %v4486, %v4838
      %v4885 = vadd.f32 %v4487, %v4840
      %v4886 = vadd.f32 %v4488, %v4843
      %v4887 = vadd.f32 %v4489, %v4845
      %v4888 = vadd.f32 %v4490, %v4848
      %v4889 = vadd.f32 %v4491, %v4850
      %v4890 = vadd.f32 %v4492, %v4853
      %v4891 = vadd.f32 %v4493, %v4855
      %v4892 = vadd.f32 %v4494, %v4858
      %v4893 = vadd.f32 %v4495, %v4860
      %v4894 = vpack.c.bf16 %v4862, %v4862
      %v4895 = vpack.c.bf16 %v4863, %v4863
      %v4896 = vpack.c.bf16 %v4864, %v4864
      %v4897 = vpack.c.bf16 %v4865, %v4865
      %v4898 = vpack.c.bf16 %v4866, %v4866
      %v4899 = vpack.c.bf16 %v4867, %v4867
      %v4900 = vpack.c.bf16 %v4868, %v4868
      %v4901 = vpack.c.bf16 %v4869, %v4869
      %v4902 = vpack.c.bf16 %v4870, %v4870
      %v4903 = vpack.c.bf16 %v4871, %v4871
      %v4904 = vpack.c.bf16 %v4872, %v4872
      %v4905 = vpack.c.bf16 %v4873, %v4873
      %v4906 = vpack.c.bf16 %v4874, %v4874
      %v4907 = vpack.c.bf16 %v4875, %v4875
      %v4908 = vpack.c.bf16 %v4876, %v4876
      %v4909 = vpack.c.bf16 %v4877, %v4877
      %v4910 = vpack.c.bf16 %v4878, %v4878
      %v4911 = vpack.c.bf16 %v4879, %v4879
      %v4912 = vpack.c.bf16 %v4880, %v4880
      %v4913 = vpack.c.bf16 %v4881, %v4881
      %v4914 = vpack.c.bf16 %v4882, %v4882
      %v4915 = vpack.c.bf16 %v4883, %v4883
      %v4916 = vpack.c.bf16 %v4884, %v4884
      %v4917 = vpack.c.bf16 %v4885, %v4885
      %v4918 = vpack.c.bf16 %v4886, %v4886
      %v4919 = vpack.c.bf16 %v4887, %v4887
      %v4920 = vpack.c.bf16 %v4888, %v4888
      %v4921 = vpack.c.bf16 %v4889, %v4889
      %v4922 = vpack.c.bf16 %v4890, %v4890
      %v4923 = vpack.c.bf16 %v4891, %v4891
      %v4924 = vpack.c.bf16 %v4892, %v4892
      %v4925 = vpack.c.bf16 %v4893, %v4893
      %4926 = vst.msk [vmem:[%s231] sm:$0xf] %vm437, %v4894
      %4927 = vst.msk [vmem:[%s231 + $0x4] sm:$0xf] %vm437, %v4895
      %4928 = vst.msk [vmem:[%s231 + $0x8] sm:$0xf] %vm437, %v4896
      %4929 = vst.msk [vmem:[%s231 + $0xc] sm:$0xf] %vm437, %v4897
      %4930 = vst.msk [vmem:[%s231 + $0x10] sm:$0xf] %vm437, %v4898
      %4931 = vst.msk [vmem:[%s231 + $0x14] sm:$0xf] %vm437, %v4899
      %4932 = vst.msk [vmem:[%s231 + $0x18] sm:$0xf] %vm437, %v4900
      %4933 = vst.msk [vmem:[%s231 + $0x1c] sm:$0xf] %vm437, %v4901
      %4934 = vst.msk [vmem:[%s231 + $0x20] sm:$0xf] %vm437, %v4902
      %4935 = vst.msk [vmem:[%s231 + $0x24] sm:$0xf] %vm437, %v4903
      %4936 = vst.msk [vmem:[%s231 + $0x28] sm:$0xf] %vm437, %v4904
      %4937 = vst.msk [vmem:[%s231 + $0x2c] sm:$0xf] %vm437, %v4905
      %4938 = vst.msk [vmem:[%s231 + $0x30] sm:$0xf] %vm437, %v4906
      %4939 = vst.msk [vmem:[%s231 + $0x34] sm:$0xf] %vm437, %v4907
      %4940 = vst.msk [vmem:[%s231 + $0x38] sm:$0xf] %vm437, %v4908
      %4941 = vst.msk [vmem:[%s231 + $0x3c] sm:$0xf] %vm437, %v4909
      %4942 = vst.msk [vmem:[%s231 + $0x40] sm:$0xf] %vm437, %v4910
      %4943 = vst.msk [vmem:[%s231 + $0x44] sm:$0xf] %vm437, %v4911
      %4944 = vst.msk [vmem:[%s231 + $0x48] sm:$0xf] %vm437, %v4912
      %4945 = vst.msk [vmem:[%s231 + $0x4c] sm:$0xf] %vm437, %v4913
      %4946 = vst.msk [vmem:[%s231 + $0x50] sm:$0xf] %vm437, %v4914
      %4947 = vst.msk [vmem:[%s231 + $0x54] sm:$0xf] %vm437, %v4915
      %4948 = vst.msk [vmem:[%s231 + $0x58] sm:$0xf] %vm437, %v4916
      %4949 = vst.msk [vmem:[%s231 + $0x5c] sm:$0xf] %vm437, %v4917
      %4950 = vst.msk [vmem:[%s231 + $0x60] sm:$0xf] %vm437, %v4918
      %4951 = vst.msk [vmem:[%s231 + $0x64] sm:$0xf] %vm437, %v4919
      %4952 = vst.msk [vmem:[%s231 + $0x68] sm:$0xf] %vm437, %v4920
      %4953 = vst.msk [vmem:[%s231 + $0x6c] sm:$0xf] %vm437, %v4921
      %4954 = vst.msk [vmem:[%s231 + $0x70] sm:$0xf] %vm437, %v4922
      %4955 = vst.msk [vmem:[%s231 + $0x74] sm:$0xf] %vm437, %v4923
      %4956 = vst.msk [vmem:[%s231 + $0x78] sm:$0xf] %vm437, %v4924
      %4957 = vst.msk [vmem:[%s231 + $0x7c] sm:$0xf] %vm437, %v4925
      %v4958 = vsel %vm1470, %v4862, 0.0
      %v4959 = vsel %vm1470, %v4863, 0.0
      %v4960 = vadd.f32 %v4958, %v4959
      %v4961 = vsel %vm1470, %v4864, 0.0
      %v4962 = vadd.f32 %v4960, %v4961
      %v4963 = vsel %vm1470, %v4865, 0.0
      %v4964 = vadd.f32 %v4962, %v4963
      %v4965 = vsel %vm1470, %v4866, 0.0
      %v4966 = vadd.f32 %v4964, %v4965
      %v4967 = vsel %vm1470, %v4867, 0.0
      %v4968 = vadd.f32 %v4966, %v4967
      %v4969 = vsel %vm1470, %v4868, 0.0
      %v4970 = vadd.f32 %v4968, %v4969
      %v4971 = vsel %vm1470, %v4869, 0.0
      %v4972 = vadd.f32 %v4970, %v4971
      %v4973 = vsel %vm1470, %v4870, 0.0
      %v4974 = vadd.f32 %v4972, %v4973
      %v4975 = vsel %vm1470, %v4871, 0.0
      %v4976 = vadd.f32 %v4974, %v4975
      %v4977 = vsel %vm1470, %v4872, 0.0
      %v4978 = vadd.f32 %v4976, %v4977
      %v4979 = vsel %vm1470, %v4873, 0.0
      %v4980 = vadd.f32 %v4978, %v4979
      %v4981 = vsel %vm1470, %v4874, 0.0
      %v4982 = vadd.f32 %v4980, %v4981
      %v4983 = vsel %vm1470, %v4875, 0.0
      %v4984 = vadd.f32 %v4982, %v4983
      %v4985 = vsel %vm1470, %v4876, 0.0
      %v4986 = vadd.f32 %v4984, %v4985
      %v4987 = vsel %vm1470, %v4877, 0.0
      %v4988 = vadd.f32 %v4986, %v4987
      %v4989 = vsel %vm1470, %v4878, 0.0
      %v4990 = vadd.f32 %v4988, %v4989
      %v4991 = vsel %vm1470, %v4879, 0.0
      %v4992 = vadd.f32 %v4990, %v4991
      %v4993 = vsel %vm1470, %v4880, 0.0
      %v4994 = vadd.f32 %v4992, %v4993
      %v4995 = vsel %vm1470, %v4881, 0.0
      %v4996 = vadd.f32 %v4994, %v4995
      %v4997 = vsel %vm1470, %v4882, 0.0
      %v4998 = vadd.f32 %v4996, %v4997
      %v4999 = vsel %vm1470, %v4883, 0.0
      %v5000 = vadd.f32 %v4998, %v4999
      %v5001 = vsel %vm1470, %v4884, 0.0
      %v5002 = vadd.f32 %v5000, %v5001
      %v5003 = vsel %vm1470, %v4885, 0.0
      %v5004 = vadd.f32 %v5002, %v5003
      %v5005 = vsel %vm1470, %v4886, 0.0
      %v5006 = vadd.f32 %v5004, %v5005
      %v5007 = vsel %vm1470, %v4887, 0.0
      %v5008 = vadd.f32 %v5006, %v5007
      %v5009 = vsel %vm1470, %v4888, 0.0
      %v5010 = vadd.f32 %v5008, %v5009
      %v5011 = vsel %vm1470, %v4889, 0.0
      %v5012 = vadd.f32 %v5010, %v5011
      %v5013 = vsel %vm1470, %v4890, 0.0
      %v5014 = vadd.f32 %v5012, %v5013
      %v5015 = vsel %vm1470, %v4891, 0.0
      %v5016 = vadd.f32 %v5014, %v5015
      %v5017 = vsel %vm1470, %v4892, 0.0
      %v5018 = vadd.f32 %v5016, %v5017
      %v5019 = vsel %vm1470, %v4893, 0.0
      %v5020 = vadd.f32 %v5018, %v5019
      %v5021 = vrot.slane %v5020, 4
      %v5022 = vadd.f32 %v5020, %v5021
      %v5023 = vrot.slane %v5022, 2
      %v5024 = vadd.f32 %v5022, %v5023
      %v5025 = vrot.slane %v5024, 1
      %v5026 = vadd.f32 %v5024, %v5025
      %v5027 = vmul.f32 %v5026, 0.00390625
      %v5028 = vsub.f32 %v4862, %v5027
      %v5029 = vsub.f32 %v4863, %v5027
      %v5030 = vsub.f32 %v4864, %v5027
      %v5031 = vsub.f32 %v4865, %v5027
      %v5032 = vsub.f32 %v4866, %v5027
      %v5033 = vsub.f32 %v4867, %v5027
      %v5034 = vsub.f32 %v4868, %v5027
      %v5035 = vsub.f32 %v4869, %v5027
      %v5036 = vsub.f32 %v4870, %v5027
      %v5037 = vsub.f32 %v4871, %v5027
      %v5038 = vsub.f32 %v4872, %v5027
      %v5039 = vsub.f32 %v4873, %v5027
      %v5040 = vsub.f32 %v4874, %v5027
      %v5041 = vsub.f32 %v4875, %v5027
      %v5042 = vsub.f32 %v4876, %v5027
      %v5043 = vsub.f32 %v4877, %v5027
      %v5044 = vsub.f32 %v4878, %v5027
      %v5045 = vsub.f32 %v4879, %v5027
      %v5046 = vsub.f32 %v4880, %v5027
      %v5047 = vsub.f32 %v4881, %v5027
      %v5048 = vsub.f32 %v4882, %v5027
      %v5049 = vsub.f32 %v4883, %v5027
      %v5050 = vsub.f32 %v4884, %v5027
      %v5051 = vsub.f32 %v4885, %v5027
      %v5052 = vsub.f32 %v4886, %v5027
      %v5053 = vsub.f32 %v4887, %v5027
      %v5054 = vsub.f32 %v4888, %v5027
      %v5055 = vsub.f32 %v4889, %v5027
      %v5056 = vsub.f32 %v4890, %v5027
      %v5057 = vsub.f32 %v4891, %v5027
      %v5058 = vsub.f32 %v4892, %v5027
      %v5059 = vsub.f32 %v4893, %v5027
      %v5060 = vmul.f32 %v5028, %v5028
      %v5061 = vmul.f32 %v5029, %v5029
      %v5062 = vmul.f32 %v5030, %v5030
      %v5063 = vmul.f32 %v5031, %v5031
      %v5064 = vmul.f32 %v5032, %v5032
      %v5065 = vmul.f32 %v5033, %v5033
      %v5066 = vmul.f32 %v5034, %v5034
      %v5067 = vmul.f32 %v5035, %v5035
      %v5068 = vmul.f32 %v5036, %v5036
      %v5069 = vmul.f32 %v5037, %v5037
      %v5070 = vmul.f32 %v5038, %v5038
      %v5071 = vmul.f32 %v5039, %v5039
      %v5072 = vmul.f32 %v5040, %v5040
      %v5073 = vmul.f32 %v5041, %v5041
      %v5074 = vmul.f32 %v5042, %v5042
      %v5075 = vmul.f32 %v5043, %v5043
      %v5076 = vmul.f32 %v5044, %v5044
      %v5077 = vmul.f32 %v5045, %v5045
      %v5078 = vmul.f32 %v5046, %v5046
      %v5079 = vmul.f32 %v5047, %v5047
      %v5080 = vmul.f32 %v5048, %v5048
      %v5081 = vmul.f32 %v5049, %v5049
      %v5082 = vmul.f32 %v5050, %v5050
      %v5083 = vmul.f32 %v5051, %v5051
      %v5084 = vmul.f32 %v5052, %v5052
      %v5085 = vmul.f32 %v5053, %v5053
      %v5086 = vmul.f32 %v5054, %v5054
      %v5087 = vmul.f32 %v5055, %v5055
      %v5088 = vmul.f32 %v5056, %v5056
      %v5089 = vmul.f32 %v5057, %v5057
      %v5090 = vmul.f32 %v5058, %v5058
      %v5091 = vmul.f32 %v5059, %v5059
      %v5092 = vsel %vm1470, %v5060, 0.0
      %v5093 = vsel %vm1470, %v5061, 0.0
      %v5094 = vadd.f32 %v5092, %v5093
      %v5095 = vsel %vm1470, %v5062, 0.0
      %v5096 = vadd.f32 %v5094, %v5095
      %v5097 = vsel %vm1470, %v5063, 0.0
      %v5098 = vadd.f32 %v5096, %v5097
      %v5099 = vsel %vm1470, %v5064, 0.0
      %v5100 = vadd.f32 %v5098, %v5099
      %v5101 = vsel %vm1470, %v5065, 0.0
      %v5102 = vadd.f32 %v5100, %v5101
      %v5103 = vsel %vm1470, %v5066, 0.0
      %v5104 = vadd.f32 %v5102, %v5103
      %v5105 = vsel %vm1470, %v5067, 0.0
      %v5106 = vadd.f32 %v5104, %v5105
      %v5107 = vsel %vm1470, %v5068, 0.0
      %v5108 = vadd.f32 %v5106, %v5107
      %v5109 = vsel %vm1470, %v5069, 0.0
      %v5110 = vadd.f32 %v5108, %v5109
      %v5111 = vsel %vm1470, %v5070, 0.0
      %v5112 = vadd.f32 %v5110, %v5111
      %v5113 = vsel %vm1470, %v5071, 0.0
      %v5114 = vadd.f32 %v5112, %v5113
      %v5115 = vsel %vm1470, %v5072, 0.0
      %v5116 = vadd.f32 %v5114, %v5115
      %v5117 = vsel %vm1470, %v5073, 0.0
      %v5118 = vadd.f32 %v5116, %v5117
      %v5119 = vsel %vm1470, %v5074, 0.0
      %v5120 = vadd.f32 %v5118, %v5119
      %v5121 = vsel %vm1470, %v5075, 0.0
      %v5122 = vadd.f32 %v5120, %v5121
      %v5123 = vsel %vm1470, %v5076, 0.0
      %v5124 = vadd.f32 %v5122, %v5123
      %v5125 = vsel %vm1470, %v5077, 0.0
      %v5126 = vadd.f32 %v5124, %v5125
      %v5127 = vsel %vm1470, %v5078, 0.0
      %v5128 = vadd.f32 %v5126, %v5127
      %v5129 = vsel %vm1470, %v5079, 0.0
      %v5130 = vadd.f32 %v5128, %v5129
      %v5131 = vsel %vm1470, %v5080, 0.0
      %v5132 = vadd.f32 %v5130, %v5131
      %v5133 = vsel %vm1470, %v5081, 0.0
      %v5134 = vadd.f32 %v5132, %v5133
      %v5135 = vsel %vm1470, %v5082, 0.0
      %v5136 = vadd.f32 %v5134, %v5135
      %v5137 = vsel %vm1470, %v5083, 0.0
      %v5138 = vadd.f32 %v5136, %v5137
      %v5139 = vsel %vm1470, %v5084, 0.0
      %v5140 = vadd.f32 %v5138, %v5139
      %v5141 = vsel %vm1470, %v5085, 0.0
      %v5142 = vadd.f32 %v5140, %v5141
      %v5143 = vsel %vm1470, %v5086, 0.0
      %v5144 = vadd.f32 %v5142, %v5143
      %v5145 = vsel %vm1470, %v5087, 0.0
      %v5146 = vadd.f32 %v5144, %v5145
      %v5147 = vsel %vm1470, %v5088, 0.0
      %v5148 = vadd.f32 %v5146, %v5147
      %v5149 = vsel %vm1470, %v5089, 0.0
      %v5150 = vadd.f32 %v5148, %v5149
      %v5151 = vsel %vm1470, %v5090, 0.0
      %v5152 = vadd.f32 %v5150, %v5151
      %v5153 = vsel %vm1470, %v5091, 0.0
      %v5154 = vadd.f32 %v5152, %v5153
      %v5155 = vrot.slane %v5154, 4
      %v5156 = vadd.f32 %v5154, %v5155
      %v5157 = vrot.slane %v5156, 2
      %v5158 = vadd.f32 %v5156, %v5157
      %v5159 = vrot.slane %v5158, 1
      %v5160 = vadd.f32 %v5158, %v5159
      %vm5161 = vcmask 1040384
      %v5162 = vsel %vm5161, %v5026, %v5160
      %vm5163 = vcmask 58368
      %5164 = vst.msk [vmem:[%s235] sm:$0x3] %vm5163, %v5162
      %p5165 = scmp.lt.s32.totalorder %s17, 1
      %s5166 = scalar_select %p5165, %s17, 1
      %s5167 = smul.addr %s5166, 32
      %s5168 = smul.addr %s5167, 4
      %s5169 = scalar_lea.vmem %s4, %s5168
      %p5170 = scmp.lt.s32.totalorder %s17, 1
      %s5171 = scalar_select %p5170, %s17, 1
      %s5172 = smul.addr %s5171, 2
      %s5173 = scalar_lea.vmem %s5, %s5172
      // Predicated region
      $region37: #{contracting_block_forward.4} parent=35 // pred_check
        %p5174 = pneg %p124
      $region38: #{contracting_block_forward.4} parent=35 // pred_check_branch
        %5176 = sbr.rel (%p5174) target = $region40
      $region39: #{contracting_block_forward.4} parent=35 // pred_region
        _
      $region40: #{contracting_block_forward.4} parent=35 // pred_fallthru
        _
      // Predicated region
      $region41: #{contracting_block_forward.4} parent=35 // pred_check
        %p5177 = pneg %p150
      $region42: #{contracting_block_forward.4} parent=35 // pred_check_branch
        %5179 = sbr.rel (%p5177) target = $region44
      $region43: #{contracting_block_forward.4} parent=35 // pred_region
        _
      $region44: #{contracting_block_forward.4} parent=35 // pred_fallthru
        _
    $region36: #{contracting_block_forward.4} parent=5 // pred_fallthru
      _
    %p5180 = scmp.le.s32.totalorder 2, %s12
    // Predicated region
    $region45: #{contracting_block_forward.4} parent=5 // pred_check
      %p5181 = pneg %p5180
    $region46: #{contracting_block_forward.4} parent=5 // pred_check_branch
      %5183 = sbr.rel (%p5181) target = $region48
    $region47: #{contracting_block_forward.4} parent=5 // pred_region
      %s5184 = ssub.s32 %s12, 2
      // Predicated region
      $region49: #{contracting_block_forward.4} parent=47 // pred_check
        %p5185 = pneg %p130
      $region50: #{contracting_block_forward.4} parent=47 // pred_check_branch
        %5187 = sbr.rel (%p5185) target = $region52
      $region51: #{contracting_block_forward.4} parent=47 // pred_region
        %p5188 = scmp.lt.s32.totalorder %s18, 1
        %s5189 = scalar_select %p5188, %s18, 1
        %s5190 = smul.addr %s5189, 32
        %s5191 = smul.addr %s5190, 4
        %s5192 = scalar_lea.vmem %s4, %s5191
      $region52: #{contracting_block_forward.4} parent=47 // pred_fallthru
        _
      // Predicated region
      $region53: #{contracting_block_forward.4} parent=47 // pred_check
        %p5193 = pneg %p156
      $region54: #{contracting_block_forward.4} parent=47 // pred_check_branch
        %5195 = sbr.rel (%p5193) target = $region56
      $region55: #{contracting_block_forward.4} parent=47 // pred_region
        %p5196 = scmp.lt.s32.totalorder %s18, 1
        %s5197 = scalar_select %p5196, %s18, 1
        %s5198 = smul.addr %s5197, 2
        %s5199 = scalar_lea.vmem %s5, %s5198
      $region56: #{contracting_block_forward.4} parent=47 // pred_fallthru
        _
    $region48: #{contracting_block_forward.4} parent=5 // pred_fallthru
      _
  $region6: #{contracting_block_forward.4} parent=0 // loop_footer
    %s16 = sadd.s32 1, %s12
  $region7: #{contracting_block_forward.4} parent=0 // loop_footer_branch
    %11 = sbr.rel target = $region3
  $region8: #{contracting_block_forward.4} parent=0 // loop_exit
    _

</llo_original>
